<compile_context>
chip_gen: v7x
topology: tpu7x:2x2x1
jax: 0.10.0
libtpu: 0.0.40
codegen_flags: <defaults>
</compile_context>

<pallas_src>
import math
import functools

import jax
import jax.numpy as jnp
from jax.experimental import pallas as pl
from jax.experimental.pallas import tpu as pltpu

LN_EPS = 1e-5           # PyTorch LayerNorm / TransformerEncoderLayer default
LANE = 128
MXU_DTYPE = jnp.bfloat16  # MXU operand dtype; accumulation stays f32.


def _mxu(x):
    return x.astype(MXU_DTYPE)


def _dot(a, b):
    return jnp.dot(_mxu(a), _mxu(b), preferred_element_type=jnp.float32)


def _einsum(eq, a, b):
    return jnp.einsum(eq, _mxu(a), _mxu(b), preferred_element_type=jnp.float32)


def _layernorm(x, g, b):
    mu = jnp.mean(x, axis=-1, keepdims=True)
    var = jnp.mean((x - mu) ** 2, axis=-1, keepdims=True)
    return (x - mu) * jax.lax.rsqrt(var + LN_EPS) * g + b


def _sigmoid(z):
    return 1.0 / (1.0 + jnp.exp(-z))


# ----------------------------------------------------------------------------
# Single fused kernel: InputEmbedding -> map -> EmbeddingEncoder -> head.
# Rows in a block are ordered (example, part{q=0,c=1}, seq_pos).
# ----------------------------------------------------------------------------
def fused_kernel(nheads, seq,
                 win_ref, wemb_ref, band_ref,
                 wc_ref, bc_ref, hlw_ref, hlb_ref, hgw_ref, hgb_ref, wmap_ref,
                 cln_g_ref, cln_b_ref, cdw_ref, cpw_ref,
                 ln1g_ref, ln1b_ref, ln2g_ref, ln2b_ref,
                 wqkv_ref, bqkv_ref, wo_ref, bo_ref,
                 w1_ref, b1_ref, w2_ref, b2_ref,
                 wse_ref, bse_ref, o_ref):
    nrows = wemb_ref.shape[0]             # 2 * examples_per_block * seq
    npos = win_ref.shape[0] // nrows      # char-conv positions (Lc - 4)
    d = wmap_ref.shape[1]                 # model dim (128)
    num_conv, ker, _ = cdw_ref.shape
    dh = d // nheads
    nseq = nrows // seq                   # sequences in this block (q and c)
    nex = nseq // 2                       # examples in this block

    # ---- InputEmbedding: char CNN (+relu, max over positions) ----
    # Conv positions are pre-folded into M on the host: one (npos*nrows,128)x(128,128)
    # matmul, then a max over the npos row slabs.  The padded weight routes char features
    # to lanes [dimGlove, dimGlove+dimChar), so adding the zero-padded word embedding is
    # exactly torch.cat((wordEmbed, charEmbed), dim=-1).
    y = jnp.maximum(_dot(win_ref[...], wc_ref[...]) + bc_ref[...], 0.0)
    feat = y[0:nrows, :]
    for p in range(1, npos):
        feat = jnp.maximum(feat, y[p * nrows:(p + 1) * nrows, :])
    x = wemb_ref[...].astype(jnp.float32) + feat           # (nrows, 128); lanes >= 70 are 0

    # ---- HighwayNetwork (2 layers, relu act); padded lanes stay exactly 0 ----
    for i in range(hlw_ref.shape[0]):
        t = _sigmoid(_dot(x, hgw_ref[i]) + hgb_ref[i])
        h = jnp.maximum(_dot(x, hlw_ref[i]) + hlb_ref[i], 0.0)
        x = t * h + (1.0 - t) * x

    # ---- "map": Conv1d(d0 -> dim, kernel=1, bias=False) == matmul ----
    x = _dot(x, wmap_ref[...])                              # (nrows, d)

    # ---- EmbeddingEncoder: 4 x depthwise-separable conv blocks ----
    # band (host-built, 0/1, block-diagonal per sequence): shifts[t*nrows + r, :] =
    # h[r + t - pad, :] within the sequence (zero outside) -> one aligned MXU matmul.
    band = band_ref[...]
    for i in range(num_conv):
        h = _layernorm(x, cln_g_ref[i], cln_b_ref[i])
        shifts = _dot(band, h)                              # (ker*nrows, d)
        dw = cdw_ref[i]                                     # (ker, d) depthwise weights
        conv = shifts[0:nrows, :] * dw[0:1, :]
        for t in range(1, ker):
            conv = conv + shifts[t * nrows:(t + 1) * nrows, :] * dw[t:t + 1, :]
        h = jnp.maximum(conv, 0.0)                          # relu(depthwise)
        h = jnp.maximum(_dot(h, cpw_ref[i]), 0.0)           # relu(pointwise 1x1)
        x = x + h                                           # residual

    # ---- pre-norm TransformerEncoderLayer (norm_first=True, dropout=0, no mask) ----
    scale = 1.0 / math.sqrt(dh)
    ln1 = _layernorm(x, ln1g_ref[...], ln1b_ref[...])
    qkv = _dot(ln1, wqkv_ref[...]) + bqkv_ref[...]          # single (nrows, 3d) projection

    ctx_rows = []
    for sidx in range(nseq):                                # per sequence (q / c separately)
        slab = qkv[sidx * seq:(sidx + 1) * seq, :]          # (seq, 3d)
        qh = jnp.stack([slab[:, h * dh:(h + 1) * dh] for h in range(nheads)], axis=0)
        kh = jnp.stack([slab[:, d + h * dh:d + (h + 1) * dh] for h in range(nheads)], axis=0)
        vh = jnp.stack([slab[:, 2 * d + h * dh:2 * d + (h + 1) * dh] for h in range(nheads)],
                       axis=0)
        sc = _einsum('hqe,hke->hqk', qh, kh) * scale        # (H, seq, seq)
        sc = sc - jnp.max(sc, axis=-1, keepdims=True)
        p = jnp.exp(sc)
        p = p * pl.reciprocal(jnp.sum(p, axis=-1, keepdims=True), approx=True)
        ctx = _einsum('hqk,hke->hqe', p, vh)                # (H, seq, dh)
        ctx_rows.append(jnp.concatenate([ctx[h] for h in range(nheads)], axis=-1))
    ctx_all = jnp.concatenate(ctx_rows, axis=0)             # (nrows, d) heads lane-concat
    x = x + _dot(ctx_all, wo_ref[...]) + bo_ref[...]        # single lane-dense out-proj

    ln2 = _layernorm(x, ln2g_ref[...], ln2b_ref[...])
    f = jnp.maximum(_dot(ln2, w1_ref[...]) + b1_ref[...], 0.0)
    x = x + _dot(f, w2_ref[...]) + b2_ref[...]

    # ---- head: mean over seq, concat(mean_q, mean_c), fused (start|end) classifier ----
    emb_rows = []
    for e in range(nex):
        base = e * 2 * seq
        m_q = jnp.mean(x[base:base + seq, :], axis=0, keepdims=True)
        m_c = jnp.mean(x[base + seq:base + 2 * seq, :], axis=0, keepdims=True)
        emb_rows.append(jnp.concatenate([m_q, m_c], axis=-1))
    emb = jnp.concatenate(emb_rows, axis=0)                 # (nex, 2d)
    o_ref[...] = (_dot(emb, wse_ref[...]) + bse_ref[...]).astype(o_ref.dtype)


def _const_spec(w):
    nd = w.ndim

    def idx(i):
        return (0,) * nd

    return pl.BlockSpec(w.shape, idx)   # constant block index -> stays resident in VMEM


def _make_band(nseq, seq, ker):
    pad = (ker - 1) // 2
    nrows = nseq * seq
    t = jnp.arange(ker)[:, None, None]
    r = jnp.arange(nrows)[None, :, None]
    c = jnp.arange(nrows)[None, None, :]
    same = (r // seq) == (c // seq)
    hit = (c % seq) == ((r % seq) + t - pad)
    return (same & hit).astype(jnp.float32).reshape(ker * nrows, nrows)


# ----------------------------------------------------------------------------
# EmbedEncClf forward (with_mask=False, dropout=0).
# ----------------------------------------------------------------------------
def embed_enc_clf_forward(params, q_word, q_char, c_word, c_char, *,
                          nheads, out_dim, num_blocks=2):
    b, s = q_word.shape
    lc = q_char.shape[-1]
    dc = params["char_table"].shape[-1]
    dg = params["glove_table"].shape[-1]
    kw = 5                                     # Conv2d(dimChar, dimChar, (1, 5))
    npos = lc - kw + 1
    if b % num_blocks != 0:
        num_blocks = 1
    bb = b // num_blocks                       # examples per grid block
    nrows_blk = 2 * bb * s                     # q + c rows per block
    n = 2 * b * s                              # total rows
    out_pad = params["w_se"].shape[1] // 2

    # Row ordering (example, part{q=0,c=1}, seq): each grid block owns whole examples.
    word_idx = jnp.stack([q_word, c_word], axis=1).reshape(n)            # (N,)
    char_idx = jnp.stack([q_char, c_char], axis=1).reshape(n, lc)        # (N, Lc)

    # Embedding gathers + im2col + lane padding: plain-JAX data plumbing outside the kernel
    # (gather has no clean Pallas equivalent at these tiny table sizes).
    char_emb = jnp.take(params["char_table"], char_idx, axis=0)          # (N, Lc, dC)
    word_emb = jnp.take(params["glove_table"], word_idx, axis=0)         # (N, dG)
    wemb_pad = jnp.pad(word_emb, ((0, 0), (0, LANE - dg)))               # (N, 128)
    windows = jnp.stack(
        [char_emb[:, j:j + kw, :].reshape(n, kw * dc) for j in range(npos)], axis=0)
    windows = jnp.pad(windows, ((0, 0), (0, 0), (0, LANE - kw * dc)))    # (npos, N, 128)
    # Per-block layout with rows ordered (position, local-row): one M=npos*nrows_blk matmul.
    win = windows.reshape(npos, num_blocks, nrows_blk, LANE)
    win = win.transpose(1, 0, 2, 3).reshape(num_blocks, npos * nrows_blk, LANE)

    band = _make_band(2 * bb, s, params["conv_dw"].shape[1])   # (ker*nrows_blk, nrows_blk)

    weights = [params["wc"], params["bc"],
               params["hw_lin_w"], params["hw_lin_b"],
               params["hw_gate_w"], params["hw_gate_b"],
               params["wmap"],
               params["conv_ln_g"], params["conv_ln_b"], params["conv_dw"], params["conv_pw"],
               params["ln1_g"], params["ln1_b"], params["ln2_g"], params["ln2_b"],
               params["wqkv"], params["bqkv"], params["wo"], params["bo"],
               params["w1"], params["b1"], params["w2"], params["b2"],
               params["w_se"], params["b_se"]]

    logits = pl.pallas_call(
        functools.partial(fused_kernel, nheads, s),
        out_shape=jax.ShapeDtypeStruct((num_blocks, bb, 2 * out_pad), jnp.float32),
        grid=(num_blocks,),
        in_specs=[pl.BlockSpec((None, npos * nrows_blk, LANE), lambda i: (i, 0, 0)),
                  pl.BlockSpec((nrows_blk, LANE), lambda i: (i, 0)),
                  _const_spec(band)] + [_const_spec(w) for w in weights],
        out_specs=pl.BlockSpec((None, bb, 2 * out_pad), lambda i: (i, 0, 0)),
        compiler_params=pltpu.CompilerParams(dimension_semantics=("parallel",)),
    )(win, wemb_pad, band, *weights)

    logits = logits.reshape(b, 2 * out_pad)
    return logits[:, :out_dim], logits[:, out_pad:out_pad + out_dim]


# ----------------------------------------------------------------------------
# Parameters (deterministic synthetic init, stored in padded / fused kernel layouts).
# ----------------------------------------------------------------------------
def init_params(key, *, num_char, dim_char, dim_glove, vocab, dim, num_conv, ker,
                nheads, out_dim, char_kw=5):
    d0 = dim_char + dim_glove
    out_pad = ((out_dim + LANE - 1) // LANE) * LANE
    keys = iter(jax.random.split(key, 20))

    def nrm(shape, fan_in):
        return jax.random.normal(next(keys), shape, jnp.float32) / math.sqrt(fan_in)

    def bf16(x):
        return x.astype(MXU_DTYPE)

    # TODO(synk): GloVe 6B vectors are synthetic (no file/network access); importing real
    # torch checkpoints also needs the layout transposes (Linear/Conv weight -> (in, out),
    # in_proj_weight -> (D, 3D)), which is untestable with synthetic weights.
    char_table = nrm((num_char, dim_char), 1.0)
    glove_table = nrm((vocab, dim_glove), 1.0)

    # Conv2d(dC, dC, (1,5)): flattened (kw*dC, dC), padded so output lands in lanes 50:70.
    wc = nrm((char_kw * dim_char, dim_char), char_kw * dim_char)
    wc_pad = jnp.zeros((LANE, LANE), jnp.float32).at[
        :char_kw * dim_char, dim_glove:dim_glove + dim_char].set(wc)
    bc_pad = jnp.zeros((1, LANE), jnp.float32)

    hw_lin = nrm((2, d0, d0), d0)
    hw_gate = nrm((2, d0, d0), d0)
    hw_lin_pad = jnp.zeros((2, LANE, LANE), jnp.float32).at[:, :d0, :d0].set(hw_lin)
    hw_gate_pad = jnp.zeros((2, LANE, LANE), jnp.float32).at[:, :d0, :d0].set(hw_gate)

    wmap = nrm((d0, dim), d0)
    wmap_pad = jnp.zeros((LANE, dim), jnp.float32).at[:d0, :].set(wmap)

    # start / end classifiers fused (cols [0:400] = start, [512:912] = end; rest zero-pad).
    w_start = nrm((2 * dim, out_dim), 2 * dim)
    w_end = nrm((2 * dim, out_dim), 2 * dim)
    w_se = (jnp.zeros((2 * dim, 2 * out_pad), jnp.float32)
            .at[:, :out_dim].set(w_start)
            .at[:, out_pad:out_pad + out_dim].set(w_end))

    return dict(
        char_table=char_table, glove_table=glove_table,
        wc=bf16(wc_pad), bc=bc_pad,
        hw_lin_w=bf16(hw_lin_pad), hw_lin_b=jnp.zeros((2, 1, LANE), jnp.float32),
        hw_gate_w=bf16(hw_gate_pad), hw_gate_b=jnp.zeros((2, 1, LANE), jnp.float32),
        wmap=bf16(wmap_pad),
        conv_ln_g=jnp.ones((num_conv, 1, dim), jnp.float32),
        conv_ln_b=jnp.zeros((num_conv, 1, dim), jnp.float32),
        conv_dw=nrm((num_conv, ker, dim), ker),
        conv_pw=bf16(nrm((num_conv, dim, dim), dim)),
        ln1_g=jnp.ones((1, dim), jnp.float32), ln1_b=jnp.zeros((1, dim), jnp.float32),
        ln2_g=jnp.ones((1, dim), jnp.float32), ln2_b=jnp.zeros((1, dim), jnp.float32),
        wqkv=bf16(nrm((dim, 3 * dim), dim)), bqkv=jnp.zeros((1, 3 * dim), jnp.float32),
        wo=bf16(nrm((dim, dim), dim)), bo=jnp.zeros((1, dim), jnp.float32),
        w1=bf16(nrm((dim, 4 * dim), dim)), b1=jnp.zeros((1, 4 * dim), jnp.float32),
        w2=bf16(nrm((4 * dim, dim), 4 * dim)), b2=jnp.zeros((1, dim), jnp.float32),
        w_se=bf16(w_se), b_se=jnp.zeros((1, 2 * out_pad), jnp.float32),
    )


if __name__ == "__main__":
    BATCH, SEQ, LC = 2, 16, 8
    NUM_CHAR, DIM_CHAR, DIM_GLOVE, VOCAB = 32, 20, 50, 64
    DIM, NHEADS, NUM_CONV, KER, OUT_DIM = 128, 8, 4, 7, 400

    key = jax.random.PRNGKey(0)
    k_qw, k_qc, k_cw, k_cc, k_p = jax.random.split(key, 5)
    q_word = jax.random.randint(k_qw, (BATCH, SEQ), 0, VOCAB, dtype=jnp.int32)
    q_char = jax.random.randint(k_qc, (BATCH, SEQ, LC), 0, NUM_CHAR, dtype=jnp.int32)
    c_word = jax.random.randint(k_cw, (BATCH, SEQ), 0, VOCAB, dtype=jnp.int32)
    c_char = jax.random.randint(k_cc, (BATCH, SEQ, LC), 0, NUM_CHAR, dtype=jnp.int32)

    params = init_params(k_p, num_char=NUM_CHAR, dim_char=DIM_CHAR, dim_glove=DIM_GLOVE,
                         vocab=VOCAB, dim=DIM, num_conv=NUM_CONV, ker=KER,
                         nheads=NHEADS, out_dim=OUT_DIM)

    # num_blocks=2: one example per grid step so both v7x TensorCores get a block.
    # On single-TC v5e/v6e, num_blocks=1 (M=64, one step) is marginally better.
    fwd = jax.jit(functools.partial(embed_enc_clf_forward, nheads=NHEADS,
                                    out_dim=OUT_DIM, num_blocks=2))
    start_logits, end_logits = fwd(params, q_word, q_char, c_word, c_char)
    jax.block_until_ready((start_logits, end_logits))

    assert start_logits.shape == (BATCH, OUT_DIM)
    assert end_logits.shape == (BATCH, OUT_DIM)
    assert bool(jnp.all(jnp.isfinite(start_logits)))
    assert bool(jnp.all(jnp.isfinite(end_logits)))
    print("KERNEL_OK")
</pallas_src>

<mosaic_0001>
module attributes {stable_mosaic.version = 11 : i64} {
  func.func @fused_kernel(%arg0: i32, %arg1: memref<1x128x128xf32, #tpu.memory_space<vmem>>, %arg2: memref<32x128xf32, #tpu.memory_space<vmem>>, %arg3: memref<224x32xf32, #tpu.memory_space<vmem>>, %arg4: memref<128x128xbf16, #tpu.memory_space<vmem>>, %arg5: memref<1x128xf32, #tpu.memory_space<vmem>>, %arg6: memref<2x128x128xbf16, #tpu.memory_space<vmem>>, %arg7: memref<2x1x128xf32, #tpu.memory_space<vmem>>, %arg8: memref<2x128x128xbf16, #tpu.memory_space<vmem>>, %arg9: memref<2x1x128xf32, #tpu.memory_space<vmem>>, %arg10: memref<128x128xbf16, #tpu.memory_space<vmem>>, %arg11: memref<4x1x128xf32, #tpu.memory_space<vmem>>, %arg12: memref<4x1x128xf32, #tpu.memory_space<vmem>>, %arg13: memref<4x7x128xf32, #tpu.memory_space<vmem>>, %arg14: memref<4x128x128xbf16, #tpu.memory_space<vmem>>, %arg15: memref<1x128xf32, #tpu.memory_space<vmem>>, %arg16: memref<1x128xf32, #tpu.memory_space<vmem>>, %arg17: memref<1x128xf32, #tpu.memory_space<vmem>>, %arg18: memref<1x128xf32, #tpu.memory_space<vmem>>, %arg19: memref<128x384xbf16, #tpu.memory_space<vmem>>, %arg20: memref<1x384xf32, #tpu.memory_space<vmem>>, %arg21: memref<128x128xbf16, #tpu.memory_space<vmem>>, %arg22: memref<1x128xf32, #tpu.memory_space<vmem>>, %arg23: memref<128x512xbf16, #tpu.memory_space<vmem>>, %arg24: memref<1x512xf32, #tpu.memory_space<vmem>>, %arg25: memref<512x128xbf16, #tpu.memory_space<vmem>>, %arg26: memref<1x128xf32, #tpu.memory_space<vmem>>, %arg27: memref<256x1024xbf16, #tpu.memory_space<vmem>>, %arg28: memref<1x1024xf32, #tpu.memory_space<vmem>>, %arg29: memref<1x1x1024xf32, #tpu.memory_space<vmem>>) attributes {dimension_semantics = [#tpu.dimension_semantics<parallel>], iteration_bounds = array<i64: 2>, scalar_prefetch = 0 : i64, scratch_operands = 0 : i64, tpu.core_type = #tpu.core_type<tc>, window_params = [{transform_indices = @transform_0, window_bounds = array<i64: 1, 128, 128>}, {transform_indices = @transform_1, window_bounds = array<i64: 32, 128>}, {pipeline_mode = #tpu.pipeline_mode<synchronous>, transform_indices = @transform_2, window_bounds = array<i64: 224, 32>}, {pipeline_mode = #tpu.pipeline_mode<synchronous>, transform_indices = @transform_3, window_bounds = array<i64: 128, 128>}, {pipeline_mode = #tpu.pipeline_mode<synchronous>, transform_indices = @transform_4, window_bounds = array<i64: 1, 128>}, {pipeline_mode = #tpu.pipeline_mode<synchronous>, transform_indices = @transform_5, window_bounds = array<i64: 2, 128, 128>}, {pipeline_mode = #tpu.pipeline_mode<synchronous>, transform_indices = @transform_6, window_bounds = array<i64: 2, 1, 128>}, {pipeline_mode = #tpu.pipeline_mode<synchronous>, transform_indices = @transform_7, window_bounds = array<i64: 2, 128, 128>}, {pipeline_mode = #tpu.pipeline_mode<synchronous>, transform_indices = @transform_8, window_bounds = array<i64: 2, 1, 128>}, {pipeline_mode = #tpu.pipeline_mode<synchronous>, transform_indices = @transform_9, window_bounds = array<i64: 128, 128>}, {pipeline_mode = #tpu.pipeline_mode<synchronous>, transform_indices = @transform_10, window_bounds = array<i64: 4, 1, 128>}, {pipeline_mode = #tpu.pipeline_mode<synchronous>, transform_indices = @transform_11, window_bounds = array<i64: 4, 1, 128>}, {pipeline_mode = #tpu.pipeline_mode<synchronous>, transform_indices = @transform_12, window_bounds = array<i64: 4, 7, 128>}, {pipeline_mode = #tpu.pipeline_mode<synchronous>, transform_indices = @transform_13, window_bounds = array<i64: 4, 128, 128>}, {pipeline_mode = #tpu.pipeline_mode<synchronous>, transform_indices = @transform_14, window_bounds = array<i64: 1, 128>}, {pipeline_mode = #tpu.pipeline_mode<synchronous>, transform_indices = @transform_15, window_bounds = array<i64: 1, 128>}, {pipeline_mode = #tpu.pipeline_mode<synchronous>, transform_indices = @transform_16, window_bounds = array<i64: 1, 128>}, {pipeline_mode = #tpu.pipeline_mode<synchronous>, transform_indices = @transform_17, window_bounds = array<i64: 1, 128>}, {pipeline_mode = #tpu.pipeline_mode<synchronous>, transform_indices = @transform_18, window_bounds = array<i64: 128, 384>}, {pipeline_mode = #tpu.pipeline_mode<synchronous>, transform_indices = @transform_19, window_bounds = array<i64: 1, 384>}, {pipeline_mode = #tpu.pipeline_mode<synchronous>, transform_indices = @transform_20, window_bounds = array<i64: 128, 128>}, {pipeline_mode = #tpu.pipeline_mode<synchronous>, transform_indices = @transform_21, window_bounds = array<i64: 1, 128>}, {pipeline_mode = #tpu.pipeline_mode<synchronous>, transform_indices = @transform_22, window_bounds = array<i64: 128, 512>}, {pipeline_mode = #tpu.pipeline_mode<synchronous>, transform_indices = @transform_23, window_bounds = array<i64: 1, 512>}, {pipeline_mode = #tpu.pipeline_mode<synchronous>, transform_indices = @transform_24, window_bounds = array<i64: 512, 128>}, {pipeline_mode = #tpu.pipeline_mode<synchronous>, transform_indices = @transform_25, window_bounds = array<i64: 1, 128>}, {pipeline_mode = #tpu.pipeline_mode<synchronous>, transform_indices = @transform_26, window_bounds = array<i64: 256, 1024>}, {pipeline_mode = #tpu.pipeline_mode<synchronous>, transform_indices = @transform_27, window_bounds = array<i64: 1, 1024>}, {transform_indices = @transform_28, window_bounds = array<i64: 1, 1, 1024>}]} {
    %c0 = arith.constant 0 : index
    %c0_0 = arith.constant 0 : index
    %c0_1 = arith.constant 0 : index
    %0 = vector.load %arg1[%c0, %c0_0, %c0_1] : memref<1x128x128xf32, #tpu.memory_space<vmem>>, vector<1x128x128xf32>
    %1 = vector.shape_cast %0 : vector<1x128x128xf32> to vector<128x128xf32>
    %c0_2 = arith.constant 0 : index
    %c0_3 = arith.constant 0 : index
    %2 = vector.load %arg4[%c0_2, %c0_3] : memref<128x128xbf16, #tpu.memory_space<vmem>>, vector<128x128xbf16>
    %3 = arith.truncf %1 : vector<128x128xf32> to vector<128x128xbf16>
    %cst = arith.constant dense<0.000000e+00> : vector<128x128xf32>
    %4 = tpu.matmul %3, %2, %cst {dimension_numbers = #tpu.dot_dimension_numbers<[1], [0], [0], [1], [0, 0, 1, 1], [], []>} : vector<128x128xbf16>, vector<128x128xbf16>, vector<128x128xf32> -> vector<128x128xf32>
    %c0_4 = arith.constant 0 : index
    %c0_5 = arith.constant 0 : index
    %5 = vector.load %arg5[%c0_4, %c0_5] : memref<1x128xf32, #tpu.memory_space<vmem>>, vector<1x128xf32>
    %6 = vector.broadcast %5 : vector<1x128xf32> to vector<128x128xf32>
    %7 = arith.addf %4, %6 : vector<128x128xf32>
    %cst_6 = arith.constant 0.000000e+00 : f32
    %8 = vector.broadcast %cst_6 : f32 to vector<128x128xf32>
    %9 = arith.maximumf %7, %8 : vector<128x128xf32>
    %10 = vector.extract_strided_slice %9 {offsets = [0, 0], sizes = [32, 128], strides = [1, 1]} : vector<128x128xf32> to vector<32x128xf32>
    %11 = vector.extract_strided_slice %9 {offsets = [32, 0], sizes = [32, 128], strides = [1, 1]} : vector<128x128xf32> to vector<32x128xf32>
    %12 = arith.maximumf %10, %11 : vector<32x128xf32>
    %13 = vector.extract_strided_slice %9 {offsets = [64, 0], sizes = [32, 128], strides = [1, 1]} : vector<128x128xf32> to vector<32x128xf32>
    %14 = arith.maximumf %12, %13 : vector<32x128xf32>
    %15 = vector.extract_strided_slice %9 {offsets = [96, 0], sizes = [32, 128], strides = [1, 1]} : vector<128x128xf32> to vector<32x128xf32>
    %16 = arith.maximumf %14, %15 : vector<32x128xf32>
    %c0_7 = arith.constant 0 : index
    %c0_8 = arith.constant 0 : index
    %17 = vector.load %arg2[%c0_7, %c0_8] : memref<32x128xf32, #tpu.memory_space<vmem>>, vector<32x128xf32>
    %18 = arith.addf %17, %16 : vector<32x128xf32>
    %c0_9 = arith.constant 0 : index
    %c0_10 = arith.constant 0 : index
    %c0_11 = arith.constant 0 : index
    %19 = vector.load %arg8[%c0_9, %c0_10, %c0_11] : memref<2x128x128xbf16, #tpu.memory_space<vmem>>, vector<1x128x128xbf16>
    %20 = vector.shape_cast %19 : vector<1x128x128xbf16> to vector<128x128xbf16>
    %21 = arith.truncf %18 : vector<32x128xf32> to vector<32x128xbf16>
    %cst_12 = arith.constant dense<0.000000e+00> : vector<32x128xf32>
    %22 = tpu.matmul %21, %20, %cst_12 {dimension_numbers = #tpu.dot_dimension_numbers<[1], [0], [0], [1], [0, 0, 1, 1], [], []>} : vector<32x128xbf16>, vector<128x128xbf16>, vector<32x128xf32> -> vector<32x128xf32>
    %c0_13 = arith.constant 0 : index
    %c0_14 = arith.constant 0 : index
    %c0_15 = arith.constant 0 : index
    %23 = vector.load %arg9[%c0_13, %c0_14, %c0_15] : memref<2x1x128xf32, #tpu.memory_space<vmem>>, vector<1x1x128xf32>
    %24 = vector.shape_cast %23 : vector<1x1x128xf32> to vector<1x128xf32>
    %25 = vector.broadcast %24 : vector<1x128xf32> to vector<32x128xf32>
    %26 = arith.addf %22, %25 : vector<32x128xf32>
    %cst_16 = arith.constant 0.000000e+00 : f32
    %27 = vector.broadcast %cst_16 : f32 to vector<32x128xf32>
    %28 = arith.subf %27, %26 : vector<32x128xf32>
    %29 = math.exp %28 : vector<32x128xf32>
    %cst_17 = arith.constant 1.000000e+00 : f32
    %30 = vector.broadcast %cst_17 : f32 to vector<32x128xf32>
    %31 = arith.addf %30, %29 : vector<32x128xf32>
    %cst_18 = arith.constant 1.000000e+00 : f32
    %32 = vector.broadcast %cst_18 : f32 to vector<32x128xf32>
    %33 = arith.divf %32, %31 : vector<32x128xf32>
    %c0_19 = arith.constant 0 : index
    %c0_20 = arith.constant 0 : index
    %c0_21 = arith.constant 0 : index
    %34 = vector.load %arg6[%c0_19, %c0_20, %c0_21] : memref<2x128x128xbf16, #tpu.memory_space<vmem>>, vector<1x128x128xbf16>
    %35 = vector.shape_cast %34 : vector<1x128x128xbf16> to vector<128x128xbf16>
    %36 = arith.truncf %18 : vector<32x128xf32> to vector<32x128xbf16>
    %cst_22 = arith.constant dense<0.000000e+00> : vector<32x128xf32>
    %37 = tpu.matmul %36, %35, %cst_22 {dimension_numbers = #tpu.dot_dimension_numbers<[1], [0], [0], [1], [0, 0, 1, 1], [], []>} : vector<32x128xbf16>, vector<128x128xbf16>, vector<32x128xf32> -> vector<32x128xf32>
    %c0_23 = arith.constant 0 : index
    %c0_24 = arith.constant 0 : index
    %c0_25 = arith.constant 0 : index
    %38 = vector.load %arg7[%c0_23, %c0_24, %c0_25] : memref<2x1x128xf32, #tpu.memory_space<vmem>>, vector<1x1x128xf32>
    %39 = vector.shape_cast %38 : vector<1x1x128xf32> to vector<1x128xf32>
    %40 = vector.broadcast %39 : vector<1x128xf32> to vector<32x128xf32>
    %41 = arith.addf %37, %40 : vector<32x128xf32>
    %cst_26 = arith.constant 0.000000e+00 : f32
    %42 = vector.broadcast %cst_26 : f32 to vector<32x128xf32>
    %43 = arith.maximumf %41, %42 : vector<32x128xf32>
    %44 = arith.mulf %33, %43 : vector<32x128xf32>
    %cst_27 = arith.constant 1.000000e+00 : f32
    %45 = vector.broadcast %cst_27 : f32 to vector<32x128xf32>
    %46 = arith.subf %45, %33 : vector<32x128xf32>
    %47 = arith.mulf %46, %18 : vector<32x128xf32>
    %48 = arith.addf %44, %47 : vector<32x128xf32>
    %c1 = arith.constant 1 : index
    %c0_28 = arith.constant 0 : index
    %c0_29 = arith.constant 0 : index
    %49 = vector.load %arg8[%c1, %c0_28, %c0_29] : memref<2x128x128xbf16, #tpu.memory_space<vmem>>, vector<1x128x128xbf16>
    %50 = vector.shape_cast %49 : vector<1x128x128xbf16> to vector<128x128xbf16>
    %51 = arith.truncf %48 : vector<32x128xf32> to vector<32x128xbf16>
    %cst_30 = arith.constant dense<0.000000e+00> : vector<32x128xf32>
    %52 = tpu.matmul %51, %50, %cst_30 {dimension_numbers = #tpu.dot_dimension_numbers<[1], [0], [0], [1], [0, 0, 1, 1], [], []>} : vector<32x128xbf16>, vector<128x128xbf16>, vector<32x128xf32> -> vector<32x128xf32>
    %c1_31 = arith.constant 1 : index
    %c0_32 = arith.constant 0 : index
    %c0_33 = arith.constant 0 : index
    %53 = vector.load %arg9[%c1_31, %c0_32, %c0_33] : memref<2x1x128xf32, #tpu.memory_space<vmem>>, vector<1x1x128xf32>
    %54 = vector.shape_cast %53 : vector<1x1x128xf32> to vector<1x128xf32>
    %55 = vector.broadcast %54 : vector<1x128xf32> to vector<32x128xf32>
    %56 = arith.addf %52, %55 : vector<32x128xf32>
    %cst_34 = arith.constant 0.000000e+00 : f32
    %57 = vector.broadcast %cst_34 : f32 to vector<32x128xf32>
    %58 = arith.subf %57, %56 : vector<32x128xf32>
    %59 = math.exp %58 : vector<32x128xf32>
    %cst_35 = arith.constant 1.000000e+00 : f32
    %60 = vector.broadcast %cst_35 : f32 to vector<32x128xf32>
    %61 = arith.addf %60, %59 : vector<32x128xf32>
    %cst_36 = arith.constant 1.000000e+00 : f32
    %62 = vector.broadcast %cst_36 : f32 to vector<32x128xf32>
    %63 = arith.divf %62, %61 : vector<32x128xf32>
    %c1_37 = arith.constant 1 : index
    %c0_38 = arith.constant 0 : index
    %c0_39 = arith.constant 0 : index
    %64 = vector.load %arg6[%c1_37, %c0_38, %c0_39] : memref<2x128x128xbf16, #tpu.memory_space<vmem>>, vector<1x128x128xbf16>
    %65 = vector.shape_cast %64 : vector<1x128x128xbf16> to vector<128x128xbf16>
    %66 = arith.truncf %48 : vector<32x128xf32> to vector<32x128xbf16>
    %cst_40 = arith.constant dense<0.000000e+00> : vector<32x128xf32>
    %67 = tpu.matmul %66, %65, %cst_40 {dimension_numbers = #tpu.dot_dimension_numbers<[1], [0], [0], [1], [0, 0, 1, 1], [], []>} : vector<32x128xbf16>, vector<128x128xbf16>, vector<32x128xf32> -> vector<32x128xf32>
    %c1_41 = arith.constant 1 : index
    %c0_42 = arith.constant 0 : index
    %c0_43 = arith.constant 0 : index
    %68 = vector.load %arg7[%c1_41, %c0_42, %c0_43] : memref<2x1x128xf32, #tpu.memory_space<vmem>>, vector<1x1x128xf32>
    %69 = vector.shape_cast %68 : vector<1x1x128xf32> to vector<1x128xf32>
    %70 = vector.broadcast %69 : vector<1x128xf32> to vector<32x128xf32>
    %71 = arith.addf %67, %70 : vector<32x128xf32>
    %cst_44 = arith.constant 0.000000e+00 : f32
    %72 = vector.broadcast %cst_44 : f32 to vector<32x128xf32>
    %73 = arith.maximumf %71, %72 : vector<32x128xf32>
    %74 = arith.mulf %63, %73 : vector<32x128xf32>
    %cst_45 = arith.constant 1.000000e+00 : f32
    %75 = vector.broadcast %cst_45 : f32 to vector<32x128xf32>
    %76 = arith.subf %75, %63 : vector<32x128xf32>
    %77 = arith.mulf %76, %48 : vector<32x128xf32>
    %78 = arith.addf %74, %77 : vector<32x128xf32>
    %c0_46 = arith.constant 0 : index
    %c0_47 = arith.constant 0 : index
    %79 = vector.load %arg10[%c0_46, %c0_47] : memref<128x128xbf16, #tpu.memory_space<vmem>>, vector<128x128xbf16>
    %80 = arith.truncf %78 : vector<32x128xf32> to vector<32x128xbf16>
    %cst_48 = arith.constant dense<0.000000e+00> : vector<32x128xf32>
    %81 = tpu.matmul %80, %79, %cst_48 {dimension_numbers = #tpu.dot_dimension_numbers<[1], [0], [0], [1], [0, 0, 1, 1], [], []>} : vector<32x128xbf16>, vector<128x128xbf16>, vector<32x128xf32> -> vector<32x128xf32>
    %c0_49 = arith.constant 0 : index
    %c0_50 = arith.constant 0 : index
    %82 = vector.load %arg3[%c0_49, %c0_50] : memref<224x32xf32, #tpu.memory_space<vmem>>, vector<224x32xf32>
    %c0_51 = arith.constant 0 : index
    %c0_52 = arith.constant 0 : index
    %c0_53 = arith.constant 0 : index
    %83 = vector.load %arg11[%c0_51, %c0_52, %c0_53] : memref<4x1x128xf32, #tpu.memory_space<vmem>>, vector<1x1x128xf32>
    %84 = vector.shape_cast %83 : vector<1x1x128xf32> to vector<1x128xf32>
    %c0_54 = arith.constant 0 : index
    %c0_55 = arith.constant 0 : index
    %c0_56 = arith.constant 0 : index
    %85 = vector.load %arg12[%c0_54, %c0_55, %c0_56] : memref<4x1x128xf32, #tpu.memory_space<vmem>>, vector<1x1x128xf32>
    %86 = vector.shape_cast %85 : vector<1x1x128xf32> to vector<1x128xf32>
    %cst_57 = arith.constant dense<0.000000e+00> : vector<32xf32>
    %87 = vector.multi_reduction <add>, %81, %cst_57 [1] : vector<32x128xf32> to vector<32xf32>
    %88 = vector.shape_cast %87 : vector<32xf32> to vector<32x1xf32>
    %cst_58 = arith.constant 1.280000e+02 : f32
    %89 = vector.broadcast %cst_58 : f32 to vector<32x1xf32>
    %90 = arith.divf %88, %89 : vector<32x1xf32>
    %91 = vector.broadcast %90 : vector<32x1xf32> to vector<32x128xf32>
    %92 = arith.subf %81, %91 : vector<32x128xf32>
    %93 = arith.mulf %92, %92 : vector<32x128xf32>
    %cst_59 = arith.constant dense<0.000000e+00> : vector<32xf32>
    %94 = vector.multi_reduction <add>, %93, %cst_59 [1] : vector<32x128xf32> to vector<32xf32>
    %95 = vector.shape_cast %94 : vector<32xf32> to vector<32x1xf32>
    %cst_60 = arith.constant 1.280000e+02 : f32
    %96 = vector.broadcast %cst_60 : f32 to vector<32x1xf32>
    %97 = arith.divf %95, %96 : vector<32x1xf32>
    %98 = vector.broadcast %90 : vector<32x1xf32> to vector<32x128xf32>
    %99 = arith.subf %81, %98 : vector<32x128xf32>
    %cst_61 = arith.constant 9.99999974E-6 : f32
    %100 = vector.broadcast %cst_61 : f32 to vector<32x1xf32>
    %101 = arith.addf %97, %100 : vector<32x1xf32>
    %102 = math.rsqrt %101 : vector<32x1xf32>
    %103 = vector.broadcast %102 : vector<32x1xf32> to vector<32x128xf32>
    %104 = arith.mulf %99, %103 : vector<32x128xf32>
    %105 = vector.broadcast %84 : vector<1x128xf32> to vector<32x128xf32>
    %106 = arith.mulf %104, %105 : vector<32x128xf32>
    %107 = vector.broadcast %86 : vector<1x128xf32> to vector<32x128xf32>
    %108 = arith.addf %106, %107 : vector<32x128xf32>
    %109 = arith.truncf %82 : vector<224x32xf32> to vector<224x32xbf16>
    %110 = arith.truncf %108 : vector<32x128xf32> to vector<32x128xbf16>
    %cst_62 = arith.constant dense<0.000000e+00> : vector<224x128xf32>
    %111 = tpu.matmul %109, %110, %cst_62 {dimension_numbers = #tpu.dot_dimension_numbers<[1], [0], [0], [1], [0, 0, 1, 1], [], []>} : vector<224x32xbf16>, vector<32x128xbf16>, vector<224x128xf32> -> vector<224x128xf32>
    %c0_63 = arith.constant 0 : index
    %c0_64 = arith.constant 0 : index
    %c0_65 = arith.constant 0 : index
    %112 = vector.load %arg13[%c0_63, %c0_64, %c0_65] : memref<4x7x128xf32, #tpu.memory_space<vmem>>, vector<1x7x128xf32>
    %113 = vector.shape_cast %112 : vector<1x7x128xf32> to vector<7x128xf32>
    %114 = vector.extract_strided_slice %111 {offsets = [0, 0], sizes = [32, 128], strides = [1, 1]} : vector<224x128xf32> to vector<32x128xf32>
    %115 = vector.extract_strided_slice %113 {offsets = [0, 0], sizes = [1, 128], strides = [1, 1]} : vector<7x128xf32> to vector<1x128xf32>
    %116 = vector.broadcast %115 : vector<1x128xf32> to vector<32x128xf32>
    %117 = arith.mulf %114, %116 : vector<32x128xf32>
    %118 = vector.extract_strided_slice %111 {offsets = [32, 0], sizes = [32, 128], strides = [1, 1]} : vector<224x128xf32> to vector<32x128xf32>
    %119 = vector.extract_strided_slice %113 {offsets = [1, 0], sizes = [1, 128], strides = [1, 1]} : vector<7x128xf32> to vector<1x128xf32>
    %120 = vector.broadcast %119 : vector<1x128xf32> to vector<32x128xf32>
    %121 = arith.mulf %118, %120 : vector<32x128xf32>
    %122 = arith.addf %117, %121 : vector<32x128xf32>
    %123 = vector.extract_strided_slice %111 {offsets = [64, 0], sizes = [32, 128], strides = [1, 1]} : vector<224x128xf32> to vector<32x128xf32>
    %124 = vector.extract_strided_slice %113 {offsets = [2, 0], sizes = [1, 128], strides = [1, 1]} : vector<7x128xf32> to vector<1x128xf32>
    %125 = vector.broadcast %124 : vector<1x128xf32> to vector<32x128xf32>
    %126 = arith.mulf %123, %125 : vector<32x128xf32>
    %127 = arith.addf %122, %126 : vector<32x128xf32>
    %128 = vector.extract_strided_slice %111 {offsets = [96, 0], sizes = [32, 128], strides = [1, 1]} : vector<224x128xf32> to vector<32x128xf32>
    %129 = vector.extract_strided_slice %113 {offsets = [3, 0], sizes = [1, 128], strides = [1, 1]} : vector<7x128xf32> to vector<1x128xf32>
    %130 = vector.broadcast %129 : vector<1x128xf32> to vector<32x128xf32>
    %131 = arith.mulf %128, %130 : vector<32x128xf32>
    %132 = arith.addf %127, %131 : vector<32x128xf32>
    %133 = vector.extract_strided_slice %111 {offsets = [128, 0], sizes = [32, 128], strides = [1, 1]} : vector<224x128xf32> to vector<32x128xf32>
    %134 = vector.extract_strided_slice %113 {offsets = [4, 0], sizes = [1, 128], strides = [1, 1]} : vector<7x128xf32> to vector<1x128xf32>
    %135 = vector.broadcast %134 : vector<1x128xf32> to vector<32x128xf32>
    %136 = arith.mulf %133, %135 : vector<32x128xf32>
    %137 = arith.addf %132, %136 : vector<32x128xf32>
    %138 = vector.extract_strided_slice %111 {offsets = [160, 0], sizes = [32, 128], strides = [1, 1]} : vector<224x128xf32> to vector<32x128xf32>
    %139 = vector.extract_strided_slice %113 {offsets = [5, 0], sizes = [1, 128], strides = [1, 1]} : vector<7x128xf32> to vector<1x128xf32>
    %140 = vector.broadcast %139 : vector<1x128xf32> to vector<32x128xf32>
    %141 = arith.mulf %138, %140 : vector<32x128xf32>
    %142 = arith.addf %137, %141 : vector<32x128xf32>
    %143 = vector.extract_strided_slice %111 {offsets = [192, 0], sizes = [32, 128], strides = [1, 1]} : vector<224x128xf32> to vector<32x128xf32>
    %144 = vector.extract_strided_slice %113 {offsets = [6, 0], sizes = [1, 128], strides = [1, 1]} : vector<7x128xf32> to vector<1x128xf32>
    %145 = vector.broadcast %144 : vector<1x128xf32> to vector<32x128xf32>
    %146 = arith.mulf %143, %145 : vector<32x128xf32>
    %147 = arith.addf %142, %146 : vector<32x128xf32>
    %cst_66 = arith.constant 0.000000e+00 : f32
    %148 = vector.broadcast %cst_66 : f32 to vector<32x128xf32>
    %149 = arith.maximumf %147, %148 : vector<32x128xf32>
    %c0_67 = arith.constant 0 : index
    %c0_68 = arith.constant 0 : index
    %c0_69 = arith.constant 0 : index
    %150 = vector.load %arg14[%c0_67, %c0_68, %c0_69] : memref<4x128x128xbf16, #tpu.memory_space<vmem>>, vector<1x128x128xbf16>
    %151 = vector.shape_cast %150 : vector<1x128x128xbf16> to vector<128x128xbf16>
    %152 = arith.truncf %149 : vector<32x128xf32> to vector<32x128xbf16>
    %cst_70 = arith.constant dense<0.000000e+00> : vector<32x128xf32>
    %153 = tpu.matmul %152, %151, %cst_70 {dimension_numbers = #tpu.dot_dimension_numbers<[1], [0], [0], [1], [0, 0, 1, 1], [], []>} : vector<32x128xbf16>, vector<128x128xbf16>, vector<32x128xf32> -> vector<32x128xf32>
    %cst_71 = arith.constant 0.000000e+00 : f32
    %154 = vector.broadcast %cst_71 : f32 to vector<32x128xf32>
    %155 = arith.maximumf %153, %154 : vector<32x128xf32>
    %156 = arith.addf %81, %155 : vector<32x128xf32>
    %c1_72 = arith.constant 1 : index
    %c0_73 = arith.constant 0 : index
    %c0_74 = arith.constant 0 : index
    %157 = vector.load %arg11[%c1_72, %c0_73, %c0_74] : memref<4x1x128xf32, #tpu.memory_space<vmem>>, vector<1x1x128xf32>
    %158 = vector.shape_cast %157 : vector<1x1x128xf32> to vector<1x128xf32>
    %c1_75 = arith.constant 1 : index
    %c0_76 = arith.constant 0 : index
    %c0_77 = arith.constant 0 : index
    %159 = vector.load %arg12[%c1_75, %c0_76, %c0_77] : memref<4x1x128xf32, #tpu.memory_space<vmem>>, vector<1x1x128xf32>
    %160 = vector.shape_cast %159 : vector<1x1x128xf32> to vector<1x128xf32>
    %cst_78 = arith.constant dense<0.000000e+00> : vector<32xf32>
    %161 = vector.multi_reduction <add>, %156, %cst_78 [1] : vector<32x128xf32> to vector<32xf32>
    %162 = vector.shape_cast %161 : vector<32xf32> to vector<32x1xf32>
    %cst_79 = arith.constant 1.280000e+02 : f32
    %163 = vector.broadcast %cst_79 : f32 to vector<32x1xf32>
    %164 = arith.divf %162, %163 : vector<32x1xf32>
    %165 = vector.broadcast %164 : vector<32x1xf32> to vector<32x128xf32>
    %166 = arith.subf %156, %165 : vector<32x128xf32>
    %167 = arith.mulf %166, %166 : vector<32x128xf32>
    %cst_80 = arith.constant dense<0.000000e+00> : vector<32xf32>
    %168 = vector.multi_reduction <add>, %167, %cst_80 [1] : vector<32x128xf32> to vector<32xf32>
    %169 = vector.shape_cast %168 : vector<32xf32> to vector<32x1xf32>
    %cst_81 = arith.constant 1.280000e+02 : f32
    %170 = vector.broadcast %cst_81 : f32 to vector<32x1xf32>
    %171 = arith.divf %169, %170 : vector<32x1xf32>
    %172 = vector.broadcast %164 : vector<32x1xf32> to vector<32x128xf32>
    %173 = arith.subf %156, %172 : vector<32x128xf32>
    %cst_82 = arith.constant 9.99999974E-6 : f32
    %174 = vector.broadcast %cst_82 : f32 to vector<32x1xf32>
    %175 = arith.addf %171, %174 : vector<32x1xf32>
    %176 = math.rsqrt %175 : vector<32x1xf32>
    %177 = vector.broadcast %176 : vector<32x1xf32> to vector<32x128xf32>
    %178 = arith.mulf %173, %177 : vector<32x128xf32>
    %179 = vector.broadcast %158 : vector<1x128xf32> to vector<32x128xf32>
    %180 = arith.mulf %178, %179 : vector<32x128xf32>
    %181 = vector.broadcast %160 : vector<1x128xf32> to vector<32x128xf32>
    %182 = arith.addf %180, %181 : vector<32x128xf32>
    %183 = arith.truncf %82 : vector<224x32xf32> to vector<224x32xbf16>
    %184 = arith.truncf %182 : vector<32x128xf32> to vector<32x128xbf16>
    %cst_83 = arith.constant dense<0.000000e+00> : vector<224x128xf32>
    %185 = tpu.matmul %183, %184, %cst_83 {dimension_numbers = #tpu.dot_dimension_numbers<[1], [0], [0], [1], [0, 0, 1, 1], [], []>} : vector<224x32xbf16>, vector<32x128xbf16>, vector<224x128xf32> -> vector<224x128xf32>
    %c1_84 = arith.constant 1 : index
    %c0_85 = arith.constant 0 : index
    %c0_86 = arith.constant 0 : index
    %186 = vector.load %arg13[%c1_84, %c0_85, %c0_86] : memref<4x7x128xf32, #tpu.memory_space<vmem>>, vector<1x7x128xf32>
    %187 = vector.shape_cast %186 : vector<1x7x128xf32> to vector<7x128xf32>
    %188 = vector.extract_strided_slice %185 {offsets = [0, 0], sizes = [32, 128], strides = [1, 1]} : vector<224x128xf32> to vector<32x128xf32>
    %189 = vector.extract_strided_slice %187 {offsets = [0, 0], sizes = [1, 128], strides = [1, 1]} : vector<7x128xf32> to vector<1x128xf32>
    %190 = vector.broadcast %189 : vector<1x128xf32> to vector<32x128xf32>
    %191 = arith.mulf %188, %190 : vector<32x128xf32>
    %192 = vector.extract_strided_slice %185 {offsets = [32, 0], sizes = [32, 128], strides = [1, 1]} : vector<224x128xf32> to vector<32x128xf32>
    %193 = vector.extract_strided_slice %187 {offsets = [1, 0], sizes = [1, 128], strides = [1, 1]} : vector<7x128xf32> to vector<1x128xf32>
    %194 = vector.broadcast %193 : vector<1x128xf32> to vector<32x128xf32>
    %195 = arith.mulf %192, %194 : vector<32x128xf32>
    %196 = arith.addf %191, %195 : vector<32x128xf32>
    %197 = vector.extract_strided_slice %185 {offsets = [64, 0], sizes = [32, 128], strides = [1, 1]} : vector<224x128xf32> to vector<32x128xf32>
    %198 = vector.extract_strided_slice %187 {offsets = [2, 0], sizes = [1, 128], strides = [1, 1]} : vector<7x128xf32> to vector<1x128xf32>
    %199 = vector.broadcast %198 : vector<1x128xf32> to vector<32x128xf32>
    %200 = arith.mulf %197, %199 : vector<32x128xf32>
    %201 = arith.addf %196, %200 : vector<32x128xf32>
    %202 = vector.extract_strided_slice %185 {offsets = [96, 0], sizes = [32, 128], strides = [1, 1]} : vector<224x128xf32> to vector<32x128xf32>
    %203 = vector.extract_strided_slice %187 {offsets = [3, 0], sizes = [1, 128], strides = [1, 1]} : vector<7x128xf32> to vector<1x128xf32>
    %204 = vector.broadcast %203 : vector<1x128xf32> to vector<32x128xf32>
    %205 = arith.mulf %202, %204 : vector<32x128xf32>
    %206 = arith.addf %201, %205 : vector<32x128xf32>
    %207 = vector.extract_strided_slice %185 {offsets = [128, 0], sizes = [32, 128], strides = [1, 1]} : vector<224x128xf32> to vector<32x128xf32>
    %208 = vector.extract_strided_slice %187 {offsets = [4, 0], sizes = [1, 128], strides = [1, 1]} : vector<7x128xf32> to vector<1x128xf32>
    %209 = vector.broadcast %208 : vector<1x128xf32> to vector<32x128xf32>
    %210 = arith.mulf %207, %209 : vector<32x128xf32>
    %211 = arith.addf %206, %210 : vector<32x128xf32>
    %212 = vector.extract_strided_slice %185 {offsets = [160, 0], sizes = [32, 128], strides = [1, 1]} : vector<224x128xf32> to vector<32x128xf32>
    %213 = vector.extract_strided_slice %187 {offsets = [5, 0], sizes = [1, 128], strides = [1, 1]} : vector<7x128xf32> to vector<1x128xf32>
    %214 = vector.broadcast %213 : vector<1x128xf32> to vector<32x128xf32>
    %215 = arith.mulf %212, %214 : vector<32x128xf32>
    %216 = arith.addf %211, %215 : vector<32x128xf32>
    %217 = vector.extract_strided_slice %185 {offsets = [192, 0], sizes = [32, 128], strides = [1, 1]} : vector<224x128xf32> to vector<32x128xf32>
    %218 = vector.extract_strided_slice %187 {offsets = [6, 0], sizes = [1, 128], strides = [1, 1]} : vector<7x128xf32> to vector<1x128xf32>
    %219 = vector.broadcast %218 : vector<1x128xf32> to vector<32x128xf32>
    %220 = arith.mulf %217, %219 : vector<32x128xf32>
    %221 = arith.addf %216, %220 : vector<32x128xf32>
    %cst_87 = arith.constant 0.000000e+00 : f32
    %222 = vector.broadcast %cst_87 : f32 to vector<32x128xf32>
    %223 = arith.maximumf %221, %222 : vector<32x128xf32>
    %c1_88 = arith.constant 1 : index
    %c0_89 = arith.constant 0 : index
    %c0_90 = arith.constant 0 : index
    %224 = vector.load %arg14[%c1_88, %c0_89, %c0_90] : memref<4x128x128xbf16, #tpu.memory_space<vmem>>, vector<1x128x128xbf16>
    %225 = vector.shape_cast %224 : vector<1x128x128xbf16> to vector<128x128xbf16>
    %226 = arith.truncf %223 : vector<32x128xf32> to vector<32x128xbf16>
    %cst_91 = arith.constant dense<0.000000e+00> : vector<32x128xf32>
    %227 = tpu.matmul %226, %225, %cst_91 {dimension_numbers = #tpu.dot_dimension_numbers<[1], [0], [0], [1], [0, 0, 1, 1], [], []>} : vector<32x128xbf16>, vector<128x128xbf16>, vector<32x128xf32> -> vector<32x128xf32>
    %cst_92 = arith.constant 0.000000e+00 : f32
    %228 = vector.broadcast %cst_92 : f32 to vector<32x128xf32>
    %229 = arith.maximumf %227, %228 : vector<32x128xf32>
    %230 = arith.addf %156, %229 : vector<32x128xf32>
    %c2 = arith.constant 2 : index
    %c0_93 = arith.constant 0 : index
    %c0_94 = arith.constant 0 : index
    %231 = vector.load %arg11[%c2, %c0_93, %c0_94] : memref<4x1x128xf32, #tpu.memory_space<vmem>>, vector<1x1x128xf32>
    %232 = vector.shape_cast %231 : vector<1x1x128xf32> to vector<1x128xf32>
    %c2_95 = arith.constant 2 : index
    %c0_96 = arith.constant 0 : index
    %c0_97 = arith.constant 0 : index
    %233 = vector.load %arg12[%c2_95, %c0_96, %c0_97] : memref<4x1x128xf32, #tpu.memory_space<vmem>>, vector<1x1x128xf32>
    %234 = vector.shape_cast %233 : vector<1x1x128xf32> to vector<1x128xf32>
    %cst_98 = arith.constant dense<0.000000e+00> : vector<32xf32>
    %235 = vector.multi_reduction <add>, %230, %cst_98 [1] : vector<32x128xf32> to vector<32xf32>
    %236 = vector.shape_cast %235 : vector<32xf32> to vector<32x1xf32>
    %cst_99 = arith.constant 1.280000e+02 : f32
    %237 = vector.broadcast %cst_99 : f32 to vector<32x1xf32>
    %238 = arith.divf %236, %237 : vector<32x1xf32>
    %239 = vector.broadcast %238 : vector<32x1xf32> to vector<32x128xf32>
    %240 = arith.subf %230, %239 : vector<32x128xf32>
    %241 = arith.mulf %240, %240 : vector<32x128xf32>
    %cst_100 = arith.constant dense<0.000000e+00> : vector<32xf32>
    %242 = vector.multi_reduction <add>, %241, %cst_100 [1] : vector<32x128xf32> to vector<32xf32>
    %243 = vector.shape_cast %242 : vector<32xf32> to vector<32x1xf32>
    %cst_101 = arith.constant 1.280000e+02 : f32
    %244 = vector.broadcast %cst_101 : f32 to vector<32x1xf32>
    %245 = arith.divf %243, %244 : vector<32x1xf32>
    %246 = vector.broadcast %238 : vector<32x1xf32> to vector<32x128xf32>
    %247 = arith.subf %230, %246 : vector<32x128xf32>
    %cst_102 = arith.constant 9.99999974E-6 : f32
    %248 = vector.broadcast %cst_102 : f32 to vector<32x1xf32>
    %249 = arith.addf %245, %248 : vector<32x1xf32>
    %250 = math.rsqrt %249 : vector<32x1xf32>
    %251 = vector.broadcast %250 : vector<32x1xf32> to vector<32x128xf32>
    %252 = arith.mulf %247, %251 : vector<32x128xf32>
    %253 = vector.broadcast %232 : vector<1x128xf32> to vector<32x128xf32>
    %254 = arith.mulf %252, %253 : vector<32x128xf32>
    %255 = vector.broadcast %234 : vector<1x128xf32> to vector<32x128xf32>
    %256 = arith.addf %254, %255 : vector<32x128xf32>
    %257 = arith.truncf %82 : vector<224x32xf32> to vector<224x32xbf16>
    %258 = arith.truncf %256 : vector<32x128xf32> to vector<32x128xbf16>
    %cst_103 = arith.constant dense<0.000000e+00> : vector<224x128xf32>
    %259 = tpu.matmul %257, %258, %cst_103 {dimension_numbers = #tpu.dot_dimension_numbers<[1], [0], [0], [1], [0, 0, 1, 1], [], []>} : vector<224x32xbf16>, vector<32x128xbf16>, vector<224x128xf32> -> vector<224x128xf32>
    %c2_104 = arith.constant 2 : index
    %c0_105 = arith.constant 0 : index
    %c0_106 = arith.constant 0 : index
    %260 = vector.load %arg13[%c2_104, %c0_105, %c0_106] : memref<4x7x128xf32, #tpu.memory_space<vmem>>, vector<1x7x128xf32>
    %261 = vector.shape_cast %260 : vector<1x7x128xf32> to vector<7x128xf32>
    %262 = vector.extract_strided_slice %259 {offsets = [0, 0], sizes = [32, 128], strides = [1, 1]} : vector<224x128xf32> to vector<32x128xf32>
    %263 = vector.extract_strided_slice %261 {offsets = [0, 0], sizes = [1, 128], strides = [1, 1]} : vector<7x128xf32> to vector<1x128xf32>
    %264 = vector.broadcast %263 : vector<1x128xf32> to vector<32x128xf32>
    %265 = arith.mulf %262, %264 : vector<32x128xf32>
    %266 = vector.extract_strided_slice %259 {offsets = [32, 0], sizes = [32, 128], strides = [1, 1]} : vector<224x128xf32> to vector<32x128xf32>
    %267 = vector.extract_strided_slice %261 {offsets = [1, 0], sizes = [1, 128], strides = [1, 1]} : vector<7x128xf32> to vector<1x128xf32>
    %268 = vector.broadcast %267 : vector<1x128xf32> to vector<32x128xf32>
    %269 = arith.mulf %266, %268 : vector<32x128xf32>
    %270 = arith.addf %265, %269 : vector<32x128xf32>
    %271 = vector.extract_strided_slice %259 {offsets = [64, 0], sizes = [32, 128], strides = [1, 1]} : vector<224x128xf32> to vector<32x128xf32>
    %272 = vector.extract_strided_slice %261 {offsets = [2, 0], sizes = [1, 128], strides = [1, 1]} : vector<7x128xf32> to vector<1x128xf32>
    %273 = vector.broadcast %272 : vector<1x128xf32> to vector<32x128xf32>
    %274 = arith.mulf %271, %273 : vector<32x128xf32>
    %275 = arith.addf %270, %274 : vector<32x128xf32>
    %276 = vector.extract_strided_slice %259 {offsets = [96, 0], sizes = [32, 128], strides = [1, 1]} : vector<224x128xf32> to vector<32x128xf32>
    %277 = vector.extract_strided_slice %261 {offsets = [3, 0], sizes = [1, 128], strides = [1, 1]} : vector<7x128xf32> to vector<1x128xf32>
    %278 = vector.broadcast %277 : vector<1x128xf32> to vector<32x128xf32>
    %279 = arith.mulf %276, %278 : vector<32x128xf32>
    %280 = arith.addf %275, %279 : vector<32x128xf32>
    %281 = vector.extract_strided_slice %259 {offsets = [128, 0], sizes = [32, 128], strides = [1, 1]} : vector<224x128xf32> to vector<32x128xf32>
    %282 = vector.extract_strided_slice %261 {offsets = [4, 0], sizes = [1, 128], strides = [1, 1]} : vector<7x128xf32> to vector<1x128xf32>
    %283 = vector.broadcast %282 : vector<1x128xf32> to vector<32x128xf32>
    %284 = arith.mulf %281, %283 : vector<32x128xf32>
    %285 = arith.addf %280, %284 : vector<32x128xf32>
    %286 = vector.extract_strided_slice %259 {offsets = [160, 0], sizes = [32, 128], strides = [1, 1]} : vector<224x128xf32> to vector<32x128xf32>
    %287 = vector.extract_strided_slice %261 {offsets = [5, 0], sizes = [1, 128], strides = [1, 1]} : vector<7x128xf32> to vector<1x128xf32>
    %288 = vector.broadcast %287 : vector<1x128xf32> to vector<32x128xf32>
    %289 = arith.mulf %286, %288 : vector<32x128xf32>
    %290 = arith.addf %285, %289 : vector<32x128xf32>
    %291 = vector.extract_strided_slice %259 {offsets = [192, 0], sizes = [32, 128], strides = [1, 1]} : vector<224x128xf32> to vector<32x128xf32>
    %292 = vector.extract_strided_slice %261 {offsets = [6, 0], sizes = [1, 128], strides = [1, 1]} : vector<7x128xf32> to vector<1x128xf32>
    %293 = vector.broadcast %292 : vector<1x128xf32> to vector<32x128xf32>
    %294 = arith.mulf %291, %293 : vector<32x128xf32>
    %295 = arith.addf %290, %294 : vector<32x128xf32>
    %cst_107 = arith.constant 0.000000e+00 : f32
    %296 = vector.broadcast %cst_107 : f32 to vector<32x128xf32>
    %297 = arith.maximumf %295, %296 : vector<32x128xf32>
    %c2_108 = arith.constant 2 : index
    %c0_109 = arith.constant 0 : index
    %c0_110 = arith.constant 0 : index
    %298 = vector.load %arg14[%c2_108, %c0_109, %c0_110] : memref<4x128x128xbf16, #tpu.memory_space<vmem>>, vector<1x128x128xbf16>
    %299 = vector.shape_cast %298 : vector<1x128x128xbf16> to vector<128x128xbf16>
    %300 = arith.truncf %297 : vector<32x128xf32> to vector<32x128xbf16>
    %cst_111 = arith.constant dense<0.000000e+00> : vector<32x128xf32>
    %301 = tpu.matmul %300, %299, %cst_111 {dimension_numbers = #tpu.dot_dimension_numbers<[1], [0], [0], [1], [0, 0, 1, 1], [], []>} : vector<32x128xbf16>, vector<128x128xbf16>, vector<32x128xf32> -> vector<32x128xf32>
    %cst_112 = arith.constant 0.000000e+00 : f32
    %302 = vector.broadcast %cst_112 : f32 to vector<32x128xf32>
    %303 = arith.maximumf %301, %302 : vector<32x128xf32>
    %304 = arith.addf %230, %303 : vector<32x128xf32>
    %c3 = arith.constant 3 : index
    %c0_113 = arith.constant 0 : index
    %c0_114 = arith.constant 0 : index
    %305 = vector.load %arg11[%c3, %c0_113, %c0_114] : memref<4x1x128xf32, #tpu.memory_space<vmem>>, vector<1x1x128xf32>
    %306 = vector.shape_cast %305 : vector<1x1x128xf32> to vector<1x128xf32>
    %c3_115 = arith.constant 3 : index
    %c0_116 = arith.constant 0 : index
    %c0_117 = arith.constant 0 : index
    %307 = vector.load %arg12[%c3_115, %c0_116, %c0_117] : memref<4x1x128xf32, #tpu.memory_space<vmem>>, vector<1x1x128xf32>
    %308 = vector.shape_cast %307 : vector<1x1x128xf32> to vector<1x128xf32>
    %cst_118 = arith.constant dense<0.000000e+00> : vector<32xf32>
    %309 = vector.multi_reduction <add>, %304, %cst_118 [1] : vector<32x128xf32> to vector<32xf32>
    %310 = vector.shape_cast %309 : vector<32xf32> to vector<32x1xf32>
    %cst_119 = arith.constant 1.280000e+02 : f32
    %311 = vector.broadcast %cst_119 : f32 to vector<32x1xf32>
    %312 = arith.divf %310, %311 : vector<32x1xf32>
    %313 = vector.broadcast %312 : vector<32x1xf32> to vector<32x128xf32>
    %314 = arith.subf %304, %313 : vector<32x128xf32>
    %315 = arith.mulf %314, %314 : vector<32x128xf32>
    %cst_120 = arith.constant dense<0.000000e+00> : vector<32xf32>
    %316 = vector.multi_reduction <add>, %315, %cst_120 [1] : vector<32x128xf32> to vector<32xf32>
    %317 = vector.shape_cast %316 : vector<32xf32> to vector<32x1xf32>
    %cst_121 = arith.constant 1.280000e+02 : f32
    %318 = vector.broadcast %cst_121 : f32 to vector<32x1xf32>
    %319 = arith.divf %317, %318 : vector<32x1xf32>
    %320 = vector.broadcast %312 : vector<32x1xf32> to vector<32x128xf32>
    %321 = arith.subf %304, %320 : vector<32x128xf32>
    %cst_122 = arith.constant 9.99999974E-6 : f32
    %322 = vector.broadcast %cst_122 : f32 to vector<32x1xf32>
    %323 = arith.addf %319, %322 : vector<32x1xf32>
    %324 = math.rsqrt %323 : vector<32x1xf32>
    %325 = vector.broadcast %324 : vector<32x1xf32> to vector<32x128xf32>
    %326 = arith.mulf %321, %325 : vector<32x128xf32>
    %327 = vector.broadcast %306 : vector<1x128xf32> to vector<32x128xf32>
    %328 = arith.mulf %326, %327 : vector<32x128xf32>
    %329 = vector.broadcast %308 : vector<1x128xf32> to vector<32x128xf32>
    %330 = arith.addf %328, %329 : vector<32x128xf32>
    %331 = arith.truncf %82 : vector<224x32xf32> to vector<224x32xbf16>
    %332 = arith.truncf %330 : vector<32x128xf32> to vector<32x128xbf16>
    %cst_123 = arith.constant dense<0.000000e+00> : vector<224x128xf32>
    %333 = tpu.matmul %331, %332, %cst_123 {dimension_numbers = #tpu.dot_dimension_numbers<[1], [0], [0], [1], [0, 0, 1, 1], [], []>} : vector<224x32xbf16>, vector<32x128xbf16>, vector<224x128xf32> -> vector<224x128xf32>
    %c3_124 = arith.constant 3 : index
    %c0_125 = arith.constant 0 : index
    %c0_126 = arith.constant 0 : index
    %334 = vector.load %arg13[%c3_124, %c0_125, %c0_126] : memref<4x7x128xf32, #tpu.memory_space<vmem>>, vector<1x7x128xf32>
    %335 = vector.shape_cast %334 : vector<1x7x128xf32> to vector<7x128xf32>
    %336 = vector.extract_strided_slice %333 {offsets = [0, 0], sizes = [32, 128], strides = [1, 1]} : vector<224x128xf32> to vector<32x128xf32>
    %337 = vector.extract_strided_slice %335 {offsets = [0, 0], sizes = [1, 128], strides = [1, 1]} : vector<7x128xf32> to vector<1x128xf32>
    %338 = vector.broadcast %337 : vector<1x128xf32> to vector<32x128xf32>
    %339 = arith.mulf %336, %338 : vector<32x128xf32>
    %340 = vector.extract_strided_slice %333 {offsets = [32, 0], sizes = [32, 128], strides = [1, 1]} : vector<224x128xf32> to vector<32x128xf32>
    %341 = vector.extract_strided_slice %335 {offsets = [1, 0], sizes = [1, 128], strides = [1, 1]} : vector<7x128xf32> to vector<1x128xf32>
    %342 = vector.broadcast %341 : vector<1x128xf32> to vector<32x128xf32>
    %343 = arith.mulf %340, %342 : vector<32x128xf32>
    %344 = arith.addf %339, %343 : vector<32x128xf32>
    %345 = vector.extract_strided_slice %333 {offsets = [64, 0], sizes = [32, 128], strides = [1, 1]} : vector<224x128xf32> to vector<32x128xf32>
    %346 = vector.extract_strided_slice %335 {offsets = [2, 0], sizes = [1, 128], strides = [1, 1]} : vector<7x128xf32> to vector<1x128xf32>
    %347 = vector.broadcast %346 : vector<1x128xf32> to vector<32x128xf32>
    %348 = arith.mulf %345, %347 : vector<32x128xf32>
    %349 = arith.addf %344, %348 : vector<32x128xf32>
    %350 = vector.extract_strided_slice %333 {offsets = [96, 0], sizes = [32, 128], strides = [1, 1]} : vector<224x128xf32> to vector<32x128xf32>
    %351 = vector.extract_strided_slice %335 {offsets = [3, 0], sizes = [1, 128], strides = [1, 1]} : vector<7x128xf32> to vector<1x128xf32>
    %352 = vector.broadcast %351 : vector<1x128xf32> to vector<32x128xf32>
    %353 = arith.mulf %350, %352 : vector<32x128xf32>
    %354 = arith.addf %349, %353 : vector<32x128xf32>
    %355 = vector.extract_strided_slice %333 {offsets = [128, 0], sizes = [32, 128], strides = [1, 1]} : vector<224x128xf32> to vector<32x128xf32>
    %356 = vector.extract_strided_slice %335 {offsets = [4, 0], sizes = [1, 128], strides = [1, 1]} : vector<7x128xf32> to vector<1x128xf32>
    %357 = vector.broadcast %356 : vector<1x128xf32> to vector<32x128xf32>
    %358 = arith.mulf %355, %357 : vector<32x128xf32>
    %359 = arith.addf %354, %358 : vector<32x128xf32>
    %360 = vector.extract_strided_slice %333 {offsets = [160, 0], sizes = [32, 128], strides = [1, 1]} : vector<224x128xf32> to vector<32x128xf32>
    %361 = vector.extract_strided_slice %335 {offsets = [5, 0], sizes = [1, 128], strides = [1, 1]} : vector<7x128xf32> to vector<1x128xf32>
    %362 = vector.broadcast %361 : vector<1x128xf32> to vector<32x128xf32>
    %363 = arith.mulf %360, %362 : vector<32x128xf32>
    %364 = arith.addf %359, %363 : vector<32x128xf32>
    %365 = vector.extract_strided_slice %333 {offsets = [192, 0], sizes = [32, 128], strides = [1, 1]} : vector<224x128xf32> to vector<32x128xf32>
    %366 = vector.extract_strided_slice %335 {offsets = [6, 0], sizes = [1, 128], strides = [1, 1]} : vector<7x128xf32> to vector<1x128xf32>
    %367 = vector.broadcast %366 : vector<1x128xf32> to vector<32x128xf32>
    %368 = arith.mulf %365, %367 : vector<32x128xf32>
    %369 = arith.addf %364, %368 : vector<32x128xf32>
    %cst_127 = arith.constant 0.000000e+00 : f32
    %370 = vector.broadcast %cst_127 : f32 to vector<32x128xf32>
    %371 = arith.maximumf %369, %370 : vector<32x128xf32>
    %c3_128 = arith.constant 3 : index
    %c0_129 = arith.constant 0 : index
    %c0_130 = arith.constant 0 : index
    %372 = vector.load %arg14[%c3_128, %c0_129, %c0_130] : memref<4x128x128xbf16, #tpu.memory_space<vmem>>, vector<1x128x128xbf16>
    %373 = vector.shape_cast %372 : vector<1x128x128xbf16> to vector<128x128xbf16>
    %374 = arith.truncf %371 : vector<32x128xf32> to vector<32x128xbf16>
    %cst_131 = arith.constant dense<0.000000e+00> : vector<32x128xf32>
    %375 = tpu.matmul %374, %373, %cst_131 {dimension_numbers = #tpu.dot_dimension_numbers<[1], [0], [0], [1], [0, 0, 1, 1], [], []>} : vector<32x128xbf16>, vector<128x128xbf16>, vector<32x128xf32> -> vector<32x128xf32>
    %cst_132 = arith.constant 0.000000e+00 : f32
    %376 = vector.broadcast %cst_132 : f32 to vector<32x128xf32>
    %377 = arith.maximumf %375, %376 : vector<32x128xf32>
    %378 = arith.addf %304, %377 : vector<32x128xf32>
    %c0_133 = arith.constant 0 : index
    %c0_134 = arith.constant 0 : index
    %379 = vector.load %arg15[%c0_133, %c0_134] : memref<1x128xf32, #tpu.memory_space<vmem>>, vector<1x128xf32>
    %c0_135 = arith.constant 0 : index
    %c0_136 = arith.constant 0 : index
    %380 = vector.load %arg16[%c0_135, %c0_136] : memref<1x128xf32, #tpu.memory_space<vmem>>, vector<1x128xf32>
    %cst_137 = arith.constant dense<0.000000e+00> : vector<32xf32>
    %381 = vector.multi_reduction <add>, %378, %cst_137 [1] : vector<32x128xf32> to vector<32xf32>
    %382 = vector.shape_cast %381 : vector<32xf32> to vector<32x1xf32>
    %cst_138 = arith.constant 1.280000e+02 : f32
    %383 = vector.broadcast %cst_138 : f32 to vector<32x1xf32>
    %384 = arith.divf %382, %383 : vector<32x1xf32>
    %385 = vector.broadcast %384 : vector<32x1xf32> to vector<32x128xf32>
    %386 = arith.subf %378, %385 : vector<32x128xf32>
    %387 = arith.mulf %386, %386 : vector<32x128xf32>
    %cst_139 = arith.constant dense<0.000000e+00> : vector<32xf32>
    %388 = vector.multi_reduction <add>, %387, %cst_139 [1] : vector<32x128xf32> to vector<32xf32>
    %389 = vector.shape_cast %388 : vector<32xf32> to vector<32x1xf32>
    %cst_140 = arith.constant 1.280000e+02 : f32
    %390 = vector.broadcast %cst_140 : f32 to vector<32x1xf32>
    %391 = arith.divf %389, %390 : vector<32x1xf32>
    %392 = vector.broadcast %384 : vector<32x1xf32> to vector<32x128xf32>
    %393 = arith.subf %378, %392 : vector<32x128xf32>
    %cst_141 = arith.constant 9.99999974E-6 : f32
    %394 = vector.broadcast %cst_141 : f32 to vector<32x1xf32>
    %395 = arith.addf %391, %394 : vector<32x1xf32>
    %396 = math.rsqrt %395 : vector<32x1xf32>
    %397 = vector.broadcast %396 : vector<32x1xf32> to vector<32x128xf32>
    %398 = arith.mulf %393, %397 : vector<32x128xf32>
    %399 = vector.broadcast %379 : vector<1x128xf32> to vector<32x128xf32>
    %400 = arith.mulf %398, %399 : vector<32x128xf32>
    %401 = vector.broadcast %380 : vector<1x128xf32> to vector<32x128xf32>
    %402 = arith.addf %400, %401 : vector<32x128xf32>
    %c0_142 = arith.constant 0 : index
    %c0_143 = arith.constant 0 : index
    %403 = vector.load %arg19[%c0_142, %c0_143] : memref<128x384xbf16, #tpu.memory_space<vmem>>, vector<128x384xbf16>
    %404 = arith.truncf %402 : vector<32x128xf32> to vector<32x128xbf16>
    %cst_144 = arith.constant dense<0.000000e+00> : vector<32x384xf32>
    %405 = tpu.matmul %404, %403, %cst_144 {dimension_numbers = #tpu.dot_dimension_numbers<[1], [0], [0], [1], [0, 0, 1, 1], [], []>} : vector<32x128xbf16>, vector<128x384xbf16>, vector<32x384xf32> -> vector<32x384xf32>
    %c0_145 = arith.constant 0 : index
    %c0_146 = arith.constant 0 : index
    %406 = vector.load %arg20[%c0_145, %c0_146] : memref<1x384xf32, #tpu.memory_space<vmem>>, vector<1x384xf32>
    %407 = vector.broadcast %406 : vector<1x384xf32> to vector<32x384xf32>
    %408 = arith.addf %405, %407 : vector<32x384xf32>
    %409 = vector.extract_strided_slice %408 {offsets = [0, 0], sizes = [16, 384], strides = [1, 1]} : vector<32x384xf32> to vector<16x384xf32>
    %410 = vector.extract_strided_slice %409 {offsets = [0, 0], sizes = [16, 16], strides = [1, 1]} : vector<16x384xf32> to vector<16x16xf32>
    %411 = vector.extract_strided_slice %409 {offsets = [0, 16], sizes = [16, 16], strides = [1, 1]} : vector<16x384xf32> to vector<16x16xf32>
    %412 = vector.extract_strided_slice %409 {offsets = [0, 32], sizes = [16, 16], strides = [1, 1]} : vector<16x384xf32> to vector<16x16xf32>
    %413 = vector.extract_strided_slice %409 {offsets = [0, 48], sizes = [16, 16], strides = [1, 1]} : vector<16x384xf32> to vector<16x16xf32>
    %414 = vector.extract_strided_slice %409 {offsets = [0, 64], sizes = [16, 16], strides = [1, 1]} : vector<16x384xf32> to vector<16x16xf32>
    %415 = vector.extract_strided_slice %409 {offsets = [0, 80], sizes = [16, 16], strides = [1, 1]} : vector<16x384xf32> to vector<16x16xf32>
    %416 = vector.extract_strided_slice %409 {offsets = [0, 96], sizes = [16, 16], strides = [1, 1]} : vector<16x384xf32> to vector<16x16xf32>
    %417 = vector.extract_strided_slice %409 {offsets = [0, 112], sizes = [16, 16], strides = [1, 1]} : vector<16x384xf32> to vector<16x16xf32>
    %418 = vector.shape_cast %410 : vector<16x16xf32> to vector<1x16x16xf32>
    %419 = vector.shape_cast %411 : vector<16x16xf32> to vector<1x16x16xf32>
    %420 = vector.shape_cast %412 : vector<16x16xf32> to vector<1x16x16xf32>
    %421 = vector.shape_cast %413 : vector<16x16xf32> to vector<1x16x16xf32>
    %422 = vector.shape_cast %414 : vector<16x16xf32> to vector<1x16x16xf32>
    %423 = vector.shape_cast %415 : vector<16x16xf32> to vector<1x16x16xf32>
    %424 = vector.shape_cast %416 : vector<16x16xf32> to vector<1x16x16xf32>
    %425 = vector.shape_cast %417 : vector<16x16xf32> to vector<1x16x16xf32>
    %426 = tpu.concatenate %418, %419, %420, %421, %422, %423, %424, %425 in 0 : vector<1x16x16xf32>, vector<1x16x16xf32>, vector<1x16x16xf32>, vector<1x16x16xf32>, vector<1x16x16xf32>, vector<1x16x16xf32>, vector<1x16x16xf32>, vector<1x16x16xf32> -> vector<8x16x16xf32>
    %427 = vector.extract_strided_slice %409 {offsets = [0, 128], sizes = [16, 16], strides = [1, 1]} : vector<16x384xf32> to vector<16x16xf32>
    %428 = vector.extract_strided_slice %409 {offsets = [0, 144], sizes = [16, 16], strides = [1, 1]} : vector<16x384xf32> to vector<16x16xf32>
    %429 = vector.extract_strided_slice %409 {offsets = [0, 160], sizes = [16, 16], strides = [1, 1]} : vector<16x384xf32> to vector<16x16xf32>
    %430 = vector.extract_strided_slice %409 {offsets = [0, 176], sizes = [16, 16], strides = [1, 1]} : vector<16x384xf32> to vector<16x16xf32>
    %431 = vector.extract_strided_slice %409 {offsets = [0, 192], sizes = [16, 16], strides = [1, 1]} : vector<16x384xf32> to vector<16x16xf32>
    %432 = vector.extract_strided_slice %409 {offsets = [0, 208], sizes = [16, 16], strides = [1, 1]} : vector<16x384xf32> to vector<16x16xf32>
    %433 = vector.extract_strided_slice %409 {offsets = [0, 224], sizes = [16, 16], strides = [1, 1]} : vector<16x384xf32> to vector<16x16xf32>
    %434 = vector.extract_strided_slice %409 {offsets = [0, 240], sizes = [16, 16], strides = [1, 1]} : vector<16x384xf32> to vector<16x16xf32>
    %435 = vector.shape_cast %427 : vector<16x16xf32> to vector<1x16x16xf32>
    %436 = vector.shape_cast %428 : vector<16x16xf32> to vector<1x16x16xf32>
    %437 = vector.shape_cast %429 : vector<16x16xf32> to vector<1x16x16xf32>
    %438 = vector.shape_cast %430 : vector<16x16xf32> to vector<1x16x16xf32>
    %439 = vector.shape_cast %431 : vector<16x16xf32> to vector<1x16x16xf32>
    %440 = vector.shape_cast %432 : vector<16x16xf32> to vector<1x16x16xf32>
    %441 = vector.shape_cast %433 : vector<16x16xf32> to vector<1x16x16xf32>
    %442 = vector.shape_cast %434 : vector<16x16xf32> to vector<1x16x16xf32>
    %443 = tpu.concatenate %435, %436, %437, %438, %439, %440, %441, %442 in 0 : vector<1x16x16xf32>, vector<1x16x16xf32>, vector<1x16x16xf32>, vector<1x16x16xf32>, vector<1x16x16xf32>, vector<1x16x16xf32>, vector<1x16x16xf32>, vector<1x16x16xf32> -> vector<8x16x16xf32>
    %444 = vector.extract_strided_slice %409 {offsets = [0, 256], sizes = [16, 16], strides = [1, 1]} : vector<16x384xf32> to vector<16x16xf32>
    %445 = vector.extract_strided_slice %409 {offsets = [0, 272], sizes = [16, 16], strides = [1, 1]} : vector<16x384xf32> to vector<16x16xf32>
    %446 = vector.extract_strided_slice %409 {offsets = [0, 288], sizes = [16, 16], strides = [1, 1]} : vector<16x384xf32> to vector<16x16xf32>
    %447 = vector.extract_strided_slice %409 {offsets = [0, 304], sizes = [16, 16], strides = [1, 1]} : vector<16x384xf32> to vector<16x16xf32>
    %448 = vector.extract_strided_slice %409 {offsets = [0, 320], sizes = [16, 16], strides = [1, 1]} : vector<16x384xf32> to vector<16x16xf32>
    %449 = vector.extract_strided_slice %409 {offsets = [0, 336], sizes = [16, 16], strides = [1, 1]} : vector<16x384xf32> to vector<16x16xf32>
    %450 = vector.extract_strided_slice %409 {offsets = [0, 352], sizes = [16, 16], strides = [1, 1]} : vector<16x384xf32> to vector<16x16xf32>
    %451 = vector.extract_strided_slice %409 {offsets = [0, 368], sizes = [16, 16], strides = [1, 1]} : vector<16x384xf32> to vector<16x16xf32>
    %452 = vector.shape_cast %444 : vector<16x16xf32> to vector<1x16x16xf32>
    %453 = vector.shape_cast %445 : vector<16x16xf32> to vector<1x16x16xf32>
    %454 = vector.shape_cast %446 : vector<16x16xf32> to vector<1x16x16xf32>
    %455 = vector.shape_cast %447 : vector<16x16xf32> to vector<1x16x16xf32>
    %456 = vector.shape_cast %448 : vector<16x16xf32> to vector<1x16x16xf32>
    %457 = vector.shape_cast %449 : vector<16x16xf32> to vector<1x16x16xf32>
    %458 = vector.shape_cast %450 : vector<16x16xf32> to vector<1x16x16xf32>
    %459 = vector.shape_cast %451 : vector<16x16xf32> to vector<1x16x16xf32>
    %460 = tpu.concatenate %452, %453, %454, %455, %456, %457, %458, %459 in 0 : vector<1x16x16xf32>, vector<1x16x16xf32>, vector<1x16x16xf32>, vector<1x16x16xf32>, vector<1x16x16xf32>, vector<1x16x16xf32>, vector<1x16x16xf32>, vector<1x16x16xf32> -> vector<8x16x16xf32>
    %461 = arith.truncf %426 : vector<8x16x16xf32> to vector<8x16x16xbf16>
    %462 = arith.truncf %443 : vector<8x16x16xf32> to vector<8x16x16xbf16>
    "tpu.trace_start"() <{level = 10 : i32, message = "hqe,hke->hqk"}> : () -> ()
    %cst_147 = arith.constant dense<0.000000e+00> : vector<8x16x16xf32>
    %463 = tpu.matmul %461, %462, %cst_147 {dimension_numbers = #tpu.dot_dimension_numbers<[2], [2], [1], [1], [0, 0, 0, 1, 1, 1], [0], [0]>} : vector<8x16x16xbf16>, vector<8x16x16xbf16>, vector<8x16x16xf32> -> vector<8x16x16xf32>
    "tpu.trace_stop"() : () -> ()
    %cst_148 = arith.constant 2.500000e-01 : f32
    %464 = vector.broadcast %cst_148 : f32 to vector<8x16x16xf32>
    %465 = arith.mulf %463, %464 : vector<8x16x16xf32>
    %cst_149 = arith.constant dense<0xFF800000> : vector<8x16xf32>
    %466 = vector.multi_reduction <maximumf>, %465, %cst_149 [2] : vector<8x16x16xf32> to vector<8x16xf32>
    %467 = vector.shape_cast %466 : vector<8x16xf32> to vector<8x16x1xf32>
    %468 = vector.broadcast %467 : vector<8x16x1xf32> to vector<8x16x16xf32>
    %469 = arith.subf %465, %468 : vector<8x16x16xf32>
    %470 = math.exp %469 : vector<8x16x16xf32>
    %cst_150 = arith.constant dense<0.000000e+00> : vector<8x16xf32>
    %471 = vector.multi_reduction <add>, %470, %cst_150 [2] : vector<8x16x16xf32> to vector<8x16xf32>
    %472 = vector.shape_cast %471 : vector<8x16xf32> to vector<8x16x1xf32>
    %473 = tpu.reciprocal %472 {approx = true} : vector<8x16x1xf32> -> vector<8x16x1xf32>
    %474 = vector.broadcast %473 : vector<8x16x1xf32> to vector<8x16x16xf32>
    %475 = arith.mulf %470, %474 : vector<8x16x16xf32>
    %476 = arith.truncf %475 : vector<8x16x16xf32> to vector<8x16x16xbf16>
    %477 = arith.truncf %460 : vector<8x16x16xf32> to vector<8x16x16xbf16>
    "tpu.trace_start"() <{level = 10 : i32, message = "hqk,hke->hqe"}> : () -> ()
    %cst_151 = arith.constant dense<0.000000e+00> : vector<8x16x16xf32>
    %478 = tpu.matmul %476, %477, %cst_151 {dimension_numbers = #tpu.dot_dimension_numbers<[2], [1], [1], [2], [0, 0, 0, 1, 1, 2], [0], [0]>} : vector<8x16x16xbf16>, vector<8x16x16xbf16>, vector<8x16x16xf32> -> vector<8x16x16xf32>
    "tpu.trace_stop"() : () -> ()
    %479 = vector.extract_strided_slice %478 {offsets = [0, 0, 0], sizes = [1, 16, 16], strides = [1, 1, 1]} : vector<8x16x16xf32> to vector<1x16x16xf32>
    %480 = vector.shape_cast %479 : vector<1x16x16xf32> to vector<16x16xf32>
    %481 = vector.extract_strided_slice %478 {offsets = [1, 0, 0], sizes = [1, 16, 16], strides = [1, 1, 1]} : vector<8x16x16xf32> to vector<1x16x16xf32>
    %482 = vector.shape_cast %481 : vector<1x16x16xf32> to vector<16x16xf32>
    %483 = vector.extract_strided_slice %478 {offsets = [2, 0, 0], sizes = [1, 16, 16], strides = [1, 1, 1]} : vector<8x16x16xf32> to vector<1x16x16xf32>
    %484 = vector.shape_cast %483 : vector<1x16x16xf32> to vector<16x16xf32>
    %485 = vector.extract_strided_slice %478 {offsets = [3, 0, 0], sizes = [1, 16, 16], strides = [1, 1, 1]} : vector<8x16x16xf32> to vector<1x16x16xf32>
    %486 = vector.shape_cast %485 : vector<1x16x16xf32> to vector<16x16xf32>
    %487 = vector.extract_strided_slice %478 {offsets = [4, 0, 0], sizes = [1, 16, 16], strides = [1, 1, 1]} : vector<8x16x16xf32> to vector<1x16x16xf32>
    %488 = vector.shape_cast %487 : vector<1x16x16xf32> to vector<16x16xf32>
    %489 = vector.extract_strided_slice %478 {offsets = [5, 0, 0], sizes = [1, 16, 16], strides = [1, 1, 1]} : vector<8x16x16xf32> to vector<1x16x16xf32>
    %490 = vector.shape_cast %489 : vector<1x16x16xf32> to vector<16x16xf32>
    %491 = vector.extract_strided_slice %478 {offsets = [6, 0, 0], sizes = [1, 16, 16], strides = [1, 1, 1]} : vector<8x16x16xf32> to vector<1x16x16xf32>
    %492 = vector.shape_cast %491 : vector<1x16x16xf32> to vector<16x16xf32>
    %493 = vector.extract_strided_slice %478 {offsets = [7, 0, 0], sizes = [1, 16, 16], strides = [1, 1, 1]} : vector<8x16x16xf32> to vector<1x16x16xf32>
    %494 = vector.shape_cast %493 : vector<1x16x16xf32> to vector<16x16xf32>
    %495 = tpu.concatenate %480, %482, %484, %486, %488, %490, %492, %494 in 1 : vector<16x16xf32>, vector<16x16xf32>, vector<16x16xf32>, vector<16x16xf32>, vector<16x16xf32>, vector<16x16xf32>, vector<16x16xf32>, vector<16x16xf32> -> vector<16x128xf32>
    %496 = vector.extract_strided_slice %408 {offsets = [16, 0], sizes = [16, 384], strides = [1, 1]} : vector<32x384xf32> to vector<16x384xf32>
    %497 = vector.extract_strided_slice %496 {offsets = [0, 0], sizes = [16, 16], strides = [1, 1]} : vector<16x384xf32> to vector<16x16xf32>
    %498 = vector.extract_strided_slice %496 {offsets = [0, 16], sizes = [16, 16], strides = [1, 1]} : vector<16x384xf32> to vector<16x16xf32>
    %499 = vector.extract_strided_slice %496 {offsets = [0, 32], sizes = [16, 16], strides = [1, 1]} : vector<16x384xf32> to vector<16x16xf32>
    %500 = vector.extract_strided_slice %496 {offsets = [0, 48], sizes = [16, 16], strides = [1, 1]} : vector<16x384xf32> to vector<16x16xf32>
    %501 = vector.extract_strided_slice %496 {offsets = [0, 64], sizes = [16, 16], strides = [1, 1]} : vector<16x384xf32> to vector<16x16xf32>
    %502 = vector.extract_strided_slice %496 {offsets = [0, 80], sizes = [16, 16], strides = [1, 1]} : vector<16x384xf32> to vector<16x16xf32>
    %503 = vector.extract_strided_slice %496 {offsets = [0, 96], sizes = [16, 16], strides = [1, 1]} : vector<16x384xf32> to vector<16x16xf32>
    %504 = vector.extract_strided_slice %496 {offsets = [0, 112], sizes = [16, 16], strides = [1, 1]} : vector<16x384xf32> to vector<16x16xf32>
    %505 = vector.shape_cast %497 : vector<16x16xf32> to vector<1x16x16xf32>
    %506 = vector.shape_cast %498 : vector<16x16xf32> to vector<1x16x16xf32>
    %507 = vector.shape_cast %499 : vector<16x16xf32> to vector<1x16x16xf32>
    %508 = vector.shape_cast %500 : vector<16x16xf32> to vector<1x16x16xf32>
    %509 = vector.shape_cast %501 : vector<16x16xf32> to vector<1x16x16xf32>
    %510 = vector.shape_cast %502 : vector<16x16xf32> to vector<1x16x16xf32>
    %511 = vector.shape_cast %503 : vector<16x16xf32> to vector<1x16x16xf32>
    %512 = vector.shape_cast %504 : vector<16x16xf32> to vector<1x16x16xf32>
    %513 = tpu.concatenate %505, %506, %507, %508, %509, %510, %511, %512 in 0 : vector<1x16x16xf32>, vector<1x16x16xf32>, vector<1x16x16xf32>, vector<1x16x16xf32>, vector<1x16x16xf32>, vector<1x16x16xf32>, vector<1x16x16xf32>, vector<1x16x16xf32> -> vector<8x16x16xf32>
    %514 = vector.extract_strided_slice %496 {offsets = [0, 128], sizes = [16, 16], strides = [1, 1]} : vector<16x384xf32> to vector<16x16xf32>
    %515 = vector.extract_strided_slice %496 {offsets = [0, 144], sizes = [16, 16], strides = [1, 1]} : vector<16x384xf32> to vector<16x16xf32>
    %516 = vector.extract_strided_slice %496 {offsets = [0, 160], sizes = [16, 16], strides = [1, 1]} : vector<16x384xf32> to vector<16x16xf32>
    %517 = vector.extract_strided_slice %496 {offsets = [0, 176], sizes = [16, 16], strides = [1, 1]} : vector<16x384xf32> to vector<16x16xf32>
    %518 = vector.extract_strided_slice %496 {offsets = [0, 192], sizes = [16, 16], strides = [1, 1]} : vector<16x384xf32> to vector<16x16xf32>
    %519 = vector.extract_strided_slice %496 {offsets = [0, 208], sizes = [16, 16], strides = [1, 1]} : vector<16x384xf32> to vector<16x16xf32>
    %520 = vector.extract_strided_slice %496 {offsets = [0, 224], sizes = [16, 16], strides = [1, 1]} : vector<16x384xf32> to vector<16x16xf32>
    %521 = vector.extract_strided_slice %496 {offsets = [0, 240], sizes = [16, 16], strides = [1, 1]} : vector<16x384xf32> to vector<16x16xf32>
    %522 = vector.shape_cast %514 : vector<16x16xf32> to vector<1x16x16xf32>
    %523 = vector.shape_cast %515 : vector<16x16xf32> to vector<1x16x16xf32>
    %524 = vector.shape_cast %516 : vector<16x16xf32> to vector<1x16x16xf32>
    %525 = vector.shape_cast %517 : vector<16x16xf32> to vector<1x16x16xf32>
    %526 = vector.shape_cast %518 : vector<16x16xf32> to vector<1x16x16xf32>
    %527 = vector.shape_cast %519 : vector<16x16xf32> to vector<1x16x16xf32>
    %528 = vector.shape_cast %520 : vector<16x16xf32> to vector<1x16x16xf32>
    %529 = vector.shape_cast %521 : vector<16x16xf32> to vector<1x16x16xf32>
    %530 = tpu.concatenate %522, %523, %524, %525, %526, %527, %528, %529 in 0 : vector<1x16x16xf32>, vector<1x16x16xf32>, vector<1x16x16xf32>, vector<1x16x16xf32>, vector<1x16x16xf32>, vector<1x16x16xf32>, vector<1x16x16xf32>, vector<1x16x16xf32> -> vector<8x16x16xf32>
    %531 = vector.extract_strided_slice %496 {offsets = [0, 256], sizes = [16, 16], strides = [1, 1]} : vector<16x384xf32> to vector<16x16xf32>
    %532 = vector.extract_strided_slice %496 {offsets = [0, 272], sizes = [16, 16], strides = [1, 1]} : vector<16x384xf32> to vector<16x16xf32>
    %533 = vector.extract_strided_slice %496 {offsets = [0, 288], sizes = [16, 16], strides = [1, 1]} : vector<16x384xf32> to vector<16x16xf32>
    %534 = vector.extract_strided_slice %496 {offsets = [0, 304], sizes = [16, 16], strides = [1, 1]} : vector<16x384xf32> to vector<16x16xf32>
    %535 = vector.extract_strided_slice %496 {offsets = [0, 320], sizes = [16, 16], strides = [1, 1]} : vector<16x384xf32> to vector<16x16xf32>
    %536 = vector.extract_strided_slice %496 {offsets = [0, 336], sizes = [16, 16], strides = [1, 1]} : vector<16x384xf32> to vector<16x16xf32>
    %537 = vector.extract_strided_slice %496 {offsets = [0, 352], sizes = [16, 16], strides = [1, 1]} : vector<16x384xf32> to vector<16x16xf32>
    %538 = vector.extract_strided_slice %496 {offsets = [0, 368], sizes = [16, 16], strides = [1, 1]} : vector<16x384xf32> to vector<16x16xf32>
    %539 = vector.shape_cast %531 : vector<16x16xf32> to vector<1x16x16xf32>
    %540 = vector.shape_cast %532 : vector<16x16xf32> to vector<1x16x16xf32>
    %541 = vector.shape_cast %533 : vector<16x16xf32> to vector<1x16x16xf32>
    %542 = vector.shape_cast %534 : vector<16x16xf32> to vector<1x16x16xf32>
    %543 = vector.shape_cast %535 : vector<16x16xf32> to vector<1x16x16xf32>
    %544 = vector.shape_cast %536 : vector<16x16xf32> to vector<1x16x16xf32>
    %545 = vector.shape_cast %537 : vector<16x16xf32> to vector<1x16x16xf32>
    %546 = vector.shape_cast %538 : vector<16x16xf32> to vector<1x16x16xf32>
    %547 = tpu.concatenate %539, %540, %541, %542, %543, %544, %545, %546 in 0 : vector<1x16x16xf32>, vector<1x16x16xf32>, vector<1x16x16xf32>, vector<1x16x16xf32>, vector<1x16x16xf32>, vector<1x16x16xf32>, vector<1x16x16xf32>, vector<1x16x16xf32> -> vector<8x16x16xf32>
    %548 = arith.truncf %513 : vector<8x16x16xf32> to vector<8x16x16xbf16>
    %549 = arith.truncf %530 : vector<8x16x16xf32> to vector<8x16x16xbf16>
    "tpu.trace_start"() <{level = 10 : i32, message = "hqe,hke->hqk"}> : () -> ()
    %cst_152 = arith.constant dense<0.000000e+00> : vector<8x16x16xf32>
    %550 = tpu.matmul %548, %549, %cst_152 {dimension_numbers = #tpu.dot_dimension_numbers<[2], [2], [1], [1], [0, 0, 0, 1, 1, 1], [0], [0]>} : vector<8x16x16xbf16>, vector<8x16x16xbf16>, vector<8x16x16xf32> -> vector<8x16x16xf32>
    "tpu.trace_stop"() : () -> ()
    %cst_153 = arith.constant 2.500000e-01 : f32
    %551 = vector.broadcast %cst_153 : f32 to vector<8x16x16xf32>
    %552 = arith.mulf %550, %551 : vector<8x16x16xf32>
    %cst_154 = arith.constant dense<0xFF800000> : vector<8x16xf32>
    %553 = vector.multi_reduction <maximumf>, %552, %cst_154 [2] : vector<8x16x16xf32> to vector<8x16xf32>
    %554 = vector.shape_cast %553 : vector<8x16xf32> to vector<8x16x1xf32>
    %555 = vector.broadcast %554 : vector<8x16x1xf32> to vector<8x16x16xf32>
    %556 = arith.subf %552, %555 : vector<8x16x16xf32>
    %557 = math.exp %556 : vector<8x16x16xf32>
    %cst_155 = arith.constant dense<0.000000e+00> : vector<8x16xf32>
    %558 = vector.multi_reduction <add>, %557, %cst_155 [2] : vector<8x16x16xf32> to vector<8x16xf32>
    %559 = vector.shape_cast %558 : vector<8x16xf32> to vector<8x16x1xf32>
    %560 = tpu.reciprocal %559 {approx = true} : vector<8x16x1xf32> -> vector<8x16x1xf32>
    %561 = vector.broadcast %560 : vector<8x16x1xf32> to vector<8x16x16xf32>
    %562 = arith.mulf %557, %561 : vector<8x16x16xf32>
    %563 = arith.truncf %562 : vector<8x16x16xf32> to vector<8x16x16xbf16>
    %564 = arith.truncf %547 : vector<8x16x16xf32> to vector<8x16x16xbf16>
    "tpu.trace_start"() <{level = 10 : i32, message = "hqk,hke->hqe"}> : () -> ()
    %cst_156 = arith.constant dense<0.000000e+00> : vector<8x16x16xf32>
    %565 = tpu.matmul %563, %564, %cst_156 {dimension_numbers = #tpu.dot_dimension_numbers<[2], [1], [1], [2], [0, 0, 0, 1, 1, 2], [0], [0]>} : vector<8x16x16xbf16>, vector<8x16x16xbf16>, vector<8x16x16xf32> -> vector<8x16x16xf32>
    "tpu.trace_stop"() : () -> ()
    %566 = vector.extract_strided_slice %565 {offsets = [0, 0, 0], sizes = [1, 16, 16], strides = [1, 1, 1]} : vector<8x16x16xf32> to vector<1x16x16xf32>
    %567 = vector.shape_cast %566 : vector<1x16x16xf32> to vector<16x16xf32>
    %568 = vector.extract_strided_slice %565 {offsets = [1, 0, 0], sizes = [1, 16, 16], strides = [1, 1, 1]} : vector<8x16x16xf32> to vector<1x16x16xf32>
    %569 = vector.shape_cast %568 : vector<1x16x16xf32> to vector<16x16xf32>
    %570 = vector.extract_strided_slice %565 {offsets = [2, 0, 0], sizes = [1, 16, 16], strides = [1, 1, 1]} : vector<8x16x16xf32> to vector<1x16x16xf32>
    %571 = vector.shape_cast %570 : vector<1x16x16xf32> to vector<16x16xf32>
    %572 = vector.extract_strided_slice %565 {offsets = [3, 0, 0], sizes = [1, 16, 16], strides = [1, 1, 1]} : vector<8x16x16xf32> to vector<1x16x16xf32>
    %573 = vector.shape_cast %572 : vector<1x16x16xf32> to vector<16x16xf32>
    %574 = vector.extract_strided_slice %565 {offsets = [4, 0, 0], sizes = [1, 16, 16], strides = [1, 1, 1]} : vector<8x16x16xf32> to vector<1x16x16xf32>
    %575 = vector.shape_cast %574 : vector<1x16x16xf32> to vector<16x16xf32>
    %576 = vector.extract_strided_slice %565 {offsets = [5, 0, 0], sizes = [1, 16, 16], strides = [1, 1, 1]} : vector<8x16x16xf32> to vector<1x16x16xf32>
    %577 = vector.shape_cast %576 : vector<1x16x16xf32> to vector<16x16xf32>
    %578 = vector.extract_strided_slice %565 {offsets = [6, 0, 0], sizes = [1, 16, 16], strides = [1, 1, 1]} : vector<8x16x16xf32> to vector<1x16x16xf32>
    %579 = vector.shape_cast %578 : vector<1x16x16xf32> to vector<16x16xf32>
    %580 = vector.extract_strided_slice %565 {offsets = [7, 0, 0], sizes = [1, 16, 16], strides = [1, 1, 1]} : vector<8x16x16xf32> to vector<1x16x16xf32>
    %581 = vector.shape_cast %580 : vector<1x16x16xf32> to vector<16x16xf32>
    %582 = tpu.concatenate %567, %569, %571, %573, %575, %577, %579, %581 in 1 : vector<16x16xf32>, vector<16x16xf32>, vector<16x16xf32>, vector<16x16xf32>, vector<16x16xf32>, vector<16x16xf32>, vector<16x16xf32>, vector<16x16xf32> -> vector<16x128xf32>
    %583 = tpu.concatenate %495, %582 in 0 : vector<16x128xf32>, vector<16x128xf32> -> vector<32x128xf32>
    %c0_157 = arith.constant 0 : index
    %c0_158 = arith.constant 0 : index
    %584 = vector.load %arg21[%c0_157, %c0_158] : memref<128x128xbf16, #tpu.memory_space<vmem>>, vector<128x128xbf16>
    %585 = arith.truncf %583 : vector<32x128xf32> to vector<32x128xbf16>
    %cst_159 = arith.constant dense<0.000000e+00> : vector<32x128xf32>
    %586 = tpu.matmul %585, %584, %cst_159 {dimension_numbers = #tpu.dot_dimension_numbers<[1], [0], [0], [1], [0, 0, 1, 1], [], []>} : vector<32x128xbf16>, vector<128x128xbf16>, vector<32x128xf32> -> vector<32x128xf32>
    %587 = arith.addf %378, %586 : vector<32x128xf32>
    %c0_160 = arith.constant 0 : index
    %c0_161 = arith.constant 0 : index
    %588 = vector.load %arg22[%c0_160, %c0_161] : memref<1x128xf32, #tpu.memory_space<vmem>>, vector<1x128xf32>
    %589 = vector.broadcast %588 : vector<1x128xf32> to vector<32x128xf32>
    %590 = arith.addf %587, %589 : vector<32x128xf32>
    %c0_162 = arith.constant 0 : index
    %c0_163 = arith.constant 0 : index
    %591 = vector.load %arg17[%c0_162, %c0_163] : memref<1x128xf32, #tpu.memory_space<vmem>>, vector<1x128xf32>
    %c0_164 = arith.constant 0 : index
    %c0_165 = arith.constant 0 : index
    %592 = vector.load %arg18[%c0_164, %c0_165] : memref<1x128xf32, #tpu.memory_space<vmem>>, vector<1x128xf32>
    %cst_166 = arith.constant dense<0.000000e+00> : vector<32xf32>
    %593 = vector.multi_reduction <add>, %590, %cst_166 [1] : vector<32x128xf32> to vector<32xf32>
    %594 = vector.shape_cast %593 : vector<32xf32> to vector<32x1xf32>
    %cst_167 = arith.constant 1.280000e+02 : f32
    %595 = vector.broadcast %cst_167 : f32 to vector<32x1xf32>
    %596 = arith.divf %594, %595 : vector<32x1xf32>
    %597 = vector.broadcast %596 : vector<32x1xf32> to vector<32x128xf32>
    %598 = arith.subf %590, %597 : vector<32x128xf32>
    %599 = arith.mulf %598, %598 : vector<32x128xf32>
    %cst_168 = arith.constant dense<0.000000e+00> : vector<32xf32>
    %600 = vector.multi_reduction <add>, %599, %cst_168 [1] : vector<32x128xf32> to vector<32xf32>
    %601 = vector.shape_cast %600 : vector<32xf32> to vector<32x1xf32>
    %cst_169 = arith.constant 1.280000e+02 : f32
    %602 = vector.broadcast %cst_169 : f32 to vector<32x1xf32>
    %603 = arith.divf %601, %602 : vector<32x1xf32>
    %604 = vector.broadcast %596 : vector<32x1xf32> to vector<32x128xf32>
    %605 = arith.subf %590, %604 : vector<32x128xf32>
    %cst_170 = arith.constant 9.99999974E-6 : f32
    %606 = vector.broadcast %cst_170 : f32 to vector<32x1xf32>
    %607 = arith.addf %603, %606 : vector<32x1xf32>
    %608 = math.rsqrt %607 : vector<32x1xf32>
    %609 = vector.broadcast %608 : vector<32x1xf32> to vector<32x128xf32>
    %610 = arith.mulf %605, %609 : vector<32x128xf32>
    %611 = vector.broadcast %591 : vector<1x128xf32> to vector<32x128xf32>
    %612 = arith.mulf %610, %611 : vector<32x128xf32>
    %613 = vector.broadcast %592 : vector<1x128xf32> to vector<32x128xf32>
    %614 = arith.addf %612, %613 : vector<32x128xf32>
    %c0_171 = arith.constant 0 : index
    %c0_172 = arith.constant 0 : index
    %615 = vector.load %arg23[%c0_171, %c0_172] : memref<128x512xbf16, #tpu.memory_space<vmem>>, vector<128x512xbf16>
    %616 = arith.truncf %614 : vector<32x128xf32> to vector<32x128xbf16>
    %cst_173 = arith.constant dense<0.000000e+00> : vector<32x512xf32>
    %617 = tpu.matmul %616, %615, %cst_173 {dimension_numbers = #tpu.dot_dimension_numbers<[1], [0], [0], [1], [0, 0, 1, 1], [], []>} : vector<32x128xbf16>, vector<128x512xbf16>, vector<32x512xf32> -> vector<32x512xf32>
    %c0_174 = arith.constant 0 : index
    %c0_175 = arith.constant 0 : index
    %618 = vector.load %arg24[%c0_174, %c0_175] : memref<1x512xf32, #tpu.memory_space<vmem>>, vector<1x512xf32>
    %619 = vector.broadcast %618 : vector<1x512xf32> to vector<32x512xf32>
    %620 = arith.addf %617, %619 : vector<32x512xf32>
    %cst_176 = arith.constant 0.000000e+00 : f32
    %621 = vector.broadcast %cst_176 : f32 to vector<32x512xf32>
    %622 = arith.maximumf %620, %621 : vector<32x512xf32>
    %c0_177 = arith.constant 0 : index
    %c0_178 = arith.constant 0 : index
    %623 = vector.load %arg25[%c0_177, %c0_178] : memref<512x128xbf16, #tpu.memory_space<vmem>>, vector<512x128xbf16>
    %624 = arith.truncf %622 : vector<32x512xf32> to vector<32x512xbf16>
    %cst_179 = arith.constant dense<0.000000e+00> : vector<32x128xf32>
    %625 = tpu.matmul %624, %623, %cst_179 {dimension_numbers = #tpu.dot_dimension_numbers<[1], [0], [0], [1], [0, 0, 1, 1], [], []>} : vector<32x512xbf16>, vector<512x128xbf16>, vector<32x128xf32> -> vector<32x128xf32>
    %626 = arith.addf %590, %625 : vector<32x128xf32>
    %c0_180 = arith.constant 0 : index
    %c0_181 = arith.constant 0 : index
    %627 = vector.load %arg26[%c0_180, %c0_181] : memref<1x128xf32, #tpu.memory_space<vmem>>, vector<1x128xf32>
    %628 = vector.broadcast %627 : vector<1x128xf32> to vector<32x128xf32>
    %629 = arith.addf %626, %628 : vector<32x128xf32>
    %630 = vector.extract_strided_slice %629 {offsets = [0, 0], sizes = [16, 128], strides = [1, 1]} : vector<32x128xf32> to vector<16x128xf32>
    %cst_182 = arith.constant dense<0.000000e+00> : vector<128xf32>
    %631 = vector.multi_reduction <add>, %630, %cst_182 [0] : vector<16x128xf32> to vector<128xf32>
    %632 = vector.shape_cast %631 : vector<128xf32> to vector<1x128xf32>
    %cst_183 = arith.constant 1.600000e+01 : f32
    %633 = vector.broadcast %cst_183 : f32 to vector<1x128xf32>
    %634 = arith.divf %632, %633 : vector<1x128xf32>
    %635 = vector.extract_strided_slice %629 {offsets = [16, 0], sizes = [16, 128], strides = [1, 1]} : vector<32x128xf32> to vector<16x128xf32>
    %cst_184 = arith.constant dense<0.000000e+00> : vector<128xf32>
    %636 = vector.multi_reduction <add>, %635, %cst_184 [0] : vector<16x128xf32> to vector<128xf32>
    %637 = vector.shape_cast %636 : vector<128xf32> to vector<1x128xf32>
    %cst_185 = arith.constant 1.600000e+01 : f32
    %638 = vector.broadcast %cst_185 : f32 to vector<1x128xf32>
    %639 = arith.divf %637, %638 : vector<1x128xf32>
    %640 = tpu.concatenate %634, %639 in 1 : vector<1x128xf32>, vector<1x128xf32> -> vector<1x256xf32>
    %c0_186 = arith.constant 0 : index
    %c0_187 = arith.constant 0 : index
    %641 = vector.load %arg27[%c0_186, %c0_187] : memref<256x1024xbf16, #tpu.memory_space<vmem>>, vector<256x1024xbf16>
    %642 = arith.truncf %640 : vector<1x256xf32> to vector<1x256xbf16>
    %cst_188 = arith.constant dense<0.000000e+00> : vector<1x1024xf32>
    %643 = tpu.matmul %642, %641, %cst_188 {dimension_numbers = #tpu.dot_dimension_numbers<[1], [0], [0], [1], [0, 0, 1, 1], [], []>} : vector<1x256xbf16>, vector<256x1024xbf16>, vector<1x1024xf32> -> vector<1x1024xf32>
    %c0_189 = arith.constant 0 : index
    %c0_190 = arith.constant 0 : index
    %644 = vector.load %arg28[%c0_189, %c0_190] : memref<1x1024xf32, #tpu.memory_space<vmem>>, vector<1x1024xf32>
    %645 = arith.addf %643, %644 : vector<1x1024xf32>
    %c0_191 = arith.constant 0 : index
    %c0_192 = arith.constant 0 : index
    %c0_193 = arith.constant 0 : index
    %646 = vector.load %arg29[%c0_191, %c0_192, %c0_193] : memref<1x1x1024xf32, #tpu.memory_space<vmem>>, vector<1x1x1024xf32>
    %647 = vector.shape_cast %646 : vector<1x1x1024xf32> to vector<1x1024xf32>
    %648 = vector.shape_cast %645 : vector<1x1024xf32> to vector<1x1x1024xf32>
    tpu.vector_store %arg29[%c0_191, %c0_192, %c0_193], %648 {strides = array<i32>} : memref<1x1x1024xf32, #tpu.memory_space<vmem>>, vector<1x1x1024xf32>,
    return
  }
  func.func @transform_0(%arg0: i32) -> (i32, i32, i32) {
    %c0_i32 = arith.constant 0 : i32
    %c0_i32_0 = arith.constant 0 : i32
    %c0_i32_1 = arith.constant 0 : i32
    return %arg0, %c0_i32, %c0_i32_0 : i32, i32, i32
  }
  func.func @transform_1(%arg0: i32) -> (i32, i32) {
    %c0_i32 = arith.constant 0 : i32
    %c0_i32_0 = arith.constant 0 : i32
    return %arg0, %c0_i32 : i32, i32
  }
  func.func @transform_2(%arg0: i32) -> (i32, i32) {
    %c0_i32 = arith.constant 0 : i32
    %c0_i32_0 = arith.constant 0 : i32
    %c0_i32_1 = arith.constant 0 : i32
    return %c0_i32, %c0_i32_0 : i32, i32
  }
  func.func @transform_3(%arg0: i32) -> (i32, i32) {
    %c0_i32 = arith.constant 0 : i32
    %c0_i32_0 = arith.constant 0 : i32
    %c0_i32_1 = arith.constant 0 : i32
    return %c0_i32, %c0_i32_0 : i32, i32
  }
  func.func @transform_4(%arg0: i32) -> (i32, i32) {
    %c0_i32 = arith.constant 0 : i32
    %c0_i32_0 = arith.constant 0 : i32
    %c0_i32_1 = arith.constant 0 : i32
    return %c0_i32, %c0_i32_0 : i32, i32
  }
  func.func @transform_5(%arg0: i32) -> (i32, i32, i32) {
    %c0_i32 = arith.constant 0 : i32
    %c0_i32_0 = arith.constant 0 : i32
    %c0_i32_1 = arith.constant 0 : i32
    %c0_i32_2 = arith.constant 0 : i32
    return %c0_i32, %c0_i32_0, %c0_i32_1 : i32, i32, i32
  }
  func.func @transform_6(%arg0: i32) -> (i32, i32, i32) {
    %c0_i32 = arith.constant 0 : i32
    %c0_i32_0 = arith.constant 0 : i32
    %c0_i32_1 = arith.constant 0 : i32
    %c0_i32_2 = arith.constant 0 : i32
    return %c0_i32, %c0_i32_0, %c0_i32_1 : i32, i32, i32
  }
  func.func @transform_7(%arg0: i32) -> (i32, i32, i32) {
    %c0_i32 = arith.constant 0 : i32
    %c0_i32_0 = arith.constant 0 : i32
    %c0_i32_1 = arith.constant 0 : i32
    %c0_i32_2 = arith.constant 0 : i32
    return %c0_i32, %c0_i32_0, %c0_i32_1 : i32, i32, i32
  }
  func.func @transform_8(%arg0: i32) -> (i32, i32, i32) {
    %c0_i32 = arith.constant 0 : i32
    %c0_i32_0 = arith.constant 0 : i32
    %c0_i32_1 = arith.constant 0 : i32
    %c0_i32_2 = arith.constant 0 : i32
    return %c0_i32, %c0_i32_0, %c0_i32_1 : i32, i32, i32
  }
  func.func @transform_9(%arg0: i32) -> (i32, i32) {
    %c0_i32 = arith.constant 0 : i32
    %c0_i32_0 = arith.constant 0 : i32
    %c0_i32_1 = arith.constant 0 : i32
    return %c0_i32, %c0_i32_0 : i32, i32
  }
  func.func @transform_10(%arg0: i32) -> (i32, i32, i32) {
    %c0_i32 = arith.constant 0 : i32
    %c0_i32_0 = arith.constant 0 : i32
    %c0_i32_1 = arith.constant 0 : i32
    %c0_i32_2 = arith.constant 0 : i32
    return %c0_i32, %c0_i32_0, %c0_i32_1 : i32, i32, i32
  }
  func.func @transform_11(%arg0: i32) -> (i32, i32, i32) {
    %c0_i32 = arith.constant 0 : i32
    %c0_i32_0 = arith.constant 0 : i32
    %c0_i32_1 = arith.constant 0 : i32
    %c0_i32_2 = arith.constant 0 : i32
    return %c0_i32, %c0_i32_0, %c0_i32_1 : i32, i32, i32
  }
  func.func @transform_12(%arg0: i32) -> (i32, i32, i32) {
    %c0_i32 = arith.constant 0 : i32
    %c0_i32_0 = arith.constant 0 : i32
    %c0_i32_1 = arith.constant 0 : i32
    %c0_i32_2 = arith.constant 0 : i32
    return %c0_i32, %c0_i32_0, %c0_i32_1 : i32, i32, i32
  }
  func.func @transform_13(%arg0: i32) -> (i32, i32, i32) {
    %c0_i32 = arith.constant 0 : i32
    %c0_i32_0 = arith.constant 0 : i32
    %c0_i32_1 = arith.constant 0 : i32
    %c0_i32_2 = arith.constant 0 : i32
    return %c0_i32, %c0_i32_0, %c0_i32_1 : i32, i32, i32
  }
  func.func @transform_14(%arg0: i32) -> (i32, i32) {
    %c0_i32 = arith.constant 0 : i32
    %c0_i32_0 = arith.constant 0 : i32
    %c0_i32_1 = arith.constant 0 : i32
    return %c0_i32, %c0_i32_0 : i32, i32
  }
  func.func @transform_15(%arg0: i32) -> (i32, i32) {
    %c0_i32 = arith.constant 0 : i32
    %c0_i32_0 = arith.constant 0 : i32
    %c0_i32_1 = arith.constant 0 : i32
    return %c0_i32, %c0_i32_0 : i32, i32
  }
  func.func @transform_16(%arg0: i32) -> (i32, i32) {
    %c0_i32 = arith.constant 0 : i32
    %c0_i32_0 = arith.constant 0 : i32
    %c0_i32_1 = arith.constant 0 : i32
    return %c0_i32, %c0_i32_0 : i32, i32
  }
  func.func @transform_17(%arg0: i32) -> (i32, i32) {
    %c0_i32 = arith.constant 0 : i32
    %c0_i32_0 = arith.constant 0 : i32
    %c0_i32_1 = arith.constant 0 : i32
    return %c0_i32, %c0_i32_0 : i32, i32
  }
  func.func @transform_18(%arg0: i32) -> (i32, i32) {
    %c0_i32 = arith.constant 0 : i32
    %c0_i32_0 = arith.constant 0 : i32
    %c0_i32_1 = arith.constant 0 : i32
    return %c0_i32, %c0_i32_0 : i32, i32
  }
  func.func @transform_19(%arg0: i32) -> (i32, i32) {
    %c0_i32 = arith.constant 0 : i32
    %c0_i32_0 = arith.constant 0 : i32
    %c0_i32_1 = arith.constant 0 : i32
    return %c0_i32, %c0_i32_0 : i32, i32
  }
  func.func @transform_20(%arg0: i32) -> (i32, i32) {
    %c0_i32 = arith.constant 0 : i32
    %c0_i32_0 = arith.constant 0 : i32
    %c0_i32_1 = arith.constant 0 : i32
    return %c0_i32, %c0_i32_0 : i32, i32
  }
  func.func @transform_21(%arg0: i32) -> (i32, i32) {
    %c0_i32 = arith.constant 0 : i32
    %c0_i32_0 = arith.constant 0 : i32
    %c0_i32_1 = arith.constant 0 : i32
    return %c0_i32, %c0_i32_0 : i32, i32
  }
  func.func @transform_22(%arg0: i32) -> (i32, i32) {
    %c0_i32 = arith.constant 0 : i32
    %c0_i32_0 = arith.constant 0 : i32
    %c0_i32_1 = arith.constant 0 : i32
    return %c0_i32, %c0_i32_0 : i32, i32
  }
  func.func @transform_23(%arg0: i32) -> (i32, i32) {
    %c0_i32 = arith.constant 0 : i32
    %c0_i32_0 = arith.constant 0 : i32
    %c0_i32_1 = arith.constant 0 : i32
    return %c0_i32, %c0_i32_0 : i32, i32
  }
  func.func @transform_24(%arg0: i32) -> (i32, i32) {
    %c0_i32 = arith.constant 0 : i32
    %c0_i32_0 = arith.constant 0 : i32
    %c0_i32_1 = arith.constant 0 : i32
    return %c0_i32, %c0_i32_0 : i32, i32
  }
  func.func @transform_25(%arg0: i32) -> (i32, i32) {
    %c0_i32 = arith.constant 0 : i32
    %c0_i32_0 = arith.constant 0 : i32
    %c0_i32_1 = arith.constant 0 : i32
    return %c0_i32, %c0_i32_0 : i32, i32
  }
  func.func @transform_26(%arg0: i32) -> (i32, i32) {
    %c0_i32 = arith.constant 0 : i32
    %c0_i32_0 = arith.constant 0 : i32
    %c0_i32_1 = arith.constant 0 : i32
    return %c0_i32, %c0_i32_0 : i32, i32
  }
  func.func @transform_27(%arg0: i32) -> (i32, i32) {
    %c0_i32 = arith.constant 0 : i32
    %c0_i32_0 = arith.constant 0 : i32
    %c0_i32_1 = arith.constant 0 : i32
    return %c0_i32, %c0_i32_0 : i32, i32
  }
  func.func @transform_28(%arg0: i32) -> (i32, i32, i32) {
    %c0_i32 = arith.constant 0 : i32
    %c0_i32_0 = arith.constant 0 : i32
    %c0_i32_1 = arith.constant 0 : i32
    return %arg0, %c0_i32, %c0_i32_0 : i32, i32, i32
  }
}

</mosaic_0001>

<llo_original>
// kernel: embed_enc_clf_forward.1
$region0: #{embed_enc_clf_forward.1}
  #allocation0 [shape = 'u32[]', space=smem, size = 0x4, offset = 0x4, fixed_abs, tag = 'smem constant byte address 0x4 - core index']
  #allocation1 [shape = 'u32[144,128]{1,0:T(1,128)}', space=vmem, size = 0x12000, scoped, tag = 'internal scratch']
  %s0 = inlined_call_operand.vmem [shape: f32[2,128,128], index: 0, kind: input, shape index: {}]
  %s1 = inlined_call_operand.vmem [shape: f32[64,128], index: 1, kind: input, shape index: {}]
  %s2 = inlined_call_operand.vmem [shape: f32[224,32], index: 2, kind: input, shape index: {}]
  %s3 = inlined_call_operand.vmem [shape: bf16[128,128], index: 3, kind: input, shape index: {}]
  %s4 = inlined_call_operand.vmem [shape: f32[1,128], index: 4, kind: input, shape index: {}]
  %s5 = inlined_call_operand.vmem [shape: bf16[2,128,128], index: 5, kind: input, shape index: {}]
  %s6 = inlined_call_operand.vmem [shape: f32[2,1,128], index: 6, kind: input, shape index: {}]
  %s7 = inlined_call_operand.vmem [shape: bf16[2,128,128], index: 7, kind: input, shape index: {}]
  %s8 = inlined_call_operand.vmem [shape: f32[2,1,128], index: 8, kind: input, shape index: {}]
  %s9 = inlined_call_operand.vmem [shape: bf16[128,128], index: 9, kind: input, shape index: {}]
  %s10 = inlined_call_operand.vmem [shape: f32[4,1,128], index: 10, kind: input, shape index: {}]
  %s11 = inlined_call_operand.vmem [shape: f32[4,1,128], index: 11, kind: input, shape index: {}]
  %s12 = inlined_call_operand.vmem [shape: f32[4,7,128], index: 12, kind: input, shape index: {}]
  %s13 = inlined_call_operand.vmem [shape: bf16[4,128,128], index: 13, kind: input, shape index: {}]
  %s14 = inlined_call_operand.vmem [shape: f32[1,128], index: 14, kind: input, shape index: {}]
  %s15 = inlined_call_operand.vmem [shape: f32[1,128], index: 15, kind: input, shape index: {}]
  %s16 = inlined_call_operand.vmem [shape: f32[1,128], index: 16, kind: input, shape index: {}]
  %s17 = inlined_call_operand.vmem [shape: f32[1,128], index: 17, kind: input, shape index: {}]
  %s18 = inlined_call_operand.vmem [shape: bf16[128,384], index: 18, kind: input, shape index: {}]
  %s19 = inlined_call_operand.vmem [shape: f32[1,384], index: 19, kind: input, shape index: {}]
  %s20 = inlined_call_operand.vmem [shape: bf16[128,128], index: 20, kind: input, shape index: {}]
  %s21 = inlined_call_operand.vmem [shape: f32[1,128], index: 21, kind: input, shape index: {}]
  %s22 = inlined_call_operand.vmem [shape: bf16[128,512], index: 22, kind: input, shape index: {}]
  %s23 = inlined_call_operand.vmem [shape: f32[1,512], index: 23, kind: input, shape index: {}]
  %s24 = inlined_call_operand.vmem [shape: bf16[512,128], index: 24, kind: input, shape index: {}]
  %s25 = inlined_call_operand.vmem [shape: f32[1,128], index: 25, kind: input, shape index: {}]
  %s26 = inlined_call_operand.vmem [shape: bf16[256,1024], index: 26, kind: input, shape index: {}]
  %s27 = inlined_call_operand.vmem [shape: f32[1,1024], index: 27, kind: input, shape index: {}]
  %s28 = inlined_call_operand.vmem [shape: f32[2,1,1024], index: 28, kind: output, shape index: {}]
  %s29 = sld [smem:[#allocation0]]
  $region145: #{embed_enc_clf_forward.1} parent=0
    _
  %s31 = ssub.s32 1, %s29
  %s32 = scalar_select 0, %s31, %s29
  loop: start=0, step=1, limit=4
  $region2: #{embed_enc_clf_forward.1} parent=0 // loop_pre_header
    _
  $region3: #{embed_enc_clf_forward.1} parent=0 // loop_header
    %s34 = sphi 0, %s38
    %p35 = scmp.ge.s32.totalorder %s34, 4
    %s44 = sphi 0, %s46
    %s47 = sphi 0, %s44
    %s48 = sphi 0, %s47
    %s64 = sphi 0, %s48
    %s70 = sphi 0, %s72
    %s73 = sphi 0, %s70
    %s74 = sphi 0, %s73
    %s90 = sphi 0, %s74
    %s94 = sphi 0, %s94
    %s96 = sphi 0, %s94
    %s97 = sphi 0, %s96
    %s111 = sphi 0, %s97
    %s115 = sphi 0, %s115
    %s117 = sphi 0, %s115
    %s118 = sphi 0, %s117
    %s132 = sphi 0, %s118
    %s136 = sphi 0, %s136
    %s138 = sphi 0, %s136
    %s139 = sphi 0, %s138
    %s153 = sphi 0, %s139
    %s157 = sphi 0, %s157
    %s159 = sphi 0, %s157
    %s160 = sphi 0, %s159
    %s174 = sphi 0, %s160
    %s178 = sphi 0, %s178
    %s180 = sphi 0, %s178
    %s181 = sphi 0, %s180
    %s195 = sphi 0, %s181
    %s199 = sphi 0, %s199
    %s201 = sphi 0, %s199
    %s202 = sphi 0, %s201
    %s216 = sphi 0, %s202
    %s220 = sphi 0, %s220
    %s222 = sphi 0, %s220
    %s223 = sphi 0, %s222
    %s237 = sphi 0, %s223
    %s241 = sphi 0, %s241
    %s243 = sphi 0, %s241
    %s244 = sphi 0, %s243
    %s258 = sphi 0, %s244
    %s262 = sphi 0, %s262
    %s264 = sphi 0, %s262
    %s265 = sphi 0, %s264
    %s279 = sphi 0, %s265
    %s283 = sphi 0, %s283
    %s285 = sphi 0, %s283
    %s286 = sphi 0, %s285
    %s300 = sphi 0, %s286
    %s304 = sphi 0, %s304
    %s306 = sphi 0, %s304
    %s307 = sphi 0, %s306
    %s321 = sphi 0, %s307
    %s325 = sphi 0, %s325
    %s327 = sphi 0, %s325
    %s328 = sphi 0, %s327
    %s342 = sphi 0, %s328
    %s346 = sphi 0, %s346
    %s348 = sphi 0, %s346
    %s349 = sphi 0, %s348
    %s363 = sphi 0, %s349
    %s367 = sphi 0, %s367
    %s369 = sphi 0, %s367
    %s370 = sphi 0, %s369
    %s384 = sphi 0, %s370
    %s388 = sphi 0, %s388
    %s390 = sphi 0, %s388
    %s391 = sphi 0, %s390
    %s405 = sphi 0, %s391
    %s409 = sphi 0, %s409
    %s411 = sphi 0, %s409
    %s412 = sphi 0, %s411
    %s426 = sphi 0, %s412
    %s430 = sphi 0, %s430
    %s432 = sphi 0, %s430
    %s433 = sphi 0, %s432
    %s447 = sphi 0, %s433
    %s451 = sphi 0, %s451
    %s453 = sphi 0, %s451
    %s454 = sphi 0, %s453
    %s468 = sphi 0, %s454
    %s472 = sphi 0, %s472
    %s474 = sphi 0, %s472
    %s475 = sphi 0, %s474
    %s489 = sphi 0, %s475
    %s493 = sphi 0, %s493
    %s495 = sphi 0, %s493
    %s496 = sphi 0, %s495
    %s510 = sphi 0, %s496
    %s514 = sphi 0, %s514
    %s516 = sphi 0, %s514
    %s517 = sphi 0, %s516
    %s531 = sphi 0, %s517
    %s535 = sphi 0, %s535
    %s537 = sphi 0, %s535
    %s538 = sphi 0, %s537
    %s552 = sphi 0, %s538
    %s556 = sphi 0, %s556
    %s558 = sphi 0, %s556
    %s559 = sphi 0, %s558
    %s573 = sphi 0, %s559
    %s577 = sphi 0, %s577
    %s579 = sphi 0, %s577
    %s580 = sphi 0, %s579
    %s594 = sphi 0, %s580
    %s598 = sphi 0, %s598
    %s600 = sphi 0, %s598
    %s601 = sphi 0, %s600
    %s615 = sphi 0, %s601
    %s619 = sphi 0, %s619
    %s621 = sphi 0, %s619
    %s622 = sphi 0, %s621
    %s636 = sphi 0, %s622
    %s642 = sphi 0, %s644
    %s645 = sphi 0, %s642
    %s646 = sphi 0, %s645
    %s662 = sphi 0, %s646
  $region4: #{embed_enc_clf_forward.1} parent=0 // loop_header_branch
    %37 = sbr.rel (%p35) target = $region8
  $region5: #{embed_enc_clf_forward.1} parent=0 // loop_body
    %s39 = ssub.s32 %s34, 1
    %s40 = ssub.s32 %s34, 2
    %s41 = sadd.s32 %s34, 1
    %s42 = ssub.s32 %s34, %s41
    %p43 = scmp.eq.s32.totalorder %s42, 0
    %s45 = sadd.s32 %s44, 1
    %s46 = scalar_select %p43, %s44, %s45
    %p49 = pneg %p43
    %p50 = scmp.eq.s32.totalorder %s34, 1
    %p51 = por %p49, %p50
    %p52 = scmp.ne.s32.totalorder %s44, %s47
    %p53 = scmp.eq.s32.totalorder %s34, 0
    %p54 = por %p52, %p53
    %p55 = scmp.ne.s32.totalorder %s44, %s47
    %p56 = scmp.eq.s32.totalorder %s39, 1
    %p57 = por %p55, %p56
    %p58 = scmp.ne.s32.totalorder %s47, %s48
    %p59 = scmp.eq.s32.totalorder %s39, 0
    %p60 = por %p58, %p59
    %p61 = scmp.ne.s32.totalorder %s47, %s48
    %p62 = scmp.eq.s32.totalorder %s40, 1
    %p63 = por %p61, %p62
    %p65 = scmp.ne.s32.totalorder %s48, %s64
    %p66 = scmp.eq.s32.totalorder %s40, 0
    %p67 = por %p65, %p66
    %s68 = ssub.s32 %s34, %s41
    %p69 = scmp.eq.s32.totalorder %s68, 0
    %s71 = sadd.s32 %s70, 1
    %s72 = scalar_select %p69, %s70, %s71
    %p75 = pneg %p69
    %p76 = scmp.eq.s32.totalorder %s34, 1
    %p77 = por %p75, %p76
    %p78 = scmp.ne.s32.totalorder %s70, %s73
    %p79 = scmp.eq.s32.totalorder %s34, 0
    %p80 = por %p78, %p79
    %p81 = scmp.ne.s32.totalorder %s70, %s73
    %p82 = scmp.eq.s32.totalorder %s39, 1
    %p83 = por %p81, %p82
    %p84 = scmp.ne.s32.totalorder %s73, %s74
    %p85 = scmp.eq.s32.totalorder %s39, 0
    %p86 = por %p84, %p85
    %p87 = scmp.ne.s32.totalorder %s73, %s74
    %p88 = scmp.eq.s32.totalorder %s40, 1
    %p89 = por %p87, %p88
    %p91 = scmp.ne.s32.totalorder %s74, %s90
    %p92 = scmp.eq.s32.totalorder %s40, 0
    %p93 = por %p91, %p92
    %s95 = sadd.s32 %s94, 1
    %p98 = scmp.eq.s32.totalorder %s34, 1
    %p99 = scmp.ne.s32.totalorder %s94, %s96
    %p100 = scmp.eq.s32.totalorder %s34, 0
    %p101 = por %p99, %p100
    %p102 = scmp.ne.s32.totalorder %s94, %s96
    %p103 = scmp.eq.s32.totalorder %s39, 1
    %p104 = por %p102, %p103
    %p105 = scmp.ne.s32.totalorder %s96, %s97
    %p106 = scmp.eq.s32.totalorder %s39, 0
    %p107 = por %p105, %p106
    %p108 = scmp.ne.s32.totalorder %s96, %s97
    %p109 = scmp.eq.s32.totalorder %s40, 1
    %p110 = por %p108, %p109
    %p112 = scmp.ne.s32.totalorder %s97, %s111
    %p113 = scmp.eq.s32.totalorder %s40, 0
    %p114 = por %p112, %p113
    %s116 = sadd.s32 %s115, 1
    %p119 = scmp.eq.s32.totalorder %s34, 1
    %p120 = scmp.ne.s32.totalorder %s115, %s117
    %p121 = scmp.eq.s32.totalorder %s34, 0
    %p122 = por %p120, %p121
    %p123 = scmp.ne.s32.totalorder %s115, %s117
    %p124 = scmp.eq.s32.totalorder %s39, 1
    %p125 = por %p123, %p124
    %p126 = scmp.ne.s32.totalorder %s117, %s118
    %p127 = scmp.eq.s32.totalorder %s39, 0
    %p128 = por %p126, %p127
    %p129 = scmp.ne.s32.totalorder %s117, %s118
    %p130 = scmp.eq.s32.totalorder %s40, 1
    %p131 = por %p129, %p130
    %p133 = scmp.ne.s32.totalorder %s118, %s132
    %p134 = scmp.eq.s32.totalorder %s40, 0
    %p135 = por %p133, %p134
    %s137 = sadd.s32 %s136, 1
    %p140 = scmp.eq.s32.totalorder %s34, 1
    %p141 = scmp.ne.s32.totalorder %s136, %s138
    %p142 = scmp.eq.s32.totalorder %s34, 0
    %p143 = por %p141, %p142
    %p144 = scmp.ne.s32.totalorder %s136, %s138
    %p145 = scmp.eq.s32.totalorder %s39, 1
    %p146 = por %p144, %p145
    %p147 = scmp.ne.s32.totalorder %s138, %s139
    %p148 = scmp.eq.s32.totalorder %s39, 0
    %p149 = por %p147, %p148
    %p150 = scmp.ne.s32.totalorder %s138, %s139
    %p151 = scmp.eq.s32.totalorder %s40, 1
    %p152 = por %p150, %p151
    %p154 = scmp.ne.s32.totalorder %s139, %s153
    %p155 = scmp.eq.s32.totalorder %s40, 0
    %p156 = por %p154, %p155
    %s158 = sadd.s32 %s157, 1
    %p161 = scmp.eq.s32.totalorder %s34, 1
    %p162 = scmp.ne.s32.totalorder %s157, %s159
    %p163 = scmp.eq.s32.totalorder %s34, 0
    %p164 = por %p162, %p163
    %p165 = scmp.ne.s32.totalorder %s157, %s159
    %p166 = scmp.eq.s32.totalorder %s39, 1
    %p167 = por %p165, %p166
    %p168 = scmp.ne.s32.totalorder %s159, %s160
    %p169 = scmp.eq.s32.totalorder %s39, 0
    %p170 = por %p168, %p169
    %p171 = scmp.ne.s32.totalorder %s159, %s160
    %p172 = scmp.eq.s32.totalorder %s40, 1
    %p173 = por %p171, %p172
    %p175 = scmp.ne.s32.totalorder %s160, %s174
    %p176 = scmp.eq.s32.totalorder %s40, 0
    %p177 = por %p175, %p176
    %s179 = sadd.s32 %s178, 1
    %p182 = scmp.eq.s32.totalorder %s34, 1
    %p183 = scmp.ne.s32.totalorder %s178, %s180
    %p184 = scmp.eq.s32.totalorder %s34, 0
    %p185 = por %p183, %p184
    %p186 = scmp.ne.s32.totalorder %s178, %s180
    %p187 = scmp.eq.s32.totalorder %s39, 1
    %p188 = por %p186, %p187
    %p189 = scmp.ne.s32.totalorder %s180, %s181
    %p190 = scmp.eq.s32.totalorder %s39, 0
    %p191 = por %p189, %p190
    %p192 = scmp.ne.s32.totalorder %s180, %s181
    %p193 = scmp.eq.s32.totalorder %s40, 1
    %p194 = por %p192, %p193
    %p196 = scmp.ne.s32.totalorder %s181, %s195
    %p197 = scmp.eq.s32.totalorder %s40, 0
    %p198 = por %p196, %p197
    %s200 = sadd.s32 %s199, 1
    %p203 = scmp.eq.s32.totalorder %s34, 1
    %p204 = scmp.ne.s32.totalorder %s199, %s201
    %p205 = scmp.eq.s32.totalorder %s34, 0
    %p206 = por %p204, %p205
    %p207 = scmp.ne.s32.totalorder %s199, %s201
    %p208 = scmp.eq.s32.totalorder %s39, 1
    %p209 = por %p207, %p208
    %p210 = scmp.ne.s32.totalorder %s201, %s202
    %p211 = scmp.eq.s32.totalorder %s39, 0
    %p212 = por %p210, %p211
    %p213 = scmp.ne.s32.totalorder %s201, %s202
    %p214 = scmp.eq.s32.totalorder %s40, 1
    %p215 = por %p213, %p214
    %p217 = scmp.ne.s32.totalorder %s202, %s216
    %p218 = scmp.eq.s32.totalorder %s40, 0
    %p219 = por %p217, %p218
    %s221 = sadd.s32 %s220, 1
    %p224 = scmp.eq.s32.totalorder %s34, 1
    %p225 = scmp.ne.s32.totalorder %s220, %s222
    %p226 = scmp.eq.s32.totalorder %s34, 0
    %p227 = por %p225, %p226
    %p228 = scmp.ne.s32.totalorder %s220, %s222
    %p229 = scmp.eq.s32.totalorder %s39, 1
    %p230 = por %p228, %p229
    %p231 = scmp.ne.s32.totalorder %s222, %s223
    %p232 = scmp.eq.s32.totalorder %s39, 0
    %p233 = por %p231, %p232
    %p234 = scmp.ne.s32.totalorder %s222, %s223
    %p235 = scmp.eq.s32.totalorder %s40, 1
    %p236 = por %p234, %p235
    %p238 = scmp.ne.s32.totalorder %s223, %s237
    %p239 = scmp.eq.s32.totalorder %s40, 0
    %p240 = por %p238, %p239
    %s242 = sadd.s32 %s241, 1
    %p245 = scmp.eq.s32.totalorder %s34, 1
    %p246 = scmp.ne.s32.totalorder %s241, %s243
    %p247 = scmp.eq.s32.totalorder %s34, 0
    %p248 = por %p246, %p247
    %p249 = scmp.ne.s32.totalorder %s241, %s243
    %p250 = scmp.eq.s32.totalorder %s39, 1
    %p251 = por %p249, %p250
    %p252 = scmp.ne.s32.totalorder %s243, %s244
    %p253 = scmp.eq.s32.totalorder %s39, 0
    %p254 = por %p252, %p253
    %p255 = scmp.ne.s32.totalorder %s243, %s244
    %p256 = scmp.eq.s32.totalorder %s40, 1
    %p257 = por %p255, %p256
    %p259 = scmp.ne.s32.totalorder %s244, %s258
    %p260 = scmp.eq.s32.totalorder %s40, 0
    %p261 = por %p259, %p260
    %s263 = sadd.s32 %s262, 1
    %p266 = scmp.eq.s32.totalorder %s34, 1
    %p267 = scmp.ne.s32.totalorder %s262, %s264
    %p268 = scmp.eq.s32.totalorder %s34, 0
    %p269 = por %p267, %p268
    %p270 = scmp.ne.s32.totalorder %s262, %s264
    %p271 = scmp.eq.s32.totalorder %s39, 1
    %p272 = por %p270, %p271
    %p273 = scmp.ne.s32.totalorder %s264, %s265
    %p274 = scmp.eq.s32.totalorder %s39, 0
    %p275 = por %p273, %p274
    %p276 = scmp.ne.s32.totalorder %s264, %s265
    %p277 = scmp.eq.s32.totalorder %s40, 1
    %p278 = por %p276, %p277
    %p280 = scmp.ne.s32.totalorder %s265, %s279
    %p281 = scmp.eq.s32.totalorder %s40, 0
    %p282 = por %p280, %p281
    %s284 = sadd.s32 %s283, 1
    %p287 = scmp.eq.s32.totalorder %s34, 1
    %p288 = scmp.ne.s32.totalorder %s283, %s285
    %p289 = scmp.eq.s32.totalorder %s34, 0
    %p290 = por %p288, %p289
    %p291 = scmp.ne.s32.totalorder %s283, %s285
    %p292 = scmp.eq.s32.totalorder %s39, 1
    %p293 = por %p291, %p292
    %p294 = scmp.ne.s32.totalorder %s285, %s286
    %p295 = scmp.eq.s32.totalorder %s39, 0
    %p296 = por %p294, %p295
    %p297 = scmp.ne.s32.totalorder %s285, %s286
    %p298 = scmp.eq.s32.totalorder %s40, 1
    %p299 = por %p297, %p298
    %p301 = scmp.ne.s32.totalorder %s286, %s300
    %p302 = scmp.eq.s32.totalorder %s40, 0
    %p303 = por %p301, %p302
    %s305 = sadd.s32 %s304, 1
    %p308 = scmp.eq.s32.totalorder %s34, 1
    %p309 = scmp.ne.s32.totalorder %s304, %s306
    %p310 = scmp.eq.s32.totalorder %s34, 0
    %p311 = por %p309, %p310
    %p312 = scmp.ne.s32.totalorder %s304, %s306
    %p313 = scmp.eq.s32.totalorder %s39, 1
    %p314 = por %p312, %p313
    %p315 = scmp.ne.s32.totalorder %s306, %s307
    %p316 = scmp.eq.s32.totalorder %s39, 0
    %p317 = por %p315, %p316
    %p318 = scmp.ne.s32.totalorder %s306, %s307
    %p319 = scmp.eq.s32.totalorder %s40, 1
    %p320 = por %p318, %p319
    %p322 = scmp.ne.s32.totalorder %s307, %s321
    %p323 = scmp.eq.s32.totalorder %s40, 0
    %p324 = por %p322, %p323
    %s326 = sadd.s32 %s325, 1
    %p329 = scmp.eq.s32.totalorder %s34, 1
    %p330 = scmp.ne.s32.totalorder %s325, %s327
    %p331 = scmp.eq.s32.totalorder %s34, 0
    %p332 = por %p330, %p331
    %p333 = scmp.ne.s32.totalorder %s325, %s327
    %p334 = scmp.eq.s32.totalorder %s39, 1
    %p335 = por %p333, %p334
    %p336 = scmp.ne.s32.totalorder %s327, %s328
    %p337 = scmp.eq.s32.totalorder %s39, 0
    %p338 = por %p336, %p337
    %p339 = scmp.ne.s32.totalorder %s327, %s328
    %p340 = scmp.eq.s32.totalorder %s40, 1
    %p341 = por %p339, %p340
    %p343 = scmp.ne.s32.totalorder %s328, %s342
    %p344 = scmp.eq.s32.totalorder %s40, 0
    %p345 = por %p343, %p344
    %s347 = sadd.s32 %s346, 1
    %p350 = scmp.eq.s32.totalorder %s34, 1
    %p351 = scmp.ne.s32.totalorder %s346, %s348
    %p352 = scmp.eq.s32.totalorder %s34, 0
    %p353 = por %p351, %p352
    %p354 = scmp.ne.s32.totalorder %s346, %s348
    %p355 = scmp.eq.s32.totalorder %s39, 1
    %p356 = por %p354, %p355
    %p357 = scmp.ne.s32.totalorder %s348, %s349
    %p358 = scmp.eq.s32.totalorder %s39, 0
    %p359 = por %p357, %p358
    %p360 = scmp.ne.s32.totalorder %s348, %s349
    %p361 = scmp.eq.s32.totalorder %s40, 1
    %p362 = por %p360, %p361
    %p364 = scmp.ne.s32.totalorder %s349, %s363
    %p365 = scmp.eq.s32.totalorder %s40, 0
    %p366 = por %p364, %p365
    %s368 = sadd.s32 %s367, 1
    %p371 = scmp.eq.s32.totalorder %s34, 1
    %p372 = scmp.ne.s32.totalorder %s367, %s369
    %p373 = scmp.eq.s32.totalorder %s34, 0
    %p374 = por %p372, %p373
    %p375 = scmp.ne.s32.totalorder %s367, %s369
    %p376 = scmp.eq.s32.totalorder %s39, 1
    %p377 = por %p375, %p376
    %p378 = scmp.ne.s32.totalorder %s369, %s370
    %p379 = scmp.eq.s32.totalorder %s39, 0
    %p380 = por %p378, %p379
    %p381 = scmp.ne.s32.totalorder %s369, %s370
    %p382 = scmp.eq.s32.totalorder %s40, 1
    %p383 = por %p381, %p382
    %p385 = scmp.ne.s32.totalorder %s370, %s384
    %p386 = scmp.eq.s32.totalorder %s40, 0
    %p387 = por %p385, %p386
    %s389 = sadd.s32 %s388, 1
    %p392 = scmp.eq.s32.totalorder %s34, 1
    %p393 = scmp.ne.s32.totalorder %s388, %s390
    %p394 = scmp.eq.s32.totalorder %s34, 0
    %p395 = por %p393, %p394
    %p396 = scmp.ne.s32.totalorder %s388, %s390
    %p397 = scmp.eq.s32.totalorder %s39, 1
    %p398 = por %p396, %p397
    %p399 = scmp.ne.s32.totalorder %s390, %s391
    %p400 = scmp.eq.s32.totalorder %s39, 0
    %p401 = por %p399, %p400
    %p402 = scmp.ne.s32.totalorder %s390, %s391
    %p403 = scmp.eq.s32.totalorder %s40, 1
    %p404 = por %p402, %p403
    %p406 = scmp.ne.s32.totalorder %s391, %s405
    %p407 = scmp.eq.s32.totalorder %s40, 0
    %p408 = por %p406, %p407
    %s410 = sadd.s32 %s409, 1
    %p413 = scmp.eq.s32.totalorder %s34, 1
    %p414 = scmp.ne.s32.totalorder %s409, %s411
    %p415 = scmp.eq.s32.totalorder %s34, 0
    %p416 = por %p414, %p415
    %p417 = scmp.ne.s32.totalorder %s409, %s411
    %p418 = scmp.eq.s32.totalorder %s39, 1
    %p419 = por %p417, %p418
    %p420 = scmp.ne.s32.totalorder %s411, %s412
    %p421 = scmp.eq.s32.totalorder %s39, 0
    %p422 = por %p420, %p421
    %p423 = scmp.ne.s32.totalorder %s411, %s412
    %p424 = scmp.eq.s32.totalorder %s40, 1
    %p425 = por %p423, %p424
    %p427 = scmp.ne.s32.totalorder %s412, %s426
    %p428 = scmp.eq.s32.totalorder %s40, 0
    %p429 = por %p427, %p428
    %s431 = sadd.s32 %s430, 1
    %p434 = scmp.eq.s32.totalorder %s34, 1
    %p435 = scmp.ne.s32.totalorder %s430, %s432
    %p436 = scmp.eq.s32.totalorder %s34, 0
    %p437 = por %p435, %p436
    %p438 = scmp.ne.s32.totalorder %s430, %s432
    %p439 = scmp.eq.s32.totalorder %s39, 1
    %p440 = por %p438, %p439
    %p441 = scmp.ne.s32.totalorder %s432, %s433
    %p442 = scmp.eq.s32.totalorder %s39, 0
    %p443 = por %p441, %p442
    %p444 = scmp.ne.s32.totalorder %s432, %s433
    %p445 = scmp.eq.s32.totalorder %s40, 1
    %p446 = por %p444, %p445
    %p448 = scmp.ne.s32.totalorder %s433, %s447
    %p449 = scmp.eq.s32.totalorder %s40, 0
    %p450 = por %p448, %p449
    %s452 = sadd.s32 %s451, 1
    %p455 = scmp.eq.s32.totalorder %s34, 1
    %p456 = scmp.ne.s32.totalorder %s451, %s453
    %p457 = scmp.eq.s32.totalorder %s34, 0
    %p458 = por %p456, %p457
    %p459 = scmp.ne.s32.totalorder %s451, %s453
    %p460 = scmp.eq.s32.totalorder %s39, 1
    %p461 = por %p459, %p460
    %p462 = scmp.ne.s32.totalorder %s453, %s454
    %p463 = scmp.eq.s32.totalorder %s39, 0
    %p464 = por %p462, %p463
    %p465 = scmp.ne.s32.totalorder %s453, %s454
    %p466 = scmp.eq.s32.totalorder %s40, 1
    %p467 = por %p465, %p466
    %p469 = scmp.ne.s32.totalorder %s454, %s468
    %p470 = scmp.eq.s32.totalorder %s40, 0
    %p471 = por %p469, %p470
    %s473 = sadd.s32 %s472, 1
    %p476 = scmp.eq.s32.totalorder %s34, 1
    %p477 = scmp.ne.s32.totalorder %s472, %s474
    %p478 = scmp.eq.s32.totalorder %s34, 0
    %p479 = por %p477, %p478
    %p480 = scmp.ne.s32.totalorder %s472, %s474
    %p481 = scmp.eq.s32.totalorder %s39, 1
    %p482 = por %p480, %p481
    %p483 = scmp.ne.s32.totalorder %s474, %s475
    %p484 = scmp.eq.s32.totalorder %s39, 0
    %p485 = por %p483, %p484
    %p486 = scmp.ne.s32.totalorder %s474, %s475
    %p487 = scmp.eq.s32.totalorder %s40, 1
    %p488 = por %p486, %p487
    %p490 = scmp.ne.s32.totalorder %s475, %s489
    %p491 = scmp.eq.s32.totalorder %s40, 0
    %p492 = por %p490, %p491
    %s494 = sadd.s32 %s493, 1
    %p497 = scmp.eq.s32.totalorder %s34, 1
    %p498 = scmp.ne.s32.totalorder %s493, %s495
    %p499 = scmp.eq.s32.totalorder %s34, 0
    %p500 = por %p498, %p499
    %p501 = scmp.ne.s32.totalorder %s493, %s495
    %p502 = scmp.eq.s32.totalorder %s39, 1
    %p503 = por %p501, %p502
    %p504 = scmp.ne.s32.totalorder %s495, %s496
    %p505 = scmp.eq.s32.totalorder %s39, 0
    %p506 = por %p504, %p505
    %p507 = scmp.ne.s32.totalorder %s495, %s496
    %p508 = scmp.eq.s32.totalorder %s40, 1
    %p509 = por %p507, %p508
    %p511 = scmp.ne.s32.totalorder %s496, %s510
    %p512 = scmp.eq.s32.totalorder %s40, 0
    %p513 = por %p511, %p512
    %s515 = sadd.s32 %s514, 1
    %p518 = scmp.eq.s32.totalorder %s34, 1
    %p519 = scmp.ne.s32.totalorder %s514, %s516
    %p520 = scmp.eq.s32.totalorder %s34, 0
    %p521 = por %p519, %p520
    %p522 = scmp.ne.s32.totalorder %s514, %s516
    %p523 = scmp.eq.s32.totalorder %s39, 1
    %p524 = por %p522, %p523
    %p525 = scmp.ne.s32.totalorder %s516, %s517
    %p526 = scmp.eq.s32.totalorder %s39, 0
    %p527 = por %p525, %p526
    %p528 = scmp.ne.s32.totalorder %s516, %s517
    %p529 = scmp.eq.s32.totalorder %s40, 1
    %p530 = por %p528, %p529
    %p532 = scmp.ne.s32.totalorder %s517, %s531
    %p533 = scmp.eq.s32.totalorder %s40, 0
    %p534 = por %p532, %p533
    %s536 = sadd.s32 %s535, 1
    %p539 = scmp.eq.s32.totalorder %s34, 1
    %p540 = scmp.ne.s32.totalorder %s535, %s537
    %p541 = scmp.eq.s32.totalorder %s34, 0
    %p542 = por %p540, %p541
    %p543 = scmp.ne.s32.totalorder %s535, %s537
    %p544 = scmp.eq.s32.totalorder %s39, 1
    %p545 = por %p543, %p544
    %p546 = scmp.ne.s32.totalorder %s537, %s538
    %p547 = scmp.eq.s32.totalorder %s39, 0
    %p548 = por %p546, %p547
    %p549 = scmp.ne.s32.totalorder %s537, %s538
    %p550 = scmp.eq.s32.totalorder %s40, 1
    %p551 = por %p549, %p550
    %p553 = scmp.ne.s32.totalorder %s538, %s552
    %p554 = scmp.eq.s32.totalorder %s40, 0
    %p555 = por %p553, %p554
    %s557 = sadd.s32 %s556, 1
    %p560 = scmp.eq.s32.totalorder %s34, 1
    %p561 = scmp.ne.s32.totalorder %s556, %s558
    %p562 = scmp.eq.s32.totalorder %s34, 0
    %p563 = por %p561, %p562
    %p564 = scmp.ne.s32.totalorder %s556, %s558
    %p565 = scmp.eq.s32.totalorder %s39, 1
    %p566 = por %p564, %p565
    %p567 = scmp.ne.s32.totalorder %s558, %s559
    %p568 = scmp.eq.s32.totalorder %s39, 0
    %p569 = por %p567, %p568
    %p570 = scmp.ne.s32.totalorder %s558, %s559
    %p571 = scmp.eq.s32.totalorder %s40, 1
    %p572 = por %p570, %p571
    %p574 = scmp.ne.s32.totalorder %s559, %s573
    %p575 = scmp.eq.s32.totalorder %s40, 0
    %p576 = por %p574, %p575
    %s578 = sadd.s32 %s577, 1
    %p581 = scmp.eq.s32.totalorder %s34, 1
    %p582 = scmp.ne.s32.totalorder %s577, %s579
    %p583 = scmp.eq.s32.totalorder %s34, 0
    %p584 = por %p582, %p583
    %p585 = scmp.ne.s32.totalorder %s577, %s579
    %p586 = scmp.eq.s32.totalorder %s39, 1
    %p587 = por %p585, %p586
    %p588 = scmp.ne.s32.totalorder %s579, %s580
    %p589 = scmp.eq.s32.totalorder %s39, 0
    %p590 = por %p588, %p589
    %p591 = scmp.ne.s32.totalorder %s579, %s580
    %p592 = scmp.eq.s32.totalorder %s40, 1
    %p593 = por %p591, %p592
    %p595 = scmp.ne.s32.totalorder %s580, %s594
    %p596 = scmp.eq.s32.totalorder %s40, 0
    %p597 = por %p595, %p596
    %s599 = sadd.s32 %s598, 1
    %p602 = scmp.eq.s32.totalorder %s34, 1
    %p603 = scmp.ne.s32.totalorder %s598, %s600
    %p604 = scmp.eq.s32.totalorder %s34, 0
    %p605 = por %p603, %p604
    %p606 = scmp.ne.s32.totalorder %s598, %s600
    %p607 = scmp.eq.s32.totalorder %s39, 1
    %p608 = por %p606, %p607
    %p609 = scmp.ne.s32.totalorder %s600, %s601
    %p610 = scmp.eq.s32.totalorder %s39, 0
    %p611 = por %p609, %p610
    %p612 = scmp.ne.s32.totalorder %s600, %s601
    %p613 = scmp.eq.s32.totalorder %s40, 1
    %p614 = por %p612, %p613
    %p616 = scmp.ne.s32.totalorder %s601, %s615
    %p617 = scmp.eq.s32.totalorder %s40, 0
    %p618 = por %p616, %p617
    %s620 = sadd.s32 %s619, 1
    %p623 = scmp.eq.s32.totalorder %s34, 1
    %p624 = scmp.ne.s32.totalorder %s619, %s621
    %p625 = scmp.eq.s32.totalorder %s34, 0
    %p626 = por %p624, %p625
    %p627 = scmp.ne.s32.totalorder %s619, %s621
    %p628 = scmp.eq.s32.totalorder %s39, 1
    %p629 = por %p627, %p628
    %p630 = scmp.ne.s32.totalorder %s621, %s622
    %p631 = scmp.eq.s32.totalorder %s39, 0
    %p632 = por %p630, %p631
    %p633 = scmp.ne.s32.totalorder %s621, %s622
    %p634 = scmp.eq.s32.totalorder %s40, 1
    %p635 = por %p633, %p634
    %p637 = scmp.ne.s32.totalorder %s622, %s636
    %p638 = scmp.eq.s32.totalorder %s40, 0
    %p639 = por %p637, %p638
    %s640 = ssub.s32 %s34, %s41
    %p641 = scmp.eq.s32.totalorder %s640, 0
    %s643 = sadd.s32 %s642, 1
    %s644 = scalar_select %p641, %s642, %s643
    %p647 = pneg %p641
    %p648 = scmp.eq.s32.totalorder %s34, 1
    %p649 = por %p647, %p648
    %p650 = scmp.ne.s32.totalorder %s642, %s645
    %p651 = scmp.eq.s32.totalorder %s34, 0
    %p652 = por %p650, %p651
    %p653 = scmp.ne.s32.totalorder %s642, %s645
    %p654 = scmp.eq.s32.totalorder %s39, 1
    %p655 = por %p653, %p654
    %p656 = scmp.ne.s32.totalorder %s645, %s646
    %p657 = scmp.eq.s32.totalorder %s39, 0
    %p658 = por %p656, %p657
    %p659 = scmp.ne.s32.totalorder %s645, %s646
    %p660 = scmp.eq.s32.totalorder %s40, 1
    %p661 = por %p659, %p660
    %p663 = scmp.ne.s32.totalorder %s646, %s662
    %p664 = scmp.eq.s32.totalorder %s40, 0
    %p665 = por %p663, %p664
    %p666 = scmp.le.s32.totalorder 1, %s34
    %p667 = scmp.lt.s32.totalorder %s34, 3
    %p668 = pnand %p666, %p667
    %p669 = pneg %p668
    // Predicated region
    $region9: #{embed_enc_clf_forward.1} parent=5 // pred_check
      _
    $region10: #{embed_enc_clf_forward.1} parent=5 // pred_check_branch
      %671 = sbr.rel (%p668) target = $region12
    $region11: #{embed_enc_clf_forward.1} parent=5 // pred_region
      %s672 = ssub.s32 %s34, 1
      // Predicated region
      $region13: #{embed_enc_clf_forward.1} parent=11 // pred_check
        %p673 = pneg %p107
      $region14: #{embed_enc_clf_forward.1} parent=11 // pred_check_branch
        %675 = sbr.rel (%p673) target = $region16
      $region15: #{embed_enc_clf_forward.1} parent=11 // pred_region
        _
      $region16: #{embed_enc_clf_forward.1} parent=11 // pred_fallthru
        _
      // Predicated region
      $region17: #{embed_enc_clf_forward.1} parent=11 // pred_check
        %p676 = pneg %p128
      $region18: #{embed_enc_clf_forward.1} parent=11 // pred_check_branch
        %678 = sbr.rel (%p676) target = $region20
      $region19: #{embed_enc_clf_forward.1} parent=11 // pred_region
        _
      $region20: #{embed_enc_clf_forward.1} parent=11 // pred_fallthru
        _
      // Predicated region
      $region21: #{embed_enc_clf_forward.1} parent=11 // pred_check
        %p679 = pneg %p149
      $region22: #{embed_enc_clf_forward.1} parent=11 // pred_check_branch
        %681 = sbr.rel (%p679) target = $region24
      $region23: #{embed_enc_clf_forward.1} parent=11 // pred_region
        _
      $region24: #{embed_enc_clf_forward.1} parent=11 // pred_fallthru
        _
      // Predicated region
      $region25: #{embed_enc_clf_forward.1} parent=11 // pred_check
        %p682 = pneg %p170
      $region26: #{embed_enc_clf_forward.1} parent=11 // pred_check_branch
        %684 = sbr.rel (%p682) target = $region28
      $region27: #{embed_enc_clf_forward.1} parent=11 // pred_region
        _
      $region28: #{embed_enc_clf_forward.1} parent=11 // pred_fallthru
        _
      // Predicated region
      $region29: #{embed_enc_clf_forward.1} parent=11 // pred_check
        %p685 = pneg %p191
      $region30: #{embed_enc_clf_forward.1} parent=11 // pred_check_branch
        %687 = sbr.rel (%p685) target = $region32
      $region31: #{embed_enc_clf_forward.1} parent=11 // pred_region
        _
      $region32: #{embed_enc_clf_forward.1} parent=11 // pred_fallthru
        _
      // Predicated region
      $region33: #{embed_enc_clf_forward.1} parent=11 // pred_check
        %p688 = pneg %p212
      $region34: #{embed_enc_clf_forward.1} parent=11 // pred_check_branch
        %690 = sbr.rel (%p688) target = $region36
      $region35: #{embed_enc_clf_forward.1} parent=11 // pred_region
        _
      $region36: #{embed_enc_clf_forward.1} parent=11 // pred_fallthru
        _
      // Predicated region
      $region37: #{embed_enc_clf_forward.1} parent=11 // pred_check
        %p691 = pneg %p233
      $region38: #{embed_enc_clf_forward.1} parent=11 // pred_check_branch
        %693 = sbr.rel (%p691) target = $region40
      $region39: #{embed_enc_clf_forward.1} parent=11 // pred_region
        _
      $region40: #{embed_enc_clf_forward.1} parent=11 // pred_fallthru
        _
      // Predicated region
      $region41: #{embed_enc_clf_forward.1} parent=11 // pred_check
        %p694 = pneg %p254
      $region42: #{embed_enc_clf_forward.1} parent=11 // pred_check_branch
        %696 = sbr.rel (%p694) target = $region44
      $region43: #{embed_enc_clf_forward.1} parent=11 // pred_region
        _
      $region44: #{embed_enc_clf_forward.1} parent=11 // pred_fallthru
        _
      // Predicated region
      $region45: #{embed_enc_clf_forward.1} parent=11 // pred_check
        %p697 = pneg %p275
      $region46: #{embed_enc_clf_forward.1} parent=11 // pred_check_branch
        %699 = sbr.rel (%p697) target = $region48
      $region47: #{embed_enc_clf_forward.1} parent=11 // pred_region
        _
      $region48: #{embed_enc_clf_forward.1} parent=11 // pred_fallthru
        _
      // Predicated region
      $region49: #{embed_enc_clf_forward.1} parent=11 // pred_check
        %p700 = pneg %p296
      $region50: #{embed_enc_clf_forward.1} parent=11 // pred_check_branch
        %702 = sbr.rel (%p700) target = $region52
      $region51: #{embed_enc_clf_forward.1} parent=11 // pred_region
        _
      $region52: #{embed_enc_clf_forward.1} parent=11 // pred_fallthru
        _
      // Predicated region
      $region53: #{embed_enc_clf_forward.1} parent=11 // pred_check
        %p703 = pneg %p317
      $region54: #{embed_enc_clf_forward.1} parent=11 // pred_check_branch
        %705 = sbr.rel (%p703) target = $region56
      $region55: #{embed_enc_clf_forward.1} parent=11 // pred_region
        _
      $region56: #{embed_enc_clf_forward.1} parent=11 // pred_fallthru
        _
      // Predicated region
      $region57: #{embed_enc_clf_forward.1} parent=11 // pred_check
        %p706 = pneg %p338
      $region58: #{embed_enc_clf_forward.1} parent=11 // pred_check_branch
        %708 = sbr.rel (%p706) target = $region60
      $region59: #{embed_enc_clf_forward.1} parent=11 // pred_region
        _
      $region60: #{embed_enc_clf_forward.1} parent=11 // pred_fallthru
        _
      // Predicated region
      $region61: #{embed_enc_clf_forward.1} parent=11 // pred_check
        %p709 = pneg %p359
      $region62: #{embed_enc_clf_forward.1} parent=11 // pred_check_branch
        %711 = sbr.rel (%p709) target = $region64
      $region63: #{embed_enc_clf_forward.1} parent=11 // pred_region
        _
      $region64: #{embed_enc_clf_forward.1} parent=11 // pred_fallthru
        _
      // Predicated region
      $region65: #{embed_enc_clf_forward.1} parent=11 // pred_check
        %p712 = pneg %p380
      $region66: #{embed_enc_clf_forward.1} parent=11 // pred_check_branch
        %714 = sbr.rel (%p712) target = $region68
      $region67: #{embed_enc_clf_forward.1} parent=11 // pred_region
        _
      $region68: #{embed_enc_clf_forward.1} parent=11 // pred_fallthru
        _
      // Predicated region
      $region69: #{embed_enc_clf_forward.1} parent=11 // pred_check
        %p715 = pneg %p401
      $region70: #{embed_enc_clf_forward.1} parent=11 // pred_check_branch
        %717 = sbr.rel (%p715) target = $region72
      $region71: #{embed_enc_clf_forward.1} parent=11 // pred_region
        _
      $region72: #{embed_enc_clf_forward.1} parent=11 // pred_fallthru
        _
      // Predicated region
      $region73: #{embed_enc_clf_forward.1} parent=11 // pred_check
        %p718 = pneg %p422
      $region74: #{embed_enc_clf_forward.1} parent=11 // pred_check_branch
        %720 = sbr.rel (%p718) target = $region76
      $region75: #{embed_enc_clf_forward.1} parent=11 // pred_region
        _
      $region76: #{embed_enc_clf_forward.1} parent=11 // pred_fallthru
        _
      // Predicated region
      $region77: #{embed_enc_clf_forward.1} parent=11 // pred_check
        %p721 = pneg %p443
      $region78: #{embed_enc_clf_forward.1} parent=11 // pred_check_branch
        %723 = sbr.rel (%p721) target = $region80
      $region79: #{embed_enc_clf_forward.1} parent=11 // pred_region
        _
      $region80: #{embed_enc_clf_forward.1} parent=11 // pred_fallthru
        _
      // Predicated region
      $region81: #{embed_enc_clf_forward.1} parent=11 // pred_check
        %p724 = pneg %p464
      $region82: #{embed_enc_clf_forward.1} parent=11 // pred_check_branch
        %726 = sbr.rel (%p724) target = $region84
      $region83: #{embed_enc_clf_forward.1} parent=11 // pred_region
        _
      $region84: #{embed_enc_clf_forward.1} parent=11 // pred_fallthru
        _
      // Predicated region
      $region85: #{embed_enc_clf_forward.1} parent=11 // pred_check
        %p727 = pneg %p485
      $region86: #{embed_enc_clf_forward.1} parent=11 // pred_check_branch
        %729 = sbr.rel (%p727) target = $region88
      $region87: #{embed_enc_clf_forward.1} parent=11 // pred_region
        _
      $region88: #{embed_enc_clf_forward.1} parent=11 // pred_fallthru
        _
      // Predicated region
      $region89: #{embed_enc_clf_forward.1} parent=11 // pred_check
        %p730 = pneg %p506
      $region90: #{embed_enc_clf_forward.1} parent=11 // pred_check_branch
        %732 = sbr.rel (%p730) target = $region92
      $region91: #{embed_enc_clf_forward.1} parent=11 // pred_region
        _
      $region92: #{embed_enc_clf_forward.1} parent=11 // pred_fallthru
        _
      // Predicated region
      $region93: #{embed_enc_clf_forward.1} parent=11 // pred_check
        %p733 = pneg %p527
      $region94: #{embed_enc_clf_forward.1} parent=11 // pred_check_branch
        %735 = sbr.rel (%p733) target = $region96
      $region95: #{embed_enc_clf_forward.1} parent=11 // pred_region
        _
      $region96: #{embed_enc_clf_forward.1} parent=11 // pred_fallthru
        _
      // Predicated region
      $region97: #{embed_enc_clf_forward.1} parent=11 // pred_check
        %p736 = pneg %p548
      $region98: #{embed_enc_clf_forward.1} parent=11 // pred_check_branch
        %738 = sbr.rel (%p736) target = $region100
      $region99: #{embed_enc_clf_forward.1} parent=11 // pred_region
        _
      $region100: #{embed_enc_clf_forward.1} parent=11 // pred_fallthru
        _
      // Predicated region
      $region101: #{embed_enc_clf_forward.1} parent=11 // pred_check
        %p739 = pneg %p569
      $region102: #{embed_enc_clf_forward.1} parent=11 // pred_check_branch
        %741 = sbr.rel (%p739) target = $region104
      $region103: #{embed_enc_clf_forward.1} parent=11 // pred_region
        _
      $region104: #{embed_enc_clf_forward.1} parent=11 // pred_fallthru
        _
      // Predicated region
      $region105: #{embed_enc_clf_forward.1} parent=11 // pred_check
        %p742 = pneg %p590
      $region106: #{embed_enc_clf_forward.1} parent=11 // pred_check_branch
        %744 = sbr.rel (%p742) target = $region108
      $region107: #{embed_enc_clf_forward.1} parent=11 // pred_region
        _
      $region108: #{embed_enc_clf_forward.1} parent=11 // pred_fallthru
        _
      // Predicated region
      $region109: #{embed_enc_clf_forward.1} parent=11 // pred_check
        %p745 = pneg %p611
      $region110: #{embed_enc_clf_forward.1} parent=11 // pred_check_branch
        %747 = sbr.rel (%p745) target = $region112
      $region111: #{embed_enc_clf_forward.1} parent=11 // pred_region
        _
      $region112: #{embed_enc_clf_forward.1} parent=11 // pred_fallthru
        _
      // Predicated region
      $region113: #{embed_enc_clf_forward.1} parent=11 // pred_check
        %p748 = pneg %p632
      $region114: #{embed_enc_clf_forward.1} parent=11 // pred_check_branch
        %750 = sbr.rel (%p748) target = $region116
      $region115: #{embed_enc_clf_forward.1} parent=11 // pred_region
        _
      $region116: #{embed_enc_clf_forward.1} parent=11 // pred_fallthru
        _
    $region12: #{embed_enc_clf_forward.1} parent=5 // pred_fallthru
      _
    %p751 = scmp.lt.s32.totalorder %s34, 2
    // Predicated region
    $region117: #{embed_enc_clf_forward.1} parent=5 // pred_check
      %p752 = pneg %p751
    $region118: #{embed_enc_clf_forward.1} parent=5 // pred_check_branch
      %754 = sbr.rel (%p752) target = $region120
    $region119: #{embed_enc_clf_forward.1} parent=5 // pred_region
      // Predicated region
      $region121: #{embed_enc_clf_forward.1} parent=119 // pred_check
        %p755 = pneg %p54
      $region122: #{embed_enc_clf_forward.1} parent=119 // pred_check_branch
        %757 = sbr.rel (%p755) target = $region124
      $region123: #{embed_enc_clf_forward.1} parent=119 // pred_region
        %p758 = scmp.lt.s32.totalorder %s34, 1
        %s759 = scalar_select %p758, %s34, 1
        %s760 = smul.addr %s759, 16
        %s761 = smul.addr %s760, 8
        %s762 = scalar_lea.vmem %s0, %s761
      $region124: #{embed_enc_clf_forward.1} parent=119 // pred_fallthru
        _
      // Predicated region
      $region125: #{embed_enc_clf_forward.1} parent=119 // pred_check
        %p763 = pneg %p80
      $region126: #{embed_enc_clf_forward.1} parent=119 // pred_check_branch
        %765 = sbr.rel (%p763) target = $region128
      $region127: #{embed_enc_clf_forward.1} parent=119 // pred_region
        %s766 = smul.u32 4, %s34
        %p767 = scmp.lt.s32.totalorder %s766, 7
        %s768 = scalar_select %p767, %s766, 7
        %s769 = smul.addr %s768, 8
        %s770 = scalar_lea.vmem %s1, %s769
        %s771 = smul.u32 4, %s34
      $region128: #{embed_enc_clf_forward.1} parent=119 // pred_fallthru
        _
    $region120: #{embed_enc_clf_forward.1} parent=5 // pred_fallthru
      _
    %p772 = scmp.le.s32.totalorder 1, %s34
    %p773 = scmp.lt.s32.totalorder %s34, 3
    %p774 = pnand %p772, %p773
    %p775 = pneg %p774
    // Predicated region
    $region129: #{embed_enc_clf_forward.1} parent=5 // pred_check
      _
    $region130: #{embed_enc_clf_forward.1} parent=5 // pred_check_branch
      %777 = sbr.rel (%p774) target = $region132
    $region131: #{embed_enc_clf_forward.1} parent=5 // pred_region
      %s778 = ssub.s32 %s34, 1
      %p779 = scmp.lt.s32.totalorder %s39, 1
      %s780 = scalar_select %p779, %s39, 1
      %s781 = smul.addr %s780, 16
      %s782 = smul.addr %s781, 8
      %s783 = scalar_lea.vmem %s0, %s782
      %p784 = pneg %p60
      %p785 = pneg %p57
      %s786 = smul.u32 4, %s39
      %p787 = scmp.lt.s32.totalorder %s786, 7
      %s788 = scalar_select %p787, %s786, 7
      %s789 = smul.addr %s788, 8
      %s790 = scalar_lea.vmem %s1, %s789
      %p791 = pneg %p86
      %p792 = pneg %p83
      %p793 = pneg %p107
      %p794 = pneg %p104
      %p795 = pneg %p128
      %p796 = pneg %p125
      %p797 = pneg %p149
      %p798 = pneg %p146
      %p799 = pneg %p170
      %p800 = pneg %p167
      %p801 = pneg %p191
      %p802 = pneg %p188
      %p803 = pneg %p212
      %p804 = pneg %p209
      %p805 = pneg %p233
      %p806 = pneg %p230
      %p807 = pneg %p254
      %p808 = pneg %p251
      %p809 = pneg %p275
      %p810 = pneg %p272
      %p811 = pneg %p296
      %p812 = pneg %p293
      %p813 = pneg %p317
      %p814 = pneg %p314
      %p815 = pneg %p338
      %p816 = pneg %p335
      %p817 = pneg %p359
      %p818 = pneg %p356
      %p819 = pneg %p380
      %p820 = pneg %p377
      %p821 = pneg %p401
      %p822 = pneg %p398
      %p823 = pneg %p422
      %p824 = pneg %p419
      %p825 = pneg %p443
      %p826 = pneg %p440
      %p827 = pneg %p464
      %p828 = pneg %p461
      %p829 = pneg %p485
      %p830 = pneg %p482
      %p831 = pneg %p506
      %p832 = pneg %p503
      %p833 = pneg %p527
      %p834 = pneg %p524
      %p835 = pneg %p548
      %p836 = pneg %p545
      %p837 = pneg %p569
      %p838 = pneg %p566
      %p839 = pneg %p590
      %p840 = pneg %p587
      %p841 = pneg %p611
      %p842 = pneg %p608
      %p843 = pneg %p632
      %p844 = pneg %p629
      %p845 = pneg %p658
      %p846 = pneg %p655
      %p847 = scmp.lt.s32.totalorder %s39, 1
      %s848 = scalar_select %p847, %s39, 1
      %s849 = smul.addr %s848, 8
      %s850 = scalar_lea.vmem %s28, %s849
      %p851 = scmp.lt.s32.totalorder %s39, 1
      %s852 = scalar_select %p851, %s39, 1
      %s853 = smul.addr %s852, 16
      %s854 = smul.addr %s853, 8
      %s855 = scalar_lea.vmem %s0, %s854
      %s856 = smul.u32 4, %s39
      %p857 = scmp.lt.s32.totalorder %s856, 7
      %s858 = scalar_select %p857, %s856, 7
      %s859 = smul.addr %s858, 8
      %s860 = scalar_lea.vmem %s1, %s859
      %s861 = smul.u32 4, %s39
      %p862 = scmp.lt.s32.totalorder %s39, 1
      %s863 = scalar_select %p862, %s39, 1
      %s864 = smul.addr %s863, 8
      %s865 = scalar_lea.vmem %s28, %s864
      %v867 = vld [vmem:[%s855] sm:$0xff]
      %v868 = vld [vmem:[%s855 + $0x8] sm:$0xff]
      %v869 = vld [vmem:[%s855 + $0x10] sm:$0xff]
      %v870 = vld [vmem:[%s855 + $0x18] sm:$0xff]
      %v871 = vld [vmem:[%s855 + $0x20] sm:$0xff]
      %v872 = vld [vmem:[%s855 + $0x28] sm:$0xff]
      %v873 = vld [vmem:[%s855 + $0x30] sm:$0xff]
      %v874 = vld [vmem:[%s855 + $0x38] sm:$0xff]
      %v875 = vld [vmem:[%s855 + $0x40] sm:$0xff]
      %v876 = vld [vmem:[%s855 + $0x48] sm:$0xff]
      %v877 = vld [vmem:[%s855 + $0x50] sm:$0xff]
      %v878 = vld [vmem:[%s855 + $0x58] sm:$0xff]
      %v879 = vld [vmem:[%s855 + $0x60] sm:$0xff]
      %v880 = vld [vmem:[%s855 + $0x68] sm:$0xff]
      %v881 = vld [vmem:[%s855 + $0x70] sm:$0xff]
      %v882 = vld [vmem:[%s855 + $0x78] sm:$0xff]
      %v883 = vld [vmem:[%s3] sm:$0xf]
      %v884 = vld [vmem:[%s3 + $0x4] sm:$0xf]
      %v885 = vld [vmem:[%s3 + $0x8] sm:$0xf]
      %v886 = vld [vmem:[%s3 + $0xc] sm:$0xf]
      %v887 = vld [vmem:[%s3 + $0x10] sm:$0xf]
      %v888 = vld [vmem:[%s3 + $0x14] sm:$0xf]
      %v889 = vld [vmem:[%s3 + $0x18] sm:$0xf]
      %v890 = vld [vmem:[%s3 + $0x1c] sm:$0xf]
      %v891 = vld [vmem:[%s3 + $0x20] sm:$0xf]
      %v892 = vld [vmem:[%s3 + $0x24] sm:$0xf]
      %v893 = vld [vmem:[%s3 + $0x28] sm:$0xf]
      %v894 = vld [vmem:[%s3 + $0x2c] sm:$0xf]
      %v895 = vld [vmem:[%s3 + $0x30] sm:$0xf]
      %v896 = vld [vmem:[%s3 + $0x34] sm:$0xf]
      %v897 = vld [vmem:[%s3 + $0x38] sm:$0xf]
      %v898 = vld [vmem:[%s3 + $0x3c] sm:$0xf]
      %v899 = vpack.c.bf16 %v868, %v867
      %v900 = vpack.c.bf16 %v870, %v869
      %v901 = vpack.c.bf16 %v872, %v871
      %v902 = vpack.c.bf16 %v874, %v873
      %v903 = vpack.c.bf16 %v876, %v875
      %v904 = vpack.c.bf16 %v878, %v877
      %v905 = vpack.c.bf16 %v880, %v879
      %v906 = vpack.c.bf16 %v882, %v881
      %v907 = vld [vmem:[%s4] sm:$0x1]
      %v909 = vlaneseq
      %v910 = vshrl.u32 %v909, 7
      %v911 = vsub.s32 0, %v910
      %v912 = vrot.slane %v907, %v911
      %v930 = vunpack.c.l.b16 %v883
      %v931 = vunpack.c.l.b16 %v884
      %v932 = vunpack.c.l.b16 %v885
      %v933 = vunpack.c.l.b16 %v886
      %v934 = vunpack.c.l.b16 %v887
      %v935 = vunpack.c.l.b16 %v888
      %v936 = vunpack.c.l.b16 %v889
      %v937 = vunpack.c.l.b16 %v890
      %v938 = vunpack.c.l.b16 %v891
      %v939 = vunpack.c.l.b16 %v892
      %v940 = vunpack.c.l.b16 %v893
      %v941 = vunpack.c.l.b16 %v894
      %v942 = vunpack.c.l.b16 %v895
      %v943 = vunpack.c.l.b16 %v896
      %v944 = vunpack.c.l.b16 %v897
      %v945 = vunpack.c.l.b16 %v898
      %v946 = vpack.c.b16 %v931, %v930
      %v947 = vpack.c.b16 %v933, %v932
      %v948 = vpack.c.b16 %v935, %v934
      %v949 = vpack.c.b16 %v937, %v936
      %v950 = vpack.c.b16 %v939, %v938
      %v951 = vpack.c.b16 %v941, %v940
      %v952 = vpack.c.b16 %v943, %v942
      %v953 = vpack.c.b16 %v945, %v944
      %962 = vmatprep.subr.bf16.mxu0 0
      %963 = vmatpush1.bf16.msra.mxu0 %v946
      %964 = vmatprep.subr.bf16.mxu0 0
      %965 = vmatpush1.bf16.msra.mxu0 %v947
      %966 = vmatprep.subr.bf16.mxu0 0
      %967 = vmatpush1.bf16.msra.mxu0 %v948
      %968 = vmatprep.subr.bf16.mxu0 0
      %969 = vmatpush1.bf16.msra.mxu0 %v949
      %970 = vmatprep.subr.bf16.mxu0 0
      %971 = vmatpush1.bf16.msra.mxu0 %v950
      %972 = vmatprep.subr.bf16.mxu0 0
      %973 = vmatpush1.bf16.msra.mxu0 %v951
      %974 = vmatprep.subr.bf16.mxu0 0
      %975 = vmatpush1.bf16.msra.mxu0 %v952
      %976 = vmatprep.subr.bf16.mxu0 0
      %977 = vmatpush1.bf16.msra.mxu0 %v953
      %978 = vmatprep.subr.bf16.mxu0 0
      %979 = vmatpush1.bf16.msra.mxu0 0
      %980 = vmatprep.subr.bf16.mxu0 0
      %981 = vmatpush1.bf16.msra.mxu0 0
      %982 = vmatprep.subr.bf16.mxu0 0
      %983 = vmatpush1.bf16.msra.mxu0 0
      %984 = vmatprep.subr.bf16.mxu0 0
      %985 = vmatpush1.bf16.msra.mxu0 0
      %986 = vmatprep.subr.bf16.mxu0 0
      %987 = vmatpush1.bf16.msra.mxu0 0
      %988 = vmatprep.subr.bf16.mxu0 0
      %989 = vmatpush1.bf16.msra.mxu0 0
      %990 = vmatprep.subr.bf16.mxu0 0
      %991 = vmatpush1.bf16.msra.mxu0 0
      %992 = vmatprep.subr.bf16.mxu0 0
      %993 = vmatpush1.bf16.msra.mxu0 0
      %994 = vmatprep.mubr.bf16.mxu0 0
      %995 = vmatmul.mubr.bf16.gmra.mrb[0].mxu0 %v899
      %v996 = vpop.f32.mrb[0].mxu0
      %v997 = vadd.f32 %v912, %v996
      %v998 = vpop.f32.mrb[0].mxu0
      %v999 = vpop.f32.mrb[0].mxu0
      %v1000 = vadd.f32 %v912, %v999
      %v1001 = vpop.f32.mrb[0].mxu0
      %1002 = vmatprep.mubr.bf16.mxu0 0
      %1003 = vmatmul.mubr.bf16.gmra.mrb[0].mxu0 %v900
      %v1004 = vpop.f32.mrb[0].mxu0
      %v1005 = vadd.f32 %v912, %v1004
      %v1006 = vpop.f32.mrb[0].mxu0
      %v1007 = vpop.f32.mrb[0].mxu0
      %v1008 = vadd.f32 %v912, %v1007
      %v1009 = vpop.f32.mrb[0].mxu0
      %1010 = vmatprep.mubr.bf16.mxu0 0
      %1011 = vmatmul.mubr.bf16.gmra.mrb[0].mxu0 %v901
      %v1012 = vpop.f32.mrb[0].mxu0
      %v1013 = vadd.f32 %v912, %v1012
      %v1014 = vpop.f32.mrb[0].mxu0
      %v1015 = vpop.f32.mrb[0].mxu0
      %v1016 = vadd.f32 %v912, %v1015
      %v1017 = vpop.f32.mrb[0].mxu0
      %1018 = vmatprep.mubr.bf16.mxu0 0
      %1019 = vmatmul.mubr.bf16.gmra.mrb[0].mxu0 %v902
      %v1020 = vpop.f32.mrb[0].mxu0
      %v1021 = vadd.f32 %v912, %v1020
      %v1022 = vpop.f32.mrb[0].mxu0
      %v1023 = vpop.f32.mrb[0].mxu0
      %v1024 = vadd.f32 %v912, %v1023
      %v1025 = vpop.f32.mrb[0].mxu0
      %1026 = vmatprep.mubr.bf16.mxu0 0
      %1027 = vmatmul.mubr.bf16.gmra.mrb[0].mxu0 %v903
      %v1028 = vpop.f32.mrb[0].mxu0
      %v1029 = vadd.f32 %v912, %v1028
      %v1030 = vpop.f32.mrb[0].mxu0
      %v1031 = vpop.f32.mrb[0].mxu0
      %v1032 = vadd.f32 %v912, %v1031
      %v1033 = vpop.f32.mrb[0].mxu0
      %1034 = vmatprep.mubr.bf16.mxu0 0
      %1035 = vmatmul.mubr.bf16.gmra.mrb[0].mxu0 %v904
      %v1036 = vpop.f32.mrb[0].mxu0
      %v1037 = vadd.f32 %v912, %v1036
      %v1038 = vpop.f32.mrb[0].mxu0
      %v1039 = vpop.f32.mrb[0].mxu0
      %v1040 = vadd.f32 %v912, %v1039
      %v1041 = vpop.f32.mrb[0].mxu0
      %1042 = vmatprep.mubr.bf16.mxu0 0
      %1043 = vmatmul.mubr.bf16.gmra.mrb[0].mxu0 %v905
      %v1044 = vpop.f32.mrb[0].mxu0
      %v1045 = vadd.f32 %v912, %v1044
      %v1046 = vpop.f32.mrb[0].mxu0
      %v1047 = vpop.f32.mrb[0].mxu0
      %v1048 = vadd.f32 %v912, %v1047
      %v1049 = vpop.f32.mrb[0].mxu0
      %1050 = vmatprep.mubr.bf16.mxu0 0
      %1051 = vmatmul.mubr.bf16.gmra.mrb[0].mxu0 %v906
      %v1052 = vpop.f32.mrb[0].mxu0
      %v1053 = vadd.f32 %v912, %v1052
      %v1054 = vpop.f32.mrb[0].mxu0
      %v1055 = vpop.f32.mrb[0].mxu0
      %v1056 = vadd.f32 %v912, %v1055
      %v1057 = vpop.f32.mrb[0].mxu0
      %1058 = vdwg.mxu0
      %v1059 = vmax.f32 %v997, 0.0
      %v1060 = vmax.f32 %v1000, 0.0
      %v1061 = vmax.f32 %v1005, 0.0
      %v1062 = vmax.f32 %v1008, 0.0
      %v1063 = vmax.f32 %v1013, 0.0
      %v1064 = vmax.f32 %v1016, 0.0
      %v1065 = vmax.f32 %v1021, 0.0
      %v1066 = vmax.f32 %v1024, 0.0
      %v1067 = vmax.f32 %v1029, 0.0
      %v1068 = vmax.f32 %v1032, 0.0
      %v1069 = vmax.f32 %v1037, 0.0
      %v1070 = vmax.f32 %v1040, 0.0
      %v1071 = vmax.f32 %v1045, 0.0
      %v1072 = vmax.f32 %v1048, 0.0
      %v1073 = vmax.f32 %v1053, 0.0
      %v1074 = vmax.f32 %v1056, 0.0
      %v1075 = vmax.f32 %v1059, %v1063
      %v1076 = vmax.f32 %v1060, %v1064
      %v1077 = vmax.f32 %v1061, %v1065
      %v1078 = vmax.f32 %v1062, %v1066
      %v1079 = vmax.f32 %v1075, %v1067
      %v1080 = vmax.f32 %v1076, %v1068
      %v1081 = vmax.f32 %v1077, %v1069
      %v1082 = vmax.f32 %v1078, %v1070
      %v1083 = vmax.f32 %v1079, %v1071
      %v1084 = vmax.f32 %v1080, %v1072
      %v1085 = vmax.f32 %v1081, %v1073
      %v1086 = vmax.f32 %v1082, %v1074
      %v1087 = vld [vmem:[%s860] sm:$0xff]
      %v1088 = vld [vmem:[%s860 + $0x8] sm:$0xff]
      %v1089 = vld [vmem:[%s860 + $0x10] sm:$0xff]
      %v1090 = vld [vmem:[%s860 + $0x18] sm:$0xff]
      %v1091 = vadd.f32 %v1087, %v1083
      %v1092 = vadd.f32 %v1088, %v1084
      %v1093 = vadd.f32 %v1089, %v1085
      %v1094 = vadd.f32 %v1090, %v1086
      %v1095 = vld [vmem:[%s7] sm:$0xf]
      %v1096 = vld [vmem:[%s7 + $0x4] sm:$0xf]
      %v1097 = vld [vmem:[%s7 + $0x8] sm:$0xf]
      %v1098 = vld [vmem:[%s7 + $0xc] sm:$0xf]
      %v1099 = vld [vmem:[%s7 + $0x10] sm:$0xf]
      %v1100 = vld [vmem:[%s7 + $0x14] sm:$0xf]
      %v1101 = vld [vmem:[%s7 + $0x18] sm:$0xf]
      %v1102 = vld [vmem:[%s7 + $0x1c] sm:$0xf]
      %v1103 = vld [vmem:[%s7 + $0x20] sm:$0xf]
      %v1104 = vld [vmem:[%s7 + $0x24] sm:$0xf]
      %v1105 = vld [vmem:[%s7 + $0x28] sm:$0xf]
      %v1106 = vld [vmem:[%s7 + $0x2c] sm:$0xf]
      %v1107 = vld [vmem:[%s7 + $0x30] sm:$0xf]
      %v1108 = vld [vmem:[%s7 + $0x34] sm:$0xf]
      %v1109 = vld [vmem:[%s7 + $0x38] sm:$0xf]
      %v1110 = vld [vmem:[%s7 + $0x3c] sm:$0xf]
      %v1111 = vpack.c.bf16 %v1092, %v1091
      %v1112 = vpack.c.bf16 %v1094, %v1093
      %v1113 = vld [vmem:[%s8] sm:$0x1]
      %v1115 = vlaneseq
      %v1116 = vshrl.u32 %v1115, 7
      %v1117 = vsub.s32 0, %v1116
      %v1118 = vrot.slane %v1113, %v1117
      %v1136 = vunpack.c.l.b16 %v1095
      %v1137 = vunpack.c.l.b16 %v1096
      %v1138 = vunpack.c.l.b16 %v1097
      %v1139 = vunpack.c.l.b16 %v1098
      %v1140 = vunpack.c.l.b16 %v1099
      %v1141 = vunpack.c.l.b16 %v1100
      %v1142 = vunpack.c.l.b16 %v1101
      %v1143 = vunpack.c.l.b16 %v1102
      %v1144 = vunpack.c.l.b16 %v1103
      %v1145 = vunpack.c.l.b16 %v1104
      %v1146 = vunpack.c.l.b16 %v1105
      %v1147 = vunpack.c.l.b16 %v1106
      %v1148 = vunpack.c.l.b16 %v1107
      %v1149 = vunpack.c.l.b16 %v1108
      %v1150 = vunpack.c.l.b16 %v1109
      %v1151 = vunpack.c.l.b16 %v1110
      %v1152 = vpack.c.b16 %v1137, %v1136
      %v1153 = vpack.c.b16 %v1139, %v1138
      %v1154 = vpack.c.b16 %v1141, %v1140
      %v1155 = vpack.c.b16 %v1143, %v1142
      %v1156 = vpack.c.b16 %v1145, %v1144
      %v1157 = vpack.c.b16 %v1147, %v1146
      %v1158 = vpack.c.b16 %v1149, %v1148
      %v1159 = vpack.c.b16 %v1151, %v1150
      %1168 = vmatprep.subr.bf16.mxu0 0
      %1169 = vmatpush1.bf16.msra.mxu0 %v1152
      %1170 = vmatprep.subr.bf16.mxu0 0
      %1171 = vmatpush1.bf16.msra.mxu0 %v1153
      %1172 = vmatprep.subr.bf16.mxu0 0
      %1173 = vmatpush1.bf16.msra.mxu0 %v1154
      %1174 = vmatprep.subr.bf16.mxu0 0
      %1175 = vmatpush1.bf16.msra.mxu0 %v1155
      %1176 = vmatprep.subr.bf16.mxu0 0
      %1177 = vmatpush1.bf16.msra.mxu0 %v1156
      %1178 = vmatprep.subr.bf16.mxu0 0
      %1179 = vmatpush1.bf16.msra.mxu0 %v1157
      %1180 = vmatprep.subr.bf16.mxu0 0
      %1181 = vmatpush1.bf16.msra.mxu0 %v1158
      %1182 = vmatprep.subr.bf16.mxu0 0
      %1183 = vmatpush1.bf16.msra.mxu0 %v1159
      %1184 = vmatprep.subr.bf16.mxu0 0
      %1185 = vmatpush1.bf16.msra.mxu0 0
      %1186 = vmatprep.subr.bf16.mxu0 0
      %1187 = vmatpush1.bf16.msra.mxu0 0
      %1188 = vmatprep.subr.bf16.mxu0 0
      %1189 = vmatpush1.bf16.msra.mxu0 0
      %1190 = vmatprep.subr.bf16.mxu0 0
      %1191 = vmatpush1.bf16.msra.mxu0 0
      %1192 = vmatprep.subr.bf16.mxu0 0
      %1193 = vmatpush1.bf16.msra.mxu0 0
      %1194 = vmatprep.subr.bf16.mxu0 0
      %1195 = vmatpush1.bf16.msra.mxu0 0
      %1196 = vmatprep.subr.bf16.mxu0 0
      %1197 = vmatpush1.bf16.msra.mxu0 0
      %1198 = vmatprep.subr.bf16.mxu0 0
      %1199 = vmatpush1.bf16.msra.mxu0 0
      %1200 = vmatprep.mubr.bf16.mxu0 0
      %1201 = vmatmul.mubr.bf16.gmra.mrb[0].mxu0 %v1111
      %v1202 = vpop.f32.mrb[0].mxu0
      %v1203 = vadd.f32 %v1118, %v1202
      %v1204 = vpop.f32.mrb[0].mxu0
      %v1205 = vpop.f32.mrb[0].mxu0
      %v1206 = vadd.f32 %v1118, %v1205
      %v1207 = vpop.f32.mrb[0].mxu0
      %1208 = vmatprep.mubr.bf16.mxu0 0
      %1209 = vmatmul.mubr.bf16.gmra.mrb[0].mxu0 %v1112
      %v1210 = vpop.f32.mrb[0].mxu0
      %v1211 = vadd.f32 %v1118, %v1210
      %v1212 = vpop.f32.mrb[0].mxu0
      %v1213 = vpop.f32.mrb[0].mxu0
      %v1214 = vadd.f32 %v1118, %v1213
      %v1215 = vpop.f32.mrb[0].mxu0
      %1216 = vdwg.mxu0
      %v1217 = vsub.f32 0.0, %v1203
      %v1218 = vsub.f32 0.0, %v1206
      %v1219 = vsub.f32 0.0, %v1211
      %v1220 = vsub.f32 0.0, %v1214
      %v1221 = vmul.f32 %v1217, 1.442695
      %v1222 = vpow.pop %v1221
      %v1223 = vmul.f32 %v1218, 1.442695
      %v1224 = vpow.pop %v1223
      %v1225 = vmul.f32 %v1219, 1.442695
      %v1226 = vpow.pop %v1225
      %v1227 = vmul.f32 %v1220, 1.442695
      %v1228 = vpow.pop %v1227
      %v1229 = vadd.f32 %v1222, 1.0
      %v1230 = vadd.f32 %v1224, 1.0
      %v1231 = vadd.f32 %v1226, 1.0
      %v1232 = vadd.f32 %v1228, 1.0
      %v1233 = vrcp.pop %v1229
      %v1234 = vmul.f32 1.0, %v1233
      %v1235 = vrcp.pop %v1230
      %v1236 = vmul.f32 1.0, %v1235
      %v1237 = vrcp.pop %v1231
      %v1238 = vmul.f32 1.0, %v1237
      %v1239 = vrcp.pop %v1232
      %v1240 = vmul.f32 1.0, %v1239
      %v1241 = vld [vmem:[%s5] sm:$0xf]
      %v1242 = vld [vmem:[%s5 + $0x4] sm:$0xf]
      %v1243 = vld [vmem:[%s5 + $0x8] sm:$0xf]
      %v1244 = vld [vmem:[%s5 + $0xc] sm:$0xf]
      %v1245 = vld [vmem:[%s5 + $0x10] sm:$0xf]
      %v1246 = vld [vmem:[%s5 + $0x14] sm:$0xf]
      %v1247 = vld [vmem:[%s5 + $0x18] sm:$0xf]
      %v1248 = vld [vmem:[%s5 + $0x1c] sm:$0xf]
      %v1249 = vld [vmem:[%s5 + $0x20] sm:$0xf]
      %v1250 = vld [vmem:[%s5 + $0x24] sm:$0xf]
      %v1251 = vld [vmem:[%s5 + $0x28] sm:$0xf]
      %v1252 = vld [vmem:[%s5 + $0x2c] sm:$0xf]
      %v1253 = vld [vmem:[%s5 + $0x30] sm:$0xf]
      %v1254 = vld [vmem:[%s5 + $0x34] sm:$0xf]
      %v1255 = vld [vmem:[%s5 + $0x38] sm:$0xf]
      %v1256 = vld [vmem:[%s5 + $0x3c] sm:$0xf]
      %v1257 = vld [vmem:[%s6] sm:$0x1]
      %v1259 = vlaneseq
      %v1260 = vshrl.u32 %v1259, 7
      %v1261 = vsub.s32 0, %v1260
      %v1262 = vrot.slane %v1257, %v1261
      %v1280 = vunpack.c.l.b16 %v1241
      %v1281 = vunpack.c.l.b16 %v1242
      %v1282 = vunpack.c.l.b16 %v1243
      %v1283 = vunpack.c.l.b16 %v1244
      %v1284 = vunpack.c.l.b16 %v1245
      %v1285 = vunpack.c.l.b16 %v1246
      %v1286 = vunpack.c.l.b16 %v1247
      %v1287 = vunpack.c.l.b16 %v1248
      %v1288 = vunpack.c.l.b16 %v1249
      %v1289 = vunpack.c.l.b16 %v1250
      %v1290 = vunpack.c.l.b16 %v1251
      %v1291 = vunpack.c.l.b16 %v1252
      %v1292 = vunpack.c.l.b16 %v1253
      %v1293 = vunpack.c.l.b16 %v1254
      %v1294 = vunpack.c.l.b16 %v1255
      %v1295 = vunpack.c.l.b16 %v1256
      %v1296 = vpack.c.b16 %v1281, %v1280
      %v1297 = vpack.c.b16 %v1283, %v1282
      %v1298 = vpack.c.b16 %v1285, %v1284
      %v1299 = vpack.c.b16 %v1287, %v1286
      %v1300 = vpack.c.b16 %v1289, %v1288
      %v1301 = vpack.c.b16 %v1291, %v1290
      %v1302 = vpack.c.b16 %v1293, %v1292
      %v1303 = vpack.c.b16 %v1295, %v1294
      %1312 = vmatprep.subr.bf16.mxu0 0
      %1313 = vmatpush1.bf16.msra.mxu0 %v1296
      %1314 = vmatprep.subr.bf16.mxu0 0
      %1315 = vmatpush1.bf16.msra.mxu0 %v1297
      %1316 = vmatprep.subr.bf16.mxu0 0
      %1317 = vmatpush1.bf16.msra.mxu0 %v1298
      %1318 = vmatprep.subr.bf16.mxu0 0
      %1319 = vmatpush1.bf16.msra.mxu0 %v1299
      %1320 = vmatprep.subr.bf16.mxu0 0
      %1321 = vmatpush1.bf16.msra.mxu0 %v1300
      %1322 = vmatprep.subr.bf16.mxu0 0
      %1323 = vmatpush1.bf16.msra.mxu0 %v1301
      %1324 = vmatprep.subr.bf16.mxu0 0
      %1325 = vmatpush1.bf16.msra.mxu0 %v1302
      %1326 = vmatprep.subr.bf16.mxu0 0
      %1327 = vmatpush1.bf16.msra.mxu0 %v1303
      %1328 = vmatprep.subr.bf16.mxu0 0
      %1329 = vmatpush1.bf16.msra.mxu0 0
      %1330 = vmatprep.subr.bf16.mxu0 0
      %1331 = vmatpush1.bf16.msra.mxu0 0
      %1332 = vmatprep.subr.bf16.mxu0 0
      %1333 = vmatpush1.bf16.msra.mxu0 0
      %1334 = vmatprep.subr.bf16.mxu0 0
      %1335 = vmatpush1.bf16.msra.mxu0 0
      %1336 = vmatprep.subr.bf16.mxu0 0
      %1337 = vmatpush1.bf16.msra.mxu0 0
      %1338 = vmatprep.subr.bf16.mxu0 0
      %1339 = vmatpush1.bf16.msra.mxu0 0
      %1340 = vmatprep.subr.bf16.mxu0 0
      %1341 = vmatpush1.bf16.msra.mxu0 0
      %1342 = vmatprep.subr.bf16.mxu0 0
      %1343 = vmatpush1.bf16.msra.mxu0 0
      %1344 = vmatprep.mubr.bf16.mxu0 0
      %1345 = vmatmul.mubr.bf16.gmra.mrb[0].mxu0 %v1111
      %v1346 = vpop.f32.mrb[0].mxu0
      %v1347 = vadd.f32 %v1262, %v1346
      %v1348 = vpop.f32.mrb[0].mxu0
      %v1349 = vpop.f32.mrb[0].mxu0
      %v1350 = vadd.f32 %v1262, %v1349
      %v1351 = vpop.f32.mrb[0].mxu0
      %1352 = vmatprep.mubr.bf16.mxu0 0
      %1353 = vmatmul.mubr.bf16.gmra.mrb[0].mxu0 %v1112
      %v1354 = vpop.f32.mrb[0].mxu0
      %v1355 = vadd.f32 %v1262, %v1354
      %v1356 = vpop.f32.mrb[0].mxu0
      %v1357 = vpop.f32.mrb[0].mxu0
      %v1358 = vadd.f32 %v1262, %v1357
      %v1359 = vpop.f32.mrb[0].mxu0
      %1360 = vdwg.mxu0
      %v1361 = vmax.f32 %v1347, 0.0
      %v1362 = vmax.f32 %v1350, 0.0
      %v1363 = vmax.f32 %v1355, 0.0
      %v1364 = vmax.f32 %v1358, 0.0
      %v1365 = vmul.f32 %v1234, %v1361
      %v1366 = vmul.f32 %v1236, %v1362
      %v1367 = vmul.f32 %v1238, %v1363
      %v1368 = vmul.f32 %v1240, %v1364
      %v1369 = vsub.f32 1.0, %v1234
      %v1370 = vsub.f32 1.0, %v1236
      %v1371 = vsub.f32 1.0, %v1238
      %v1372 = vsub.f32 1.0, %v1240
      %v1373 = vmul.f32 %v1369, %v1091
      %v1374 = vmul.f32 %v1370, %v1092
      %v1375 = vmul.f32 %v1371, %v1093
      %v1376 = vmul.f32 %v1372, %v1094
      %v1377 = vadd.f32 %v1365, %v1373
      %v1378 = vadd.f32 %v1366, %v1374
      %v1379 = vadd.f32 %v1367, %v1375
      %v1380 = vadd.f32 %v1368, %v1376
      %s1381 = scalar_lea.vmem %s7, 64
      %v1382 = vld [vmem:[%s1381] sm:$0xf]
      %v1383 = vld [vmem:[%s1381 + $0x4] sm:$0xf]
      %v1384 = vld [vmem:[%s1381 + $0x8] sm:$0xf]
      %v1385 = vld [vmem:[%s1381 + $0xc] sm:$0xf]
      %v1386 = vld [vmem:[%s1381 + $0x10] sm:$0xf]
      %v1387 = vld [vmem:[%s1381 + $0x14] sm:$0xf]
      %v1388 = vld [vmem:[%s1381 + $0x18] sm:$0xf]
      %v1389 = vld [vmem:[%s1381 + $0x1c] sm:$0xf]
      %v1390 = vld [vmem:[%s1381 + $0x20] sm:$0xf]
      %v1391 = vld [vmem:[%s1381 + $0x24] sm:$0xf]
      %v1392 = vld [vmem:[%s1381 + $0x28] sm:$0xf]
      %v1393 = vld [vmem:[%s1381 + $0x2c] sm:$0xf]
      %v1394 = vld [vmem:[%s1381 + $0x30] sm:$0xf]
      %v1395 = vld [vmem:[%s1381 + $0x34] sm:$0xf]
      %v1396 = vld [vmem:[%s1381 + $0x38] sm:$0xf]
      %v1397 = vld [vmem:[%s1381 + $0x3c] sm:$0xf]
      %v1398 = vpack.c.bf16 %v1378, %v1377
      %v1399 = vpack.c.bf16 %v1380, %v1379
      %s1400 = scalar_lea.vmem %s8, 1
      %v1401 = vld [vmem:[%s1400] sm:$0x1]
      %v1403 = vlaneseq
      %v1404 = vshrl.u32 %v1403, 7
      %v1405 = vsub.s32 0, %v1404
      %v1406 = vrot.slane %v1401, %v1405
      %v1424 = vunpack.c.l.b16 %v1382
      %v1425 = vunpack.c.l.b16 %v1383
      %v1426 = vunpack.c.l.b16 %v1384
      %v1427 = vunpack.c.l.b16 %v1385
      %v1428 = vunpack.c.l.b16 %v1386
      %v1429 = vunpack.c.l.b16 %v1387
      %v1430 = vunpack.c.l.b16 %v1388
      %v1431 = vunpack.c.l.b16 %v1389
      %v1432 = vunpack.c.l.b16 %v1390
      %v1433 = vunpack.c.l.b16 %v1391
      %v1434 = vunpack.c.l.b16 %v1392
      %v1435 = vunpack.c.l.b16 %v1393
      %v1436 = vunpack.c.l.b16 %v1394
      %v1437 = vunpack.c.l.b16 %v1395
      %v1438 = vunpack.c.l.b16 %v1396
      %v1439 = vunpack.c.l.b16 %v1397
      %v1440 = vpack.c.b16 %v1425, %v1424
      %v1441 = vpack.c.b16 %v1427, %v1426
      %v1442 = vpack.c.b16 %v1429, %v1428
      %v1443 = vpack.c.b16 %v1431, %v1430
      %v1444 = vpack.c.b16 %v1433, %v1432
      %v1445 = vpack.c.b16 %v1435, %v1434
      %v1446 = vpack.c.b16 %v1437, %v1436
      %v1447 = vpack.c.b16 %v1439, %v1438
      %1456 = vmatprep.subr.bf16.mxu0 0
      %1457 = vmatpush1.bf16.msra.mxu0 %v1440
      %1458 = vmatprep.subr.bf16.mxu0 0
      %1459 = vmatpush1.bf16.msra.mxu0 %v1441
      %1460 = vmatprep.subr.bf16.mxu0 0
      %1461 = vmatpush1.bf16.msra.mxu0 %v1442
      %1462 = vmatprep.subr.bf16.mxu0 0
      %1463 = vmatpush1.bf16.msra.mxu0 %v1443
      %1464 = vmatprep.subr.bf16.mxu0 0
      %1465 = vmatpush1.bf16.msra.mxu0 %v1444
      %1466 = vmatprep.subr.bf16.mxu0 0
      %1467 = vmatpush1.bf16.msra.mxu0 %v1445
      %1468 = vmatprep.subr.bf16.mxu0 0
      %1469 = vmatpush1.bf16.msra.mxu0 %v1446
      %1470 = vmatprep.subr.bf16.mxu0 0
      %1471 = vmatpush1.bf16.msra.mxu0 %v1447
      %1472 = vmatprep.subr.bf16.mxu0 0
      %1473 = vmatpush1.bf16.msra.mxu0 0
      %1474 = vmatprep.subr.bf16.mxu0 0
      %1475 = vmatpush1.bf16.msra.mxu0 0
      %1476 = vmatprep.subr.bf16.mxu0 0
      %1477 = vmatpush1.bf16.msra.mxu0 0
      %1478 = vmatprep.subr.bf16.mxu0 0
      %1479 = vmatpush1.bf16.msra.mxu0 0
      %1480 = vmatprep.subr.bf16.mxu0 0
      %1481 = vmatpush1.bf16.msra.mxu0 0
      %1482 = vmatprep.subr.bf16.mxu0 0
      %1483 = vmatpush1.bf16.msra.mxu0 0
      %1484 = vmatprep.subr.bf16.mxu0 0
      %1485 = vmatpush1.bf16.msra.mxu0 0
      %1486 = vmatprep.subr.bf16.mxu0 0
      %1487 = vmatpush1.bf16.msra.mxu0 0
      %1488 = vmatprep.mubr.bf16.mxu0 0
      %1489 = vmatmul.mubr.bf16.gmra.mrb[0].mxu0 %v1398
      %v1490 = vpop.f32.mrb[0].mxu0
      %v1491 = vadd.f32 %v1406, %v1490
      %v1492 = vpop.f32.mrb[0].mxu0
      %v1493 = vpop.f32.mrb[0].mxu0
      %v1494 = vadd.f32 %v1406, %v1493
      %v1495 = vpop.f32.mrb[0].mxu0
      %1496 = vmatprep.mubr.bf16.mxu0 0
      %1497 = vmatmul.mubr.bf16.gmra.mrb[0].mxu0 %v1399
      %v1498 = vpop.f32.mrb[0].mxu0
      %v1499 = vadd.f32 %v1406, %v1498
      %v1500 = vpop.f32.mrb[0].mxu0
      %v1501 = vpop.f32.mrb[0].mxu0
      %v1502 = vadd.f32 %v1406, %v1501
      %v1503 = vpop.f32.mrb[0].mxu0
      %1504 = vdwg.mxu0
      %v1505 = vsub.f32 0.0, %v1491
      %v1506 = vsub.f32 0.0, %v1494
      %v1507 = vsub.f32 0.0, %v1499
      %v1508 = vsub.f32 0.0, %v1502
      %v1509 = vmul.f32 %v1505, 1.442695
      %v1510 = vpow.pop %v1509
      %v1511 = vmul.f32 %v1506, 1.442695
      %v1512 = vpow.pop %v1511
      %v1513 = vmul.f32 %v1507, 1.442695
      %v1514 = vpow.pop %v1513
      %v1515 = vmul.f32 %v1508, 1.442695
      %v1516 = vpow.pop %v1515
      %v1517 = vadd.f32 %v1510, 1.0
      %v1518 = vadd.f32 %v1512, 1.0
      %v1519 = vadd.f32 %v1514, 1.0
      %v1520 = vadd.f32 %v1516, 1.0
      %v1521 = vrcp.pop %v1517
      %v1522 = vmul.f32 1.0, %v1521
      %v1523 = vrcp.pop %v1518
      %v1524 = vmul.f32 1.0, %v1523
      %v1525 = vrcp.pop %v1519
      %v1526 = vmul.f32 1.0, %v1525
      %v1527 = vrcp.pop %v1520
      %v1528 = vmul.f32 1.0, %v1527
      %s1529 = scalar_lea.vmem %s5, 64
      %v1530 = vld [vmem:[%s1529] sm:$0xf]
      %v1531 = vld [vmem:[%s1529 + $0x4] sm:$0xf]
      %v1532 = vld [vmem:[%s1529 + $0x8] sm:$0xf]
      %v1533 = vld [vmem:[%s1529 + $0xc] sm:$0xf]
      %v1534 = vld [vmem:[%s1529 + $0x10] sm:$0xf]
      %v1535 = vld [vmem:[%s1529 + $0x14] sm:$0xf]
      %v1536 = vld [vmem:[%s1529 + $0x18] sm:$0xf]
      %v1537 = vld [vmem:[%s1529 + $0x1c] sm:$0xf]
      %v1538 = vld [vmem:[%s1529 + $0x20] sm:$0xf]
      %v1539 = vld [vmem:[%s1529 + $0x24] sm:$0xf]
      %v1540 = vld [vmem:[%s1529 + $0x28] sm:$0xf]
      %v1541 = vld [vmem:[%s1529 + $0x2c] sm:$0xf]
      %v1542 = vld [vmem:[%s1529 + $0x30] sm:$0xf]
      %v1543 = vld [vmem:[%s1529 + $0x34] sm:$0xf]
      %v1544 = vld [vmem:[%s1529 + $0x38] sm:$0xf]
      %v1545 = vld [vmem:[%s1529 + $0x3c] sm:$0xf]
      %s1546 = scalar_lea.vmem %s6, 1
      %v1547 = vld [vmem:[%s1546] sm:$0x1]
      %v1549 = vlaneseq
      %v1550 = vshrl.u32 %v1549, 7
      %v1551 = vsub.s32 0, %v1550
      %v1552 = vrot.slane %v1547, %v1551
      %v1570 = vunpack.c.l.b16 %v1530
      %v1571 = vunpack.c.l.b16 %v1531
      %v1572 = vunpack.c.l.b16 %v1532
      %v1573 = vunpack.c.l.b16 %v1533
      %v1574 = vunpack.c.l.b16 %v1534
      %v1575 = vunpack.c.l.b16 %v1535
      %v1576 = vunpack.c.l.b16 %v1536
      %v1577 = vunpack.c.l.b16 %v1537
      %v1578 = vunpack.c.l.b16 %v1538
      %v1579 = vunpack.c.l.b16 %v1539
      %v1580 = vunpack.c.l.b16 %v1540
      %v1581 = vunpack.c.l.b16 %v1541
      %v1582 = vunpack.c.l.b16 %v1542
      %v1583 = vunpack.c.l.b16 %v1543
      %v1584 = vunpack.c.l.b16 %v1544
      %v1585 = vunpack.c.l.b16 %v1545
      %v1586 = vpack.c.b16 %v1571, %v1570
      %v1587 = vpack.c.b16 %v1573, %v1572
      %v1588 = vpack.c.b16 %v1575, %v1574
      %v1589 = vpack.c.b16 %v1577, %v1576
      %v1590 = vpack.c.b16 %v1579, %v1578
      %v1591 = vpack.c.b16 %v1581, %v1580
      %v1592 = vpack.c.b16 %v1583, %v1582
      %v1593 = vpack.c.b16 %v1585, %v1584
      %1602 = vmatprep.subr.bf16.mxu0 0
      %1603 = vmatpush1.bf16.msra.mxu0 %v1586
      %1604 = vmatprep.subr.bf16.mxu0 0
      %1605 = vmatpush1.bf16.msra.mxu0 %v1587
      %1606 = vmatprep.subr.bf16.mxu0 0
      %1607 = vmatpush1.bf16.msra.mxu0 %v1588
      %1608 = vmatprep.subr.bf16.mxu0 0
      %1609 = vmatpush1.bf16.msra.mxu0 %v1589
      %1610 = vmatprep.subr.bf16.mxu0 0
      %1611 = vmatpush1.bf16.msra.mxu0 %v1590
      %1612 = vmatprep.subr.bf16.mxu0 0
      %1613 = vmatpush1.bf16.msra.mxu0 %v1591
      %1614 = vmatprep.subr.bf16.mxu0 0
      %1615 = vmatpush1.bf16.msra.mxu0 %v1592
      %1616 = vmatprep.subr.bf16.mxu0 0
      %1617 = vmatpush1.bf16.msra.mxu0 %v1593
      %1618 = vmatprep.subr.bf16.mxu0 0
      %1619 = vmatpush1.bf16.msra.mxu0 0
      %1620 = vmatprep.subr.bf16.mxu0 0
      %1621 = vmatpush1.bf16.msra.mxu0 0
      %1622 = vmatprep.subr.bf16.mxu0 0
      %1623 = vmatpush1.bf16.msra.mxu0 0
      %1624 = vmatprep.subr.bf16.mxu0 0
      %1625 = vmatpush1.bf16.msra.mxu0 0
      %1626 = vmatprep.subr.bf16.mxu0 0
      %1627 = vmatpush1.bf16.msra.mxu0 0
      %1628 = vmatprep.subr.bf16.mxu0 0
      %1629 = vmatpush1.bf16.msra.mxu0 0
      %1630 = vmatprep.subr.bf16.mxu0 0
      %1631 = vmatpush1.bf16.msra.mxu0 0
      %1632 = vmatprep.subr.bf16.mxu0 0
      %1633 = vmatpush1.bf16.msra.mxu0 0
      %1634 = vmatprep.mubr.bf16.mxu0 0
      %1635 = vmatmul.mubr.bf16.gmra.mrb[0].mxu0 %v1398
      %v1636 = vpop.f32.mrb[0].mxu0
      %v1637 = vadd.f32 %v1552, %v1636
      %v1638 = vpop.f32.mrb[0].mxu0
      %v1639 = vpop.f32.mrb[0].mxu0
      %v1640 = vadd.f32 %v1552, %v1639
      %v1641 = vpop.f32.mrb[0].mxu0
      %1642 = vmatprep.mubr.bf16.mxu0 0
      %1643 = vmatmul.mubr.bf16.gmra.mrb[0].mxu0 %v1399
      %v1644 = vpop.f32.mrb[0].mxu0
      %v1645 = vadd.f32 %v1552, %v1644
      %v1646 = vpop.f32.mrb[0].mxu0
      %v1647 = vpop.f32.mrb[0].mxu0
      %v1648 = vadd.f32 %v1552, %v1647
      %v1649 = vpop.f32.mrb[0].mxu0
      %1650 = vdwg.mxu0
      %v1651 = vmax.f32 %v1637, 0.0
      %v1652 = vmax.f32 %v1640, 0.0
      %v1653 = vmax.f32 %v1645, 0.0
      %v1654 = vmax.f32 %v1648, 0.0
      %v1655 = vmul.f32 %v1522, %v1651
      %v1656 = vmul.f32 %v1524, %v1652
      %v1657 = vmul.f32 %v1526, %v1653
      %v1658 = vmul.f32 %v1528, %v1654
      %v1659 = vsub.f32 1.0, %v1522
      %v1660 = vsub.f32 1.0, %v1524
      %v1661 = vsub.f32 1.0, %v1526
      %v1662 = vsub.f32 1.0, %v1528
      %v1663 = vmul.f32 %v1659, %v1377
      %v1664 = vmul.f32 %v1660, %v1378
      %v1665 = vmul.f32 %v1661, %v1379
      %v1666 = vmul.f32 %v1662, %v1380
      %v1667 = vadd.f32 %v1655, %v1663
      %v1668 = vadd.f32 %v1656, %v1664
      %v1669 = vadd.f32 %v1657, %v1665
      %v1670 = vadd.f32 %v1658, %v1666
      %v1671 = vld [vmem:[%s9] sm:$0xf]
      %v1672 = vld [vmem:[%s9 + $0x4] sm:$0xf]
      %v1673 = vld [vmem:[%s9 + $0x8] sm:$0xf]
      %v1674 = vld [vmem:[%s9 + $0xc] sm:$0xf]
      %v1675 = vld [vmem:[%s9 + $0x10] sm:$0xf]
      %v1676 = vld [vmem:[%s9 + $0x14] sm:$0xf]
      %v1677 = vld [vmem:[%s9 + $0x18] sm:$0xf]
      %v1678 = vld [vmem:[%s9 + $0x1c] sm:$0xf]
      %v1679 = vld [vmem:[%s9 + $0x20] sm:$0xf]
      %v1680 = vld [vmem:[%s9 + $0x24] sm:$0xf]
      %v1681 = vld [vmem:[%s9 + $0x28] sm:$0xf]
      %v1682 = vld [vmem:[%s9 + $0x2c] sm:$0xf]
      %v1683 = vld [vmem:[%s9 + $0x30] sm:$0xf]
      %v1684 = vld [vmem:[%s9 + $0x34] sm:$0xf]
      %v1685 = vld [vmem:[%s9 + $0x38] sm:$0xf]
      %v1686 = vld [vmem:[%s9 + $0x3c] sm:$0xf]
      %v1687 = vpack.c.bf16 %v1668, %v1667
      %v1688 = vpack.c.bf16 %v1670, %v1669
      %v1705 = vunpack.c.l.b16 %v1671
      %v1706 = vunpack.c.l.b16 %v1672
      %v1707 = vunpack.c.l.b16 %v1673
      %v1708 = vunpack.c.l.b16 %v1674
      %v1709 = vunpack.c.l.b16 %v1675
      %v1710 = vunpack.c.l.b16 %v1676
      %v1711 = vunpack.c.l.b16 %v1677
      %v1712 = vunpack.c.l.b16 %v1678
      %v1713 = vunpack.c.l.b16 %v1679
      %v1714 = vunpack.c.l.b16 %v1680
      %v1715 = vunpack.c.l.b16 %v1681
      %v1716 = vunpack.c.l.b16 %v1682
      %v1717 = vunpack.c.l.b16 %v1683
      %v1718 = vunpack.c.l.b16 %v1684
      %v1719 = vunpack.c.l.b16 %v1685
      %v1720 = vunpack.c.l.b16 %v1686
      %v1721 = vpack.c.b16 %v1706, %v1705
      %v1722 = vpack.c.b16 %v1708, %v1707
      %v1723 = vpack.c.b16 %v1710, %v1709
      %v1724 = vpack.c.b16 %v1712, %v1711
      %v1725 = vpack.c.b16 %v1714, %v1713
      %v1726 = vpack.c.b16 %v1716, %v1715
      %v1727 = vpack.c.b16 %v1718, %v1717
      %v1728 = vpack.c.b16 %v1720, %v1719
      %1737 = vmatprep.subr.bf16.mxu0 0
      %1738 = vmatpush1.bf16.msra.mxu0 %v1721
      %1739 = vmatprep.subr.bf16.mxu0 0
      %1740 = vmatpush1.bf16.msra.mxu0 %v1722
      %1741 = vmatprep.subr.bf16.mxu0 0
      %1742 = vmatpush1.bf16.msra.mxu0 %v1723
      %1743 = vmatprep.subr.bf16.mxu0 0
      %1744 = vmatpush1.bf16.msra.mxu0 %v1724
      %1745 = vmatprep.subr.bf16.mxu0 0
      %1746 = vmatpush1.bf16.msra.mxu0 %v1725
      %1747 = vmatprep.subr.bf16.mxu0 0
      %1748 = vmatpush1.bf16.msra.mxu0 %v1726
      %1749 = vmatprep.subr.bf16.mxu0 0
      %1750 = vmatpush1.bf16.msra.mxu0 %v1727
      %1751 = vmatprep.subr.bf16.mxu0 0
      %1752 = vmatpush1.bf16.msra.mxu0 %v1728
      %1753 = vmatprep.subr.bf16.mxu0 0
      %1754 = vmatpush1.bf16.msra.mxu0 0
      %1755 = vmatprep.subr.bf16.mxu0 0
      %1756 = vmatpush1.bf16.msra.mxu0 0
      %1757 = vmatprep.subr.bf16.mxu0 0
      %1758 = vmatpush1.bf16.msra.mxu0 0
      %1759 = vmatprep.subr.bf16.mxu0 0
      %1760 = vmatpush1.bf16.msra.mxu0 0
      %1761 = vmatprep.subr.bf16.mxu0 0
      %1762 = vmatpush1.bf16.msra.mxu0 0
      %1763 = vmatprep.subr.bf16.mxu0 0
      %1764 = vmatpush1.bf16.msra.mxu0 0
      %1765 = vmatprep.subr.bf16.mxu0 0
      %1766 = vmatpush1.bf16.msra.mxu0 0
      %1767 = vmatprep.subr.bf16.mxu0 0
      %1768 = vmatpush1.bf16.msra.mxu0 0
      %1769 = vmatprep.mubr.bf16.mxu0 0
      %1770 = vmatmul.mubr.bf16.gmra.mrb[0].mxu0 %v1687
      %v1771 = vpop.f32.mrb[0].mxu0
      %v1772 = vadd.f32 0.0, %v1771
      %v1773 = vpop.f32.mrb[0].mxu0
      %v1774 = vpop.f32.mrb[0].mxu0
      %v1775 = vadd.f32 0.0, %v1774
      %v1776 = vpop.f32.mrb[0].mxu0
      %1777 = vmatprep.mubr.bf16.mxu0 0
      %1778 = vmatmul.mubr.bf16.gmra.mrb[0].mxu0 %v1688
      %v1779 = vpop.f32.mrb[0].mxu0
      %v1780 = vadd.f32 0.0, %v1779
      %v1781 = vpop.f32.mrb[0].mxu0
      %v1782 = vpop.f32.mrb[0].mxu0
      %v1783 = vadd.f32 0.0, %v1782
      %v1784 = vpop.f32.mrb[0].mxu0
      %1785 = vdwg.mxu0
      %v1786 = vld [vmem:[%s2] sm:$0xff]
      %v1787 = vld [vmem:[%s2 + $0x8] sm:$0xff]
      %v1788 = vld [vmem:[%s2 + $0x10] sm:$0xff]
      %v1789 = vld [vmem:[%s2 + $0x18] sm:$0xff]
      %v1790 = vld [vmem:[%s2 + $0x20] sm:$0xff]
      %v1791 = vld [vmem:[%s2 + $0x28] sm:$0xff]
      %v1792 = vld [vmem:[%s2 + $0x30] sm:$0xff]
      %v1793 = vld [vmem:[%s2 + $0x38] sm:$0xff]
      %v1794 = vld [vmem:[%s2 + $0x40] sm:$0xff]
      %v1795 = vld [vmem:[%s2 + $0x48] sm:$0xff]
      %v1796 = vld [vmem:[%s2 + $0x50] sm:$0xff]
      %v1797 = vld [vmem:[%s2 + $0x58] sm:$0xff]
      %v1798 = vld [vmem:[%s2 + $0x60] sm:$0xff]
      %v1799 = vld [vmem:[%s2 + $0x68] sm:$0xff]
      %v1800 = vld [vmem:[%s2 + $0x70] sm:$0xff]
      %v1801 = vld [vmem:[%s2 + $0x78] sm:$0xff]
      %v1802 = vld [vmem:[%s2 + $0x80] sm:$0xff]
      %v1803 = vld [vmem:[%s2 + $0x88] sm:$0xff]
      %v1804 = vld [vmem:[%s2 + $0x90] sm:$0xff]
      %v1805 = vld [vmem:[%s2 + $0x98] sm:$0xff]
      %v1806 = vld [vmem:[%s2 + $0xa0] sm:$0xff]
      %v1807 = vld [vmem:[%s2 + $0xa8] sm:$0xff]
      %v1808 = vld [vmem:[%s2 + $0xb0] sm:$0xff]
      %v1809 = vld [vmem:[%s2 + $0xb8] sm:$0xff]
      %v1810 = vld [vmem:[%s2 + $0xc0] sm:$0xff]
      %v1811 = vld [vmem:[%s2 + $0xc8] sm:$0xff]
      %v1812 = vld [vmem:[%s2 + $0xd0] sm:$0xff]
      %v1813 = vld [vmem:[%s2 + $0xd8] sm:$0xff]
      %v1814 = vld [vmem:[%s10] sm:$0x1]
      %v1815 = vld [vmem:[%s11] sm:$0x1]
      %1816 = vadd.xlane.f32.xlu0 %v1772
      %v1817 = vpop.xlane.xlu0 %1816
      %1818 = vadd.xlane.f32.xlu0 %v1775
      %v1819 = vpop.xlane.xlu0 %1818
      %1820 = vadd.xlane.f32.xlu0 %v1780
      %v1821 = vpop.xlane.xlu0 %1820
      %1822 = vadd.xlane.f32.xlu0 %v1783
      %v1823 = vpop.xlane.xlu0 %1822
      %v1824 = vrcp.pop 128.0
      %v1825 = vmul.f32 %v1817, %v1824
      %v1826 = vmul.f32 %v1819, %v1824
      %v1827 = vmul.f32 %v1821, %v1824
      %v1828 = vmul.f32 %v1823, %v1824
      %v1829 = vsub.f32 %v1772, %v1825
      %v1830 = vsub.f32 %v1775, %v1826
      %v1831 = vsub.f32 %v1780, %v1827
      %v1832 = vsub.f32 %v1783, %v1828
      %v1833 = vmul.f32 %v1829, %v1829
      %v1834 = vmul.f32 %v1830, %v1830
      %v1835 = vmul.f32 %v1831, %v1831
      %v1836 = vmul.f32 %v1832, %v1832
      %1837 = vadd.xlane.f32.xlu0 %v1833
      %v1838 = vpop.xlane.xlu0 %1837
      %1839 = vadd.xlane.f32.xlu0 %v1834
      %v1840 = vpop.xlane.xlu0 %1839
      %1841 = vadd.xlane.f32.xlu0 %v1835
      %v1842 = vpop.xlane.xlu0 %1841
      %1843 = vadd.xlane.f32.xlu0 %v1836
      %v1844 = vpop.xlane.xlu0 %1843
      %v1845 = vmul.f32 %v1838, %v1824
      %v1846 = vmul.f32 %v1840, %v1824
      %v1847 = vmul.f32 %v1842, %v1824
      %v1848 = vmul.f32 %v1844, %v1824
      %v1849 = vadd.f32 %v1845, 1e-05
      %v1850 = vadd.f32 %v1846, 1e-05
      %v1851 = vadd.f32 %v1847, 1e-05
      %v1852 = vadd.f32 %v1848, 1e-05
      %v1853 = vrsqrt.pop %v1849
      %v1854 = vrsqrt.pop %v1850
      %v1855 = vrsqrt.pop %v1851
      %v1856 = vrsqrt.pop %v1852
      %v1857 = vmul.f32 %v1829, %v1853
      %v1858 = vmul.f32 %v1830, %v1854
      %v1859 = vmul.f32 %v1831, %v1855
      %v1860 = vmul.f32 %v1832, %v1856
      %v1862 = vlaneseq
      %v1863 = vshrl.u32 %v1862, 7
      %v1864 = vsub.s32 0, %v1863
      %v1865 = vrot.slane %v1814, %v1864
      %v1867 = vmul.f32 %v1857, %v1865
      %v1868 = vmul.f32 %v1858, %v1865
      %v1869 = vmul.f32 %v1859, %v1865
      %v1870 = vmul.f32 %v1860, %v1865
      %v1872 = vlaneseq
      %v1873 = vshrl.u32 %v1872, 7
      %v1874 = vsub.s32 0, %v1873
      %v1875 = vrot.slane %v1815, %v1874
      %v1877 = vadd.f32 %v1867, %v1875
      %v1878 = vadd.f32 %v1868, %v1875
      %v1879 = vadd.f32 %v1869, %v1875
      %v1880 = vadd.f32 %v1870, %v1875
      %v1881 = vpack.c.bf16 %v1787, %v1786
      %v1882 = vpack.c.bf16 %v1789, %v1788
      %v1883 = vpack.c.bf16 %v1791, %v1790
      %v1884 = vpack.c.bf16 %v1793, %v1792
      %v1885 = vpack.c.bf16 %v1795, %v1794
      %v1886 = vpack.c.bf16 %v1797, %v1796
      %v1887 = vpack.c.bf16 %v1799, %v1798
      %v1888 = vpack.c.bf16 %v1801, %v1800
      %v1889 = vpack.c.bf16 %v1803, %v1802
      %v1890 = vpack.c.bf16 %v1805, %v1804
      %v1891 = vpack.c.bf16 %v1807, %v1806
      %v1892 = vpack.c.bf16 %v1809, %v1808
      %v1893 = vpack.c.bf16 %v1811, %v1810
      %v1894 = vpack.c.bf16 %v1813, %v1812
      %v1895 = vpack.c.bf16 %v1878, %v1877
      %v1896 = vpack.c.bf16 %v1880, %v1879
      %vm1897 = vcmask 261120
      %v1899 = vsel %vm1897, %v1881, 0
      %v1902 = vsel %vm1897, %v1882, 0
      %v1905 = vsel %vm1897, %v1883, 0
      %v1908 = vsel %vm1897, %v1884, 0
      %v1911 = vsel %vm1897, %v1885, 0
      %v1914 = vsel %vm1897, %v1886, 0
      %v1917 = vsel %vm1897, %v1887, 0
      %v1920 = vsel %vm1897, %v1888, 0
      %v1923 = vsel %vm1897, %v1889, 0
      %v1926 = vsel %vm1897, %v1890, 0
      %v1929 = vsel %vm1897, %v1891, 0
      %v1932 = vsel %vm1897, %v1892, 0
      %v1935 = vsel %vm1897, %v1893, 0
      %v1938 = vsel %vm1897, %v1894, 0
      %1940 = vmatprep.subr.bf16.mxu0 0
      %1941 = vmatpush1.bf16.msra.mxu0 %v1895
      %1942 = vmatprep.subr.bf16.mxu0 0
      %1943 = vmatpush1.bf16.msra.mxu0 %v1896
      %1944 = vmatprep.subr.bf16.mxu0 0
      %1945 = vmatpush1.bf16.msra.mxu0 0
      %1946 = vmatprep.subr.bf16.mxu0 0
      %1947 = vmatpush1.bf16.msra.mxu0 0
      %1948 = vmatprep.subr.bf16.mxu0 0
      %1949 = vmatpush1.bf16.msra.mxu0 0
      %1950 = vmatprep.subr.bf16.mxu0 0
      %1951 = vmatpush1.bf16.msra.mxu0 0
      %1952 = vmatprep.subr.bf16.mxu0 0
      %1953 = vmatpush1.bf16.msra.mxu0 0
      %1954 = vmatprep.subr.bf16.mxu0 0
      %1955 = vmatpush1.bf16.msra.mxu0 0
      %1956 = vmatprep.subr.bf16.mxu0 0
      %1957 = vmatpush1.bf16.msra.mxu0 0
      %1958 = vmatprep.subr.bf16.mxu0 0
      %1959 = vmatpush1.bf16.msra.mxu0 0
      %1960 = vmatprep.subr.bf16.mxu0 0
      %1961 = vmatpush1.bf16.msra.mxu0 0
      %1962 = vmatprep.subr.bf16.mxu0 0
      %1963 = vmatpush1.bf16.msra.mxu0 0
      %1964 = vmatprep.subr.bf16.mxu0 0
      %1965 = vmatpush1.bf16.msra.mxu0 0
      %1966 = vmatprep.subr.bf16.mxu0 0
      %1967 = vmatpush1.bf16.msra.mxu0 0
      %1968 = vmatprep.subr.bf16.mxu0 0
      %1969 = vmatpush1.bf16.msra.mxu0 0
      %1970 = vmatprep.subr.bf16.mxu0 0
      %1971 = vmatpush1.bf16.msra.mxu0 0
      %1972 = vmatprep.mubr.bf16.mxu0 0
      %1973 = vmatmul.mubr.bf16.gmra.mrb[0].mxu0 %v1899
      %v1974 = vpop.f32.mrb[0].mxu0
      %v1975 = vadd.f32 0.0, %v1974
      %v1976 = vpop.f32.mrb[0].mxu0
      %v1977 = vpop.f32.mrb[0].mxu0
      %v1978 = vadd.f32 0.0, %v1977
      %v1979 = vpop.f32.mrb[0].mxu0
      %1980 = vmatprep.mubr.bf16.mxu0 0
      %1981 = vmatmul.mubr.bf16.gmra.mrb[0].mxu0 %v1902
      %v1982 = vpop.f32.mrb[0].mxu0
      %v1983 = vadd.f32 0.0, %v1982
      %v1984 = vpop.f32.mrb[0].mxu0
      %v1985 = vpop.f32.mrb[0].mxu0
      %v1986 = vadd.f32 0.0, %v1985
      %v1987 = vpop.f32.mrb[0].mxu0
      %1988 = vmatprep.mubr.bf16.mxu0 0
      %1989 = vmatmul.mubr.bf16.gmra.mrb[0].mxu0 %v1905
      %v1990 = vpop.f32.mrb[0].mxu0
      %v1991 = vadd.f32 0.0, %v1990
      %v1992 = vpop.f32.mrb[0].mxu0
      %v1993 = vpop.f32.mrb[0].mxu0
      %v1994 = vadd.f32 0.0, %v1993
      %v1995 = vpop.f32.mrb[0].mxu0
      %1996 = vmatprep.mubr.bf16.mxu0 0
      %1997 = vmatmul.mubr.bf16.gmra.mrb[0].mxu0 %v1908
      %v1998 = vpop.f32.mrb[0].mxu0
      %v1999 = vadd.f32 0.0, %v1998
      %v2000 = vpop.f32.mrb[0].mxu0
      %v2001 = vpop.f32.mrb[0].mxu0
      %v2002 = vadd.f32 0.0, %v2001
      %v2003 = vpop.f32.mrb[0].mxu0
      %2004 = vmatprep.mubr.bf16.mxu0 0
      %2005 = vmatmul.mubr.bf16.gmra.mrb[0].mxu0 %v1911
      %v2006 = vpop.f32.mrb[0].mxu0
      %v2007 = vadd.f32 0.0, %v2006
      %v2008 = vpop.f32.mrb[0].mxu0
      %v2009 = vpop.f32.mrb[0].mxu0
      %v2010 = vadd.f32 0.0, %v2009
      %v2011 = vpop.f32.mrb[0].mxu0
      %2012 = vmatprep.mubr.bf16.mxu0 0
      %2013 = vmatmul.mubr.bf16.gmra.mrb[0].mxu0 %v1914
      %v2014 = vpop.f32.mrb[0].mxu0
      %v2015 = vadd.f32 0.0, %v2014
      %v2016 = vpop.f32.mrb[0].mxu0
      %v2017 = vpop.f32.mrb[0].mxu0
      %v2018 = vadd.f32 0.0, %v2017
      %v2019 = vpop.f32.mrb[0].mxu0
      %2020 = vmatprep.mubr.bf16.mxu0 0
      %2021 = vmatmul.mubr.bf16.gmra.mrb[0].mxu0 %v1917
      %v2022 = vpop.f32.mrb[0].mxu0
      %v2023 = vadd.f32 0.0, %v2022
      %v2024 = vpop.f32.mrb[0].mxu0
      %v2025 = vpop.f32.mrb[0].mxu0
      %v2026 = vadd.f32 0.0, %v2025
      %v2027 = vpop.f32.mrb[0].mxu0
      %2028 = vmatprep.mubr.bf16.mxu0 0
      %2029 = vmatmul.mubr.bf16.gmra.mrb[0].mxu0 %v1920
      %v2030 = vpop.f32.mrb[0].mxu0
      %v2031 = vadd.f32 0.0, %v2030
      %v2032 = vpop.f32.mrb[0].mxu0
      %v2033 = vpop.f32.mrb[0].mxu0
      %v2034 = vadd.f32 0.0, %v2033
      %v2035 = vpop.f32.mrb[0].mxu0
      %2036 = vmatprep.mubr.bf16.mxu0 0
      %2037 = vmatmul.mubr.bf16.gmra.mrb[0].mxu0 %v1923
      %v2038 = vpop.f32.mrb[0].mxu0
      %v2039 = vadd.f32 0.0, %v2038
      %v2040 = vpop.f32.mrb[0].mxu0
      %v2041 = vpop.f32.mrb[0].mxu0
      %v2042 = vadd.f32 0.0, %v2041
      %v2043 = vpop.f32.mrb[0].mxu0
      %2044 = vmatprep.mubr.bf16.mxu0 0
      %2045 = vmatmul.mubr.bf16.gmra.mrb[0].mxu0 %v1926
      %v2046 = vpop.f32.mrb[0].mxu0
      %v2047 = vadd.f32 0.0, %v2046
      %v2048 = vpop.f32.mrb[0].mxu0
      %v2049 = vpop.f32.mrb[0].mxu0
      %v2050 = vadd.f32 0.0, %v2049
      %v2051 = vpop.f32.mrb[0].mxu0
      %2052 = vmatprep.mubr.bf16.mxu0 0
      %2053 = vmatmul.mubr.bf16.gmra.mrb[0].mxu0 %v1929
      %v2054 = vpop.f32.mrb[0].mxu0
      %v2055 = vadd.f32 0.0, %v2054
      %v2056 = vpop.f32.mrb[0].mxu0
      %v2057 = vpop.f32.mrb[0].mxu0
      %v2058 = vadd.f32 0.0, %v2057
      %v2059 = vpop.f32.mrb[0].mxu0
      %2060 = vmatprep.mubr.bf16.mxu0 0
      %2061 = vmatmul.mubr.bf16.gmra.mrb[0].mxu0 %v1932
      %v2062 = vpop.f32.mrb[0].mxu0
      %v2063 = vadd.f32 0.0, %v2062
      %v2064 = vpop.f32.mrb[0].mxu0
      %v2065 = vpop.f32.mrb[0].mxu0
      %v2066 = vadd.f32 0.0, %v2065
      %v2067 = vpop.f32.mrb[0].mxu0
      %2068 = vmatprep.mubr.bf16.mxu0 0
      %2069 = vmatmul.mubr.bf16.gmra.mrb[0].mxu0 %v1935
      %v2070 = vpop.f32.mrb[0].mxu0
      %v2071 = vadd.f32 0.0, %v2070
      %v2072 = vpop.f32.mrb[0].mxu0
      %v2073 = vpop.f32.mrb[0].mxu0
      %v2074 = vadd.f32 0.0, %v2073
      %v2075 = vpop.f32.mrb[0].mxu0
      %2076 = vmatprep.mubr.bf16.mxu0 0
      %2077 = vmatmul.mubr.bf16.gmra.mrb[0].mxu0 %v1938
      %v2078 = vpop.f32.mrb[0].mxu0
      %v2079 = vadd.f32 0.0, %v2078
      %v2080 = vpop.f32.mrb[0].mxu0
      %v2081 = vpop.f32.mrb[0].mxu0
      %v2082 = vadd.f32 0.0, %v2081
      %v2083 = vpop.f32.mrb[0].mxu0
      %2084 = vdwg.mxu0
      %v2085 = vld [vmem:[%s12] sm:$0x7f]
      %v2086 = vlaneseq
      %v2087 = vshrl.u32 %v2086, 7
      %v2088 = vsub.s32 0, %v2087
      %v2089 = vrot.slane %v2085, %v2088
      %v2090 = vmul.f32 %v1975, %v2089
      %v2091 = vmul.f32 %v1978, %v2089
      %v2092 = vmul.f32 %v1983, %v2089
      %v2093 = vmul.f32 %v1986, %v2089
      %v2094 = vlaneseq
      %v2095 = vshrl.u32 %v2094, 7
      %v2096 = vsub.s32 1, %v2095
      %v2097 = vrot.slane %v2085, %v2096
      %v2098 = vmul.f32 %v1991, %v2097
      %v2099 = vmul.f32 %v1994, %v2097
      %v2100 = vmul.f32 %v1999, %v2097
      %v2101 = vmul.f32 %v2002, %v2097
      %v2102 = vadd.f32 %v2090, %v2098
      %v2103 = vadd.f32 %v2091, %v2099
      %v2104 = vadd.f32 %v2092, %v2100
      %v2105 = vadd.f32 %v2093, %v2101
      %v2106 = vlaneseq
      %v2107 = vshrl.u32 %v2106, 7
      %v2108 = vsub.s32 2, %v2107
      %v2109 = vrot.slane %v2085, %v2108
      %v2110 = vmul.f32 %v2007, %v2109
      %v2111 = vmul.f32 %v2010, %v2109
      %v2112 = vmul.f32 %v2015, %v2109
      %v2113 = vmul.f32 %v2018, %v2109
      %v2114 = vadd.f32 %v2102, %v2110
      %v2115 = vadd.f32 %v2103, %v2111
      %v2116 = vadd.f32 %v2104, %v2112
      %v2117 = vadd.f32 %v2105, %v2113
      %v2118 = vlaneseq
      %v2119 = vshrl.u32 %v2118, 7
      %v2120 = vsub.s32 3, %v2119
      %v2121 = vrot.slane %v2085, %v2120
      %v2122 = vmul.f32 %v2023, %v2121
      %v2123 = vmul.f32 %v2026, %v2121
      %v2124 = vmul.f32 %v2031, %v2121
      %v2125 = vmul.f32 %v2034, %v2121
      %v2126 = vadd.f32 %v2114, %v2122
      %v2127 = vadd.f32 %v2115, %v2123
      %v2128 = vadd.f32 %v2116, %v2124
      %v2129 = vadd.f32 %v2117, %v2125
      %v2130 = vlaneseq
      %v2131 = vshrl.u32 %v2130, 7
      %v2132 = vsub.s32 4, %v2131
      %v2133 = vrot.slane %v2085, %v2132
      %v2134 = vmul.f32 %v2039, %v2133
      %v2135 = vmul.f32 %v2042, %v2133
      %v2136 = vmul.f32 %v2047, %v2133
      %v2137 = vmul.f32 %v2050, %v2133
      %v2138 = vadd.f32 %v2126, %v2134
      %v2139 = vadd.f32 %v2127, %v2135
      %v2140 = vadd.f32 %v2128, %v2136
      %v2141 = vadd.f32 %v2129, %v2137
      %v2142 = vlaneseq
      %v2143 = vshrl.u32 %v2142, 7
      %v2144 = vsub.s32 5, %v2143
      %v2145 = vrot.slane %v2085, %v2144
      %v2146 = vmul.f32 %v2055, %v2145
      %v2147 = vmul.f32 %v2058, %v2145
      %v2148 = vmul.f32 %v2063, %v2145
      %v2149 = vmul.f32 %v2066, %v2145
      %v2150 = vadd.f32 %v2138, %v2146
      %v2151 = vadd.f32 %v2139, %v2147
      %v2152 = vadd.f32 %v2140, %v2148
      %v2153 = vadd.f32 %v2141, %v2149
      %v2154 = vlaneseq
      %v2155 = vshrl.u32 %v2154, 7
      %v2156 = vsub.s32 6, %v2155
      %v2157 = vrot.slane %v2085, %v2156
      %v2158 = vmul.f32 %v2071, %v2157
      %v2159 = vmul.f32 %v2074, %v2157
      %v2160 = vmul.f32 %v2079, %v2157
      %v2161 = vmul.f32 %v2082, %v2157
      %v2162 = vadd.f32 %v2150, %v2158
      %v2163 = vadd.f32 %v2151, %v2159
      %v2164 = vadd.f32 %v2152, %v2160
      %v2165 = vadd.f32 %v2153, %v2161
      %v2166 = vmax.f32 %v2162, 0.0
      %v2167 = vmax.f32 %v2163, 0.0
      %v2168 = vmax.f32 %v2164, 0.0
      %v2169 = vmax.f32 %v2165, 0.0
      %v2170 = vld [vmem:[%s13] sm:$0xf]
      %v2171 = vld [vmem:[%s13 + $0x4] sm:$0xf]
      %v2172 = vld [vmem:[%s13 + $0x8] sm:$0xf]
      %v2173 = vld [vmem:[%s13 + $0xc] sm:$0xf]
      %v2174 = vld [vmem:[%s13 + $0x10] sm:$0xf]
      %v2175 = vld [vmem:[%s13 + $0x14] sm:$0xf]
      %v2176 = vld [vmem:[%s13 + $0x18] sm:$0xf]
      %v2177 = vld [vmem:[%s13 + $0x1c] sm:$0xf]
      %v2178 = vld [vmem:[%s13 + $0x20] sm:$0xf]
      %v2179 = vld [vmem:[%s13 + $0x24] sm:$0xf]
      %v2180 = vld [vmem:[%s13 + $0x28] sm:$0xf]
      %v2181 = vld [vmem:[%s13 + $0x2c] sm:$0xf]
      %v2182 = vld [vmem:[%s13 + $0x30] sm:$0xf]
      %v2183 = vld [vmem:[%s13 + $0x34] sm:$0xf]
      %v2184 = vld [vmem:[%s13 + $0x38] sm:$0xf]
      %v2185 = vld [vmem:[%s13 + $0x3c] sm:$0xf]
      %v2186 = vpack.c.bf16 %v2167, %v2166
      %v2187 = vpack.c.bf16 %v2169, %v2168
      %v2204 = vunpack.c.l.b16 %v2170
      %v2205 = vunpack.c.l.b16 %v2171
      %v2206 = vunpack.c.l.b16 %v2172
      %v2207 = vunpack.c.l.b16 %v2173
      %v2208 = vunpack.c.l.b16 %v2174
      %v2209 = vunpack.c.l.b16 %v2175
      %v2210 = vunpack.c.l.b16 %v2176
      %v2211 = vunpack.c.l.b16 %v2177
      %v2212 = vunpack.c.l.b16 %v2178
      %v2213 = vunpack.c.l.b16 %v2179
      %v2214 = vunpack.c.l.b16 %v2180
      %v2215 = vunpack.c.l.b16 %v2181
      %v2216 = vunpack.c.l.b16 %v2182
      %v2217 = vunpack.c.l.b16 %v2183
      %v2218 = vunpack.c.l.b16 %v2184
      %v2219 = vunpack.c.l.b16 %v2185
      %v2220 = vpack.c.b16 %v2205, %v2204
      %v2221 = vpack.c.b16 %v2207, %v2206
      %v2222 = vpack.c.b16 %v2209, %v2208
      %v2223 = vpack.c.b16 %v2211, %v2210
      %v2224 = vpack.c.b16 %v2213, %v2212
      %v2225 = vpack.c.b16 %v2215, %v2214
      %v2226 = vpack.c.b16 %v2217, %v2216
      %v2227 = vpack.c.b16 %v2219, %v2218
      %2236 = vmatprep.subr.bf16.mxu0 0
      %2237 = vmatpush1.bf16.msra.mxu0 %v2220
      %2238 = vmatprep.subr.bf16.mxu0 0
      %2239 = vmatpush1.bf16.msra.mxu0 %v2221
      %2240 = vmatprep.subr.bf16.mxu0 0
      %2241 = vmatpush1.bf16.msra.mxu0 %v2222
      %2242 = vmatprep.subr.bf16.mxu0 0
      %2243 = vmatpush1.bf16.msra.mxu0 %v2223
      %2244 = vmatprep.subr.bf16.mxu0 0
      %2245 = vmatpush1.bf16.msra.mxu0 %v2224
      %2246 = vmatprep.subr.bf16.mxu0 0
      %2247 = vmatpush1.bf16.msra.mxu0 %v2225
      %2248 = vmatprep.subr.bf16.mxu0 0
      %2249 = vmatpush1.bf16.msra.mxu0 %v2226
      %2250 = vmatprep.subr.bf16.mxu0 0
      %2251 = vmatpush1.bf16.msra.mxu0 %v2227
      %2252 = vmatprep.subr.bf16.mxu0 0
      %2253 = vmatpush1.bf16.msra.mxu0 0
      %2254 = vmatprep.subr.bf16.mxu0 0
      %2255 = vmatpush1.bf16.msra.mxu0 0
      %2256 = vmatprep.subr.bf16.mxu0 0
      %2257 = vmatpush1.bf16.msra.mxu0 0
      %2258 = vmatprep.subr.bf16.mxu0 0
      %2259 = vmatpush1.bf16.msra.mxu0 0
      %2260 = vmatprep.subr.bf16.mxu0 0
      %2261 = vmatpush1.bf16.msra.mxu0 0
      %2262 = vmatprep.subr.bf16.mxu0 0
      %2263 = vmatpush1.bf16.msra.mxu0 0
      %2264 = vmatprep.subr.bf16.mxu0 0
      %2265 = vmatpush1.bf16.msra.mxu0 0
      %2266 = vmatprep.subr.bf16.mxu0 0
      %2267 = vmatpush1.bf16.msra.mxu0 0
      %2268 = vmatprep.mubr.bf16.mxu0 0
      %2269 = vmatmul.mubr.bf16.gmra.mrb[0].mxu0 %v2186
      %v2270 = vpop.f32.mrb[0].mxu0
      %v2271 = vadd.f32 0.0, %v2270
      %v2272 = vpop.f32.mrb[0].mxu0
      %v2273 = vpop.f32.mrb[0].mxu0
      %v2274 = vadd.f32 0.0, %v2273
      %v2275 = vpop.f32.mrb[0].mxu0
      %2276 = vmatprep.mubr.bf16.mxu0 0
      %2277 = vmatmul.mubr.bf16.gmra.mrb[0].mxu0 %v2187
      %v2278 = vpop.f32.mrb[0].mxu0
      %v2279 = vadd.f32 0.0, %v2278
      %v2280 = vpop.f32.mrb[0].mxu0
      %v2281 = vpop.f32.mrb[0].mxu0
      %v2282 = vadd.f32 0.0, %v2281
      %v2283 = vpop.f32.mrb[0].mxu0
      %2284 = vdwg.mxu0
      %v2285 = vmax.f32 %v2271, 0.0
      %v2286 = vmax.f32 %v2274, 0.0
      %v2287 = vmax.f32 %v2279, 0.0
      %v2288 = vmax.f32 %v2282, 0.0
      %v2289 = vadd.f32 %v1772, %v2285
      %v2290 = vadd.f32 %v1775, %v2286
      %v2291 = vadd.f32 %v1780, %v2287
      %v2292 = vadd.f32 %v1783, %v2288
      %s2293 = scalar_lea.vmem %s10, 1
      %v2294 = vld [vmem:[%s2293] sm:$0x1]
      %s2295 = scalar_lea.vmem %s11, 1
      %v2296 = vld [vmem:[%s2295] sm:$0x1]
      %2297 = vadd.xlane.f32.xlu0 %v2289
      %v2298 = vpop.xlane.xlu0 %2297
      %2299 = vadd.xlane.f32.xlu0 %v2290
      %v2300 = vpop.xlane.xlu0 %2299
      %2301 = vadd.xlane.f32.xlu0 %v2291
      %v2302 = vpop.xlane.xlu0 %2301
      %2303 = vadd.xlane.f32.xlu0 %v2292
      %v2304 = vpop.xlane.xlu0 %2303
      %v2305 = vmul.f32 %v2298, %v1824
      %v2306 = vmul.f32 %v2300, %v1824
      %v2307 = vmul.f32 %v2302, %v1824
      %v2308 = vmul.f32 %v2304, %v1824
      %v2309 = vsub.f32 %v2289, %v2305
      %v2310 = vsub.f32 %v2290, %v2306
      %v2311 = vsub.f32 %v2291, %v2307
      %v2312 = vsub.f32 %v2292, %v2308
      %v2313 = vmul.f32 %v2309, %v2309
      %v2314 = vmul.f32 %v2310, %v2310
      %v2315 = vmul.f32 %v2311, %v2311
      %v2316 = vmul.f32 %v2312, %v2312
      %2317 = vadd.xlane.f32.xlu0 %v2313
      %v2318 = vpop.xlane.xlu0 %2317
      %2319 = vadd.xlane.f32.xlu0 %v2314
      %v2320 = vpop.xlane.xlu0 %2319
      %2321 = vadd.xlane.f32.xlu0 %v2315
      %v2322 = vpop.xlane.xlu0 %2321
      %2323 = vadd.xlane.f32.xlu0 %v2316
      %v2324 = vpop.xlane.xlu0 %2323
      %v2325 = vmul.f32 %v2318, %v1824
      %v2326 = vmul.f32 %v2320, %v1824
      %v2327 = vmul.f32 %v2322, %v1824
      %v2328 = vmul.f32 %v2324, %v1824
      %v2329 = vadd.f32 %v2325, 1e-05
      %v2330 = vadd.f32 %v2326, 1e-05
      %v2331 = vadd.f32 %v2327, 1e-05
      %v2332 = vadd.f32 %v2328, 1e-05
      %v2333 = vrsqrt.pop %v2329
      %v2334 = vrsqrt.pop %v2330
      %v2335 = vrsqrt.pop %v2331
      %v2336 = vrsqrt.pop %v2332
      %v2337 = vmul.f32 %v2309, %v2333
      %v2338 = vmul.f32 %v2310, %v2334
      %v2339 = vmul.f32 %v2311, %v2335
      %v2340 = vmul.f32 %v2312, %v2336
      %v2342 = vlaneseq
      %v2343 = vshrl.u32 %v2342, 7
      %v2344 = vsub.s32 0, %v2343
      %v2345 = vrot.slane %v2294, %v2344
      %v2347 = vmul.f32 %v2337, %v2345
      %v2348 = vmul.f32 %v2338, %v2345
      %v2349 = vmul.f32 %v2339, %v2345
      %v2350 = vmul.f32 %v2340, %v2345
      %v2352 = vlaneseq
      %v2353 = vshrl.u32 %v2352, 7
      %v2354 = vsub.s32 0, %v2353
      %v2355 = vrot.slane %v2296, %v2354
      %v2357 = vadd.f32 %v2347, %v2355
      %v2358 = vadd.f32 %v2348, %v2355
      %v2359 = vadd.f32 %v2349, %v2355
      %v2360 = vadd.f32 %v2350, %v2355
      %v2361 = vpack.c.bf16 %v2358, %v2357
      %v2362 = vpack.c.bf16 %v2360, %v2359
      %2363 = vmatprep.subr.bf16.mxu0 0
      %2364 = vmatpush1.bf16.msra.mxu0 %v2361
      %2365 = vmatprep.subr.bf16.mxu0 0
      %2366 = vmatpush1.bf16.msra.mxu0 %v2362
      %2367 = vmatprep.subr.bf16.mxu0 0
      %2368 = vmatpush1.bf16.msra.mxu0 0
      %2369 = vmatprep.subr.bf16.mxu0 0
      %2370 = vmatpush1.bf16.msra.mxu0 0
      %2371 = vmatprep.subr.bf16.mxu0 0
      %2372 = vmatpush1.bf16.msra.mxu0 0
      %2373 = vmatprep.subr.bf16.mxu0 0
      %2374 = vmatpush1.bf16.msra.mxu0 0
      %2375 = vmatprep.subr.bf16.mxu0 0
      %2376 = vmatpush1.bf16.msra.mxu0 0
      %2377 = vmatprep.subr.bf16.mxu0 0
      %2378 = vmatpush1.bf16.msra.mxu0 0
      %2379 = vmatprep.subr.bf16.mxu0 0
      %2380 = vmatpush1.bf16.msra.mxu0 0
      %2381 = vmatprep.subr.bf16.mxu0 0
      %2382 = vmatpush1.bf16.msra.mxu0 0
      %2383 = vmatprep.subr.bf16.mxu0 0
      %2384 = vmatpush1.bf16.msra.mxu0 0
      %2385 = vmatprep.subr.bf16.mxu0 0
      %2386 = vmatpush1.bf16.msra.mxu0 0
      %2387 = vmatprep.subr.bf16.mxu0 0
      %2388 = vmatpush1.bf16.msra.mxu0 0
      %2389 = vmatprep.subr.bf16.mxu0 0
      %2390 = vmatpush1.bf16.msra.mxu0 0
      %2391 = vmatprep.subr.bf16.mxu0 0
      %2392 = vmatpush1.bf16.msra.mxu0 0
      %2393 = vmatprep.subr.bf16.mxu0 0
      %2394 = vmatpush1.bf16.msra.mxu0 0
      %2395 = vmatprep.mubr.bf16.mxu0 0
      %2396 = vmatmul.mubr.bf16.gmra.mrb[0].mxu0 %v1899
      %v2397 = vpop.f32.mrb[0].mxu0
      %v2398 = vadd.f32 0.0, %v2397
      %v2399 = vpop.f32.mrb[0].mxu0
      %v2400 = vpop.f32.mrb[0].mxu0
      %v2401 = vadd.f32 0.0, %v2400
      %v2402 = vpop.f32.mrb[0].mxu0
      %2403 = vmatprep.mubr.bf16.mxu0 0
      %2404 = vmatmul.mubr.bf16.gmra.mrb[0].mxu0 %v1902
      %v2405 = vpop.f32.mrb[0].mxu0
      %v2406 = vadd.f32 0.0, %v2405
      %v2407 = vpop.f32.mrb[0].mxu0
      %v2408 = vpop.f32.mrb[0].mxu0
      %v2409 = vadd.f32 0.0, %v2408
      %v2410 = vpop.f32.mrb[0].mxu0
      %2411 = vmatprep.mubr.bf16.mxu0 0
      %2412 = vmatmul.mubr.bf16.gmra.mrb[0].mxu0 %v1905
      %v2413 = vpop.f32.mrb[0].mxu0
      %v2414 = vadd.f32 0.0, %v2413
      %v2415 = vpop.f32.mrb[0].mxu0
      %v2416 = vpop.f32.mrb[0].mxu0
      %v2417 = vadd.f32 0.0, %v2416
      %v2418 = vpop.f32.mrb[0].mxu0
      %2419 = vmatprep.mubr.bf16.mxu0 0
      %2420 = vmatmul.mubr.bf16.gmra.mrb[0].mxu0 %v1908
      %v2421 = vpop.f32.mrb[0].mxu0
      %v2422 = vadd.f32 0.0, %v2421
      %v2423 = vpop.f32.mrb[0].mxu0
      %v2424 = vpop.f32.mrb[0].mxu0
      %v2425 = vadd.f32 0.0, %v2424
      %v2426 = vpop.f32.mrb[0].mxu0
      %2427 = vmatprep.mubr.bf16.mxu0 0
      %2428 = vmatmul.mubr.bf16.gmra.mrb[0].mxu0 %v1911
      %v2429 = vpop.f32.mrb[0].mxu0
      %v2430 = vadd.f32 0.0, %v2429
      %v2431 = vpop.f32.mrb[0].mxu0
      %v2432 = vpop.f32.mrb[0].mxu0
      %v2433 = vadd.f32 0.0, %v2432
      %v2434 = vpop.f32.mrb[0].mxu0
      %2435 = vmatprep.mubr.bf16.mxu0 0
      %2436 = vmatmul.mubr.bf16.gmra.mrb[0].mxu0 %v1914
      %v2437 = vpop.f32.mrb[0].mxu0
      %v2438 = vadd.f32 0.0, %v2437
      %v2439 = vpop.f32.mrb[0].mxu0
      %v2440 = vpop.f32.mrb[0].mxu0
      %v2441 = vadd.f32 0.0, %v2440
      %v2442 = vpop.f32.mrb[0].mxu0
      %2443 = vmatprep.mubr.bf16.mxu0 0
      %2444 = vmatmul.mubr.bf16.gmra.mrb[0].mxu0 %v1917
      %v2445 = vpop.f32.mrb[0].mxu0
      %v2446 = vadd.f32 0.0, %v2445
      %v2447 = vpop.f32.mrb[0].mxu0
      %v2448 = vpop.f32.mrb[0].mxu0
      %v2449 = vadd.f32 0.0, %v2448
      %v2450 = vpop.f32.mrb[0].mxu0
      %2451 = vmatprep.mubr.bf16.mxu0 0
      %2452 = vmatmul.mubr.bf16.gmra.mrb[0].mxu0 %v1920
      %v2453 = vpop.f32.mrb[0].mxu0
      %v2454 = vadd.f32 0.0, %v2453
      %v2455 = vpop.f32.mrb[0].mxu0
      %v2456 = vpop.f32.mrb[0].mxu0
      %v2457 = vadd.f32 0.0, %v2456
      %v2458 = vpop.f32.mrb[0].mxu0
      %2459 = vmatprep.mubr.bf16.mxu0 0
      %2460 = vmatmul.mubr.bf16.gmra.mrb[0].mxu0 %v1923
      %v2461 = vpop.f32.mrb[0].mxu0
      %v2462 = vadd.f32 0.0, %v2461
      %v2463 = vpop.f32.mrb[0].mxu0
      %v2464 = vpop.f32.mrb[0].mxu0
      %v2465 = vadd.f32 0.0, %v2464
      %v2466 = vpop.f32.mrb[0].mxu0
      %2467 = vmatprep.mubr.bf16.mxu0 0
      %2468 = vmatmul.mubr.bf16.gmra.mrb[0].mxu0 %v1926
      %v2469 = vpop.f32.mrb[0].mxu0
      %v2470 = vadd.f32 0.0, %v2469
      %v2471 = vpop.f32.mrb[0].mxu0
      %v2472 = vpop.f32.mrb[0].mxu0
      %v2473 = vadd.f32 0.0, %v2472
      %v2474 = vpop.f32.mrb[0].mxu0
      %2475 = vmatprep.mubr.bf16.mxu0 0
      %2476 = vmatmul.mubr.bf16.gmra.mrb[0].mxu0 %v1929
      %v2477 = vpop.f32.mrb[0].mxu0
      %v2478 = vadd.f32 0.0, %v2477
      %v2479 = vpop.f32.mrb[0].mxu0
      %v2480 = vpop.f32.mrb[0].mxu0
      %v2481 = vadd.f32 0.0, %v2480
      %v2482 = vpop.f32.mrb[0].mxu0
      %2483 = vmatprep.mubr.bf16.mxu0 0
      %2484 = vmatmul.mubr.bf16.gmra.mrb[0].mxu0 %v1932
      %v2485 = vpop.f32.mrb[0].mxu0
      %v2486 = vadd.f32 0.0, %v2485
      %v2487 = vpop.f32.mrb[0].mxu0
      %v2488 = vpop.f32.mrb[0].mxu0
      %v2489 = vadd.f32 0.0, %v2488
      %v2490 = vpop.f32.mrb[0].mxu0
      %2491 = vmatprep.mubr.bf16.mxu0 0
      %2492 = vmatmul.mubr.bf16.gmra.mrb[0].mxu0 %v1935
      %v2493 = vpop.f32.mrb[0].mxu0
      %v2494 = vadd.f32 0.0, %v2493
      %v2495 = vpop.f32.mrb[0].mxu0
      %v2496 = vpop.f32.mrb[0].mxu0
      %v2497 = vadd.f32 0.0, %v2496
      %v2498 = vpop.f32.mrb[0].mxu0
      %2499 = vmatprep.mubr.bf16.mxu0 0
      %2500 = vmatmul.mubr.bf16.gmra.mrb[0].mxu0 %v1938
      %v2501 = vpop.f32.mrb[0].mxu0
      %v2502 = vadd.f32 0.0, %v2501
      %v2503 = vpop.f32.mrb[0].mxu0
      %v2504 = vpop.f32.mrb[0].mxu0
      %v2505 = vadd.f32 0.0, %v2504
      %v2506 = vpop.f32.mrb[0].mxu0
      %2507 = vdwg.mxu0
      %s2508 = scalar_lea.vmem %s12, 8
      %v2509 = vld [vmem:[%s2508] sm:$0x7f]
      %v2510 = vlaneseq
      %v2511 = vshrl.u32 %v2510, 7
      %v2512 = vsub.s32 0, %v2511
      %v2513 = vrot.slane %v2509, %v2512
      %v2514 = vmul.f32 %v2398, %v2513
      %v2515 = vmul.f32 %v2401, %v2513
      %v2516 = vmul.f32 %v2406, %v2513
      %v2517 = vmul.f32 %v2409, %v2513
      %v2518 = vlaneseq
      %v2519 = vshrl.u32 %v2518, 7
      %v2520 = vsub.s32 1, %v2519
      %v2521 = vrot.slane %v2509, %v2520
      %v2522 = vmul.f32 %v2414, %v2521
      %v2523 = vmul.f32 %v2417, %v2521
      %v2524 = vmul.f32 %v2422, %v2521
      %v2525 = vmul.f32 %v2425, %v2521
      %v2526 = vadd.f32 %v2514, %v2522
      %v2527 = vadd.f32 %v2515, %v2523
      %v2528 = vadd.f32 %v2516, %v2524
      %v2529 = vadd.f32 %v2517, %v2525
      %v2530 = vlaneseq
      %v2531 = vshrl.u32 %v2530, 7
      %v2532 = vsub.s32 2, %v2531
      %v2533 = vrot.slane %v2509, %v2532
      %v2534 = vmul.f32 %v2430, %v2533
      %v2535 = vmul.f32 %v2433, %v2533
      %v2536 = vmul.f32 %v2438, %v2533
      %v2537 = vmul.f32 %v2441, %v2533
      %v2538 = vadd.f32 %v2526, %v2534
      %v2539 = vadd.f32 %v2527, %v2535
      %v2540 = vadd.f32 %v2528, %v2536
      %v2541 = vadd.f32 %v2529, %v2537
      %v2542 = vlaneseq
      %v2543 = vshrl.u32 %v2542, 7
      %v2544 = vsub.s32 3, %v2543
      %v2545 = vrot.slane %v2509, %v2544
      %v2546 = vmul.f32 %v2446, %v2545
      %v2547 = vmul.f32 %v2449, %v2545
      %v2548 = vmul.f32 %v2454, %v2545
      %v2549 = vmul.f32 %v2457, %v2545
      %v2550 = vadd.f32 %v2538, %v2546
      %v2551 = vadd.f32 %v2539, %v2547
      %v2552 = vadd.f32 %v2540, %v2548
      %v2553 = vadd.f32 %v2541, %v2549
      %v2554 = vlaneseq
      %v2555 = vshrl.u32 %v2554, 7
      %v2556 = vsub.s32 4, %v2555
      %v2557 = vrot.slane %v2509, %v2556
      %v2558 = vmul.f32 %v2462, %v2557
      %v2559 = vmul.f32 %v2465, %v2557
      %v2560 = vmul.f32 %v2470, %v2557
      %v2561 = vmul.f32 %v2473, %v2557
      %v2562 = vadd.f32 %v2550, %v2558
      %v2563 = vadd.f32 %v2551, %v2559
      %v2564 = vadd.f32 %v2552, %v2560
      %v2565 = vadd.f32 %v2553, %v2561
      %v2566 = vlaneseq
      %v2567 = vshrl.u32 %v2566, 7
      %v2568 = vsub.s32 5, %v2567
      %v2569 = vrot.slane %v2509, %v2568
      %v2570 = vmul.f32 %v2478, %v2569
      %v2571 = vmul.f32 %v2481, %v2569
      %v2572 = vmul.f32 %v2486, %v2569
      %v2573 = vmul.f32 %v2489, %v2569
      %v2574 = vadd.f32 %v2562, %v2570
      %v2575 = vadd.f32 %v2563, %v2571
      %v2576 = vadd.f32 %v2564, %v2572
      %v2577 = vadd.f32 %v2565, %v2573
      %v2578 = vlaneseq
      %v2579 = vshrl.u32 %v2578, 7
      %v2580 = vsub.s32 6, %v2579
      %v2581 = vrot.slane %v2509, %v2580
      %v2582 = vmul.f32 %v2494, %v2581
      %v2583 = vmul.f32 %v2497, %v2581
      %v2584 = vmul.f32 %v2502, %v2581
      %v2585 = vmul.f32 %v2505, %v2581
      %v2586 = vadd.f32 %v2574, %v2582
      %v2587 = vadd.f32 %v2575, %v2583
      %v2588 = vadd.f32 %v2576, %v2584
      %v2589 = vadd.f32 %v2577, %v2585
      %v2590 = vmax.f32 %v2586, 0.0
      %v2591 = vmax.f32 %v2587, 0.0
      %v2592 = vmax.f32 %v2588, 0.0
      %v2593 = vmax.f32 %v2589, 0.0
      %s2594 = scalar_lea.vmem %s13, 64
      %v2595 = vld [vmem:[%s2594] sm:$0xf]
      %v2596 = vld [vmem:[%s2594 + $0x4] sm:$0xf]
      %v2597 = vld [vmem:[%s2594 + $0x8] sm:$0xf]
      %v2598 = vld [vmem:[%s2594 + $0xc] sm:$0xf]
      %v2599 = vld [vmem:[%s2594 + $0x10] sm:$0xf]
      %v2600 = vld [vmem:[%s2594 + $0x14] sm:$0xf]
      %v2601 = vld [vmem:[%s2594 + $0x18] sm:$0xf]
      %v2602 = vld [vmem:[%s2594 + $0x1c] sm:$0xf]
      %v2603 = vld [vmem:[%s2594 + $0x20] sm:$0xf]
      %v2604 = vld [vmem:[%s2594 + $0x24] sm:$0xf]
      %v2605 = vld [vmem:[%s2594 + $0x28] sm:$0xf]
      %v2606 = vld [vmem:[%s2594 + $0x2c] sm:$0xf]
      %v2607 = vld [vmem:[%s2594 + $0x30] sm:$0xf]
      %v2608 = vld [vmem:[%s2594 + $0x34] sm:$0xf]
      %v2609 = vld [vmem:[%s2594 + $0x38] sm:$0xf]
      %v2610 = vld [vmem:[%s2594 + $0x3c] sm:$0xf]
      %v2611 = vpack.c.bf16 %v2591, %v2590
      %v2612 = vpack.c.bf16 %v2593, %v2592
      %v2629 = vunpack.c.l.b16 %v2595
      %v2630 = vunpack.c.l.b16 %v2596
      %v2631 = vunpack.c.l.b16 %v2597
      %v2632 = vunpack.c.l.b16 %v2598
      %v2633 = vunpack.c.l.b16 %v2599
      %v2634 = vunpack.c.l.b16 %v2600
      %v2635 = vunpack.c.l.b16 %v2601
      %v2636 = vunpack.c.l.b16 %v2602
      %v2637 = vunpack.c.l.b16 %v2603
      %v2638 = vunpack.c.l.b16 %v2604
      %v2639 = vunpack.c.l.b16 %v2605
      %v2640 = vunpack.c.l.b16 %v2606
      %v2641 = vunpack.c.l.b16 %v2607
      %v2642 = vunpack.c.l.b16 %v2608
      %v2643 = vunpack.c.l.b16 %v2609
      %v2644 = vunpack.c.l.b16 %v2610
      %v2645 = vpack.c.b16 %v2630, %v2629
      %v2646 = vpack.c.b16 %v2632, %v2631
      %v2647 = vpack.c.b16 %v2634, %v2633
      %v2648 = vpack.c.b16 %v2636, %v2635
      %v2649 = vpack.c.b16 %v2638, %v2637
      %v2650 = vpack.c.b16 %v2640, %v2639
      %v2651 = vpack.c.b16 %v2642, %v2641
      %v2652 = vpack.c.b16 %v2644, %v2643
      %2661 = vmatprep.subr.bf16.mxu0 0
      %2662 = vmatpush1.bf16.msra.mxu0 %v2645
      %2663 = vmatprep.subr.bf16.mxu0 0
      %2664 = vmatpush1.bf16.msra.mxu0 %v2646
      %2665 = vmatprep.subr.bf16.mxu0 0
      %2666 = vmatpush1.bf16.msra.mxu0 %v2647
      %2667 = vmatprep.subr.bf16.mxu0 0
      %2668 = vmatpush1.bf16.msra.mxu0 %v2648
      %2669 = vmatprep.subr.bf16.mxu0 0
      %2670 = vmatpush1.bf16.msra.mxu0 %v2649
      %2671 = vmatprep.subr.bf16.mxu0 0
      %2672 = vmatpush1.bf16.msra.mxu0 %v2650
      %2673 = vmatprep.subr.bf16.mxu0 0
      %2674 = vmatpush1.bf16.msra.mxu0 %v2651
      %2675 = vmatprep.subr.bf16.mxu0 0
      %2676 = vmatpush1.bf16.msra.mxu0 %v2652
      %2677 = vmatprep.subr.bf16.mxu0 0
      %2678 = vmatpush1.bf16.msra.mxu0 0
      %2679 = vmatprep.subr.bf16.mxu0 0
      %2680 = vmatpush1.bf16.msra.mxu0 0
      %2681 = vmatprep.subr.bf16.mxu0 0
      %2682 = vmatpush1.bf16.msra.mxu0 0
      %2683 = vmatprep.subr.bf16.mxu0 0
      %2684 = vmatpush1.bf16.msra.mxu0 0
      %2685 = vmatprep.subr.bf16.mxu0 0
      %2686 = vmatpush1.bf16.msra.mxu0 0
      %2687 = vmatprep.subr.bf16.mxu0 0
      %2688 = vmatpush1.bf16.msra.mxu0 0
      %2689 = vmatprep.subr.bf16.mxu0 0
      %2690 = vmatpush1.bf16.msra.mxu0 0
      %2691 = vmatprep.subr.bf16.mxu0 0
      %2692 = vmatpush1.bf16.msra.mxu0 0
      %2693 = vmatprep.mubr.bf16.mxu0 0
      %2694 = vmatmul.mubr.bf16.gmra.mrb[0].mxu0 %v2611
      %v2695 = vpop.f32.mrb[0].mxu0
      %v2696 = vadd.f32 0.0, %v2695
      %v2697 = vpop.f32.mrb[0].mxu0
      %v2698 = vpop.f32.mrb[0].mxu0
      %v2699 = vadd.f32 0.0, %v2698
      %v2700 = vpop.f32.mrb[0].mxu0
      %2701 = vmatprep.mubr.bf16.mxu0 0
      %2702 = vmatmul.mubr.bf16.gmra.mrb[0].mxu0 %v2612
      %v2703 = vpop.f32.mrb[0].mxu0
      %v2704 = vadd.f32 0.0, %v2703
      %v2705 = vpop.f32.mrb[0].mxu0
      %v2706 = vpop.f32.mrb[0].mxu0
      %v2707 = vadd.f32 0.0, %v2706
      %v2708 = vpop.f32.mrb[0].mxu0
      %2709 = vdwg.mxu0
      %v2710 = vmax.f32 %v2696, 0.0
      %v2711 = vmax.f32 %v2699, 0.0
      %v2712 = vmax.f32 %v2704, 0.0
      %v2713 = vmax.f32 %v2707, 0.0
      %v2714 = vadd.f32 %v2289, %v2710
      %v2715 = vadd.f32 %v2290, %v2711
      %v2716 = vadd.f32 %v2291, %v2712
      %v2717 = vadd.f32 %v2292, %v2713
      %s2718 = scalar_lea.vmem %s10, 2
      %v2719 = vld [vmem:[%s2718] sm:$0x1]
      %s2720 = scalar_lea.vmem %s11, 2
      %v2721 = vld [vmem:[%s2720] sm:$0x1]
      %2722 = vadd.xlane.f32.xlu0 %v2714
      %v2723 = vpop.xlane.xlu0 %2722
      %2724 = vadd.xlane.f32.xlu0 %v2715
      %v2725 = vpop.xlane.xlu0 %2724
      %2726 = vadd.xlane.f32.xlu0 %v2716
      %v2727 = vpop.xlane.xlu0 %2726
      %2728 = vadd.xlane.f32.xlu0 %v2717
      %v2729 = vpop.xlane.xlu0 %2728
      %v2730 = vmul.f32 %v2723, %v1824
      %v2731 = vmul.f32 %v2725, %v1824
      %v2732 = vmul.f32 %v2727, %v1824
      %v2733 = vmul.f32 %v2729, %v1824
      %v2734 = vsub.f32 %v2714, %v2730
      %v2735 = vsub.f32 %v2715, %v2731
      %v2736 = vsub.f32 %v2716, %v2732
      %v2737 = vsub.f32 %v2717, %v2733
      %v2738 = vmul.f32 %v2734, %v2734
      %v2739 = vmul.f32 %v2735, %v2735
      %v2740 = vmul.f32 %v2736, %v2736
      %v2741 = vmul.f32 %v2737, %v2737
      %2742 = vadd.xlane.f32.xlu0 %v2738
      %v2743 = vpop.xlane.xlu0 %2742
      %2744 = vadd.xlane.f32.xlu0 %v2739
      %v2745 = vpop.xlane.xlu0 %2744
      %2746 = vadd.xlane.f32.xlu0 %v2740
      %v2747 = vpop.xlane.xlu0 %2746
      %2748 = vadd.xlane.f32.xlu0 %v2741
      %v2749 = vpop.xlane.xlu0 %2748
      %v2750 = vmul.f32 %v2743, %v1824
      %v2751 = vmul.f32 %v2745, %v1824
      %v2752 = vmul.f32 %v2747, %v1824
      %v2753 = vmul.f32 %v2749, %v1824
      %v2754 = vadd.f32 %v2750, 1e-05
      %v2755 = vadd.f32 %v2751, 1e-05
      %v2756 = vadd.f32 %v2752, 1e-05
      %v2757 = vadd.f32 %v2753, 1e-05
      %v2758 = vrsqrt.pop %v2754
      %v2759 = vrsqrt.pop %v2755
      %v2760 = vrsqrt.pop %v2756
      %v2761 = vrsqrt.pop %v2757
      %v2762 = vmul.f32 %v2734, %v2758
      %v2763 = vmul.f32 %v2735, %v2759
      %v2764 = vmul.f32 %v2736, %v2760
      %v2765 = vmul.f32 %v2737, %v2761
      %v2767 = vlaneseq
      %v2768 = vshrl.u32 %v2767, 7
      %v2769 = vsub.s32 0, %v2768
      %v2770 = vrot.slane %v2719, %v2769
      %v2772 = vmul.f32 %v2762, %v2770
      %v2773 = vmul.f32 %v2763, %v2770
      %v2774 = vmul.f32 %v2764, %v2770
      %v2775 = vmul.f32 %v2765, %v2770
      %v2777 = vlaneseq
      %v2778 = vshrl.u32 %v2777, 7
      %v2779 = vsub.s32 0, %v2778
      %v2780 = vrot.slane %v2721, %v2779
      %v2782 = vadd.f32 %v2772, %v2780
      %v2783 = vadd.f32 %v2773, %v2780
      %v2784 = vadd.f32 %v2774, %v2780
      %v2785 = vadd.f32 %v2775, %v2780
      %v2786 = vpack.c.bf16 %v2783, %v2782
      %v2787 = vpack.c.bf16 %v2785, %v2784
      %2788 = vmatprep.subr.bf16.mxu0 0
      %2789 = vmatpush1.bf16.msra.mxu0 %v2786
      %2790 = vmatprep.subr.bf16.mxu0 0
      %2791 = vmatpush1.bf16.msra.mxu0 %v2787
      %2792 = vmatprep.subr.bf16.mxu0 0
      %2793 = vmatpush1.bf16.msra.mxu0 0
      %2794 = vmatprep.subr.bf16.mxu0 0
      %2795 = vmatpush1.bf16.msra.mxu0 0
      %2796 = vmatprep.subr.bf16.mxu0 0
      %2797 = vmatpush1.bf16.msra.mxu0 0
      %2798 = vmatprep.subr.bf16.mxu0 0
      %2799 = vmatpush1.bf16.msra.mxu0 0
      %2800 = vmatprep.subr.bf16.mxu0 0
      %2801 = vmatpush1.bf16.msra.mxu0 0
      %2802 = vmatprep.subr.bf16.mxu0 0
      %2803 = vmatpush1.bf16.msra.mxu0 0
      %2804 = vmatprep.subr.bf16.mxu0 0
      %2805 = vmatpush1.bf16.msra.mxu0 0
      %2806 = vmatprep.subr.bf16.mxu0 0
      %2807 = vmatpush1.bf16.msra.mxu0 0
      %2808 = vmatprep.subr.bf16.mxu0 0
      %2809 = vmatpush1.bf16.msra.mxu0 0
      %2810 = vmatprep.subr.bf16.mxu0 0
      %2811 = vmatpush1.bf16.msra.mxu0 0
      %2812 = vmatprep.subr.bf16.mxu0 0
      %2813 = vmatpush1.bf16.msra.mxu0 0
      %2814 = vmatprep.subr.bf16.mxu0 0
      %2815 = vmatpush1.bf16.msra.mxu0 0
      %2816 = vmatprep.subr.bf16.mxu0 0
      %2817 = vmatpush1.bf16.msra.mxu0 0
      %2818 = vmatprep.subr.bf16.mxu0 0
      %2819 = vmatpush1.bf16.msra.mxu0 0
      %2820 = vmatprep.mubr.bf16.mxu0 0
      %2821 = vmatmul.mubr.bf16.gmra.mrb[0].mxu0 %v1899
      %v2822 = vpop.f32.mrb[0].mxu0
      %v2823 = vadd.f32 0.0, %v2822
      %v2824 = vpop.f32.mrb[0].mxu0
      %v2825 = vpop.f32.mrb[0].mxu0
      %v2826 = vadd.f32 0.0, %v2825
      %v2827 = vpop.f32.mrb[0].mxu0
      %2828 = vmatprep.mubr.bf16.mxu0 0
      %2829 = vmatmul.mubr.bf16.gmra.mrb[0].mxu0 %v1902
      %v2830 = vpop.f32.mrb[0].mxu0
      %v2831 = vadd.f32 0.0, %v2830
      %v2832 = vpop.f32.mrb[0].mxu0
      %v2833 = vpop.f32.mrb[0].mxu0
      %v2834 = vadd.f32 0.0, %v2833
      %v2835 = vpop.f32.mrb[0].mxu0
      %2836 = vmatprep.mubr.bf16.mxu0 0
      %2837 = vmatmul.mubr.bf16.gmra.mrb[0].mxu0 %v1905
      %v2838 = vpop.f32.mrb[0].mxu0
      %v2839 = vadd.f32 0.0, %v2838
      %v2840 = vpop.f32.mrb[0].mxu0
      %v2841 = vpop.f32.mrb[0].mxu0
      %v2842 = vadd.f32 0.0, %v2841
      %v2843 = vpop.f32.mrb[0].mxu0
      %2844 = vmatprep.mubr.bf16.mxu0 0
      %2845 = vmatmul.mubr.bf16.gmra.mrb[0].mxu0 %v1908
      %v2846 = vpop.f32.mrb[0].mxu0
      %v2847 = vadd.f32 0.0, %v2846
      %v2848 = vpop.f32.mrb[0].mxu0
      %v2849 = vpop.f32.mrb[0].mxu0
      %v2850 = vadd.f32 0.0, %v2849
      %v2851 = vpop.f32.mrb[0].mxu0
      %2852 = vmatprep.mubr.bf16.mxu0 0
      %2853 = vmatmul.mubr.bf16.gmra.mrb[0].mxu0 %v1911
      %v2854 = vpop.f32.mrb[0].mxu0
      %v2855 = vadd.f32 0.0, %v2854
      %v2856 = vpop.f32.mrb[0].mxu0
      %v2857 = vpop.f32.mrb[0].mxu0
      %v2858 = vadd.f32 0.0, %v2857
      %v2859 = vpop.f32.mrb[0].mxu0
      %2860 = vmatprep.mubr.bf16.mxu0 0
      %2861 = vmatmul.mubr.bf16.gmra.mrb[0].mxu0 %v1914
      %v2862 = vpop.f32.mrb[0].mxu0
      %v2863 = vadd.f32 0.0, %v2862
      %v2864 = vpop.f32.mrb[0].mxu0
      %v2865 = vpop.f32.mrb[0].mxu0
      %v2866 = vadd.f32 0.0, %v2865
      %v2867 = vpop.f32.mrb[0].mxu0
      %2868 = vmatprep.mubr.bf16.mxu0 0
      %2869 = vmatmul.mubr.bf16.gmra.mrb[0].mxu0 %v1917
      %v2870 = vpop.f32.mrb[0].mxu0
      %v2871 = vadd.f32 0.0, %v2870
      %v2872 = vpop.f32.mrb[0].mxu0
      %v2873 = vpop.f32.mrb[0].mxu0
      %v2874 = vadd.f32 0.0, %v2873
      %v2875 = vpop.f32.mrb[0].mxu0
      %2876 = vmatprep.mubr.bf16.mxu0 0
      %2877 = vmatmul.mubr.bf16.gmra.mrb[0].mxu0 %v1920
      %v2878 = vpop.f32.mrb[0].mxu0
      %v2879 = vadd.f32 0.0, %v2878
      %v2880 = vpop.f32.mrb[0].mxu0
      %v2881 = vpop.f32.mrb[0].mxu0
      %v2882 = vadd.f32 0.0, %v2881
      %v2883 = vpop.f32.mrb[0].mxu0
      %2884 = vmatprep.mubr.bf16.mxu0 0
      %2885 = vmatmul.mubr.bf16.gmra.mrb[0].mxu0 %v1923
      %v2886 = vpop.f32.mrb[0].mxu0
      %v2887 = vadd.f32 0.0, %v2886
      %v2888 = vpop.f32.mrb[0].mxu0
      %v2889 = vpop.f32.mrb[0].mxu0
      %v2890 = vadd.f32 0.0, %v2889
      %v2891 = vpop.f32.mrb[0].mxu0
      %2892 = vmatprep.mubr.bf16.mxu0 0
      %2893 = vmatmul.mubr.bf16.gmra.mrb[0].mxu0 %v1926
      %v2894 = vpop.f32.mrb[0].mxu0
      %v2895 = vadd.f32 0.0, %v2894
      %v2896 = vpop.f32.mrb[0].mxu0
      %v2897 = vpop.f32.mrb[0].mxu0
      %v2898 = vadd.f32 0.0, %v2897
      %v2899 = vpop.f32.mrb[0].mxu0
      %2900 = vmatprep.mubr.bf16.mxu0 0
      %2901 = vmatmul.mubr.bf16.gmra.mrb[0].mxu0 %v1929
      %v2902 = vpop.f32.mrb[0].mxu0
      %v2903 = vadd.f32 0.0, %v2902
      %v2904 = vpop.f32.mrb[0].mxu0
      %v2905 = vpop.f32.mrb[0].mxu0
      %v2906 = vadd.f32 0.0, %v2905
      %v2907 = vpop.f32.mrb[0].mxu0
      %2908 = vmatprep.mubr.bf16.mxu0 0
      %2909 = vmatmul.mubr.bf16.gmra.mrb[0].mxu0 %v1932
      %v2910 = vpop.f32.mrb[0].mxu0
      %v2911 = vadd.f32 0.0, %v2910
      %v2912 = vpop.f32.mrb[0].mxu0
      %v2913 = vpop.f32.mrb[0].mxu0
      %v2914 = vadd.f32 0.0, %v2913
      %v2915 = vpop.f32.mrb[0].mxu0
      %2916 = vmatprep.mubr.bf16.mxu0 0
      %2917 = vmatmul.mubr.bf16.gmra.mrb[0].mxu0 %v1935
      %v2918 = vpop.f32.mrb[0].mxu0
      %v2919 = vadd.f32 0.0, %v2918
      %v2920 = vpop.f32.mrb[0].mxu0
      %v2921 = vpop.f32.mrb[0].mxu0
      %v2922 = vadd.f32 0.0, %v2921
      %v2923 = vpop.f32.mrb[0].mxu0
      %2924 = vmatprep.mubr.bf16.mxu0 0
      %2925 = vmatmul.mubr.bf16.gmra.mrb[0].mxu0 %v1938
      %v2926 = vpop.f32.mrb[0].mxu0
      %v2927 = vadd.f32 0.0, %v2926
      %v2928 = vpop.f32.mrb[0].mxu0
      %v2929 = vpop.f32.mrb[0].mxu0
      %v2930 = vadd.f32 0.0, %v2929
      %v2931 = vpop.f32.mrb[0].mxu0
      %2932 = vdwg.mxu0
      %s2933 = scalar_lea.vmem %s12, 16
      %v2934 = vld [vmem:[%s2933] sm:$0x7f]
      %v2935 = vlaneseq
      %v2936 = vshrl.u32 %v2935, 7
      %v2937 = vsub.s32 0, %v2936
      %v2938 = vrot.slane %v2934, %v2937
      %v2939 = vmul.f32 %v2823, %v2938
      %v2940 = vmul.f32 %v2826, %v2938
      %v2941 = vmul.f32 %v2831, %v2938
      %v2942 = vmul.f32 %v2834, %v2938
      %v2943 = vlaneseq
      %v2944 = vshrl.u32 %v2943, 7
      %v2945 = vsub.s32 1, %v2944
      %v2946 = vrot.slane %v2934, %v2945
      %v2947 = vmul.f32 %v2839, %v2946
      %v2948 = vmul.f32 %v2842, %v2946
      %v2949 = vmul.f32 %v2847, %v2946
      %v2950 = vmul.f32 %v2850, %v2946
      %v2951 = vadd.f32 %v2939, %v2947
      %v2952 = vadd.f32 %v2940, %v2948
      %v2953 = vadd.f32 %v2941, %v2949
      %v2954 = vadd.f32 %v2942, %v2950
      %v2955 = vlaneseq
      %v2956 = vshrl.u32 %v2955, 7
      %v2957 = vsub.s32 2, %v2956
      %v2958 = vrot.slane %v2934, %v2957
      %v2959 = vmul.f32 %v2855, %v2958
      %v2960 = vmul.f32 %v2858, %v2958
      %v2961 = vmul.f32 %v2863, %v2958
      %v2962 = vmul.f32 %v2866, %v2958
      %v2963 = vadd.f32 %v2951, %v2959
      %v2964 = vadd.f32 %v2952, %v2960
      %v2965 = vadd.f32 %v2953, %v2961
      %v2966 = vadd.f32 %v2954, %v2962
      %v2967 = vlaneseq
      %v2968 = vshrl.u32 %v2967, 7
      %v2969 = vsub.s32 3, %v2968
      %v2970 = vrot.slane %v2934, %v2969
      %v2971 = vmul.f32 %v2871, %v2970
      %v2972 = vmul.f32 %v2874, %v2970
      %v2973 = vmul.f32 %v2879, %v2970
      %v2974 = vmul.f32 %v2882, %v2970
      %v2975 = vadd.f32 %v2963, %v2971
      %v2976 = vadd.f32 %v2964, %v2972
      %v2977 = vadd.f32 %v2965, %v2973
      %v2978 = vadd.f32 %v2966, %v2974
      %v2979 = vlaneseq
      %v2980 = vshrl.u32 %v2979, 7
      %v2981 = vsub.s32 4, %v2980
      %v2982 = vrot.slane %v2934, %v2981
      %v2983 = vmul.f32 %v2887, %v2982
      %v2984 = vmul.f32 %v2890, %v2982
      %v2985 = vmul.f32 %v2895, %v2982
      %v2986 = vmul.f32 %v2898, %v2982
      %v2987 = vadd.f32 %v2975, %v2983
      %v2988 = vadd.f32 %v2976, %v2984
      %v2989 = vadd.f32 %v2977, %v2985
      %v2990 = vadd.f32 %v2978, %v2986
      %v2991 = vlaneseq
      %v2992 = vshrl.u32 %v2991, 7
      %v2993 = vsub.s32 5, %v2992
      %v2994 = vrot.slane %v2934, %v2993
      %v2995 = vmul.f32 %v2903, %v2994
      %v2996 = vmul.f32 %v2906, %v2994
      %v2997 = vmul.f32 %v2911, %v2994
      %v2998 = vmul.f32 %v2914, %v2994
      %v2999 = vadd.f32 %v2987, %v2995
      %v3000 = vadd.f32 %v2988, %v2996
      %v3001 = vadd.f32 %v2989, %v2997
      %v3002 = vadd.f32 %v2990, %v2998
      %v3003 = vlaneseq
      %v3004 = vshrl.u32 %v3003, 7
      %v3005 = vsub.s32 6, %v3004
      %v3006 = vrot.slane %v2934, %v3005
      %v3007 = vmul.f32 %v2919, %v3006
      %v3008 = vmul.f32 %v2922, %v3006
      %v3009 = vmul.f32 %v2927, %v3006
      %v3010 = vmul.f32 %v2930, %v3006
      %v3011 = vadd.f32 %v2999, %v3007
      %v3012 = vadd.f32 %v3000, %v3008
      %v3013 = vadd.f32 %v3001, %v3009
      %v3014 = vadd.f32 %v3002, %v3010
      %v3015 = vmax.f32 %v3011, 0.0
      %v3016 = vmax.f32 %v3012, 0.0
      %v3017 = vmax.f32 %v3013, 0.0
      %v3018 = vmax.f32 %v3014, 0.0
      %s3019 = scalar_lea.vmem %s13, 128
      %v3020 = vld [vmem:[%s3019] sm:$0xf]
      %v3021 = vld [vmem:[%s3019 + $0x4] sm:$0xf]
      %v3022 = vld [vmem:[%s3019 + $0x8] sm:$0xf]
      %v3023 = vld [vmem:[%s3019 + $0xc] sm:$0xf]
      %v3024 = vld [vmem:[%s3019 + $0x10] sm:$0xf]
      %v3025 = vld [vmem:[%s3019 + $0x14] sm:$0xf]
      %v3026 = vld [vmem:[%s3019 + $0x18] sm:$0xf]
      %v3027 = vld [vmem:[%s3019 + $0x1c] sm:$0xf]
      %v3028 = vld [vmem:[%s3019 + $0x20] sm:$0xf]
      %v3029 = vld [vmem:[%s3019 + $0x24] sm:$0xf]
      %v3030 = vld [vmem:[%s3019 + $0x28] sm:$0xf]
      %v3031 = vld [vmem:[%s3019 + $0x2c] sm:$0xf]
      %v3032 = vld [vmem:[%s3019 + $0x30] sm:$0xf]
      %v3033 = vld [vmem:[%s3019 + $0x34] sm:$0xf]
      %v3034 = vld [vmem:[%s3019 + $0x38] sm:$0xf]
      %v3035 = vld [vmem:[%s3019 + $0x3c] sm:$0xf]
      %v3036 = vpack.c.bf16 %v3016, %v3015
      %v3037 = vpack.c.bf16 %v3018, %v3017
      %v3054 = vunpack.c.l.b16 %v3020
      %v3055 = vunpack.c.l.b16 %v3021
      %v3056 = vunpack.c.l.b16 %v3022
      %v3057 = vunpack.c.l.b16 %v3023
      %v3058 = vunpack.c.l.b16 %v3024
      %v3059 = vunpack.c.l.b16 %v3025
      %v3060 = vunpack.c.l.b16 %v3026
      %v3061 = vunpack.c.l.b16 %v3027
      %v3062 = vunpack.c.l.b16 %v3028
      %v3063 = vunpack.c.l.b16 %v3029
      %v3064 = vunpack.c.l.b16 %v3030
      %v3065 = vunpack.c.l.b16 %v3031
      %v3066 = vunpack.c.l.b16 %v3032
      %v3067 = vunpack.c.l.b16 %v3033
      %v3068 = vunpack.c.l.b16 %v3034
      %v3069 = vunpack.c.l.b16 %v3035
      %v3070 = vpack.c.b16 %v3055, %v3054
      %v3071 = vpack.c.b16 %v3057, %v3056
      %v3072 = vpack.c.b16 %v3059, %v3058
      %v3073 = vpack.c.b16 %v3061, %v3060
      %v3074 = vpack.c.b16 %v3063, %v3062
      %v3075 = vpack.c.b16 %v3065, %v3064
      %v3076 = vpack.c.b16 %v3067, %v3066
      %v3077 = vpack.c.b16 %v3069, %v3068
      %3086 = vmatprep.subr.bf16.mxu0 0
      %3087 = vmatpush1.bf16.msra.mxu0 %v3070
      %3088 = vmatprep.subr.bf16.mxu0 0
      %3089 = vmatpush1.bf16.msra.mxu0 %v3071
      %3090 = vmatprep.subr.bf16.mxu0 0
      %3091 = vmatpush1.bf16.msra.mxu0 %v3072
      %3092 = vmatprep.subr.bf16.mxu0 0
      %3093 = vmatpush1.bf16.msra.mxu0 %v3073
      %3094 = vmatprep.subr.bf16.mxu0 0
      %3095 = vmatpush1.bf16.msra.mxu0 %v3074
      %3096 = vmatprep.subr.bf16.mxu0 0
      %3097 = vmatpush1.bf16.msra.mxu0 %v3075
      %3098 = vmatprep.subr.bf16.mxu0 0
      %3099 = vmatpush1.bf16.msra.mxu0 %v3076
      %3100 = vmatprep.subr.bf16.mxu0 0
      %3101 = vmatpush1.bf16.msra.mxu0 %v3077
      %3102 = vmatprep.subr.bf16.mxu0 0
      %3103 = vmatpush1.bf16.msra.mxu0 0
      %3104 = vmatprep.subr.bf16.mxu0 0
      %3105 = vmatpush1.bf16.msra.mxu0 0
      %3106 = vmatprep.subr.bf16.mxu0 0
      %3107 = vmatpush1.bf16.msra.mxu0 0
      %3108 = vmatprep.subr.bf16.mxu0 0
      %3109 = vmatpush1.bf16.msra.mxu0 0
      %3110 = vmatprep.subr.bf16.mxu0 0
      %3111 = vmatpush1.bf16.msra.mxu0 0
      %3112 = vmatprep.subr.bf16.mxu0 0
      %3113 = vmatpush1.bf16.msra.mxu0 0
      %3114 = vmatprep.subr.bf16.mxu0 0
      %3115 = vmatpush1.bf16.msra.mxu0 0
      %3116 = vmatprep.subr.bf16.mxu0 0
      %3117 = vmatpush1.bf16.msra.mxu0 0
      %3118 = vmatprep.mubr.bf16.mxu0 0
      %3119 = vmatmul.mubr.bf16.gmra.mrb[0].mxu0 %v3036
      %v3120 = vpop.f32.mrb[0].mxu0
      %v3121 = vadd.f32 0.0, %v3120
      %v3122 = vpop.f32.mrb[0].mxu0
      %v3123 = vpop.f32.mrb[0].mxu0
      %v3124 = vadd.f32 0.0, %v3123
      %v3125 = vpop.f32.mrb[0].mxu0
      %3126 = vmatprep.mubr.bf16.mxu0 0
      %3127 = vmatmul.mubr.bf16.gmra.mrb[0].mxu0 %v3037
      %v3128 = vpop.f32.mrb[0].mxu0
      %v3129 = vadd.f32 0.0, %v3128
      %v3130 = vpop.f32.mrb[0].mxu0
      %v3131 = vpop.f32.mrb[0].mxu0
      %v3132 = vadd.f32 0.0, %v3131
      %v3133 = vpop.f32.mrb[0].mxu0
      %3134 = vdwg.mxu0
      %v3135 = vmax.f32 %v3121, 0.0
      %v3136 = vmax.f32 %v3124, 0.0
      %v3137 = vmax.f32 %v3129, 0.0
      %v3138 = vmax.f32 %v3132, 0.0
      %v3139 = vadd.f32 %v2714, %v3135
      %v3140 = vadd.f32 %v2715, %v3136
      %v3141 = vadd.f32 %v2716, %v3137
      %v3142 = vadd.f32 %v2717, %v3138
      %s3143 = scalar_lea.vmem %s10, 3
      %v3144 = vld [vmem:[%s3143] sm:$0x1]
      %s3145 = scalar_lea.vmem %s11, 3
      %v3146 = vld [vmem:[%s3145] sm:$0x1]
      %3147 = vadd.xlane.f32.xlu0 %v3139
      %v3148 = vpop.xlane.xlu0 %3147
      %3149 = vadd.xlane.f32.xlu0 %v3140
      %v3150 = vpop.xlane.xlu0 %3149
      %3151 = vadd.xlane.f32.xlu0 %v3141
      %v3152 = vpop.xlane.xlu0 %3151
      %3153 = vadd.xlane.f32.xlu0 %v3142
      %v3154 = vpop.xlane.xlu0 %3153
      %v3155 = vmul.f32 %v3148, %v1824
      %v3156 = vmul.f32 %v3150, %v1824
      %v3157 = vmul.f32 %v3152, %v1824
      %v3158 = vmul.f32 %v3154, %v1824
      %v3159 = vsub.f32 %v3139, %v3155
      %v3160 = vsub.f32 %v3140, %v3156
      %v3161 = vsub.f32 %v3141, %v3157
      %v3162 = vsub.f32 %v3142, %v3158
      %v3163 = vmul.f32 %v3159, %v3159
      %v3164 = vmul.f32 %v3160, %v3160
      %v3165 = vmul.f32 %v3161, %v3161
      %v3166 = vmul.f32 %v3162, %v3162
      %3167 = vadd.xlane.f32.xlu0 %v3163
      %v3168 = vpop.xlane.xlu0 %3167
      %3169 = vadd.xlane.f32.xlu0 %v3164
      %v3170 = vpop.xlane.xlu0 %3169
      %3171 = vadd.xlane.f32.xlu0 %v3165
      %v3172 = vpop.xlane.xlu0 %3171
      %3173 = vadd.xlane.f32.xlu0 %v3166
      %v3174 = vpop.xlane.xlu0 %3173
      %v3175 = vmul.f32 %v3168, %v1824
      %v3176 = vmul.f32 %v3170, %v1824
      %v3177 = vmul.f32 %v3172, %v1824
      %v3178 = vmul.f32 %v3174, %v1824
      %v3179 = vadd.f32 %v3175, 1e-05
      %v3180 = vadd.f32 %v3176, 1e-05
      %v3181 = vadd.f32 %v3177, 1e-05
      %v3182 = vadd.f32 %v3178, 1e-05
      %v3183 = vrsqrt.pop %v3179
      %v3184 = vrsqrt.pop %v3180
      %v3185 = vrsqrt.pop %v3181
      %v3186 = vrsqrt.pop %v3182
      %v3187 = vmul.f32 %v3159, %v3183
      %v3188 = vmul.f32 %v3160, %v3184
      %v3189 = vmul.f32 %v3161, %v3185
      %v3190 = vmul.f32 %v3162, %v3186
      %v3192 = vlaneseq
      %v3193 = vshrl.u32 %v3192, 7
      %v3194 = vsub.s32 0, %v3193
      %v3195 = vrot.slane %v3144, %v3194
      %v3197 = vmul.f32 %v3187, %v3195
      %v3198 = vmul.f32 %v3188, %v3195
      %v3199 = vmul.f32 %v3189, %v3195
      %v3200 = vmul.f32 %v3190, %v3195
      %v3202 = vlaneseq
      %v3203 = vshrl.u32 %v3202, 7
      %v3204 = vsub.s32 0, %v3203
      %v3205 = vrot.slane %v3146, %v3204
      %v3207 = vadd.f32 %v3197, %v3205
      %v3208 = vadd.f32 %v3198, %v3205
      %v3209 = vadd.f32 %v3199, %v3205
      %v3210 = vadd.f32 %v3200, %v3205
      %v3211 = vpack.c.bf16 %v3208, %v3207
      %v3212 = vpack.c.bf16 %v3210, %v3209
      %3213 = vmatprep.subr.bf16.mxu0 0
      %3214 = vmatpush1.bf16.msra.mxu0 %v3211
      %3215 = vmatprep.subr.bf16.mxu0 0
      %3216 = vmatpush1.bf16.msra.mxu0 %v3212
      %3217 = vmatprep.subr.bf16.mxu0 0
      %3218 = vmatpush1.bf16.msra.mxu0 0
      %3219 = vmatprep.subr.bf16.mxu0 0
      %3220 = vmatpush1.bf16.msra.mxu0 0
      %3221 = vmatprep.subr.bf16.mxu0 0
      %3222 = vmatpush1.bf16.msra.mxu0 0
      %3223 = vmatprep.subr.bf16.mxu0 0
      %3224 = vmatpush1.bf16.msra.mxu0 0
      %3225 = vmatprep.subr.bf16.mxu0 0
      %3226 = vmatpush1.bf16.msra.mxu0 0
      %3227 = vmatprep.subr.bf16.mxu0 0
      %3228 = vmatpush1.bf16.msra.mxu0 0
      %3229 = vmatprep.subr.bf16.mxu0 0
      %3230 = vmatpush1.bf16.msra.mxu0 0
      %3231 = vmatprep.subr.bf16.mxu0 0
      %3232 = vmatpush1.bf16.msra.mxu0 0
      %3233 = vmatprep.subr.bf16.mxu0 0
      %3234 = vmatpush1.bf16.msra.mxu0 0
      %3235 = vmatprep.subr.bf16.mxu0 0
      %3236 = vmatpush1.bf16.msra.mxu0 0
      %3237 = vmatprep.subr.bf16.mxu0 0
      %3238 = vmatpush1.bf16.msra.mxu0 0
      %3239 = vmatprep.subr.bf16.mxu0 0
      %3240 = vmatpush1.bf16.msra.mxu0 0
      %3241 = vmatprep.subr.bf16.mxu0 0
      %3242 = vmatpush1.bf16.msra.mxu0 0
      %3243 = vmatprep.subr.bf16.mxu0 0
      %3244 = vmatpush1.bf16.msra.mxu0 0
      %3245 = vmatprep.mubr.bf16.mxu0 0
      %3246 = vmatmul.mubr.bf16.gmra.mrb[0].mxu0 %v1899
      %v3247 = vpop.f32.mrb[0].mxu0
      %v3248 = vadd.f32 0.0, %v3247
      %v3249 = vpop.f32.mrb[0].mxu0
      %v3250 = vpop.f32.mrb[0].mxu0
      %v3251 = vadd.f32 0.0, %v3250
      %v3252 = vpop.f32.mrb[0].mxu0
      %3253 = vmatprep.mubr.bf16.mxu0 0
      %3254 = vmatmul.mubr.bf16.gmra.mrb[0].mxu0 %v1902
      %v3255 = vpop.f32.mrb[0].mxu0
      %v3256 = vadd.f32 0.0, %v3255
      %v3257 = vpop.f32.mrb[0].mxu0
      %v3258 = vpop.f32.mrb[0].mxu0
      %v3259 = vadd.f32 0.0, %v3258
      %v3260 = vpop.f32.mrb[0].mxu0
      %3261 = vmatprep.mubr.bf16.mxu0 0
      %3262 = vmatmul.mubr.bf16.gmra.mrb[0].mxu0 %v1905
      %v3263 = vpop.f32.mrb[0].mxu0
      %v3264 = vadd.f32 0.0, %v3263
      %v3265 = vpop.f32.mrb[0].mxu0
      %v3266 = vpop.f32.mrb[0].mxu0
      %v3267 = vadd.f32 0.0, %v3266
      %v3268 = vpop.f32.mrb[0].mxu0
      %3269 = vmatprep.mubr.bf16.mxu0 0
      %3270 = vmatmul.mubr.bf16.gmra.mrb[0].mxu0 %v1908
      %v3271 = vpop.f32.mrb[0].mxu0
      %v3272 = vadd.f32 0.0, %v3271
      %v3273 = vpop.f32.mrb[0].mxu0
      %v3274 = vpop.f32.mrb[0].mxu0
      %v3275 = vadd.f32 0.0, %v3274
      %v3276 = vpop.f32.mrb[0].mxu0
      %3277 = vmatprep.mubr.bf16.mxu0 0
      %3278 = vmatmul.mubr.bf16.gmra.mrb[0].mxu0 %v1911
      %v3279 = vpop.f32.mrb[0].mxu0
      %v3280 = vadd.f32 0.0, %v3279
      %v3281 = vpop.f32.mrb[0].mxu0
      %v3282 = vpop.f32.mrb[0].mxu0
      %v3283 = vadd.f32 0.0, %v3282
      %v3284 = vpop.f32.mrb[0].mxu0
      %3285 = vmatprep.mubr.bf16.mxu0 0
      %3286 = vmatmul.mubr.bf16.gmra.mrb[0].mxu0 %v1914
      %v3287 = vpop.f32.mrb[0].mxu0
      %v3288 = vadd.f32 0.0, %v3287
      %v3289 = vpop.f32.mrb[0].mxu0
      %v3290 = vpop.f32.mrb[0].mxu0
      %v3291 = vadd.f32 0.0, %v3290
      %v3292 = vpop.f32.mrb[0].mxu0
      %3293 = vmatprep.mubr.bf16.mxu0 0
      %3294 = vmatmul.mubr.bf16.gmra.mrb[0].mxu0 %v1917
      %v3295 = vpop.f32.mrb[0].mxu0
      %v3296 = vadd.f32 0.0, %v3295
      %v3297 = vpop.f32.mrb[0].mxu0
      %v3298 = vpop.f32.mrb[0].mxu0
      %v3299 = vadd.f32 0.0, %v3298
      %v3300 = vpop.f32.mrb[0].mxu0
      %3301 = vmatprep.mubr.bf16.mxu0 0
      %3302 = vmatmul.mubr.bf16.gmra.mrb[0].mxu0 %v1920
      %v3303 = vpop.f32.mrb[0].mxu0
      %v3304 = vadd.f32 0.0, %v3303
      %v3305 = vpop.f32.mrb[0].mxu0
      %v3306 = vpop.f32.mrb[0].mxu0
      %v3307 = vadd.f32 0.0, %v3306
      %v3308 = vpop.f32.mrb[0].mxu0
      %3309 = vmatprep.mubr.bf16.mxu0 0
      %3310 = vmatmul.mubr.bf16.gmra.mrb[0].mxu0 %v1923
      %v3311 = vpop.f32.mrb[0].mxu0
      %v3312 = vadd.f32 0.0, %v3311
      %v3313 = vpop.f32.mrb[0].mxu0
      %v3314 = vpop.f32.mrb[0].mxu0
      %v3315 = vadd.f32 0.0, %v3314
      %v3316 = vpop.f32.mrb[0].mxu0
      %3317 = vmatprep.mubr.bf16.mxu0 0
      %3318 = vmatmul.mubr.bf16.gmra.mrb[0].mxu0 %v1926
      %v3319 = vpop.f32.mrb[0].mxu0
      %v3320 = vadd.f32 0.0, %v3319
      %v3321 = vpop.f32.mrb[0].mxu0
      %v3322 = vpop.f32.mrb[0].mxu0
      %v3323 = vadd.f32 0.0, %v3322
      %v3324 = vpop.f32.mrb[0].mxu0
      %3325 = vmatprep.mubr.bf16.mxu0 0
      %3326 = vmatmul.mubr.bf16.gmra.mrb[0].mxu0 %v1929
      %v3327 = vpop.f32.mrb[0].mxu0
      %v3328 = vadd.f32 0.0, %v3327
      %v3329 = vpop.f32.mrb[0].mxu0
      %v3330 = vpop.f32.mrb[0].mxu0
      %v3331 = vadd.f32 0.0, %v3330
      %v3332 = vpop.f32.mrb[0].mxu0
      %3333 = vmatprep.mubr.bf16.mxu0 0
      %3334 = vmatmul.mubr.bf16.gmra.mrb[0].mxu0 %v1932
      %v3335 = vpop.f32.mrb[0].mxu0
      %v3336 = vadd.f32 0.0, %v3335
      %v3337 = vpop.f32.mrb[0].mxu0
      %v3338 = vpop.f32.mrb[0].mxu0
      %v3339 = vadd.f32 0.0, %v3338
      %v3340 = vpop.f32.mrb[0].mxu0
      %3341 = vmatprep.mubr.bf16.mxu0 0
      %3342 = vmatmul.mubr.bf16.gmra.mrb[0].mxu0 %v1935
      %v3343 = vpop.f32.mrb[0].mxu0
      %v3344 = vadd.f32 0.0, %v3343
      %v3345 = vpop.f32.mrb[0].mxu0
      %v3346 = vpop.f32.mrb[0].mxu0
      %v3347 = vadd.f32 0.0, %v3346
      %v3348 = vpop.f32.mrb[0].mxu0
      %3349 = vmatprep.mubr.bf16.mxu0 0
      %3350 = vmatmul.mubr.bf16.gmra.mrb[0].mxu0 %v1938
      %v3351 = vpop.f32.mrb[0].mxu0
      %v3352 = vadd.f32 0.0, %v3351
      %v3353 = vpop.f32.mrb[0].mxu0
      %v3354 = vpop.f32.mrb[0].mxu0
      %v3355 = vadd.f32 0.0, %v3354
      %v3356 = vpop.f32.mrb[0].mxu0
      %3357 = vdwg.mxu0
      %s3358 = scalar_lea.vmem %s12, 24
      %v3359 = vld [vmem:[%s3358] sm:$0x7f]
      %v3360 = vlaneseq
      %v3361 = vshrl.u32 %v3360, 7
      %v3362 = vsub.s32 0, %v3361
      %v3363 = vrot.slane %v3359, %v3362
      %v3364 = vmul.f32 %v3248, %v3363
      %v3365 = vmul.f32 %v3251, %v3363
      %v3366 = vmul.f32 %v3256, %v3363
      %v3367 = vmul.f32 %v3259, %v3363
      %v3368 = vlaneseq
      %v3369 = vshrl.u32 %v3368, 7
      %v3370 = vsub.s32 1, %v3369
      %v3371 = vrot.slane %v3359, %v3370
      %v3372 = vmul.f32 %v3264, %v3371
      %v3373 = vmul.f32 %v3267, %v3371
      %v3374 = vmul.f32 %v3272, %v3371
      %v3375 = vmul.f32 %v3275, %v3371
      %v3376 = vadd.f32 %v3364, %v3372
      %v3377 = vadd.f32 %v3365, %v3373
      %v3378 = vadd.f32 %v3366, %v3374
      %v3379 = vadd.f32 %v3367, %v3375
      %v3380 = vlaneseq
      %v3381 = vshrl.u32 %v3380, 7
      %v3382 = vsub.s32 2, %v3381
      %v3383 = vrot.slane %v3359, %v3382
      %v3384 = vmul.f32 %v3280, %v3383
      %v3385 = vmul.f32 %v3283, %v3383
      %v3386 = vmul.f32 %v3288, %v3383
      %v3387 = vmul.f32 %v3291, %v3383
      %v3388 = vadd.f32 %v3376, %v3384
      %v3389 = vadd.f32 %v3377, %v3385
      %v3390 = vadd.f32 %v3378, %v3386
      %v3391 = vadd.f32 %v3379, %v3387
      %v3392 = vlaneseq
      %v3393 = vshrl.u32 %v3392, 7
      %v3394 = vsub.s32 3, %v3393
      %v3395 = vrot.slane %v3359, %v3394
      %v3396 = vmul.f32 %v3296, %v3395
      %v3397 = vmul.f32 %v3299, %v3395
      %v3398 = vmul.f32 %v3304, %v3395
      %v3399 = vmul.f32 %v3307, %v3395
      %v3400 = vadd.f32 %v3388, %v3396
      %v3401 = vadd.f32 %v3389, %v3397
      %v3402 = vadd.f32 %v3390, %v3398
      %v3403 = vadd.f32 %v3391, %v3399
      %v3404 = vlaneseq
      %v3405 = vshrl.u32 %v3404, 7
      %v3406 = vsub.s32 4, %v3405
      %v3407 = vrot.slane %v3359, %v3406
      %v3408 = vmul.f32 %v3312, %v3407
      %v3409 = vmul.f32 %v3315, %v3407
      %v3410 = vmul.f32 %v3320, %v3407
      %v3411 = vmul.f32 %v3323, %v3407
      %v3412 = vadd.f32 %v3400, %v3408
      %v3413 = vadd.f32 %v3401, %v3409
      %v3414 = vadd.f32 %v3402, %v3410
      %v3415 = vadd.f32 %v3403, %v3411
      %v3416 = vlaneseq
      %v3417 = vshrl.u32 %v3416, 7
      %v3418 = vsub.s32 5, %v3417
      %v3419 = vrot.slane %v3359, %v3418
      %v3420 = vmul.f32 %v3328, %v3419
      %v3421 = vmul.f32 %v3331, %v3419
      %v3422 = vmul.f32 %v3336, %v3419
      %v3423 = vmul.f32 %v3339, %v3419
      %v3424 = vadd.f32 %v3412, %v3420
      %v3425 = vadd.f32 %v3413, %v3421
      %v3426 = vadd.f32 %v3414, %v3422
      %v3427 = vadd.f32 %v3415, %v3423
      %v3428 = vlaneseq
      %v3429 = vshrl.u32 %v3428, 7
      %v3430 = vsub.s32 6, %v3429
      %v3431 = vrot.slane %v3359, %v3430
      %v3432 = vmul.f32 %v3344, %v3431
      %v3433 = vmul.f32 %v3347, %v3431
      %v3434 = vmul.f32 %v3352, %v3431
      %v3435 = vmul.f32 %v3355, %v3431
      %v3436 = vadd.f32 %v3424, %v3432
      %v3437 = vadd.f32 %v3425, %v3433
      %v3438 = vadd.f32 %v3426, %v3434
      %v3439 = vadd.f32 %v3427, %v3435
      %v3440 = vmax.f32 %v3436, 0.0
      %v3441 = vmax.f32 %v3437, 0.0
      %v3442 = vmax.f32 %v3438, 0.0
      %v3443 = vmax.f32 %v3439, 0.0
      %s3444 = scalar_lea.vmem %s13, 192
      %v3445 = vld [vmem:[%s3444] sm:$0xf]
      %v3446 = vld [vmem:[%s3444 + $0x4] sm:$0xf]
      %v3447 = vld [vmem:[%s3444 + $0x8] sm:$0xf]
      %v3448 = vld [vmem:[%s3444 + $0xc] sm:$0xf]
      %v3449 = vld [vmem:[%s3444 + $0x10] sm:$0xf]
      %v3450 = vld [vmem:[%s3444 + $0x14] sm:$0xf]
      %v3451 = vld [vmem:[%s3444 + $0x18] sm:$0xf]
      %v3452 = vld [vmem:[%s3444 + $0x1c] sm:$0xf]
      %v3453 = vld [vmem:[%s3444 + $0x20] sm:$0xf]
      %v3454 = vld [vmem:[%s3444 + $0x24] sm:$0xf]
      %v3455 = vld [vmem:[%s3444 + $0x28] sm:$0xf]
      %v3456 = vld [vmem:[%s3444 + $0x2c] sm:$0xf]
      %v3457 = vld [vmem:[%s3444 + $0x30] sm:$0xf]
      %v3458 = vld [vmem:[%s3444 + $0x34] sm:$0xf]
      %v3459 = vld [vmem:[%s3444 + $0x38] sm:$0xf]
      %v3460 = vld [vmem:[%s3444 + $0x3c] sm:$0xf]
      %v3461 = vpack.c.bf16 %v3441, %v3440
      %v3462 = vpack.c.bf16 %v3443, %v3442
      %v3479 = vunpack.c.l.b16 %v3445
      %v3480 = vunpack.c.l.b16 %v3446
      %v3481 = vunpack.c.l.b16 %v3447
      %v3482 = vunpack.c.l.b16 %v3448
      %v3483 = vunpack.c.l.b16 %v3449
      %v3484 = vunpack.c.l.b16 %v3450
      %v3485 = vunpack.c.l.b16 %v3451
      %v3486 = vunpack.c.l.b16 %v3452
      %v3487 = vunpack.c.l.b16 %v3453
      %v3488 = vunpack.c.l.b16 %v3454
      %v3489 = vunpack.c.l.b16 %v3455
      %v3490 = vunpack.c.l.b16 %v3456
      %v3491 = vunpack.c.l.b16 %v3457
      %v3492 = vunpack.c.l.b16 %v3458
      %v3493 = vunpack.c.l.b16 %v3459
      %v3494 = vunpack.c.l.b16 %v3460
      %v3495 = vpack.c.b16 %v3480, %v3479
      %v3496 = vpack.c.b16 %v3482, %v3481
      %v3497 = vpack.c.b16 %v3484, %v3483
      %v3498 = vpack.c.b16 %v3486, %v3485
      %v3499 = vpack.c.b16 %v3488, %v3487
      %v3500 = vpack.c.b16 %v3490, %v3489
      %v3501 = vpack.c.b16 %v3492, %v3491
      %v3502 = vpack.c.b16 %v3494, %v3493
      %3511 = vmatprep.subr.bf16.mxu0 0
      %3512 = vmatpush1.bf16.msra.mxu0 %v3495
      %3513 = vmatprep.subr.bf16.mxu0 0
      %3514 = vmatpush1.bf16.msra.mxu0 %v3496
      %3515 = vmatprep.subr.bf16.mxu0 0
      %3516 = vmatpush1.bf16.msra.mxu0 %v3497
      %3517 = vmatprep.subr.bf16.mxu0 0
      %3518 = vmatpush1.bf16.msra.mxu0 %v3498
      %3519 = vmatprep.subr.bf16.mxu0 0
      %3520 = vmatpush1.bf16.msra.mxu0 %v3499
      %3521 = vmatprep.subr.bf16.mxu0 0
      %3522 = vmatpush1.bf16.msra.mxu0 %v3500
      %3523 = vmatprep.subr.bf16.mxu0 0
      %3524 = vmatpush1.bf16.msra.mxu0 %v3501
      %3525 = vmatprep.subr.bf16.mxu0 0
      %3526 = vmatpush1.bf16.msra.mxu0 %v3502
      %3527 = vmatprep.subr.bf16.mxu0 0
      %3528 = vmatpush1.bf16.msra.mxu0 0
      %3529 = vmatprep.subr.bf16.mxu0 0
      %3530 = vmatpush1.bf16.msra.mxu0 0
      %3531 = vmatprep.subr.bf16.mxu0 0
      %3532 = vmatpush1.bf16.msra.mxu0 0
      %3533 = vmatprep.subr.bf16.mxu0 0
      %3534 = vmatpush1.bf16.msra.mxu0 0
      %3535 = vmatprep.subr.bf16.mxu0 0
      %3536 = vmatpush1.bf16.msra.mxu0 0
      %3537 = vmatprep.subr.bf16.mxu0 0
      %3538 = vmatpush1.bf16.msra.mxu0 0
      %3539 = vmatprep.subr.bf16.mxu0 0
      %3540 = vmatpush1.bf16.msra.mxu0 0
      %3541 = vmatprep.subr.bf16.mxu0 0
      %3542 = vmatpush1.bf16.msra.mxu0 0
      %3543 = vmatprep.mubr.bf16.mxu0 0
      %3544 = vmatmul.mubr.bf16.gmra.mrb[0].mxu0 %v3461
      %v3545 = vpop.f32.mrb[0].mxu0
      %v3546 = vadd.f32 0.0, %v3545
      %v3547 = vpop.f32.mrb[0].mxu0
      %v3548 = vpop.f32.mrb[0].mxu0
      %v3549 = vadd.f32 0.0, %v3548
      %v3550 = vpop.f32.mrb[0].mxu0
      %3551 = vmatprep.mubr.bf16.mxu0 0
      %3552 = vmatmul.mubr.bf16.gmra.mrb[0].mxu0 %v3462
      %v3553 = vpop.f32.mrb[0].mxu0
      %v3554 = vadd.f32 0.0, %v3553
      %v3555 = vpop.f32.mrb[0].mxu0
      %v3556 = vpop.f32.mrb[0].mxu0
      %v3557 = vadd.f32 0.0, %v3556
      %v3558 = vpop.f32.mrb[0].mxu0
      %3559 = vdwg.mxu0
      %v3560 = vmax.f32 %v3546, 0.0
      %v3561 = vmax.f32 %v3549, 0.0
      %v3562 = vmax.f32 %v3554, 0.0
      %v3563 = vmax.f32 %v3557, 0.0
      %v3564 = vadd.f32 %v3139, %v3560
      %v3565 = vadd.f32 %v3140, %v3561
      %v3566 = vadd.f32 %v3141, %v3562
      %v3567 = vadd.f32 %v3142, %v3563
      %v3568 = vld [vmem:[%s14] sm:$0x1]
      %v3569 = vld [vmem:[%s15] sm:$0x1]
      %3570 = vadd.xlane.f32.xlu0 %v3564
      %v3571 = vpop.xlane.xlu0 %3570
      %3572 = vadd.xlane.f32.xlu0 %v3565
      %v3573 = vpop.xlane.xlu0 %3572
      %3574 = vadd.xlane.f32.xlu0 %v3566
      %v3575 = vpop.xlane.xlu0 %3574
      %3576 = vadd.xlane.f32.xlu0 %v3567
      %v3577 = vpop.xlane.xlu0 %3576
      %v3578 = vmul.f32 %v3571, %v1824
      %v3579 = vmul.f32 %v3573, %v1824
      %v3580 = vmul.f32 %v3575, %v1824
      %v3581 = vmul.f32 %v3577, %v1824
      %v3582 = vsub.f32 %v3564, %v3578
      %v3583 = vsub.f32 %v3565, %v3579
      %v3584 = vsub.f32 %v3566, %v3580
      %v3585 = vsub.f32 %v3567, %v3581
      %v3586 = vmul.f32 %v3582, %v3582
      %v3587 = vmul.f32 %v3583, %v3583
      %v3588 = vmul.f32 %v3584, %v3584
      %v3589 = vmul.f32 %v3585, %v3585
      %3590 = vadd.xlane.f32.xlu0 %v3586
      %v3591 = vpop.xlane.xlu0 %3590
      %3592 = vadd.xlane.f32.xlu0 %v3587
      %v3593 = vpop.xlane.xlu0 %3592
      %3594 = vadd.xlane.f32.xlu0 %v3588
      %v3595 = vpop.xlane.xlu0 %3594
      %3596 = vadd.xlane.f32.xlu0 %v3589
      %v3597 = vpop.xlane.xlu0 %3596
      %v3598 = vmul.f32 %v3591, %v1824
      %v3599 = vmul.f32 %v3593, %v1824
      %v3600 = vmul.f32 %v3595, %v1824
      %v3601 = vmul.f32 %v3597, %v1824
      %v3602 = vadd.f32 %v3598, 1e-05
      %v3603 = vadd.f32 %v3599, 1e-05
      %v3604 = vadd.f32 %v3600, 1e-05
      %v3605 = vadd.f32 %v3601, 1e-05
      %v3606 = vrsqrt.pop %v3602
      %v3607 = vrsqrt.pop %v3603
      %v3608 = vrsqrt.pop %v3604
      %v3609 = vrsqrt.pop %v3605
      %v3610 = vmul.f32 %v3582, %v3606
      %v3611 = vmul.f32 %v3583, %v3607
      %v3612 = vmul.f32 %v3584, %v3608
      %v3613 = vmul.f32 %v3585, %v3609
      %v3615 = vlaneseq
      %v3616 = vshrl.u32 %v3615, 7
      %v3617 = vsub.s32 0, %v3616
      %v3618 = vrot.slane %v3568, %v3617
      %v3620 = vmul.f32 %v3610, %v3618
      %v3621 = vmul.f32 %v3611, %v3618
      %v3622 = vmul.f32 %v3612, %v3618
      %v3623 = vmul.f32 %v3613, %v3618
      %v3625 = vlaneseq
      %v3626 = vshrl.u32 %v3625, 7
      %v3627 = vsub.s32 0, %v3626
      %v3628 = vrot.slane %v3569, %v3627
      %v3630 = vadd.f32 %v3620, %v3628
      %v3631 = vadd.f32 %v3621, %v3628
      %v3632 = vadd.f32 %v3622, %v3628
      %v3633 = vadd.f32 %v3623, %v3628
      %v3634 = vld [vmem:[%s18] sm:$0xff]
      %v3635 = vld [vmem:[%s18 + $0x8] sm:$0xf]
      %v3636 = vld [vmem:[%s18 + $0xc] sm:$0xff]
      %v3637 = vld [vmem:[%s18 + $0x14] sm:$0xf]
      %v3638 = vld [vmem:[%s18 + $0x18] sm:$0xff]
      %v3639 = vld [vmem:[%s18 + $0x20] sm:$0xf]
      %v3640 = vld [vmem:[%s18 + $0x24] sm:$0xff]
      %v3641 = vld [vmem:[%s18 + $0x2c] sm:$0xf]
      %v3642 = vld [vmem:[%s18 + $0x30] sm:$0xff]
      %v3643 = vld [vmem:[%s18 + $0x38] sm:$0xf]
      %v3644 = vld [vmem:[%s18 + $0x3c] sm:$0xff]
      %v3645 = vld [vmem:[%s18 + $0x44] sm:$0xf]
      %v3646 = vld [vmem:[%s18 + $0x48] sm:$0xff]
      %v3647 = vld [vmem:[%s18 + $0x50] sm:$0xf]
      %v3648 = vld [vmem:[%s18 + $0x54] sm:$0xff]
      %v3649 = vld [vmem:[%s18 + $0x5c] sm:$0xf]
      %v3650 = vld [vmem:[%s18 + $0x60] sm:$0xff]
      %v3651 = vld [vmem:[%s18 + $0x68] sm:$0xf]
      %v3652 = vld [vmem:[%s18 + $0x6c] sm:$0xff]
      %v3653 = vld [vmem:[%s18 + $0x74] sm:$0xf]
      %v3654 = vld [vmem:[%s18 + $0x78] sm:$0xff]
      %v3655 = vld [vmem:[%s18 + $0x80] sm:$0xf]
      %v3656 = vld [vmem:[%s18 + $0x84] sm:$0xff]
      %v3657 = vld [vmem:[%s18 + $0x8c] sm:$0xf]
      %v3658 = vld [vmem:[%s18 + $0x90] sm:$0xff]
      %v3659 = vld [vmem:[%s18 + $0x98] sm:$0xf]
      %v3660 = vld [vmem:[%s18 + $0x9c] sm:$0xff]
      %v3661 = vld [vmem:[%s18 + $0xa4] sm:$0xf]
      %v3662 = vld [vmem:[%s18 + $0xa8] sm:$0xff]
      %v3663 = vld [vmem:[%s18 + $0xb0] sm:$0xf]
      %v3664 = vld [vmem:[%s18 + $0xb4] sm:$0xff]
      %v3665 = vld [vmem:[%s18 + $0xbc] sm:$0xf]
      %v3666 = vpack.c.bf16 %v3631, %v3630
      %v3667 = vpack.c.bf16 %v3633, %v3632
      %v3668 = vld [vmem:[%s19] sm:$0x7]
      %v3670 = vlaneseq
      %v3671 = vshrl.u32 %v3670, 7
      %v3672 = vsub.s32 0, %v3671
      %v3673 = vrot.slane %v3668, %v3672
      %v3674 = vlaneseq
      %v3675 = vshrl.u32 %v3674, 7
      %v3676 = vsub.s32 1, %v3675
      %v3677 = vrot.slane %v3668, %v3676
      %v3678 = vlaneseq
      %v3679 = vshrl.u32 %v3678, 7
      %v3680 = vsub.s32 2, %v3679
      %v3681 = vrot.slane %v3668, %v3680
      %v3717 = vunpack.c.l.b16 %v3634
      %v3718 = vunpack.c.h.b16 %v3634
      %v3719 = vunpack.c.l.b16 %v3635
      %v3720 = vunpack.c.l.b16 %v3636
      %v3721 = vunpack.c.h.b16 %v3636
      %v3722 = vunpack.c.l.b16 %v3637
      %v3723 = vunpack.c.l.b16 %v3638
      %v3724 = vunpack.c.h.b16 %v3638
      %v3725 = vunpack.c.l.b16 %v3639
      %v3726 = vunpack.c.l.b16 %v3640
      %v3727 = vunpack.c.h.b16 %v3640
      %v3728 = vunpack.c.l.b16 %v3641
      %v3729 = vunpack.c.l.b16 %v3642
      %v3730 = vunpack.c.h.b16 %v3642
      %v3731 = vunpack.c.l.b16 %v3643
      %v3732 = vunpack.c.l.b16 %v3644
      %v3733 = vunpack.c.h.b16 %v3644
      %v3734 = vunpack.c.l.b16 %v3645
      %v3735 = vunpack.c.l.b16 %v3646
      %v3736 = vunpack.c.h.b16 %v3646
      %v3737 = vunpack.c.l.b16 %v3647
      %v3738 = vunpack.c.l.b16 %v3648
      %v3739 = vunpack.c.h.b16 %v3648
      %v3740 = vunpack.c.l.b16 %v3649
      %v3741 = vunpack.c.l.b16 %v3650
      %v3742 = vunpack.c.h.b16 %v3650
      %v3743 = vunpack.c.l.b16 %v3651
      %v3744 = vunpack.c.l.b16 %v3652
      %v3745 = vunpack.c.h.b16 %v3652
      %v3746 = vunpack.c.l.b16 %v3653
      %v3747 = vunpack.c.l.b16 %v3654
      %v3748 = vunpack.c.h.b16 %v3654
      %v3749 = vunpack.c.l.b16 %v3655
      %v3750 = vunpack.c.l.b16 %v3656
      %v3751 = vunpack.c.h.b16 %v3656
      %v3752 = vunpack.c.l.b16 %v3657
      %v3753 = vunpack.c.l.b16 %v3658
      %v3754 = vunpack.c.h.b16 %v3658
      %v3755 = vunpack.c.l.b16 %v3659
      %v3756 = vunpack.c.l.b16 %v3660
      %v3757 = vunpack.c.h.b16 %v3660
      %v3758 = vunpack.c.l.b16 %v3661
      %v3759 = vunpack.c.l.b16 %v3662
      %v3760 = vunpack.c.h.b16 %v3662
      %v3761 = vunpack.c.l.b16 %v3663
      %v3762 = vunpack.c.l.b16 %v3664
      %v3763 = vunpack.c.h.b16 %v3664
      %v3764 = vunpack.c.l.b16 %v3665
      %v3765 = vpack.c.b16 %v3720, %v3717
      %v3766 = vpack.c.b16 %v3721, %v3718
      %v3767 = vpack.c.b16 %v3722, %v3719
      %v3768 = vpack.c.b16 %v3726, %v3723
      %v3769 = vpack.c.b16 %v3727, %v3724
      %v3770 = vpack.c.b16 %v3728, %v3725
      %v3771 = vpack.c.b16 %v3732, %v3729
      %v3772 = vpack.c.b16 %v3733, %v3730
      %v3773 = vpack.c.b16 %v3734, %v3731
      %v3774 = vpack.c.b16 %v3738, %v3735
      %v3775 = vpack.c.b16 %v3739, %v3736
      %v3776 = vpack.c.b16 %v3740, %v3737
      %v3777 = vpack.c.b16 %v3744, %v3741
      %v3778 = vpack.c.b16 %v3745, %v3742
      %v3779 = vpack.c.b16 %v3746, %v3743
      %v3780 = vpack.c.b16 %v3750, %v3747
      %v3781 = vpack.c.b16 %v3751, %v3748
      %v3782 = vpack.c.b16 %v3752, %v3749
      %v3783 = vpack.c.b16 %v3756, %v3753
      %v3784 = vpack.c.b16 %v3757, %v3754
      %v3785 = vpack.c.b16 %v3758, %v3755
      %v3786 = vpack.c.b16 %v3762, %v3759
      %v3787 = vpack.c.b16 %v3763, %v3760
      %v3788 = vpack.c.b16 %v3764, %v3761
      %3813 = vmatprep.subr.bf16.mxu0 %v3766
      %3814 = vmatpush1.bf16.msra.mxu0 %v3765
      %3815 = vmatprep.subr.bf16.mxu0 %v3769
      %3816 = vmatpush1.bf16.msra.mxu0 %v3768
      %3817 = vmatprep.subr.bf16.mxu0 %v3772
      %3818 = vmatpush1.bf16.msra.mxu0 %v3771
      %3819 = vmatprep.subr.bf16.mxu0 %v3775
      %3820 = vmatpush1.bf16.msra.mxu0 %v3774
      %3821 = vmatprep.subr.bf16.mxu0 %v3778
      %3822 = vmatpush1.bf16.msra.mxu0 %v3777
      %3823 = vmatprep.subr.bf16.mxu0 %v3781
      %3824 = vmatpush1.bf16.msra.mxu0 %v3780
      %3825 = vmatprep.subr.bf16.mxu0 %v3784
      %3826 = vmatpush1.bf16.msra.mxu0 %v3783
      %3827 = vmatprep.subr.bf16.mxu0 %v3787
      %3828 = vmatpush1.bf16.msra.mxu0 %v3786
      %3829 = vmatprep.subr.bf16.mxu0 0
      %3830 = vmatpush1.bf16.msra.mxu0 0
      %3831 = vmatprep.subr.bf16.mxu0 0
      %3832 = vmatpush1.bf16.msra.mxu0 0
      %3833 = vmatprep.subr.bf16.mxu0 0
      %3834 = vmatpush1.bf16.msra.mxu0 0
      %3835 = vmatprep.subr.bf16.mxu0 0
      %3836 = vmatpush1.bf16.msra.mxu0 0
      %3837 = vmatprep.subr.bf16.mxu0 0
      %3838 = vmatpush1.bf16.msra.mxu0 0
      %3839 = vmatprep.subr.bf16.mxu0 0
      %3840 = vmatpush1.bf16.msra.mxu0 0
      %3841 = vmatprep.subr.bf16.mxu0 0
      %3842 = vmatpush1.bf16.msra.mxu0 0
      %3843 = vmatprep.subr.bf16.mxu0 0
      %3844 = vmatpush1.bf16.msra.mxu0 0
      %3845 = vmatprep.mubr.bf16.mxu0 0
      %3846 = vmatmul.mubr.bf16.gmra.mrb[0].mxu0 %v3666
      %v3847 = vpop.f32.mrb[0].mxu0
      %v3848 = vadd.f32 %v3673, %v3847
      %v3849 = vpop.f32.mrb[0].mxu0
      %v3850 = vadd.f32 %v3677, %v3849
      %v3851 = vpop.f32.mrb[0].mxu0
      %v3852 = vadd.f32 %v3673, %v3851
      %v3853 = vpop.f32.mrb[0].mxu0
      %v3854 = vadd.f32 %v3677, %v3853
      %3855 = vmatprep.mubr.bf16.mxu0 0
      %3856 = vmatmul.mubr.bf16.gmra.mrb[0].mxu0 %v3667
      %v3857 = vpop.f32.mrb[0].mxu0
      %v3858 = vadd.f32 %v3673, %v3857
      %v3859 = vpop.f32.mrb[0].mxu0
      %v3860 = vadd.f32 %v3677, %v3859
      %v3861 = vpop.f32.mrb[0].mxu0
      %v3862 = vadd.f32 %v3673, %v3861
      %v3863 = vpop.f32.mrb[0].mxu0
      %v3864 = vadd.f32 %v3677, %v3863
      %3865 = vdwg.mxu0
      %3866 = vmatprep.subr.bf16.mxu0 0
      %3867 = vmatpush1.bf16.msra.mxu0 %v3767
      %3868 = vmatprep.subr.bf16.mxu0 0
      %3869 = vmatpush1.bf16.msra.mxu0 %v3770
      %3870 = vmatprep.subr.bf16.mxu0 0
      %3871 = vmatpush1.bf16.msra.mxu0 %v3773
      %3872 = vmatprep.subr.bf16.mxu0 0
      %3873 = vmatpush1.bf16.msra.mxu0 %v3776
      %3874 = vmatprep.subr.bf16.mxu0 0
      %3875 = vmatpush1.bf16.msra.mxu0 %v3779
      %3876 = vmatprep.subr.bf16.mxu0 0
      %3877 = vmatpush1.bf16.msra.mxu0 %v3782
      %3878 = vmatprep.subr.bf16.mxu0 0
      %3879 = vmatpush1.bf16.msra.mxu0 %v3785
      %3880 = vmatprep.subr.bf16.mxu0 0
      %3881 = vmatpush1.bf16.msra.mxu0 %v3788
      %3882 = vmatprep.subr.bf16.mxu0 0
      %3883 = vmatpush1.bf16.msra.mxu0 0
      %3884 = vmatprep.subr.bf16.mxu0 0
      %3885 = vmatpush1.bf16.msra.mxu0 0
      %3886 = vmatprep.subr.bf16.mxu0 0
      %3887 = vmatpush1.bf16.msra.mxu0 0
      %3888 = vmatprep.subr.bf16.mxu0 0
      %3889 = vmatpush1.bf16.msra.mxu0 0
      %3890 = vmatprep.subr.bf16.mxu0 0
      %3891 = vmatpush1.bf16.msra.mxu0 0
      %3892 = vmatprep.subr.bf16.mxu0 0
      %3893 = vmatpush1.bf16.msra.mxu0 0
      %3894 = vmatprep.subr.bf16.mxu0 0
      %3895 = vmatpush1.bf16.msra.mxu0 0
      %3896 = vmatprep.subr.bf16.mxu0 0
      %3897 = vmatpush1.bf16.msra.mxu0 0
      %3898 = vmatprep.mubr.bf16.mxu0 0
      %3899 = vmatmul.mubr.bf16.gmra.mrb[0].mxu0 %v3666
      %v3900 = vpop.f32.mrb[0].mxu0
      %v3901 = vadd.f32 %v3681, %v3900
      %v3902 = vpop.f32.mrb[0].mxu0
      %v3903 = vpop.f32.mrb[0].mxu0
      %v3904 = vadd.f32 %v3681, %v3903
      %v3905 = vpop.f32.mrb[0].mxu0
      %3906 = vmatprep.mubr.bf16.mxu0 0
      %3907 = vmatmul.mubr.bf16.gmra.mrb[0].mxu0 %v3667
      %v3908 = vpop.f32.mrb[0].mxu0
      %v3909 = vadd.f32 %v3681, %v3908
      %v3910 = vpop.f32.mrb[0].mxu0
      %v3911 = vpop.f32.mrb[0].mxu0
      %v3912 = vadd.f32 %v3681, %v3911
      %v3913 = vpop.f32.mrb[0].mxu0
      %3914 = vdwg.mxu0
      %3917 = vrot.lane.b32.xlu0 %v3848, 112
      %v3918 = vpop.permute.xlu0 %3917
      %3919 = vrot.lane.b32.xlu0 %v3852, 112
      %v3920 = vpop.permute.xlu0 %3919
      %3923 = vrot.lane.b32.xlu0 %v3848, 96
      %v3924 = vpop.permute.xlu0 %3923
      %3925 = vrot.lane.b32.xlu0 %v3852, 96
      %v3926 = vpop.permute.xlu0 %3925
      %3929 = vrot.lane.b32.xlu0 %v3848, 80
      %v3930 = vpop.permute.xlu0 %3929
      %3931 = vrot.lane.b32.xlu0 %v3852, 80
      %v3932 = vpop.permute.xlu0 %3931
      %3935 = vrot.lane.b32.xlu0 %v3848, 64
      %v3936 = vpop.permute.xlu0 %3935
      %3937 = vrot.lane.b32.xlu0 %v3852, 64
      %v3938 = vpop.permute.xlu0 %3937
      %3941 = vrot.lane.b32.xlu0 %v3848, 48
      %v3942 = vpop.permute.xlu0 %3941
      %3943 = vrot.lane.b32.xlu0 %v3852, 48
      %v3944 = vpop.permute.xlu0 %3943
      %3947 = vrot.lane.b32.xlu0 %v3848, 32
      %v3948 = vpop.permute.xlu0 %3947
      %3949 = vrot.lane.b32.xlu0 %v3852, 32
      %v3950 = vpop.permute.xlu0 %3949
      %3953 = vrot.lane.b32.xlu0 %v3848, 16
      %v3954 = vpop.permute.xlu0 %3953
      %3955 = vrot.lane.b32.xlu0 %v3852, 16
      %v3956 = vpop.permute.xlu0 %3955
      %3961 = vrot.lane.b32.xlu0 %v3850, 112
      %v3962 = vpop.permute.xlu0 %3961
      %3963 = vrot.lane.b32.xlu0 %v3854, 112
      %v3964 = vpop.permute.xlu0 %3963
      %3967 = vrot.lane.b32.xlu0 %v3850, 96
      %v3968 = vpop.permute.xlu0 %3967
      %3969 = vrot.lane.b32.xlu0 %v3854, 96
      %v3970 = vpop.permute.xlu0 %3969
      %3973 = vrot.lane.b32.xlu0 %v3850, 80
      %v3974 = vpop.permute.xlu0 %3973
      %3975 = vrot.lane.b32.xlu0 %v3854, 80
      %v3976 = vpop.permute.xlu0 %3975
      %3979 = vrot.lane.b32.xlu0 %v3850, 64
      %v3980 = vpop.permute.xlu0 %3979
      %3981 = vrot.lane.b32.xlu0 %v3854, 64
      %v3982 = vpop.permute.xlu0 %3981
      %3985 = vrot.lane.b32.xlu0 %v3850, 48
      %v3986 = vpop.permute.xlu0 %3985
      %3987 = vrot.lane.b32.xlu0 %v3854, 48
      %v3988 = vpop.permute.xlu0 %3987
      %3991 = vrot.lane.b32.xlu0 %v3850, 32
      %v3992 = vpop.permute.xlu0 %3991
      %3993 = vrot.lane.b32.xlu0 %v3854, 32
      %v3994 = vpop.permute.xlu0 %3993
      %3997 = vrot.lane.b32.xlu0 %v3850, 16
      %v3998 = vpop.permute.xlu0 %3997
      %3999 = vrot.lane.b32.xlu0 %v3854, 16
      %v4000 = vpop.permute.xlu0 %3999
      %4005 = vrot.lane.b32.xlu0 %v3901, 112
      %v4006 = vpop.permute.xlu0 %4005
      %4007 = vrot.lane.b32.xlu0 %v3904, 112
      %v4008 = vpop.permute.xlu0 %4007
      %4011 = vrot.lane.b32.xlu0 %v3901, 96
      %v4012 = vpop.permute.xlu0 %4011
      %4013 = vrot.lane.b32.xlu0 %v3904, 96
      %v4014 = vpop.permute.xlu0 %4013
      %4017 = vrot.lane.b32.xlu0 %v3901, 80
      %v4018 = vpop.permute.xlu0 %4017
      %4019 = vrot.lane.b32.xlu0 %v3904, 80
      %v4020 = vpop.permute.xlu0 %4019
      %4023 = vrot.lane.b32.xlu0 %v3901, 64
      %v4024 = vpop.permute.xlu0 %4023
      %4025 = vrot.lane.b32.xlu0 %v3904, 64
      %v4026 = vpop.permute.xlu0 %4025
      %4029 = vrot.lane.b32.xlu0 %v3901, 48
      %v4030 = vpop.permute.xlu0 %4029
      %4031 = vrot.lane.b32.xlu0 %v3904, 48
      %v4032 = vpop.permute.xlu0 %4031
      %4035 = vrot.lane.b32.xlu0 %v3901, 32
      %v4036 = vpop.permute.xlu0 %4035
      %4037 = vrot.lane.b32.xlu0 %v3904, 32
      %v4038 = vpop.permute.xlu0 %4037
      %4041 = vrot.lane.b32.xlu0 %v3901, 16
      %v4042 = vpop.permute.xlu0 %4041
      %4043 = vrot.lane.b32.xlu0 %v3904, 16
      %v4044 = vpop.permute.xlu0 %4043
      %v4047 = vpack.c.bf16 %v3852, %v3848
      %v4048 = vpack.c.bf16 %v3920, %v3918
      %v4049 = vpack.c.bf16 %v3926, %v3924
      %v4050 = vpack.c.bf16 %v3932, %v3930
      %v4051 = vpack.c.bf16 %v3938, %v3936
      %v4052 = vpack.c.bf16 %v3944, %v3942
      %v4053 = vpack.c.bf16 %v3950, %v3948
      %v4054 = vpack.c.bf16 %v3956, %v3954
      %v4055 = vpack.c.bf16 %v3854, %v3850
      %v4056 = vpack.c.bf16 %v3964, %v3962
      %v4057 = vpack.c.bf16 %v3970, %v3968
      %v4058 = vpack.c.bf16 %v3976, %v3974
      %v4059 = vpack.c.bf16 %v3982, %v3980
      %v4060 = vpack.c.bf16 %v3988, %v3986
      %v4061 = vpack.c.bf16 %v3994, %v3992
      %v4062 = vpack.c.bf16 %v4000, %v3998
      %vm4063 = vcmask 130048
      %v4065 = vsel %vm4063, %v4047, 0
      %v4068 = vsel %vm4063, %v4055, 0
      %4070 = vmatprep.subr.bf16.mxu0 0
      %4071 = vmatpush1.bf16.xpose.msra.mxu0 %v4068
      %4072 = vmatprep.subr.bf16.mxu0 0
      %4073 = vmatpush1.bf16.xpose.msra.mxu0 0
      %4074 = vmatprep.subr.bf16.mxu0 0
      %4075 = vmatpush1.bf16.xpose.msra.mxu0 0
      %4076 = vmatprep.subr.bf16.mxu0 0
      %4077 = vmatpush1.bf16.xpose.msra.mxu0 0
      %4078 = vmatprep.subr.bf16.mxu0 0
      %4079 = vmatpush1.bf16.xpose.msra.mxu0 0
      %4080 = vmatprep.subr.bf16.mxu0 0
      %4081 = vmatpush1.bf16.xpose.msra.mxu0 0
      %4082 = vmatprep.subr.bf16.mxu0 0
      %4083 = vmatpush1.bf16.xpose.msra.mxu0 0
      %4084 = vmatprep.subr.bf16.mxu0 0
      %4085 = vmatpush1.bf16.xpose.msra.mxu0 0
      %4086 = vmatprep.subr.bf16.mxu0 0
      %4087 = vmatpush1.bf16.xpose.msra.mxu0 0
      %4088 = vmatprep.subr.bf16.mxu0 0
      %4089 = vmatpush1.bf16.xpose.msra.mxu0 0
      %4090 = vmatprep.subr.bf16.mxu0 0
      %4091 = vmatpush1.bf16.xpose.msra.mxu0 0
      %4092 = vmatprep.subr.bf16.mxu0 0
      %4093 = vmatpush1.bf16.xpose.msra.mxu0 0
      %4094 = vmatprep.subr.bf16.mxu0 0
      %4095 = vmatpush1.bf16.xpose.msra.mxu0 0
      %4096 = vmatprep.subr.bf16.mxu0 0
      %4097 = vmatpush1.bf16.xpose.msra.mxu0 0
      %4098 = vmatprep.subr.bf16.mxu0 0
      %4099 = vmatpush1.bf16.xpose.msra.mxu0 0
      %4100 = vmatprep.subr.bf16.mxu0 0
      %4101 = vmatpush1.bf16.xpose.msra.mxu0 0
      %4102 = vmatprep.mubr.bf16.mxu0 0
      %4103 = vmatmul.mubr.bf16.gmra.mrb[0].mxu0 %v4065
      %v4104 = vpop.f32.mrb[0].mxu0
      %v4105 = vadd.f32 0.0, %v4104
      %v4106 = vpop.f32.mrb[0].mxu0
      %v4107 = vpop.f32.mrb[0].mxu0
      %v4108 = vadd.f32 0.0, %v4107
      %v4109 = vpop.f32.mrb[0].mxu0
      %4110 = vdwg.mxu0
      %v4112 = vsel %vm4063, %v4048, 0
      %v4115 = vsel %vm4063, %v4056, 0
      %4117 = vmatprep.subr.bf16.mxu0 0
      %4118 = vmatpush1.bf16.xpose.msra.mxu0 %v4115
      %4119 = vmatprep.subr.bf16.mxu0 0
      %4120 = vmatpush1.bf16.xpose.msra.mxu0 0
      %4121 = vmatprep.subr.bf16.mxu0 0
      %4122 = vmatpush1.bf16.xpose.msra.mxu0 0
      %4123 = vmatprep.subr.bf16.mxu0 0
      %4124 = vmatpush1.bf16.xpose.msra.mxu0 0
      %4125 = vmatprep.subr.bf16.mxu0 0
      %4126 = vmatpush1.bf16.xpose.msra.mxu0 0
      %4127 = vmatprep.subr.bf16.mxu0 0
      %4128 = vmatpush1.bf16.xpose.msra.mxu0 0
      %4129 = vmatprep.subr.bf16.mxu0 0
      %4130 = vmatpush1.bf16.xpose.msra.mxu0 0
      %4131 = vmatprep.subr.bf16.mxu0 0
      %4132 = vmatpush1.bf16.xpose.msra.mxu0 0
      %4133 = vmatprep.subr.bf16.mxu0 0
      %4134 = vmatpush1.bf16.xpose.msra.mxu0 0
      %4135 = vmatprep.subr.bf16.mxu0 0
      %4136 = vmatpush1.bf16.xpose.msra.mxu0 0
      %4137 = vmatprep.subr.bf16.mxu0 0
      %4138 = vmatpush1.bf16.xpose.msra.mxu0 0
      %4139 = vmatprep.subr.bf16.mxu0 0
      %4140 = vmatpush1.bf16.xpose.msra.mxu0 0
      %4141 = vmatprep.subr.bf16.mxu0 0
      %4142 = vmatpush1.bf16.xpose.msra.mxu0 0
      %4143 = vmatprep.subr.bf16.mxu0 0
      %4144 = vmatpush1.bf16.xpose.msra.mxu0 0
      %4145 = vmatprep.subr.bf16.mxu0 0
      %4146 = vmatpush1.bf16.xpose.msra.mxu0 0
      %4147 = vmatprep.subr.bf16.mxu0 0
      %4148 = vmatpush1.bf16.xpose.msra.mxu0 0
      %4149 = vmatprep.mubr.bf16.mxu0 0
      %4150 = vmatmul.mubr.bf16.gmra.mrb[0].mxu0 %v4112
      %v4151 = vpop.f32.mrb[0].mxu0
      %v4152 = vadd.f32 0.0, %v4151
      %v4153 = vpop.f32.mrb[0].mxu0
      %v4154 = vpop.f32.mrb[0].mxu0
      %v4155 = vadd.f32 0.0, %v4154
      %v4156 = vpop.f32.mrb[0].mxu0
      %4157 = vdwg.mxu0
      %v4159 = vsel %vm4063, %v4049, 0
      %v4162 = vsel %vm4063, %v4057, 0
      %4164 = vmatprep.subr.bf16.mxu0 0
      %4165 = vmatpush1.bf16.xpose.msra.mxu0 %v4162
      %4166 = vmatprep.subr.bf16.mxu0 0
      %4167 = vmatpush1.bf16.xpose.msra.mxu0 0
      %4168 = vmatprep.subr.bf16.mxu0 0
      %4169 = vmatpush1.bf16.xpose.msra.mxu0 0
      %4170 = vmatprep.subr.bf16.mxu0 0
      %4171 = vmatpush1.bf16.xpose.msra.mxu0 0
      %4172 = vmatprep.subr.bf16.mxu0 0
      %4173 = vmatpush1.bf16.xpose.msra.mxu0 0
      %4174 = vmatprep.subr.bf16.mxu0 0
      %4175 = vmatpush1.bf16.xpose.msra.mxu0 0
      %4176 = vmatprep.subr.bf16.mxu0 0
      %4177 = vmatpush1.bf16.xpose.msra.mxu0 0
      %4178 = vmatprep.subr.bf16.mxu0 0
      %4179 = vmatpush1.bf16.xpose.msra.mxu0 0
      %4180 = vmatprep.subr.bf16.mxu0 0
      %4181 = vmatpush1.bf16.xpose.msra.mxu0 0
      %4182 = vmatprep.subr.bf16.mxu0 0
      %4183 = vmatpush1.bf16.xpose.msra.mxu0 0
      %4184 = vmatprep.subr.bf16.mxu0 0
      %4185 = vmatpush1.bf16.xpose.msra.mxu0 0
      %4186 = vmatprep.subr.bf16.mxu0 0
      %4187 = vmatpush1.bf16.xpose.msra.mxu0 0
      %4188 = vmatprep.subr.bf16.mxu0 0
      %4189 = vmatpush1.bf16.xpose.msra.mxu0 0
      %4190 = vmatprep.subr.bf16.mxu0 0
      %4191 = vmatpush1.bf16.xpose.msra.mxu0 0
      %4192 = vmatprep.subr.bf16.mxu0 0
      %4193 = vmatpush1.bf16.xpose.msra.mxu0 0
      %4194 = vmatprep.subr.bf16.mxu0 0
      %4195 = vmatpush1.bf16.xpose.msra.mxu0 0
      %4196 = vmatprep.mubr.bf16.mxu0 0
      %4197 = vmatmul.mubr.bf16.gmra.mrb[0].mxu0 %v4159
      %v4198 = vpop.f32.mrb[0].mxu0
      %v4199 = vadd.f32 0.0, %v4198
      %v4200 = vpop.f32.mrb[0].mxu0
      %v4201 = vpop.f32.mrb[0].mxu0
      %v4202 = vadd.f32 0.0, %v4201
      %v4203 = vpop.f32.mrb[0].mxu0
      %4204 = vdwg.mxu0
      %v4206 = vsel %vm4063, %v4050, 0
      %v4209 = vsel %vm4063, %v4058, 0
      %4211 = vmatprep.subr.bf16.mxu0 0
      %4212 = vmatpush1.bf16.xpose.msra.mxu0 %v4209
      %4213 = vmatprep.subr.bf16.mxu0 0
      %4214 = vmatpush1.bf16.xpose.msra.mxu0 0
      %4215 = vmatprep.subr.bf16.mxu0 0
      %4216 = vmatpush1.bf16.xpose.msra.mxu0 0
      %4217 = vmatprep.subr.bf16.mxu0 0
      %4218 = vmatpush1.bf16.xpose.msra.mxu0 0
      %4219 = vmatprep.subr.bf16.mxu0 0
      %4220 = vmatpush1.bf16.xpose.msra.mxu0 0
      %4221 = vmatprep.subr.bf16.mxu0 0
      %4222 = vmatpush1.bf16.xpose.msra.mxu0 0
      %4223 = vmatprep.subr.bf16.mxu0 0
      %4224 = vmatpush1.bf16.xpose.msra.mxu0 0
      %4225 = vmatprep.subr.bf16.mxu0 0
      %4226 = vmatpush1.bf16.xpose.msra.mxu0 0
      %4227 = vmatprep.subr.bf16.mxu0 0
      %4228 = vmatpush1.bf16.xpose.msra.mxu0 0
      %4229 = vmatprep.subr.bf16.mxu0 0
      %4230 = vmatpush1.bf16.xpose.msra.mxu0 0
      %4231 = vmatprep.subr.bf16.mxu0 0
      %4232 = vmatpush1.bf16.xpose.msra.mxu0 0
      %4233 = vmatprep.subr.bf16.mxu0 0
      %4234 = vmatpush1.bf16.xpose.msra.mxu0 0
      %4235 = vmatprep.subr.bf16.mxu0 0
      %4236 = vmatpush1.bf16.xpose.msra.mxu0 0
      %4237 = vmatprep.subr.bf16.mxu0 0
      %4238 = vmatpush1.bf16.xpose.msra.mxu0 0
      %4239 = vmatprep.subr.bf16.mxu0 0
      %4240 = vmatpush1.bf16.xpose.msra.mxu0 0
      %4241 = vmatprep.subr.bf16.mxu0 0
      %4242 = vmatpush1.bf16.xpose.msra.mxu0 0
      %4243 = vmatprep.mubr.bf16.mxu0 0
      %4244 = vmatmul.mubr.bf16.gmra.mrb[0].mxu0 %v4206
      %v4245 = vpop.f32.mrb[0].mxu0
      %v4246 = vadd.f32 0.0, %v4245
      %v4247 = vpop.f32.mrb[0].mxu0
      %v4248 = vpop.f32.mrb[0].mxu0
      %v4249 = vadd.f32 0.0, %v4248
      %v4250 = vpop.f32.mrb[0].mxu0
      %4251 = vdwg.mxu0
      %v4253 = vsel %vm4063, %v4051, 0
      %v4256 = vsel %vm4063, %v4059, 0
      %4258 = vmatprep.subr.bf16.mxu0 0
      %4259 = vmatpush1.bf16.xpose.msra.mxu0 %v4256
      %4260 = vmatprep.subr.bf16.mxu0 0
      %4261 = vmatpush1.bf16.xpose.msra.mxu0 0
      %4262 = vmatprep.subr.bf16.mxu0 0
      %4263 = vmatpush1.bf16.xpose.msra.mxu0 0
      %4264 = vmatprep.subr.bf16.mxu0 0
      %4265 = vmatpush1.bf16.xpose.msra.mxu0 0
      %4266 = vmatprep.subr.bf16.mxu0 0
      %4267 = vmatpush1.bf16.xpose.msra.mxu0 0
      %4268 = vmatprep.subr.bf16.mxu0 0
      %4269 = vmatpush1.bf16.xpose.msra.mxu0 0
      %4270 = vmatprep.subr.bf16.mxu0 0
      %4271 = vmatpush1.bf16.xpose.msra.mxu0 0
      %4272 = vmatprep.subr.bf16.mxu0 0
      %4273 = vmatpush1.bf16.xpose.msra.mxu0 0
      %4274 = vmatprep.subr.bf16.mxu0 0
      %4275 = vmatpush1.bf16.xpose.msra.mxu0 0
      %4276 = vmatprep.subr.bf16.mxu0 0
      %4277 = vmatpush1.bf16.xpose.msra.mxu0 0
      %4278 = vmatprep.subr.bf16.mxu0 0
      %4279 = vmatpush1.bf16.xpose.msra.mxu0 0
      %4280 = vmatprep.subr.bf16.mxu0 0
      %4281 = vmatpush1.bf16.xpose.msra.mxu0 0
      %4282 = vmatprep.subr.bf16.mxu0 0
      %4283 = vmatpush1.bf16.xpose.msra.mxu0 0
      %4284 = vmatprep.subr.bf16.mxu0 0
      %4285 = vmatpush1.bf16.xpose.msra.mxu0 0
      %4286 = vmatprep.subr.bf16.mxu0 0
      %4287 = vmatpush1.bf16.xpose.msra.mxu0 0
      %4288 = vmatprep.subr.bf16.mxu0 0
      %4289 = vmatpush1.bf16.xpose.msra.mxu0 0
      %4290 = vmatprep.mubr.bf16.mxu0 0
      %4291 = vmatmul.mubr.bf16.gmra.mrb[0].mxu0 %v4253
      %v4292 = vpop.f32.mrb[0].mxu0
      %v4293 = vadd.f32 0.0, %v4292
      %v4294 = vpop.f32.mrb[0].mxu0
      %v4295 = vpop.f32.mrb[0].mxu0
      %v4296 = vadd.f32 0.0, %v4295
      %v4297 = vpop.f32.mrb[0].mxu0
      %4298 = vdwg.mxu0
      %v4300 = vsel %vm4063, %v4052, 0
      %v4303 = vsel %vm4063, %v4060, 0
      %4305 = vmatprep.subr.bf16.mxu0 0
      %4306 = vmatpush1.bf16.xpose.msra.mxu0 %v4303
      %4307 = vmatprep.subr.bf16.mxu0 0
      %4308 = vmatpush1.bf16.xpose.msra.mxu0 0
      %4309 = vmatprep.subr.bf16.mxu0 0
      %4310 = vmatpush1.bf16.xpose.msra.mxu0 0
      %4311 = vmatprep.subr.bf16.mxu0 0
      %4312 = vmatpush1.bf16.xpose.msra.mxu0 0
      %4313 = vmatprep.subr.bf16.mxu0 0
      %4314 = vmatpush1.bf16.xpose.msra.mxu0 0
      %4315 = vmatprep.subr.bf16.mxu0 0
      %4316 = vmatpush1.bf16.xpose.msra.mxu0 0
      %4317 = vmatprep.subr.bf16.mxu0 0
      %4318 = vmatpush1.bf16.xpose.msra.mxu0 0
      %4319 = vmatprep.subr.bf16.mxu0 0
      %4320 = vmatpush1.bf16.xpose.msra.mxu0 0
      %4321 = vmatprep.subr.bf16.mxu0 0
      %4322 = vmatpush1.bf16.xpose.msra.mxu0 0
      %4323 = vmatprep.subr.bf16.mxu0 0
      %4324 = vmatpush1.bf16.xpose.msra.mxu0 0
      %4325 = vmatprep.subr.bf16.mxu0 0
      %4326 = vmatpush1.bf16.xpose.msra.mxu0 0
      %4327 = vmatprep.subr.bf16.mxu0 0
      %4328 = vmatpush1.bf16.xpose.msra.mxu0 0
      %4329 = vmatprep.subr.bf16.mxu0 0
      %4330 = vmatpush1.bf16.xpose.msra.mxu0 0
      %4331 = vmatprep.subr.bf16.mxu0 0
      %4332 = vmatpush1.bf16.xpose.msra.mxu0 0
      %4333 = vmatprep.subr.bf16.mxu0 0
      %4334 = vmatpush1.bf16.xpose.msra.mxu0 0
      %4335 = vmatprep.subr.bf16.mxu0 0
      %4336 = vmatpush1.bf16.xpose.msra.mxu0 0
      %4337 = vmatprep.mubr.bf16.mxu0 0
      %4338 = vmatmul.mubr.bf16.gmra.mrb[0].mxu0 %v4300
      %v4339 = vpop.f32.mrb[0].mxu0
      %v4340 = vadd.f32 0.0, %v4339
      %v4341 = vpop.f32.mrb[0].mxu0
      %v4342 = vpop.f32.mrb[0].mxu0
      %v4343 = vadd.f32 0.0, %v4342
      %v4344 = vpop.f32.mrb[0].mxu0
      %4345 = vdwg.mxu0
      %v4347 = vsel %vm4063, %v4053, 0
      %v4350 = vsel %vm4063, %v4061, 0
      %4352 = vmatprep.subr.bf16.mxu0 0
      %4353 = vmatpush1.bf16.xpose.msra.mxu0 %v4350
      %4354 = vmatprep.subr.bf16.mxu0 0
      %4355 = vmatpush1.bf16.xpose.msra.mxu0 0
      %4356 = vmatprep.subr.bf16.mxu0 0
      %4357 = vmatpush1.bf16.xpose.msra.mxu0 0
      %4358 = vmatprep.subr.bf16.mxu0 0
      %4359 = vmatpush1.bf16.xpose.msra.mxu0 0
      %4360 = vmatprep.subr.bf16.mxu0 0
      %4361 = vmatpush1.bf16.xpose.msra.mxu0 0
      %4362 = vmatprep.subr.bf16.mxu0 0
      %4363 = vmatpush1.bf16.xpose.msra.mxu0 0
      %4364 = vmatprep.subr.bf16.mxu0 0
      %4365 = vmatpush1.bf16.xpose.msra.mxu0 0
      %4366 = vmatprep.subr.bf16.mxu0 0
      %4367 = vmatpush1.bf16.xpose.msra.mxu0 0
      %4368 = vmatprep.subr.bf16.mxu0 0
      %4369 = vmatpush1.bf16.xpose.msra.mxu0 0
      %4370 = vmatprep.subr.bf16.mxu0 0
      %4371 = vmatpush1.bf16.xpose.msra.mxu0 0
      %4372 = vmatprep.subr.bf16.mxu0 0
      %4373 = vmatpush1.bf16.xpose.msra.mxu0 0
      %4374 = vmatprep.subr.bf16.mxu0 0
      %4375 = vmatpush1.bf16.xpose.msra.mxu0 0
      %4376 = vmatprep.subr.bf16.mxu0 0
      %4377 = vmatpush1.bf16.xpose.msra.mxu0 0
      %4378 = vmatprep.subr.bf16.mxu0 0
      %4379 = vmatpush1.bf16.xpose.msra.mxu0 0
      %4380 = vmatprep.subr.bf16.mxu0 0
      %4381 = vmatpush1.bf16.xpose.msra.mxu0 0
      %4382 = vmatprep.subr.bf16.mxu0 0
      %4383 = vmatpush1.bf16.xpose.msra.mxu0 0
      %4384 = vmatprep.mubr.bf16.mxu0 0
      %4385 = vmatmul.mubr.bf16.gmra.mrb[0].mxu0 %v4347
      %v4386 = vpop.f32.mrb[0].mxu0
      %v4387 = vadd.f32 0.0, %v4386
      %v4388 = vpop.f32.mrb[0].mxu0
      %v4389 = vpop.f32.mrb[0].mxu0
      %v4390 = vadd.f32 0.0, %v4389
      %v4391 = vpop.f32.mrb[0].mxu0
      %4392 = vdwg.mxu0
      %v4394 = vsel %vm4063, %v4054, 0
      %v4397 = vsel %vm4063, %v4062, 0
      %4399 = vmatprep.subr.bf16.mxu0 0
      %4400 = vmatpush1.bf16.xpose.msra.mxu0 %v4397
      %4401 = vmatprep.subr.bf16.mxu0 0
      %4402 = vmatpush1.bf16.xpose.msra.mxu0 0
      %4403 = vmatprep.subr.bf16.mxu0 0
      %4404 = vmatpush1.bf16.xpose.msra.mxu0 0
      %4405 = vmatprep.subr.bf16.mxu0 0
      %4406 = vmatpush1.bf16.xpose.msra.mxu0 0
      %4407 = vmatprep.subr.bf16.mxu0 0
      %4408 = vmatpush1.bf16.xpose.msra.mxu0 0
      %4409 = vmatprep.subr.bf16.mxu0 0
      %4410 = vmatpush1.bf16.xpose.msra.mxu0 0
      %4411 = vmatprep.subr.bf16.mxu0 0
      %4412 = vmatpush1.bf16.xpose.msra.mxu0 0
      %4413 = vmatprep.subr.bf16.mxu0 0
      %4414 = vmatpush1.bf16.xpose.msra.mxu0 0
      %4415 = vmatprep.subr.bf16.mxu0 0
      %4416 = vmatpush1.bf16.xpose.msra.mxu0 0
      %4417 = vmatprep.subr.bf16.mxu0 0
      %4418 = vmatpush1.bf16.xpose.msra.mxu0 0
      %4419 = vmatprep.subr.bf16.mxu0 0
      %4420 = vmatpush1.bf16.xpose.msra.mxu0 0
      %4421 = vmatprep.subr.bf16.mxu0 0
      %4422 = vmatpush1.bf16.xpose.msra.mxu0 0
      %4423 = vmatprep.subr.bf16.mxu0 0
      %4424 = vmatpush1.bf16.xpose.msra.mxu0 0
      %4425 = vmatprep.subr.bf16.mxu0 0
      %4426 = vmatpush1.bf16.xpose.msra.mxu0 0
      %4427 = vmatprep.subr.bf16.mxu0 0
      %4428 = vmatpush1.bf16.xpose.msra.mxu0 0
      %4429 = vmatprep.subr.bf16.mxu0 0
      %4430 = vmatpush1.bf16.xpose.msra.mxu0 0
      %4431 = vmatprep.mubr.bf16.mxu0 0
      %4432 = vmatmul.mubr.bf16.gmra.mrb[0].mxu0 %v4394
      %v4433 = vpop.f32.mrb[0].mxu0
      %v4434 = vadd.f32 0.0, %v4433
      %v4435 = vpop.f32.mrb[0].mxu0
      %v4436 = vpop.f32.mrb[0].mxu0
      %v4437 = vadd.f32 0.0, %v4436
      %v4438 = vpop.f32.mrb[0].mxu0
      %4439 = vdwg.mxu0
      %v4440 = vmul.f32 %v4105, 0.25
      %v4441 = vmul.f32 %v4108, 0.25
      %v4442 = vmul.f32 %v4152, 0.25
      %v4443 = vmul.f32 %v4155, 0.25
      %v4444 = vmul.f32 %v4199, 0.25
      %v4445 = vmul.f32 %v4202, 0.25
      %v4446 = vmul.f32 %v4246, 0.25
      %v4447 = vmul.f32 %v4249, 0.25
      %v4448 = vmul.f32 %v4293, 0.25
      %v4449 = vmul.f32 %v4296, 0.25
      %v4450 = vmul.f32 %v4340, 0.25
      %v4451 = vmul.f32 %v4343, 0.25
      %v4452 = vmul.f32 %v4387, 0.25
      %v4453 = vmul.f32 %v4390, 0.25
      %v4454 = vmul.f32 %v4434, 0.25
      %v4455 = vmul.f32 %v4437, 0.25
      %v4456 = vsel %vm4063, %v4440, -inf
      %4457 = vmax.xlane.f32.xlu0 %v4456
      %v4458 = vpop.xlane.xlu0 %4457
      %v4459 = vsel %vm4063, %v4441, -inf
      %4460 = vmax.xlane.f32.xlu0 %v4459
      %v4461 = vpop.xlane.xlu0 %4460
      %v4462 = vsel %vm4063, %v4442, -inf
      %4463 = vmax.xlane.f32.xlu0 %v4462
      %v4464 = vpop.xlane.xlu0 %4463
      %v4465 = vsel %vm4063, %v4443, -inf
      %4466 = vmax.xlane.f32.xlu0 %v4465
      %v4467 = vpop.xlane.xlu0 %4466
      %v4468 = vsel %vm4063, %v4444, -inf
      %4469 = vmax.xlane.f32.xlu0 %v4468
      %v4470 = vpop.xlane.xlu0 %4469
      %v4471 = vsel %vm4063, %v4445, -inf
      %4472 = vmax.xlane.f32.xlu0 %v4471
      %v4473 = vpop.xlane.xlu0 %4472
      %v4474 = vsel %vm4063, %v4446, -inf
      %4475 = vmax.xlane.f32.xlu0 %v4474
      %v4476 = vpop.xlane.xlu0 %4475
      %v4477 = vsel %vm4063, %v4447, -inf
      %4478 = vmax.xlane.f32.xlu0 %v4477
      %v4479 = vpop.xlane.xlu0 %4478
      %v4480 = vsel %vm4063, %v4448, -inf
      %4481 = vmax.xlane.f32.xlu0 %v4480
      %v4482 = vpop.xlane.xlu0 %4481
      %v4483 = vsel %vm4063, %v4449, -inf
      %4484 = vmax.xlane.f32.xlu0 %v4483
      %v4485 = vpop.xlane.xlu0 %4484
      %v4486 = vsel %vm4063, %v4450, -inf
      %4487 = vmax.xlane.f32.xlu0 %v4486
      %v4488 = vpop.xlane.xlu0 %4487
      %v4489 = vsel %vm4063, %v4451, -inf
      %4490 = vmax.xlane.f32.xlu0 %v4489
      %v4491 = vpop.xlane.xlu0 %4490
      %v4492 = vsel %vm4063, %v4452, -inf
      %4493 = vmax.xlane.f32.xlu0 %v4492
      %v4494 = vpop.xlane.xlu0 %4493
      %v4495 = vsel %vm4063, %v4453, -inf
      %4496 = vmax.xlane.f32.xlu0 %v4495
      %v4497 = vpop.xlane.xlu0 %4496
      %v4498 = vsel %vm4063, %v4454, -inf
      %4499 = vmax.xlane.f32.xlu0 %v4498
      %v4500 = vpop.xlane.xlu0 %4499
      %v4501 = vsel %vm4063, %v4455, -inf
      %4502 = vmax.xlane.f32.xlu0 %v4501
      %v4503 = vpop.xlane.xlu0 %4502
      %v4504 = vsub.f32 %v4440, %v4458
      %v4505 = vsub.f32 %v4441, %v4461
      %v4506 = vsub.f32 %v4442, %v4464
      %v4507 = vsub.f32 %v4443, %v4467
      %v4508 = vsub.f32 %v4444, %v4470
      %v4509 = vsub.f32 %v4445, %v4473
      %v4510 = vsub.f32 %v4446, %v4476
      %v4511 = vsub.f32 %v4447, %v4479
      %v4512 = vsub.f32 %v4448, %v4482
      %v4513 = vsub.f32 %v4449, %v4485
      %v4514 = vsub.f32 %v4450, %v4488
      %v4515 = vsub.f32 %v4451, %v4491
      %v4516 = vsub.f32 %v4452, %v4494
      %v4517 = vsub.f32 %v4453, %v4497
      %v4518 = vsub.f32 %v4454, %v4500
      %v4519 = vsub.f32 %v4455, %v4503
      %v4520 = vmul.f32 %v4504, 1.442695
      %v4521 = vpow.pop %v4520
      %v4522 = vmul.f32 %v4505, 1.442695
      %v4523 = vpow.pop %v4522
      %v4524 = vmul.f32 %v4506, 1.442695
      %v4525 = vpow.pop %v4524
      %v4526 = vmul.f32 %v4507, 1.442695
      %v4527 = vpow.pop %v4526
      %v4528 = vmul.f32 %v4508, 1.442695
      %v4529 = vpow.pop %v4528
      %v4530 = vmul.f32 %v4509, 1.442695
      %v4531 = vpow.pop %v4530
      %v4532 = vmul.f32 %v4510, 1.442695
      %v4533 = vpow.pop %v4532
      %v4534 = vmul.f32 %v4511, 1.442695
      %v4535 = vpow.pop %v4534
      %v4536 = vmul.f32 %v4512, 1.442695
      %v4537 = vpow.pop %v4536
      %v4538 = vmul.f32 %v4513, 1.442695
      %v4539 = vpow.pop %v4538
      %v4540 = vmul.f32 %v4514, 1.442695
      %v4541 = vpow.pop %v4540
      %v4542 = vmul.f32 %v4515, 1.442695
      %v4543 = vpow.pop %v4542
      %v4544 = vmul.f32 %v4516, 1.442695
      %v4545 = vpow.pop %v4544
      %v4546 = vmul.f32 %v4517, 1.442695
      %v4547 = vpow.pop %v4546
      %v4548 = vmul.f32 %v4518, 1.442695
      %v4549 = vpow.pop %v4548
      %v4550 = vmul.f32 %v4519, 1.442695
      %v4551 = vpow.pop %v4550
      %v4552 = vsel %vm4063, %v4521, 0.0
      %4553 = vadd.xlane.f32.xlu0 %v4552
      %v4554 = vpop.xlane.xlu0 %4553
      %v4555 = vsel %vm4063, %v4523, 0.0
      %4556 = vadd.xlane.f32.xlu0 %v4555
      %v4557 = vpop.xlane.xlu0 %4556
      %v4558 = vsel %vm4063, %v4525, 0.0
      %4559 = vadd.xlane.f32.xlu0 %v4558
      %v4560 = vpop.xlane.xlu0 %4559
      %v4561 = vsel %vm4063, %v4527, 0.0
      %4562 = vadd.xlane.f32.xlu0 %v4561
      %v4563 = vpop.xlane.xlu0 %4562
      %v4564 = vsel %vm4063, %v4529, 0.0
      %4565 = vadd.xlane.f32.xlu0 %v4564
      %v4566 = vpop.xlane.xlu0 %4565
      %v4567 = vsel %vm4063, %v4531, 0.0
      %4568 = vadd.xlane.f32.xlu0 %v4567
      %v4569 = vpop.xlane.xlu0 %4568
      %v4570 = vsel %vm4063, %v4533, 0.0
      %4571 = vadd.xlane.f32.xlu0 %v4570
      %v4572 = vpop.xlane.xlu0 %4571
      %v4573 = vsel %vm4063, %v4535, 0.0
      %4574 = vadd.xlane.f32.xlu0 %v4573
      %v4575 = vpop.xlane.xlu0 %4574
      %v4576 = vsel %vm4063, %v4537, 0.0
      %4577 = vadd.xlane.f32.xlu0 %v4576
      %v4578 = vpop.xlane.xlu0 %4577
      %v4579 = vsel %vm4063, %v4539, 0.0
      %4580 = vadd.xlane.f32.xlu0 %v4579
      %v4581 = vpop.xlane.xlu0 %4580
      %v4582 = vsel %vm4063, %v4541, 0.0
      %4583 = vadd.xlane.f32.xlu0 %v4582
      %v4584 = vpop.xlane.xlu0 %4583
      %v4585 = vsel %vm4063, %v4543, 0.0
      %4586 = vadd.xlane.f32.xlu0 %v4585
      %v4587 = vpop.xlane.xlu0 %4586
      %v4588 = vsel %vm4063, %v4545, 0.0
      %4589 = vadd.xlane.f32.xlu0 %v4588
      %v4590 = vpop.xlane.xlu0 %4589
      %v4591 = vsel %vm4063, %v4547, 0.0
      %4592 = vadd.xlane.f32.xlu0 %v4591
      %v4593 = vpop.xlane.xlu0 %4592
      %v4594 = vsel %vm4063, %v4549, 0.0
      %4595 = vadd.xlane.f32.xlu0 %v4594
      %v4596 = vpop.xlane.xlu0 %4595
      %v4597 = vsel %vm4063, %v4551, 0.0
      %4598 = vadd.xlane.f32.xlu0 %v4597
      %v4599 = vpop.xlane.xlu0 %4598
      %v4600 = vrcp.pop %v4554
      %v4601 = vrcp.pop %v4557
      %v4602 = vrcp.pop %v4560
      %v4603 = vrcp.pop %v4563
      %v4604 = vrcp.pop %v4566
      %v4605 = vrcp.pop %v4569
      %v4606 = vrcp.pop %v4572
      %v4607 = vrcp.pop %v4575
      %v4608 = vrcp.pop %v4578
      %v4609 = vrcp.pop %v4581
      %v4610 = vrcp.pop %v4584
      %v4611 = vrcp.pop %v4587
      %v4612 = vrcp.pop %v4590
      %v4613 = vrcp.pop %v4593
      %v4614 = vrcp.pop %v4596
      %v4615 = vrcp.pop %v4599
      %v4616 = vmul.f32 %v4521, %v4600
      %v4617 = vmul.f32 %v4523, %v4601
      %v4618 = vmul.f32 %v4525, %v4602
      %v4619 = vmul.f32 %v4527, %v4603
      %v4620 = vmul.f32 %v4529, %v4604
      %v4621 = vmul.f32 %v4531, %v4605
      %v4622 = vmul.f32 %v4533, %v4606
      %v4623 = vmul.f32 %v4535, %v4607
      %v4624 = vmul.f32 %v4537, %v4608
      %v4625 = vmul.f32 %v4539, %v4609
      %v4626 = vmul.f32 %v4541, %v4610
      %v4627 = vmul.f32 %v4543, %v4611
      %v4628 = vmul.f32 %v4545, %v4612
      %v4629 = vmul.f32 %v4547, %v4613
      %v4630 = vmul.f32 %v4549, %v4614
      %v4631 = vmul.f32 %v4551, %v4615
      %v4632 = vpack.c.bf16 %v4617, %v4616
      %v4633 = vpack.c.bf16 %v4619, %v4618
      %v4634 = vpack.c.bf16 %v4621, %v4620
      %v4635 = vpack.c.bf16 %v4623, %v4622
      %v4636 = vpack.c.bf16 %v4625, %v4624
      %v4637 = vpack.c.bf16 %v4627, %v4626
      %v4638 = vpack.c.bf16 %v4629, %v4628
      %v4639 = vpack.c.bf16 %v4631, %v4630
      %v4640 = vpack.c.bf16 %v3904, %v3901
      %v4641 = vpack.c.bf16 %v4008, %v4006
      %v4642 = vpack.c.bf16 %v4014, %v4012
      %v4643 = vpack.c.bf16 %v4020, %v4018
      %v4644 = vpack.c.bf16 %v4026, %v4024
      %v4645 = vpack.c.bf16 %v4032, %v4030
      %v4646 = vpack.c.bf16 %v4038, %v4036
      %v4647 = vpack.c.bf16 %v4044, %v4042
      %v4649 = vsel %vm4063, %v4632, 0
      %4651 = vmatprep.subr.bf16.mxu0 0
      %4652 = vmatpush1.bf16.msra.mxu0 %v4640
      %4653 = vmatprep.subr.bf16.mxu0 0
      %4654 = vmatpush1.bf16.msra.mxu0 0
      %4655 = vmatprep.subr.bf16.mxu0 0
      %4656 = vmatpush1.bf16.msra.mxu0 0
      %4657 = vmatprep.subr.bf16.mxu0 0
      %4658 = vmatpush1.bf16.msra.mxu0 0
      %4659 = vmatprep.subr.bf16.mxu0 0
      %4660 = vmatpush1.bf16.msra.mxu0 0
      %4661 = vmatprep.subr.bf16.mxu0 0
      %4662 = vmatpush1.bf16.msra.mxu0 0
      %4663 = vmatprep.subr.bf16.mxu0 0
      %4664 = vmatpush1.bf16.msra.mxu0 0
      %4665 = vmatprep.subr.bf16.mxu0 0
      %4666 = vmatpush1.bf16.msra.mxu0 0
      %4667 = vmatprep.subr.bf16.mxu0 0
      %4668 = vmatpush1.bf16.msra.mxu0 0
      %4669 = vmatprep.subr.bf16.mxu0 0
      %4670 = vmatpush1.bf16.msra.mxu0 0
      %4671 = vmatprep.subr.bf16.mxu0 0
      %4672 = vmatpush1.bf16.msra.mxu0 0
      %4673 = vmatprep.subr.bf16.mxu0 0
      %4674 = vmatpush1.bf16.msra.mxu0 0
      %4675 = vmatprep.subr.bf16.mxu0 0
      %4676 = vmatpush1.bf16.msra.mxu0 0
      %4677 = vmatprep.subr.bf16.mxu0 0
      %4678 = vmatpush1.bf16.msra.mxu0 0
      %4679 = vmatprep.subr.bf16.mxu0 0
      %4680 = vmatpush1.bf16.msra.mxu0 0
      %4681 = vmatprep.subr.bf16.mxu0 0
      %4682 = vmatpush1.bf16.msra.mxu0 0
      %4683 = vmatprep.mubr.bf16.mxu0 0
      %4684 = vmatmul.mubr.bf16.gmra.mrb[0].mxu0 %v4649
      %v4685 = vpop.f32.mrb[0].mxu0
      %v4686 = vadd.f32 0.0, %v4685
      %v4687 = vpop.f32.mrb[0].mxu0
      %v4688 = vpop.f32.mrb[0].mxu0
      %v4689 = vadd.f32 0.0, %v4688
      %v4690 = vpop.f32.mrb[0].mxu0
      %4691 = vdwg.mxu0
      %v4693 = vsel %vm4063, %v4633, 0
      %4695 = vmatprep.subr.bf16.mxu0 0
      %4696 = vmatpush1.bf16.msra.mxu0 %v4641
      %4697 = vmatprep.subr.bf16.mxu0 0
      %4698 = vmatpush1.bf16.msra.mxu0 0
      %4699 = vmatprep.subr.bf16.mxu0 0
      %4700 = vmatpush1.bf16.msra.mxu0 0
      %4701 = vmatprep.subr.bf16.mxu0 0
      %4702 = vmatpush1.bf16.msra.mxu0 0
      %4703 = vmatprep.subr.bf16.mxu0 0
      %4704 = vmatpush1.bf16.msra.mxu0 0
      %4705 = vmatprep.subr.bf16.mxu0 0
      %4706 = vmatpush1.bf16.msra.mxu0 0
      %4707 = vmatprep.subr.bf16.mxu0 0
      %4708 = vmatpush1.bf16.msra.mxu0 0
      %4709 = vmatprep.subr.bf16.mxu0 0
      %4710 = vmatpush1.bf16.msra.mxu0 0
      %4711 = vmatprep.subr.bf16.mxu0 0
      %4712 = vmatpush1.bf16.msra.mxu0 0
      %4713 = vmatprep.subr.bf16.mxu0 0
      %4714 = vmatpush1.bf16.msra.mxu0 0
      %4715 = vmatprep.subr.bf16.mxu0 0
      %4716 = vmatpush1.bf16.msra.mxu0 0
      %4717 = vmatprep.subr.bf16.mxu0 0
      %4718 = vmatpush1.bf16.msra.mxu0 0
      %4719 = vmatprep.subr.bf16.mxu0 0
      %4720 = vmatpush1.bf16.msra.mxu0 0
      %4721 = vmatprep.subr.bf16.mxu0 0
      %4722 = vmatpush1.bf16.msra.mxu0 0
      %4723 = vmatprep.subr.bf16.mxu0 0
      %4724 = vmatpush1.bf16.msra.mxu0 0
      %4725 = vmatprep.subr.bf16.mxu0 0
      %4726 = vmatpush1.bf16.msra.mxu0 0
      %4727 = vmatprep.mubr.bf16.mxu0 0
      %4728 = vmatmul.mubr.bf16.gmra.mrb[0].mxu0 %v4693
      %v4729 = vpop.f32.mrb[0].mxu0
      %v4730 = vadd.f32 0.0, %v4729
      %v4731 = vpop.f32.mrb[0].mxu0
      %v4732 = vpop.f32.mrb[0].mxu0
      %v4733 = vadd.f32 0.0, %v4732
      %v4734 = vpop.f32.mrb[0].mxu0
      %4735 = vdwg.mxu0
      %v4737 = vsel %vm4063, %v4634, 0
      %4739 = vmatprep.subr.bf16.mxu0 0
      %4740 = vmatpush1.bf16.msra.mxu0 %v4642
      %4741 = vmatprep.subr.bf16.mxu0 0
      %4742 = vmatpush1.bf16.msra.mxu0 0
      %4743 = vmatprep.subr.bf16.mxu0 0
      %4744 = vmatpush1.bf16.msra.mxu0 0
      %4745 = vmatprep.subr.bf16.mxu0 0
      %4746 = vmatpush1.bf16.msra.mxu0 0
      %4747 = vmatprep.subr.bf16.mxu0 0
      %4748 = vmatpush1.bf16.msra.mxu0 0
      %4749 = vmatprep.subr.bf16.mxu0 0
      %4750 = vmatpush1.bf16.msra.mxu0 0
      %4751 = vmatprep.subr.bf16.mxu0 0
      %4752 = vmatpush1.bf16.msra.mxu0 0
      %4753 = vmatprep.subr.bf16.mxu0 0
      %4754 = vmatpush1.bf16.msra.mxu0 0
      %4755 = vmatprep.subr.bf16.mxu0 0
      %4756 = vmatpush1.bf16.msra.mxu0 0
      %4757 = vmatprep.subr.bf16.mxu0 0
      %4758 = vmatpush1.bf16.msra.mxu0 0
      %4759 = vmatprep.subr.bf16.mxu0 0
      %4760 = vmatpush1.bf16.msra.mxu0 0
      %4761 = vmatprep.subr.bf16.mxu0 0
      %4762 = vmatpush1.bf16.msra.mxu0 0
      %4763 = vmatprep.subr.bf16.mxu0 0
      %4764 = vmatpush1.bf16.msra.mxu0 0
      %4765 = vmatprep.subr.bf16.mxu0 0
      %4766 = vmatpush1.bf16.msra.mxu0 0
      %4767 = vmatprep.subr.bf16.mxu0 0
      %4768 = vmatpush1.bf16.msra.mxu0 0
      %4769 = vmatprep.subr.bf16.mxu0 0
      %4770 = vmatpush1.bf16.msra.mxu0 0
      %4771 = vmatprep.mubr.bf16.mxu0 0
      %4772 = vmatmul.mubr.bf16.gmra.mrb[0].mxu0 %v4737
      %v4773 = vpop.f32.mrb[0].mxu0
      %v4774 = vadd.f32 0.0, %v4773
      %v4775 = vpop.f32.mrb[0].mxu0
      %v4776 = vpop.f32.mrb[0].mxu0
      %v4777 = vadd.f32 0.0, %v4776
      %v4778 = vpop.f32.mrb[0].mxu0
      %4779 = vdwg.mxu0
      %v4781 = vsel %vm4063, %v4635, 0
      %4783 = vmatprep.subr.bf16.mxu0 0
      %4784 = vmatpush1.bf16.msra.mxu0 %v4643
      %4785 = vmatprep.subr.bf16.mxu0 0
      %4786 = vmatpush1.bf16.msra.mxu0 0
      %4787 = vmatprep.subr.bf16.mxu0 0
      %4788 = vmatpush1.bf16.msra.mxu0 0
      %4789 = vmatprep.subr.bf16.mxu0 0
      %4790 = vmatpush1.bf16.msra.mxu0 0
      %4791 = vmatprep.subr.bf16.mxu0 0
      %4792 = vmatpush1.bf16.msra.mxu0 0
      %4793 = vmatprep.subr.bf16.mxu0 0
      %4794 = vmatpush1.bf16.msra.mxu0 0
      %4795 = vmatprep.subr.bf16.mxu0 0
      %4796 = vmatpush1.bf16.msra.mxu0 0
      %4797 = vmatprep.subr.bf16.mxu0 0
      %4798 = vmatpush1.bf16.msra.mxu0 0
      %4799 = vmatprep.subr.bf16.mxu0 0
      %4800 = vmatpush1.bf16.msra.mxu0 0
      %4801 = vmatprep.subr.bf16.mxu0 0
      %4802 = vmatpush1.bf16.msra.mxu0 0
      %4803 = vmatprep.subr.bf16.mxu0 0
      %4804 = vmatpush1.bf16.msra.mxu0 0
      %4805 = vmatprep.subr.bf16.mxu0 0
      %4806 = vmatpush1.bf16.msra.mxu0 0
      %4807 = vmatprep.subr.bf16.mxu0 0
      %4808 = vmatpush1.bf16.msra.mxu0 0
      %4809 = vmatprep.subr.bf16.mxu0 0
      %4810 = vmatpush1.bf16.msra.mxu0 0
      %4811 = vmatprep.subr.bf16.mxu0 0
      %4812 = vmatpush1.bf16.msra.mxu0 0
      %4813 = vmatprep.subr.bf16.mxu0 0
      %4814 = vmatpush1.bf16.msra.mxu0 0
      %4815 = vmatprep.mubr.bf16.mxu0 0
      %4816 = vmatmul.mubr.bf16.gmra.mrb[0].mxu0 %v4781
      %v4817 = vpop.f32.mrb[0].mxu0
      %v4818 = vadd.f32 0.0, %v4817
      %v4819 = vpop.f32.mrb[0].mxu0
      %v4820 = vpop.f32.mrb[0].mxu0
      %v4821 = vadd.f32 0.0, %v4820
      %v4822 = vpop.f32.mrb[0].mxu0
      %4823 = vdwg.mxu0
      %v4825 = vsel %vm4063, %v4636, 0
      %4827 = vmatprep.subr.bf16.mxu0 0
      %4828 = vmatpush1.bf16.msra.mxu0 %v4644
      %4829 = vmatprep.subr.bf16.mxu0 0
      %4830 = vmatpush1.bf16.msra.mxu0 0
      %4831 = vmatprep.subr.bf16.mxu0 0
      %4832 = vmatpush1.bf16.msra.mxu0 0
      %4833 = vmatprep.subr.bf16.mxu0 0
      %4834 = vmatpush1.bf16.msra.mxu0 0
      %4835 = vmatprep.subr.bf16.mxu0 0
      %4836 = vmatpush1.bf16.msra.mxu0 0
      %4837 = vmatprep.subr.bf16.mxu0 0
      %4838 = vmatpush1.bf16.msra.mxu0 0
      %4839 = vmatprep.subr.bf16.mxu0 0
      %4840 = vmatpush1.bf16.msra.mxu0 0
      %4841 = vmatprep.subr.bf16.mxu0 0
      %4842 = vmatpush1.bf16.msra.mxu0 0
      %4843 = vmatprep.subr.bf16.mxu0 0
      %4844 = vmatpush1.bf16.msra.mxu0 0
      %4845 = vmatprep.subr.bf16.mxu0 0
      %4846 = vmatpush1.bf16.msra.mxu0 0
      %4847 = vmatprep.subr.bf16.mxu0 0
      %4848 = vmatpush1.bf16.msra.mxu0 0
      %4849 = vmatprep.subr.bf16.mxu0 0
      %4850 = vmatpush1.bf16.msra.mxu0 0
      %4851 = vmatprep.subr.bf16.mxu0 0
      %4852 = vmatpush1.bf16.msra.mxu0 0
      %4853 = vmatprep.subr.bf16.mxu0 0
      %4854 = vmatpush1.bf16.msra.mxu0 0
      %4855 = vmatprep.subr.bf16.mxu0 0
      %4856 = vmatpush1.bf16.msra.mxu0 0
      %4857 = vmatprep.subr.bf16.mxu0 0
      %4858 = vmatpush1.bf16.msra.mxu0 0
      %4859 = vmatprep.mubr.bf16.mxu0 0
      %4860 = vmatmul.mubr.bf16.gmra.mrb[0].mxu0 %v4825
      %v4861 = vpop.f32.mrb[0].mxu0
      %v4862 = vadd.f32 0.0, %v4861
      %v4863 = vpop.f32.mrb[0].mxu0
      %v4864 = vpop.f32.mrb[0].mxu0
      %v4865 = vadd.f32 0.0, %v4864
      %v4866 = vpop.f32.mrb[0].mxu0
      %4867 = vdwg.mxu0
      %v4869 = vsel %vm4063, %v4637, 0
      %4871 = vmatprep.subr.bf16.mxu0 0
      %4872 = vmatpush1.bf16.msra.mxu0 %v4645
      %4873 = vmatprep.subr.bf16.mxu0 0
      %4874 = vmatpush1.bf16.msra.mxu0 0
      %4875 = vmatprep.subr.bf16.mxu0 0
      %4876 = vmatpush1.bf16.msra.mxu0 0
      %4877 = vmatprep.subr.bf16.mxu0 0
      %4878 = vmatpush1.bf16.msra.mxu0 0
      %4879 = vmatprep.subr.bf16.mxu0 0
      %4880 = vmatpush1.bf16.msra.mxu0 0
      %4881 = vmatprep.subr.bf16.mxu0 0
      %4882 = vmatpush1.bf16.msra.mxu0 0
      %4883 = vmatprep.subr.bf16.mxu0 0
      %4884 = vmatpush1.bf16.msra.mxu0 0
      %4885 = vmatprep.subr.bf16.mxu0 0
      %4886 = vmatpush1.bf16.msra.mxu0 0
      %4887 = vmatprep.subr.bf16.mxu0 0
      %4888 = vmatpush1.bf16.msra.mxu0 0
      %4889 = vmatprep.subr.bf16.mxu0 0
      %4890 = vmatpush1.bf16.msra.mxu0 0
      %4891 = vmatprep.subr.bf16.mxu0 0
      %4892 = vmatpush1.bf16.msra.mxu0 0
      %4893 = vmatprep.subr.bf16.mxu0 0
      %4894 = vmatpush1.bf16.msra.mxu0 0
      %4895 = vmatprep.subr.bf16.mxu0 0
      %4896 = vmatpush1.bf16.msra.mxu0 0
      %4897 = vmatprep.subr.bf16.mxu0 0
      %4898 = vmatpush1.bf16.msra.mxu0 0
      %4899 = vmatprep.subr.bf16.mxu0 0
      %4900 = vmatpush1.bf16.msra.mxu0 0
      %4901 = vmatprep.subr.bf16.mxu0 0
      %4902 = vmatpush1.bf16.msra.mxu0 0
      %4903 = vmatprep.mubr.bf16.mxu0 0
      %4904 = vmatmul.mubr.bf16.gmra.mrb[0].mxu0 %v4869
      %v4905 = vpop.f32.mrb[0].mxu0
      %v4906 = vadd.f32 0.0, %v4905
      %v4907 = vpop.f32.mrb[0].mxu0
      %v4908 = vpop.f32.mrb[0].mxu0
      %v4909 = vadd.f32 0.0, %v4908
      %v4910 = vpop.f32.mrb[0].mxu0
      %4911 = vdwg.mxu0
      %v4913 = vsel %vm4063, %v4638, 0
      %4915 = vmatprep.subr.bf16.mxu0 0
      %4916 = vmatpush1.bf16.msra.mxu0 %v4646
      %4917 = vmatprep.subr.bf16.mxu0 0
      %4918 = vmatpush1.bf16.msra.mxu0 0
      %4919 = vmatprep.subr.bf16.mxu0 0
      %4920 = vmatpush1.bf16.msra.mxu0 0
      %4921 = vmatprep.subr.bf16.mxu0 0
      %4922 = vmatpush1.bf16.msra.mxu0 0
      %4923 = vmatprep.subr.bf16.mxu0 0
      %4924 = vmatpush1.bf16.msra.mxu0 0
      %4925 = vmatprep.subr.bf16.mxu0 0
      %4926 = vmatpush1.bf16.msra.mxu0 0
      %4927 = vmatprep.subr.bf16.mxu0 0
      %4928 = vmatpush1.bf16.msra.mxu0 0
      %4929 = vmatprep.subr.bf16.mxu0 0
      %4930 = vmatpush1.bf16.msra.mxu0 0
      %4931 = vmatprep.subr.bf16.mxu0 0
      %4932 = vmatpush1.bf16.msra.mxu0 0
      %4933 = vmatprep.subr.bf16.mxu0 0
      %4934 = vmatpush1.bf16.msra.mxu0 0
      %4935 = vmatprep.subr.bf16.mxu0 0
      %4936 = vmatpush1.bf16.msra.mxu0 0
      %4937 = vmatprep.subr.bf16.mxu0 0
      %4938 = vmatpush1.bf16.msra.mxu0 0
      %4939 = vmatprep.subr.bf16.mxu0 0
      %4940 = vmatpush1.bf16.msra.mxu0 0
      %4941 = vmatprep.subr.bf16.mxu0 0
      %4942 = vmatpush1.bf16.msra.mxu0 0
      %4943 = vmatprep.subr.bf16.mxu0 0
      %4944 = vmatpush1.bf16.msra.mxu0 0
      %4945 = vmatprep.subr.bf16.mxu0 0
      %4946 = vmatpush1.bf16.msra.mxu0 0
      %4947 = vmatprep.mubr.bf16.mxu0 0
      %4948 = vmatmul.mubr.bf16.gmra.mrb[0].mxu0 %v4913
      %v4949 = vpop.f32.mrb[0].mxu0
      %v4950 = vadd.f32 0.0, %v4949
      %v4951 = vpop.f32.mrb[0].mxu0
      %v4952 = vpop.f32.mrb[0].mxu0
      %v4953 = vadd.f32 0.0, %v4952
      %v4954 = vpop.f32.mrb[0].mxu0
      %4955 = vdwg.mxu0
      %v4957 = vsel %vm4063, %v4639, 0
      %4959 = vmatprep.subr.bf16.mxu0 0
      %4960 = vmatpush1.bf16.msra.mxu0 %v4647
      %4961 = vmatprep.subr.bf16.mxu0 0
      %4962 = vmatpush1.bf16.msra.mxu0 0
      %4963 = vmatprep.subr.bf16.mxu0 0
      %4964 = vmatpush1.bf16.msra.mxu0 0
      %4965 = vmatprep.subr.bf16.mxu0 0
      %4966 = vmatpush1.bf16.msra.mxu0 0
      %4967 = vmatprep.subr.bf16.mxu0 0
      %4968 = vmatpush1.bf16.msra.mxu0 0
      %4969 = vmatprep.subr.bf16.mxu0 0
      %4970 = vmatpush1.bf16.msra.mxu0 0
      %4971 = vmatprep.subr.bf16.mxu0 0
      %4972 = vmatpush1.bf16.msra.mxu0 0
      %4973 = vmatprep.subr.bf16.mxu0 0
      %4974 = vmatpush1.bf16.msra.mxu0 0
      %4975 = vmatprep.subr.bf16.mxu0 0
      %4976 = vmatpush1.bf16.msra.mxu0 0
      %4977 = vmatprep.subr.bf16.mxu0 0
      %4978 = vmatpush1.bf16.msra.mxu0 0
      %4979 = vmatprep.subr.bf16.mxu0 0
      %4980 = vmatpush1.bf16.msra.mxu0 0
      %4981 = vmatprep.subr.bf16.mxu0 0
      %4982 = vmatpush1.bf16.msra.mxu0 0
      %4983 = vmatprep.subr.bf16.mxu0 0
      %4984 = vmatpush1.bf16.msra.mxu0 0
      %4985 = vmatprep.subr.bf16.mxu0 0
      %4986 = vmatpush1.bf16.msra.mxu0 0
      %4987 = vmatprep.subr.bf16.mxu0 0
      %4988 = vmatpush1.bf16.msra.mxu0 0
      %4989 = vmatprep.subr.bf16.mxu0 0
      %4990 = vmatpush1.bf16.msra.mxu0 0
      %4991 = vmatprep.mubr.bf16.mxu0 0
      %4992 = vmatmul.mubr.bf16.gmra.mrb[0].mxu0 %v4957
      %v4993 = vpop.f32.mrb[0].mxu0
      %v4994 = vadd.f32 0.0, %v4993
      %v4995 = vpop.f32.mrb[0].mxu0
      %v4996 = vpop.f32.mrb[0].mxu0
      %v4997 = vadd.f32 0.0, %v4996
      %v4998 = vpop.f32.mrb[0].mxu0
      %4999 = vdwg.mxu0
      %5002 = vrot.lane.b32.xlu0 %v4730, 16
      %v5003 = vpop.permute.xlu0 %5002
      %5004 = vrot.lane.b32.xlu0 %v4733, 16
      %v5005 = vpop.permute.xlu0 %5004
      %5010 = vrot.lane.b32.xlu0 %v4774, 32
      %v5011 = vpop.permute.xlu0 %5010
      %5012 = vrot.lane.b32.xlu0 %v4777, 32
      %v5013 = vpop.permute.xlu0 %5012
      %5018 = vrot.lane.b32.xlu0 %v4818, 48
      %v5019 = vpop.permute.xlu0 %5018
      %5020 = vrot.lane.b32.xlu0 %v4821, 48
      %v5021 = vpop.permute.xlu0 %5020
      %5026 = vrot.lane.b32.xlu0 %v4862, 64
      %v5027 = vpop.permute.xlu0 %5026
      %5028 = vrot.lane.b32.xlu0 %v4865, 64
      %v5029 = vpop.permute.xlu0 %5028
      %5034 = vrot.lane.b32.xlu0 %v4906, 80
      %v5035 = vpop.permute.xlu0 %5034
      %5036 = vrot.lane.b32.xlu0 %v4909, 80
      %v5037 = vpop.permute.xlu0 %5036
      %5042 = vrot.lane.b32.xlu0 %v4950, 96
      %v5043 = vpop.permute.xlu0 %5042
      %5044 = vrot.lane.b32.xlu0 %v4953, 96
      %v5045 = vpop.permute.xlu0 %5044
      %5050 = vrot.lane.b32.xlu0 %v4994, 112
      %v5051 = vpop.permute.xlu0 %5050
      %5052 = vrot.lane.b32.xlu0 %v4997, 112
      %v5053 = vpop.permute.xlu0 %5052
      %v5056 = vsel %vm4063, %v4686, %v5003
      %v5057 = vsel %vm4063, %v4689, %v5005
      %v5058 = vsel %vm1897, %v5056, %v5011
      %v5059 = vsel %vm1897, %v5057, %v5013
      %vm5060 = vcmask 392192
      %v5061 = vsel %vm5060, %v5058, %v5019
      %v5062 = vsel %vm5060, %v5059, %v5021
      %vm5063 = vcmask 523264
      %v5064 = vsel %vm5063, %v5061, %v5027
      %v5065 = vsel %vm5063, %v5062, %v5029
      %vm5066 = vcmask 654336
      %v5067 = vsel %vm5066, %v5064, %v5035
      %v5068 = vsel %vm5066, %v5065, %v5037
      %vm5069 = vcmask 785408
      %v5070 = vsel %vm5069, %v5067, %v5043
      %v5071 = vsel %vm5069, %v5068, %v5045
      %vm5072 = vcmask 916480
      %v5073 = vsel %vm5072, %v5070, %v5051
      %v5074 = vsel %vm5072, %v5071, %v5053
      %5077 = vrot.lane.b32.xlu0 %v3858, 112
      %v5078 = vpop.permute.xlu0 %5077
      %5079 = vrot.lane.b32.xlu0 %v3862, 112
      %v5080 = vpop.permute.xlu0 %5079
      %5083 = vrot.lane.b32.xlu0 %v3858, 96
      %v5084 = vpop.permute.xlu0 %5083
      %5085 = vrot.lane.b32.xlu0 %v3862, 96
      %v5086 = vpop.permute.xlu0 %5085
      %5089 = vrot.lane.b32.xlu0 %v3858, 80
      %v5090 = vpop.permute.xlu0 %5089
      %5091 = vrot.lane.b32.xlu0 %v3862, 80
      %v5092 = vpop.permute.xlu0 %5091
      %5095 = vrot.lane.b32.xlu0 %v3858, 64
      %v5096 = vpop.permute.xlu0 %5095
      %5097 = vrot.lane.b32.xlu0 %v3862, 64
      %v5098 = vpop.permute.xlu0 %5097
      %5101 = vrot.lane.b32.xlu0 %v3858, 48
      %v5102 = vpop.permute.xlu0 %5101
      %5103 = vrot.lane.b32.xlu0 %v3862, 48
      %v5104 = vpop.permute.xlu0 %5103
      %5107 = vrot.lane.b32.xlu0 %v3858, 32
      %v5108 = vpop.permute.xlu0 %5107
      %5109 = vrot.lane.b32.xlu0 %v3862, 32
      %v5110 = vpop.permute.xlu0 %5109
      %5113 = vrot.lane.b32.xlu0 %v3858, 16
      %v5114 = vpop.permute.xlu0 %5113
      %5115 = vrot.lane.b32.xlu0 %v3862, 16
      %v5116 = vpop.permute.xlu0 %5115
      %5121 = vrot.lane.b32.xlu0 %v3860, 112
      %v5122 = vpop.permute.xlu0 %5121
      %5123 = vrot.lane.b32.xlu0 %v3864, 112
      %v5124 = vpop.permute.xlu0 %5123
      %5127 = vrot.lane.b32.xlu0 %v3860, 96
      %v5128 = vpop.permute.xlu0 %5127
      %5129 = vrot.lane.b32.xlu0 %v3864, 96
      %v5130 = vpop.permute.xlu0 %5129
      %5133 = vrot.lane.b32.xlu0 %v3860, 80
      %v5134 = vpop.permute.xlu0 %5133
      %5135 = vrot.lane.b32.xlu0 %v3864, 80
      %v5136 = vpop.permute.xlu0 %5135
      %5139 = vrot.lane.b32.xlu0 %v3860, 64
      %v5140 = vpop.permute.xlu0 %5139
      %5141 = vrot.lane.b32.xlu0 %v3864, 64
      %v5142 = vpop.permute.xlu0 %5141
      %5145 = vrot.lane.b32.xlu0 %v3860, 48
      %v5146 = vpop.permute.xlu0 %5145
      %5147 = vrot.lane.b32.xlu0 %v3864, 48
      %v5148 = vpop.permute.xlu0 %5147
      %5151 = vrot.lane.b32.xlu0 %v3860, 32
      %v5152 = vpop.permute.xlu0 %5151
      %5153 = vrot.lane.b32.xlu0 %v3864, 32
      %v5154 = vpop.permute.xlu0 %5153
      %5157 = vrot.lane.b32.xlu0 %v3860, 16
      %v5158 = vpop.permute.xlu0 %5157
      %5159 = vrot.lane.b32.xlu0 %v3864, 16
      %v5160 = vpop.permute.xlu0 %5159
      %5165 = vrot.lane.b32.xlu0 %v3909, 112
      %v5166 = vpop.permute.xlu0 %5165
      %5167 = vrot.lane.b32.xlu0 %v3912, 112
      %v5168 = vpop.permute.xlu0 %5167
      %5171 = vrot.lane.b32.xlu0 %v3909, 96
      %v5172 = vpop.permute.xlu0 %5171
      %5173 = vrot.lane.b32.xlu0 %v3912, 96
      %v5174 = vpop.permute.xlu0 %5173
      %5177 = vrot.lane.b32.xlu0 %v3909, 80
      %v5178 = vpop.permute.xlu0 %5177
      %5179 = vrot.lane.b32.xlu0 %v3912, 80
      %v5180 = vpop.permute.xlu0 %5179
      %5183 = vrot.lane.b32.xlu0 %v3909, 64
      %v5184 = vpop.permute.xlu0 %5183
      %5185 = vrot.lane.b32.xlu0 %v3912, 64
      %v5186 = vpop.permute.xlu0 %5185
      %5189 = vrot.lane.b32.xlu0 %v3909, 48
      %v5190 = vpop.permute.xlu0 %5189
      %5191 = vrot.lane.b32.xlu0 %v3912, 48
      %v5192 = vpop.permute.xlu0 %5191
      %5195 = vrot.lane.b32.xlu0 %v3909, 32
      %v5196 = vpop.permute.xlu0 %5195
      %5197 = vrot.lane.b32.xlu0 %v3912, 32
      %v5198 = vpop.permute.xlu0 %5197
      %5201 = vrot.lane.b32.xlu0 %v3909, 16
      %v5202 = vpop.permute.xlu0 %5201
      %5203 = vrot.lane.b32.xlu0 %v3912, 16
      %v5204 = vpop.permute.xlu0 %5203
      %v5207 = vpack.c.bf16 %v3862, %v3858
      %v5208 = vpack.c.bf16 %v5080, %v5078
      %v5209 = vpack.c.bf16 %v5086, %v5084
      %v5210 = vpack.c.bf16 %v5092, %v5090
      %v5211 = vpack.c.bf16 %v5098, %v5096
      %v5212 = vpack.c.bf16 %v5104, %v5102
      %v5213 = vpack.c.bf16 %v5110, %v5108
      %v5214 = vpack.c.bf16 %v5116, %v5114
      %v5215 = vpack.c.bf16 %v3864, %v3860
      %v5216 = vpack.c.bf16 %v5124, %v5122
      %v5217 = vpack.c.bf16 %v5130, %v5128
      %v5218 = vpack.c.bf16 %v5136, %v5134
      %v5219 = vpack.c.bf16 %v5142, %v5140
      %v5220 = vpack.c.bf16 %v5148, %v5146
      %v5221 = vpack.c.bf16 %v5154, %v5152
      %v5222 = vpack.c.bf16 %v5160, %v5158
      %v5224 = vsel %vm4063, %v5207, 0
      %v5227 = vsel %vm4063, %v5215, 0
      %5229 = vmatprep.subr.bf16.mxu0 0
      %5230 = vmatpush1.bf16.xpose.msra.mxu0 %v5227
      %5231 = vmatprep.subr.bf16.mxu0 0
      %5232 = vmatpush1.bf16.xpose.msra.mxu0 0
      %5233 = vmatprep.subr.bf16.mxu0 0
      %5234 = vmatpush1.bf16.xpose.msra.mxu0 0
      %5235 = vmatprep.subr.bf16.mxu0 0
      %5236 = vmatpush1.bf16.xpose.msra.mxu0 0
      %5237 = vmatprep.subr.bf16.mxu0 0
      %5238 = vmatpush1.bf16.xpose.msra.mxu0 0
      %5239 = vmatprep.subr.bf16.mxu0 0
      %5240 = vmatpush1.bf16.xpose.msra.mxu0 0
      %5241 = vmatprep.subr.bf16.mxu0 0
      %5242 = vmatpush1.bf16.xpose.msra.mxu0 0
      %5243 = vmatprep.subr.bf16.mxu0 0
      %5244 = vmatpush1.bf16.xpose.msra.mxu0 0
      %5245 = vmatprep.subr.bf16.mxu0 0
      %5246 = vmatpush1.bf16.xpose.msra.mxu0 0
      %5247 = vmatprep.subr.bf16.mxu0 0
      %5248 = vmatpush1.bf16.xpose.msra.mxu0 0
      %5249 = vmatprep.subr.bf16.mxu0 0
      %5250 = vmatpush1.bf16.xpose.msra.mxu0 0
      %5251 = vmatprep.subr.bf16.mxu0 0
      %5252 = vmatpush1.bf16.xpose.msra.mxu0 0
      %5253 = vmatprep.subr.bf16.mxu0 0
      %5254 = vmatpush1.bf16.xpose.msra.mxu0 0
      %5255 = vmatprep.subr.bf16.mxu0 0
      %5256 = vmatpush1.bf16.xpose.msra.mxu0 0
      %5257 = vmatprep.subr.bf16.mxu0 0
      %5258 = vmatpush1.bf16.xpose.msra.mxu0 0
      %5259 = vmatprep.subr.bf16.mxu0 0
      %5260 = vmatpush1.bf16.xpose.msra.mxu0 0
      %5261 = vmatprep.mubr.bf16.mxu0 0
      %5262 = vmatmul.mubr.bf16.gmra.mrb[0].mxu0 %v5224
      %v5263 = vpop.f32.mrb[0].mxu0
      %v5264 = vadd.f32 0.0, %v5263
      %v5265 = vpop.f32.mrb[0].mxu0
      %v5266 = vpop.f32.mrb[0].mxu0
      %v5267 = vadd.f32 0.0, %v5266
      %v5268 = vpop.f32.mrb[0].mxu0
      %5269 = vdwg.mxu0
      %v5271 = vsel %vm4063, %v5208, 0
      %v5274 = vsel %vm4063, %v5216, 0
      %5276 = vmatprep.subr.bf16.mxu0 0
      %5277 = vmatpush1.bf16.xpose.msra.mxu0 %v5274
      %5278 = vmatprep.subr.bf16.mxu0 0
      %5279 = vmatpush1.bf16.xpose.msra.mxu0 0
      %5280 = vmatprep.subr.bf16.mxu0 0
      %5281 = vmatpush1.bf16.xpose.msra.mxu0 0
      %5282 = vmatprep.subr.bf16.mxu0 0
      %5283 = vmatpush1.bf16.xpose.msra.mxu0 0
      %5284 = vmatprep.subr.bf16.mxu0 0
      %5285 = vmatpush1.bf16.xpose.msra.mxu0 0
      %5286 = vmatprep.subr.bf16.mxu0 0
      %5287 = vmatpush1.bf16.xpose.msra.mxu0 0
      %5288 = vmatprep.subr.bf16.mxu0 0
      %5289 = vmatpush1.bf16.xpose.msra.mxu0 0
      %5290 = vmatprep.subr.bf16.mxu0 0
      %5291 = vmatpush1.bf16.xpose.msra.mxu0 0
      %5292 = vmatprep.subr.bf16.mxu0 0
      %5293 = vmatpush1.bf16.xpose.msra.mxu0 0
      %5294 = vmatprep.subr.bf16.mxu0 0
      %5295 = vmatpush1.bf16.xpose.msra.mxu0 0
      %5296 = vmatprep.subr.bf16.mxu0 0
      %5297 = vmatpush1.bf16.xpose.msra.mxu0 0
      %5298 = vmatprep.subr.bf16.mxu0 0
      %5299 = vmatpush1.bf16.xpose.msra.mxu0 0
      %5300 = vmatprep.subr.bf16.mxu0 0
      %5301 = vmatpush1.bf16.xpose.msra.mxu0 0
      %5302 = vmatprep.subr.bf16.mxu0 0
      %5303 = vmatpush1.bf16.xpose.msra.mxu0 0
      %5304 = vmatprep.subr.bf16.mxu0 0
      %5305 = vmatpush1.bf16.xpose.msra.mxu0 0
      %5306 = vmatprep.subr.bf16.mxu0 0
      %5307 = vmatpush1.bf16.xpose.msra.mxu0 0
      %5308 = vmatprep.mubr.bf16.mxu0 0
      %5309 = vmatmul.mubr.bf16.gmra.mrb[0].mxu0 %v5271
      %v5310 = vpop.f32.mrb[0].mxu0
      %v5311 = vadd.f32 0.0, %v5310
      %v5312 = vpop.f32.mrb[0].mxu0
      %v5313 = vpop.f32.mrb[0].mxu0
      %v5314 = vadd.f32 0.0, %v5313
      %v5315 = vpop.f32.mrb[0].mxu0
      %5316 = vdwg.mxu0
      %v5318 = vsel %vm4063, %v5209, 0
      %v5321 = vsel %vm4063, %v5217, 0
      %5323 = vmatprep.subr.bf16.mxu0 0
      %5324 = vmatpush1.bf16.xpose.msra.mxu0 %v5321
      %5325 = vmatprep.subr.bf16.mxu0 0
      %5326 = vmatpush1.bf16.xpose.msra.mxu0 0
      %5327 = vmatprep.subr.bf16.mxu0 0
      %5328 = vmatpush1.bf16.xpose.msra.mxu0 0
      %5329 = vmatprep.subr.bf16.mxu0 0
      %5330 = vmatpush1.bf16.xpose.msra.mxu0 0
      %5331 = vmatprep.subr.bf16.mxu0 0
      %5332 = vmatpush1.bf16.xpose.msra.mxu0 0
      %5333 = vmatprep.subr.bf16.mxu0 0
      %5334 = vmatpush1.bf16.xpose.msra.mxu0 0
      %5335 = vmatprep.subr.bf16.mxu0 0
      %5336 = vmatpush1.bf16.xpose.msra.mxu0 0
      %5337 = vmatprep.subr.bf16.mxu0 0
      %5338 = vmatpush1.bf16.xpose.msra.mxu0 0
      %5339 = vmatprep.subr.bf16.mxu0 0
      %5340 = vmatpush1.bf16.xpose.msra.mxu0 0
      %5341 = vmatprep.subr.bf16.mxu0 0
      %5342 = vmatpush1.bf16.xpose.msra.mxu0 0
      %5343 = vmatprep.subr.bf16.mxu0 0
      %5344 = vmatpush1.bf16.xpose.msra.mxu0 0
      %5345 = vmatprep.subr.bf16.mxu0 0
      %5346 = vmatpush1.bf16.xpose.msra.mxu0 0
      %5347 = vmatprep.subr.bf16.mxu0 0
      %5348 = vmatpush1.bf16.xpose.msra.mxu0 0
      %5349 = vmatprep.subr.bf16.mxu0 0
      %5350 = vmatpush1.bf16.xpose.msra.mxu0 0
      %5351 = vmatprep.subr.bf16.mxu0 0
      %5352 = vmatpush1.bf16.xpose.msra.mxu0 0
      %5353 = vmatprep.subr.bf16.mxu0 0
      %5354 = vmatpush1.bf16.xpose.msra.mxu0 0
      %5355 = vmatprep.mubr.bf16.mxu0 0
      %5356 = vmatmul.mubr.bf16.gmra.mrb[0].mxu0 %v5318
      %v5357 = vpop.f32.mrb[0].mxu0
      %v5358 = vadd.f32 0.0, %v5357
      %v5359 = vpop.f32.mrb[0].mxu0
      %v5360 = vpop.f32.mrb[0].mxu0
      %v5361 = vadd.f32 0.0, %v5360
      %v5362 = vpop.f32.mrb[0].mxu0
      %5363 = vdwg.mxu0
      %v5365 = vsel %vm4063, %v5210, 0
      %v5368 = vsel %vm4063, %v5218, 0
      %5370 = vmatprep.subr.bf16.mxu0 0
      %5371 = vmatpush1.bf16.xpose.msra.mxu0 %v5368
      %5372 = vmatprep.subr.bf16.mxu0 0
      %5373 = vmatpush1.bf16.xpose.msra.mxu0 0
      %5374 = vmatprep.subr.bf16.mxu0 0
      %5375 = vmatpush1.bf16.xpose.msra.mxu0 0
      %5376 = vmatprep.subr.bf16.mxu0 0
      %5377 = vmatpush1.bf16.xpose.msra.mxu0 0
      %5378 = vmatprep.subr.bf16.mxu0 0
      %5379 = vmatpush1.bf16.xpose.msra.mxu0 0
      %5380 = vmatprep.subr.bf16.mxu0 0
      %5381 = vmatpush1.bf16.xpose.msra.mxu0 0
      %5382 = vmatprep.subr.bf16.mxu0 0
      %5383 = vmatpush1.bf16.xpose.msra.mxu0 0
      %5384 = vmatprep.subr.bf16.mxu0 0
      %5385 = vmatpush1.bf16.xpose.msra.mxu0 0
      %5386 = vmatprep.subr.bf16.mxu0 0
      %5387 = vmatpush1.bf16.xpose.msra.mxu0 0
      %5388 = vmatprep.subr.bf16.mxu0 0
      %5389 = vmatpush1.bf16.xpose.msra.mxu0 0
      %5390 = vmatprep.subr.bf16.mxu0 0
      %5391 = vmatpush1.bf16.xpose.msra.mxu0 0
      %5392 = vmatprep.subr.bf16.mxu0 0
      %5393 = vmatpush1.bf16.xpose.msra.mxu0 0
      %5394 = vmatprep.subr.bf16.mxu0 0
      %5395 = vmatpush1.bf16.xpose.msra.mxu0 0
      %5396 = vmatprep.subr.bf16.mxu0 0
      %5397 = vmatpush1.bf16.xpose.msra.mxu0 0
      %5398 = vmatprep.subr.bf16.mxu0 0
      %5399 = vmatpush1.bf16.xpose.msra.mxu0 0
      %5400 = vmatprep.subr.bf16.mxu0 0
      %5401 = vmatpush1.bf16.xpose.msra.mxu0 0
      %5402 = vmatprep.mubr.bf16.mxu0 0
      %5403 = vmatmul.mubr.bf16.gmra.mrb[0].mxu0 %v5365
      %v5404 = vpop.f32.mrb[0].mxu0
      %v5405 = vadd.f32 0.0, %v5404
      %v5406 = vpop.f32.mrb[0].mxu0
      %v5407 = vpop.f32.mrb[0].mxu0
      %v5408 = vadd.f32 0.0, %v5407
      %v5409 = vpop.f32.mrb[0].mxu0
      %5410 = vdwg.mxu0
      %v5412 = vsel %vm4063, %v5211, 0
      %v5415 = vsel %vm4063, %v5219, 0
      %5417 = vmatprep.subr.bf16.mxu0 0
      %5418 = vmatpush1.bf16.xpose.msra.mxu0 %v5415
      %5419 = vmatprep.subr.bf16.mxu0 0
      %5420 = vmatpush1.bf16.xpose.msra.mxu0 0
      %5421 = vmatprep.subr.bf16.mxu0 0
      %5422 = vmatpush1.bf16.xpose.msra.mxu0 0
      %5423 = vmatprep.subr.bf16.mxu0 0
      %5424 = vmatpush1.bf16.xpose.msra.mxu0 0
      %5425 = vmatprep.subr.bf16.mxu0 0
      %5426 = vmatpush1.bf16.xpose.msra.mxu0 0
      %5427 = vmatprep.subr.bf16.mxu0 0
      %5428 = vmatpush1.bf16.xpose.msra.mxu0 0
      %5429 = vmatprep.subr.bf16.mxu0 0
      %5430 = vmatpush1.bf16.xpose.msra.mxu0 0
      %5431 = vmatprep.subr.bf16.mxu0 0
      %5432 = vmatpush1.bf16.xpose.msra.mxu0 0
      %5433 = vmatprep.subr.bf16.mxu0 0
      %5434 = vmatpush1.bf16.xpose.msra.mxu0 0
      %5435 = vmatprep.subr.bf16.mxu0 0
      %5436 = vmatpush1.bf16.xpose.msra.mxu0 0
      %5437 = vmatprep.subr.bf16.mxu0 0
      %5438 = vmatpush1.bf16.xpose.msra.mxu0 0
      %5439 = vmatprep.subr.bf16.mxu0 0
      %5440 = vmatpush1.bf16.xpose.msra.mxu0 0
      %5441 = vmatprep.subr.bf16.mxu0 0
      %5442 = vmatpush1.bf16.xpose.msra.mxu0 0
      %5443 = vmatprep.subr.bf16.mxu0 0
      %5444 = vmatpush1.bf16.xpose.msra.mxu0 0
      %5445 = vmatprep.subr.bf16.mxu0 0
      %5446 = vmatpush1.bf16.xpose.msra.mxu0 0
      %5447 = vmatprep.subr.bf16.mxu0 0
      %5448 = vmatpush1.bf16.xpose.msra.mxu0 0
      %5449 = vmatprep.mubr.bf16.mxu0 0
      %5450 = vmatmul.mubr.bf16.gmra.mrb[0].mxu0 %v5412
      %v5451 = vpop.f32.mrb[0].mxu0
      %v5452 = vadd.f32 0.0, %v5451
      %v5453 = vpop.f32.mrb[0].mxu0
      %v5454 = vpop.f32.mrb[0].mxu0
      %v5455 = vadd.f32 0.0, %v5454
      %v5456 = vpop.f32.mrb[0].mxu0
      %5457 = vdwg.mxu0
      %v5459 = vsel %vm4063, %v5212, 0
      %v5462 = vsel %vm4063, %v5220, 0
      %5464 = vmatprep.subr.bf16.mxu0 0
      %5465 = vmatpush1.bf16.xpose.msra.mxu0 %v5462
      %5466 = vmatprep.subr.bf16.mxu0 0
      %5467 = vmatpush1.bf16.xpose.msra.mxu0 0
      %5468 = vmatprep.subr.bf16.mxu0 0
      %5469 = vmatpush1.bf16.xpose.msra.mxu0 0
      %5470 = vmatprep.subr.bf16.mxu0 0
      %5471 = vmatpush1.bf16.xpose.msra.mxu0 0
      %5472 = vmatprep.subr.bf16.mxu0 0
      %5473 = vmatpush1.bf16.xpose.msra.mxu0 0
      %5474 = vmatprep.subr.bf16.mxu0 0
      %5475 = vmatpush1.bf16.xpose.msra.mxu0 0
      %5476 = vmatprep.subr.bf16.mxu0 0
      %5477 = vmatpush1.bf16.xpose.msra.mxu0 0
      %5478 = vmatprep.subr.bf16.mxu0 0
      %5479 = vmatpush1.bf16.xpose.msra.mxu0 0
      %5480 = vmatprep.subr.bf16.mxu0 0
      %5481 = vmatpush1.bf16.xpose.msra.mxu0 0
      %5482 = vmatprep.subr.bf16.mxu0 0
      %5483 = vmatpush1.bf16.xpose.msra.mxu0 0
      %5484 = vmatprep.subr.bf16.mxu0 0
      %5485 = vmatpush1.bf16.xpose.msra.mxu0 0
      %5486 = vmatprep.subr.bf16.mxu0 0
      %5487 = vmatpush1.bf16.xpose.msra.mxu0 0
      %5488 = vmatprep.subr.bf16.mxu0 0
      %5489 = vmatpush1.bf16.xpose.msra.mxu0 0
      %5490 = vmatprep.subr.bf16.mxu0 0
      %5491 = vmatpush1.bf16.xpose.msra.mxu0 0
      %5492 = vmatprep.subr.bf16.mxu0 0
      %5493 = vmatpush1.bf16.xpose.msra.mxu0 0
      %5494 = vmatprep.subr.bf16.mxu0 0
      %5495 = vmatpush1.bf16.xpose.msra.mxu0 0
      %5496 = vmatprep.mubr.bf16.mxu0 0
      %5497 = vmatmul.mubr.bf16.gmra.mrb[0].mxu0 %v5459
      %v5498 = vpop.f32.mrb[0].mxu0
      %v5499 = vadd.f32 0.0, %v5498
      %v5500 = vpop.f32.mrb[0].mxu0
      %v5501 = vpop.f32.mrb[0].mxu0
      %v5502 = vadd.f32 0.0, %v5501
      %v5503 = vpop.f32.mrb[0].mxu0
      %5504 = vdwg.mxu0
      %v5506 = vsel %vm4063, %v5213, 0
      %v5509 = vsel %vm4063, %v5221, 0
      %5511 = vmatprep.subr.bf16.mxu0 0
      %5512 = vmatpush1.bf16.xpose.msra.mxu0 %v5509
      %5513 = vmatprep.subr.bf16.mxu0 0
      %5514 = vmatpush1.bf16.xpose.msra.mxu0 0
      %5515 = vmatprep.subr.bf16.mxu0 0
      %5516 = vmatpush1.bf16.xpose.msra.mxu0 0
      %5517 = vmatprep.subr.bf16.mxu0 0
      %5518 = vmatpush1.bf16.xpose.msra.mxu0 0
      %5519 = vmatprep.subr.bf16.mxu0 0
      %5520 = vmatpush1.bf16.xpose.msra.mxu0 0
      %5521 = vmatprep.subr.bf16.mxu0 0
      %5522 = vmatpush1.bf16.xpose.msra.mxu0 0
      %5523 = vmatprep.subr.bf16.mxu0 0
      %5524 = vmatpush1.bf16.xpose.msra.mxu0 0
      %5525 = vmatprep.subr.bf16.mxu0 0
      %5526 = vmatpush1.bf16.xpose.msra.mxu0 0
      %5527 = vmatprep.subr.bf16.mxu0 0
      %5528 = vmatpush1.bf16.xpose.msra.mxu0 0
      %5529 = vmatprep.subr.bf16.mxu0 0
      %5530 = vmatpush1.bf16.xpose.msra.mxu0 0
      %5531 = vmatprep.subr.bf16.mxu0 0
      %5532 = vmatpush1.bf16.xpose.msra.mxu0 0
      %5533 = vmatprep.subr.bf16.mxu0 0
      %5534 = vmatpush1.bf16.xpose.msra.mxu0 0
      %5535 = vmatprep.subr.bf16.mxu0 0
      %5536 = vmatpush1.bf16.xpose.msra.mxu0 0
      %5537 = vmatprep.subr.bf16.mxu0 0
      %5538 = vmatpush1.bf16.xpose.msra.mxu0 0
      %5539 = vmatprep.subr.bf16.mxu0 0
      %5540 = vmatpush1.bf16.xpose.msra.mxu0 0
      %5541 = vmatprep.subr.bf16.mxu0 0
      %5542 = vmatpush1.bf16.xpose.msra.mxu0 0
      %5543 = vmatprep.mubr.bf16.mxu0 0
      %5544 = vmatmul.mubr.bf16.gmra.mrb[0].mxu0 %v5506
      %v5545 = vpop.f32.mrb[0].mxu0
      %v5546 = vadd.f32 0.0, %v5545
      %v5547 = vpop.f32.mrb[0].mxu0
      %v5548 = vpop.f32.mrb[0].mxu0
      %v5549 = vadd.f32 0.0, %v5548
      %v5550 = vpop.f32.mrb[0].mxu0
      %5551 = vdwg.mxu0
      %v5553 = vsel %vm4063, %v5214, 0
      %v5556 = vsel %vm4063, %v5222, 0
      %5558 = vmatprep.subr.bf16.mxu0 0
      %5559 = vmatpush1.bf16.xpose.msra.mxu0 %v5556
      %5560 = vmatprep.subr.bf16.mxu0 0
      %5561 = vmatpush1.bf16.xpose.msra.mxu0 0
      %5562 = vmatprep.subr.bf16.mxu0 0
      %5563 = vmatpush1.bf16.xpose.msra.mxu0 0
      %5564 = vmatprep.subr.bf16.mxu0 0
      %5565 = vmatpush1.bf16.xpose.msra.mxu0 0
      %5566 = vmatprep.subr.bf16.mxu0 0
      %5567 = vmatpush1.bf16.xpose.msra.mxu0 0
      %5568 = vmatprep.subr.bf16.mxu0 0
      %5569 = vmatpush1.bf16.xpose.msra.mxu0 0
      %5570 = vmatprep.subr.bf16.mxu0 0
      %5571 = vmatpush1.bf16.xpose.msra.mxu0 0
      %5572 = vmatprep.subr.bf16.mxu0 0
      %5573 = vmatpush1.bf16.xpose.msra.mxu0 0
      %5574 = vmatprep.subr.bf16.mxu0 0
      %5575 = vmatpush1.bf16.xpose.msra.mxu0 0
      %5576 = vmatprep.subr.bf16.mxu0 0
      %5577 = vmatpush1.bf16.xpose.msra.mxu0 0
      %5578 = vmatprep.subr.bf16.mxu0 0
      %5579 = vmatpush1.bf16.xpose.msra.mxu0 0
      %5580 = vmatprep.subr.bf16.mxu0 0
      %5581 = vmatpush1.bf16.xpose.msra.mxu0 0
      %5582 = vmatprep.subr.bf16.mxu0 0
      %5583 = vmatpush1.bf16.xpose.msra.mxu0 0
      %5584 = vmatprep.subr.bf16.mxu0 0
      %5585 = vmatpush1.bf16.xpose.msra.mxu0 0
      %5586 = vmatprep.subr.bf16.mxu0 0
      %5587 = vmatpush1.bf16.xpose.msra.mxu0 0
      %5588 = vmatprep.subr.bf16.mxu0 0
      %5589 = vmatpush1.bf16.xpose.msra.mxu0 0
      %5590 = vmatprep.mubr.bf16.mxu0 0
      %5591 = vmatmul.mubr.bf16.gmra.mrb[0].mxu0 %v5553
      %v5592 = vpop.f32.mrb[0].mxu0
      %v5593 = vadd.f32 0.0, %v5592
      %v5594 = vpop.f32.mrb[0].mxu0
      %v5595 = vpop.f32.mrb[0].mxu0
      %v5596 = vadd.f32 0.0, %v5595
      %v5597 = vpop.f32.mrb[0].mxu0
      %5598 = vdwg.mxu0
      %v5599 = vmul.f32 %v5264, 0.25
      %v5600 = vmul.f32 %v5267, 0.25
      %v5601 = vmul.f32 %v5311, 0.25
      %v5602 = vmul.f32 %v5314, 0.25
      %v5603 = vmul.f32 %v5358, 0.25
      %v5604 = vmul.f32 %v5361, 0.25
      %v5605 = vmul.f32 %v5405, 0.25
      %v5606 = vmul.f32 %v5408, 0.25
      %v5607 = vmul.f32 %v5452, 0.25
      %v5608 = vmul.f32 %v5455, 0.25
      %v5609 = vmul.f32 %v5499, 0.25
      %v5610 = vmul.f32 %v5502, 0.25
      %v5611 = vmul.f32 %v5546, 0.25
      %v5612 = vmul.f32 %v5549, 0.25
      %v5613 = vmul.f32 %v5593, 0.25
      %v5614 = vmul.f32 %v5596, 0.25
      %v5615 = vsel %vm4063, %v5599, -inf
      %5616 = vmax.xlane.f32.xlu0 %v5615
      %v5617 = vpop.xlane.xlu0 %5616
      %v5618 = vsel %vm4063, %v5600, -inf
      %5619 = vmax.xlane.f32.xlu0 %v5618
      %v5620 = vpop.xlane.xlu0 %5619
      %v5621 = vsel %vm4063, %v5601, -inf
      %5622 = vmax.xlane.f32.xlu0 %v5621
      %v5623 = vpop.xlane.xlu0 %5622
      %v5624 = vsel %vm4063, %v5602, -inf
      %5625 = vmax.xlane.f32.xlu0 %v5624
      %v5626 = vpop.xlane.xlu0 %5625
      %v5627 = vsel %vm4063, %v5603, -inf
      %5628 = vmax.xlane.f32.xlu0 %v5627
      %v5629 = vpop.xlane.xlu0 %5628
      %v5630 = vsel %vm4063, %v5604, -inf
      %5631 = vmax.xlane.f32.xlu0 %v5630
      %v5632 = vpop.xlane.xlu0 %5631
      %v5633 = vsel %vm4063, %v5605, -inf
      %5634 = vmax.xlane.f32.xlu0 %v5633
      %v5635 = vpop.xlane.xlu0 %5634
      %v5636 = vsel %vm4063, %v5606, -inf
      %5637 = vmax.xlane.f32.xlu0 %v5636
      %v5638 = vpop.xlane.xlu0 %5637
      %v5639 = vsel %vm4063, %v5607, -inf
      %5640 = vmax.xlane.f32.xlu0 %v5639
      %v5641 = vpop.xlane.xlu0 %5640
      %v5642 = vsel %vm4063, %v5608, -inf
      %5643 = vmax.xlane.f32.xlu0 %v5642
      %v5644 = vpop.xlane.xlu0 %5643
      %v5645 = vsel %vm4063, %v5609, -inf
      %5646 = vmax.xlane.f32.xlu0 %v5645
      %v5647 = vpop.xlane.xlu0 %5646
      %v5648 = vsel %vm4063, %v5610, -inf
      %5649 = vmax.xlane.f32.xlu0 %v5648
      %v5650 = vpop.xlane.xlu0 %5649
      %v5651 = vsel %vm4063, %v5611, -inf
      %5652 = vmax.xlane.f32.xlu0 %v5651
      %v5653 = vpop.xlane.xlu0 %5652
      %v5654 = vsel %vm4063, %v5612, -inf
      %5655 = vmax.xlane.f32.xlu0 %v5654
      %v5656 = vpop.xlane.xlu0 %5655
      %v5657 = vsel %vm4063, %v5613, -inf
      %5658 = vmax.xlane.f32.xlu0 %v5657
      %v5659 = vpop.xlane.xlu0 %5658
      %v5660 = vsel %vm4063, %v5614, -inf
      %5661 = vmax.xlane.f32.xlu0 %v5660
      %v5662 = vpop.xlane.xlu0 %5661
      %v5663 = vsub.f32 %v5599, %v5617
      %v5664 = vsub.f32 %v5600, %v5620
      %v5665 = vsub.f32 %v5601, %v5623
      %v5666 = vsub.f32 %v5602, %v5626
      %v5667 = vsub.f32 %v5603, %v5629
      %v5668 = vsub.f32 %v5604, %v5632
      %v5669 = vsub.f32 %v5605, %v5635
      %v5670 = vsub.f32 %v5606, %v5638
      %v5671 = vsub.f32 %v5607, %v5641
      %v5672 = vsub.f32 %v5608, %v5644
      %v5673 = vsub.f32 %v5609, %v5647
      %v5674 = vsub.f32 %v5610, %v5650
      %v5675 = vsub.f32 %v5611, %v5653
      %v5676 = vsub.f32 %v5612, %v5656
      %v5677 = vsub.f32 %v5613, %v5659
      %v5678 = vsub.f32 %v5614, %v5662
      %v5679 = vmul.f32 %v5663, 1.442695
      %v5680 = vpow.pop %v5679
      %v5681 = vmul.f32 %v5664, 1.442695
      %v5682 = vpow.pop %v5681
      %v5683 = vmul.f32 %v5665, 1.442695
      %v5684 = vpow.pop %v5683
      %v5685 = vmul.f32 %v5666, 1.442695
      %v5686 = vpow.pop %v5685
      %v5687 = vmul.f32 %v5667, 1.442695
      %v5688 = vpow.pop %v5687
      %v5689 = vmul.f32 %v5668, 1.442695
      %v5690 = vpow.pop %v5689
      %v5691 = vmul.f32 %v5669, 1.442695
      %v5692 = vpow.pop %v5691
      %v5693 = vmul.f32 %v5670, 1.442695
      %v5694 = vpow.pop %v5693
      %v5695 = vmul.f32 %v5671, 1.442695
      %v5696 = vpow.pop %v5695
      %v5697 = vmul.f32 %v5672, 1.442695
      %v5698 = vpow.pop %v5697
      %v5699 = vmul.f32 %v5673, 1.442695
      %v5700 = vpow.pop %v5699
      %v5701 = vmul.f32 %v5674, 1.442695
      %v5702 = vpow.pop %v5701
      %v5703 = vmul.f32 %v5675, 1.442695
      %v5704 = vpow.pop %v5703
      %v5705 = vmul.f32 %v5676, 1.442695
      %v5706 = vpow.pop %v5705
      %v5707 = vmul.f32 %v5677, 1.442695
      %v5708 = vpow.pop %v5707
      %v5709 = vmul.f32 %v5678, 1.442695
      %v5710 = vpow.pop %v5709
      %v5711 = vsel %vm4063, %v5680, 0.0
      %5712 = vadd.xlane.f32.xlu0 %v5711
      %v5713 = vpop.xlane.xlu0 %5712
      %v5714 = vsel %vm4063, %v5682, 0.0
      %5715 = vadd.xlane.f32.xlu0 %v5714
      %v5716 = vpop.xlane.xlu0 %5715
      %v5717 = vsel %vm4063, %v5684, 0.0
      %5718 = vadd.xlane.f32.xlu0 %v5717
      %v5719 = vpop.xlane.xlu0 %5718
      %v5720 = vsel %vm4063, %v5686, 0.0
      %5721 = vadd.xlane.f32.xlu0 %v5720
      %v5722 = vpop.xlane.xlu0 %5721
      %v5723 = vsel %vm4063, %v5688, 0.0
      %5724 = vadd.xlane.f32.xlu0 %v5723
      %v5725 = vpop.xlane.xlu0 %5724
      %v5726 = vsel %vm4063, %v5690, 0.0
      %5727 = vadd.xlane.f32.xlu0 %v5726
      %v5728 = vpop.xlane.xlu0 %5727
      %v5729 = vsel %vm4063, %v5692, 0.0
      %5730 = vadd.xlane.f32.xlu0 %v5729
      %v5731 = vpop.xlane.xlu0 %5730
      %v5732 = vsel %vm4063, %v5694, 0.0
      %5733 = vadd.xlane.f32.xlu0 %v5732
      %v5734 = vpop.xlane.xlu0 %5733
      %v5735 = vsel %vm4063, %v5696, 0.0
      %5736 = vadd.xlane.f32.xlu0 %v5735
      %v5737 = vpop.xlane.xlu0 %5736
      %v5738 = vsel %vm4063, %v5698, 0.0
      %5739 = vadd.xlane.f32.xlu0 %v5738
      %v5740 = vpop.xlane.xlu0 %5739
      %v5741 = vsel %vm4063, %v5700, 0.0
      %5742 = vadd.xlane.f32.xlu0 %v5741
      %v5743 = vpop.xlane.xlu0 %5742
      %v5744 = vsel %vm4063, %v5702, 0.0
      %5745 = vadd.xlane.f32.xlu0 %v5744
      %v5746 = vpop.xlane.xlu0 %5745
      %v5747 = vsel %vm4063, %v5704, 0.0
      %5748 = vadd.xlane.f32.xlu0 %v5747
      %v5749 = vpop.xlane.xlu0 %5748
      %v5750 = vsel %vm4063, %v5706, 0.0
      %5751 = vadd.xlane.f32.xlu0 %v5750
      %v5752 = vpop.xlane.xlu0 %5751
      %v5753 = vsel %vm4063, %v5708, 0.0
      %5754 = vadd.xlane.f32.xlu0 %v5753
      %v5755 = vpop.xlane.xlu0 %5754
      %v5756 = vsel %vm4063, %v5710, 0.0
      %5757 = vadd.xlane.f32.xlu0 %v5756
      %v5758 = vpop.xlane.xlu0 %5757
      %v5759 = vrcp.pop %v5713
      %v5760 = vrcp.pop %v5716
      %v5761 = vrcp.pop %v5719
      %v5762 = vrcp.pop %v5722
      %v5763 = vrcp.pop %v5725
      %v5764 = vrcp.pop %v5728
      %v5765 = vrcp.pop %v5731
      %v5766 = vrcp.pop %v5734
      %v5767 = vrcp.pop %v5737
      %v5768 = vrcp.pop %v5740
      %v5769 = vrcp.pop %v5743
      %v5770 = vrcp.pop %v5746
      %v5771 = vrcp.pop %v5749
      %v5772 = vrcp.pop %v5752
      %v5773 = vrcp.pop %v5755
      %v5774 = vrcp.pop %v5758
      %v5775 = vmul.f32 %v5680, %v5759
      %v5776 = vmul.f32 %v5682, %v5760
      %v5777 = vmul.f32 %v5684, %v5761
      %v5778 = vmul.f32 %v5686, %v5762
      %v5779 = vmul.f32 %v5688, %v5763
      %v5780 = vmul.f32 %v5690, %v5764
      %v5781 = vmul.f32 %v5692, %v5765
      %v5782 = vmul.f32 %v5694, %v5766
      %v5783 = vmul.f32 %v5696, %v5767
      %v5784 = vmul.f32 %v5698, %v5768
      %v5785 = vmul.f32 %v5700, %v5769
      %v5786 = vmul.f32 %v5702, %v5770
      %v5787 = vmul.f32 %v5704, %v5771
      %v5788 = vmul.f32 %v5706, %v5772
      %v5789 = vmul.f32 %v5708, %v5773
      %v5790 = vmul.f32 %v5710, %v5774
      %v5791 = vpack.c.bf16 %v5776, %v5775
      %v5792 = vpack.c.bf16 %v5778, %v5777
      %v5793 = vpack.c.bf16 %v5780, %v5779
      %v5794 = vpack.c.bf16 %v5782, %v5781
      %v5795 = vpack.c.bf16 %v5784, %v5783
      %v5796 = vpack.c.bf16 %v5786, %v5785
      %v5797 = vpack.c.bf16 %v5788, %v5787
      %v5798 = vpack.c.bf16 %v5790, %v5789
      %v5799 = vpack.c.bf16 %v3912, %v3909
      %v5800 = vpack.c.bf16 %v5168, %v5166
      %v5801 = vpack.c.bf16 %v5174, %v5172
      %v5802 = vpack.c.bf16 %v5180, %v5178
      %v5803 = vpack.c.bf16 %v5186, %v5184
      %v5804 = vpack.c.bf16 %v5192, %v5190
      %v5805 = vpack.c.bf16 %v5198, %v5196
      %v5806 = vpack.c.bf16 %v5204, %v5202
      %v5808 = vsel %vm4063, %v5791, 0
      %5810 = vmatprep.subr.bf16.mxu0 0
      %5811 = vmatpush1.bf16.msra.mxu0 %v5799
      %5812 = vmatprep.subr.bf16.mxu0 0
      %5813 = vmatpush1.bf16.msra.mxu0 0
      %5814 = vmatprep.subr.bf16.mxu0 0
      %5815 = vmatpush1.bf16.msra.mxu0 0
      %5816 = vmatprep.subr.bf16.mxu0 0
      %5817 = vmatpush1.bf16.msra.mxu0 0
      %5818 = vmatprep.subr.bf16.mxu0 0
      %5819 = vmatpush1.bf16.msra.mxu0 0
      %5820 = vmatprep.subr.bf16.mxu0 0
      %5821 = vmatpush1.bf16.msra.mxu0 0
      %5822 = vmatprep.subr.bf16.mxu0 0
      %5823 = vmatpush1.bf16.msra.mxu0 0
      %5824 = vmatprep.subr.bf16.mxu0 0
      %5825 = vmatpush1.bf16.msra.mxu0 0
      %5826 = vmatprep.subr.bf16.mxu0 0
      %5827 = vmatpush1.bf16.msra.mxu0 0
      %5828 = vmatprep.subr.bf16.mxu0 0
      %5829 = vmatpush1.bf16.msra.mxu0 0
      %5830 = vmatprep.subr.bf16.mxu0 0
      %5831 = vmatpush1.bf16.msra.mxu0 0
      %5832 = vmatprep.subr.bf16.mxu0 0
      %5833 = vmatpush1.bf16.msra.mxu0 0
      %5834 = vmatprep.subr.bf16.mxu0 0
      %5835 = vmatpush1.bf16.msra.mxu0 0
      %5836 = vmatprep.subr.bf16.mxu0 0
      %5837 = vmatpush1.bf16.msra.mxu0 0
      %5838 = vmatprep.subr.bf16.mxu0 0
      %5839 = vmatpush1.bf16.msra.mxu0 0
      %5840 = vmatprep.subr.bf16.mxu0 0
      %5841 = vmatpush1.bf16.msra.mxu0 0
      %5842 = vmatprep.mubr.bf16.mxu0 0
      %5843 = vmatmul.mubr.bf16.gmra.mrb[0].mxu0 %v5808
      %v5844 = vpop.f32.mrb[0].mxu0
      %v5845 = vadd.f32 0.0, %v5844
      %v5846 = vpop.f32.mrb[0].mxu0
      %v5847 = vpop.f32.mrb[0].mxu0
      %v5848 = vadd.f32 0.0, %v5847
      %v5849 = vpop.f32.mrb[0].mxu0
      %5850 = vdwg.mxu0
      %v5852 = vsel %vm4063, %v5792, 0
      %5854 = vmatprep.subr.bf16.mxu0 0
      %5855 = vmatpush1.bf16.msra.mxu0 %v5800
      %5856 = vmatprep.subr.bf16.mxu0 0
      %5857 = vmatpush1.bf16.msra.mxu0 0
      %5858 = vmatprep.subr.bf16.mxu0 0
      %5859 = vmatpush1.bf16.msra.mxu0 0
      %5860 = vmatprep.subr.bf16.mxu0 0
      %5861 = vmatpush1.bf16.msra.mxu0 0
      %5862 = vmatprep.subr.bf16.mxu0 0
      %5863 = vmatpush1.bf16.msra.mxu0 0
      %5864 = vmatprep.subr.bf16.mxu0 0
      %5865 = vmatpush1.bf16.msra.mxu0 0
      %5866 = vmatprep.subr.bf16.mxu0 0
      %5867 = vmatpush1.bf16.msra.mxu0 0
      %5868 = vmatprep.subr.bf16.mxu0 0
      %5869 = vmatpush1.bf16.msra.mxu0 0
      %5870 = vmatprep.subr.bf16.mxu0 0
      %5871 = vmatpush1.bf16.msra.mxu0 0
      %5872 = vmatprep.subr.bf16.mxu0 0
      %5873 = vmatpush1.bf16.msra.mxu0 0
      %5874 = vmatprep.subr.bf16.mxu0 0
      %5875 = vmatpush1.bf16.msra.mxu0 0
      %5876 = vmatprep.subr.bf16.mxu0 0
      %5877 = vmatpush1.bf16.msra.mxu0 0
      %5878 = vmatprep.subr.bf16.mxu0 0
      %5879 = vmatpush1.bf16.msra.mxu0 0
      %5880 = vmatprep.subr.bf16.mxu0 0
      %5881 = vmatpush1.bf16.msra.mxu0 0
      %5882 = vmatprep.subr.bf16.mxu0 0
      %5883 = vmatpush1.bf16.msra.mxu0 0
      %5884 = vmatprep.subr.bf16.mxu0 0
      %5885 = vmatpush1.bf16.msra.mxu0 0
      %5886 = vmatprep.mubr.bf16.mxu0 0
      %5887 = vmatmul.mubr.bf16.gmra.mrb[0].mxu0 %v5852
      %v5888 = vpop.f32.mrb[0].mxu0
      %v5889 = vadd.f32 0.0, %v5888
      %v5890 = vpop.f32.mrb[0].mxu0
      %v5891 = vpop.f32.mrb[0].mxu0
      %v5892 = vadd.f32 0.0, %v5891
      %v5893 = vpop.f32.mrb[0].mxu0
      %5894 = vdwg.mxu0
      %v5896 = vsel %vm4063, %v5793, 0
      %5898 = vmatprep.subr.bf16.mxu0 0
      %5899 = vmatpush1.bf16.msra.mxu0 %v5801
      %5900 = vmatprep.subr.bf16.mxu0 0
      %5901 = vmatpush1.bf16.msra.mxu0 0
      %5902 = vmatprep.subr.bf16.mxu0 0
      %5903 = vmatpush1.bf16.msra.mxu0 0
      %5904 = vmatprep.subr.bf16.mxu0 0
      %5905 = vmatpush1.bf16.msra.mxu0 0
      %5906 = vmatprep.subr.bf16.mxu0 0
      %5907 = vmatpush1.bf16.msra.mxu0 0
      %5908 = vmatprep.subr.bf16.mxu0 0
      %5909 = vmatpush1.bf16.msra.mxu0 0
      %5910 = vmatprep.subr.bf16.mxu0 0
      %5911 = vmatpush1.bf16.msra.mxu0 0
      %5912 = vmatprep.subr.bf16.mxu0 0
      %5913 = vmatpush1.bf16.msra.mxu0 0
      %5914 = vmatprep.subr.bf16.mxu0 0
      %5915 = vmatpush1.bf16.msra.mxu0 0
      %5916 = vmatprep.subr.bf16.mxu0 0
      %5917 = vmatpush1.bf16.msra.mxu0 0
      %5918 = vmatprep.subr.bf16.mxu0 0
      %5919 = vmatpush1.bf16.msra.mxu0 0
      %5920 = vmatprep.subr.bf16.mxu0 0
      %5921 = vmatpush1.bf16.msra.mxu0 0
      %5922 = vmatprep.subr.bf16.mxu0 0
      %5923 = vmatpush1.bf16.msra.mxu0 0
      %5924 = vmatprep.subr.bf16.mxu0 0
      %5925 = vmatpush1.bf16.msra.mxu0 0
      %5926 = vmatprep.subr.bf16.mxu0 0
      %5927 = vmatpush1.bf16.msra.mxu0 0
      %5928 = vmatprep.subr.bf16.mxu0 0
      %5929 = vmatpush1.bf16.msra.mxu0 0
      %5930 = vmatprep.mubr.bf16.mxu0 0
      %5931 = vmatmul.mubr.bf16.gmra.mrb[0].mxu0 %v5896
      %v5932 = vpop.f32.mrb[0].mxu0
      %v5933 = vadd.f32 0.0, %v5932
      %v5934 = vpop.f32.mrb[0].mxu0
      %v5935 = vpop.f32.mrb[0].mxu0
      %v5936 = vadd.f32 0.0, %v5935
      %v5937 = vpop.f32.mrb[0].mxu0
      %5938 = vdwg.mxu0
      %v5940 = vsel %vm4063, %v5794, 0
      %5942 = vmatprep.subr.bf16.mxu0 0
      %5943 = vmatpush1.bf16.msra.mxu0 %v5802
      %5944 = vmatprep.subr.bf16.mxu0 0
      %5945 = vmatpush1.bf16.msra.mxu0 0
      %5946 = vmatprep.subr.bf16.mxu0 0
      %5947 = vmatpush1.bf16.msra.mxu0 0
      %5948 = vmatprep.subr.bf16.mxu0 0
      %5949 = vmatpush1.bf16.msra.mxu0 0
      %5950 = vmatprep.subr.bf16.mxu0 0
      %5951 = vmatpush1.bf16.msra.mxu0 0
      %5952 = vmatprep.subr.bf16.mxu0 0
      %5953 = vmatpush1.bf16.msra.mxu0 0
      %5954 = vmatprep.subr.bf16.mxu0 0
      %5955 = vmatpush1.bf16.msra.mxu0 0
      %5956 = vmatprep.subr.bf16.mxu0 0
      %5957 = vmatpush1.bf16.msra.mxu0 0
      %5958 = vmatprep.subr.bf16.mxu0 0
      %5959 = vmatpush1.bf16.msra.mxu0 0
      %5960 = vmatprep.subr.bf16.mxu0 0
      %5961 = vmatpush1.bf16.msra.mxu0 0
      %5962 = vmatprep.subr.bf16.mxu0 0
      %5963 = vmatpush1.bf16.msra.mxu0 0
      %5964 = vmatprep.subr.bf16.mxu0 0
      %5965 = vmatpush1.bf16.msra.mxu0 0
      %5966 = vmatprep.subr.bf16.mxu0 0
      %5967 = vmatpush1.bf16.msra.mxu0 0
      %5968 = vmatprep.subr.bf16.mxu0 0
      %5969 = vmatpush1.bf16.msra.mxu0 0
      %5970 = vmatprep.subr.bf16.mxu0 0
      %5971 = vmatpush1.bf16.msra.mxu0 0
      %5972 = vmatprep.subr.bf16.mxu0 0
      %5973 = vmatpush1.bf16.msra.mxu0 0
      %5974 = vmatprep.mubr.bf16.mxu0 0
      %5975 = vmatmul.mubr.bf16.gmra.mrb[0].mxu0 %v5940
      %v5976 = vpop.f32.mrb[0].mxu0
      %v5977 = vadd.f32 0.0, %v5976
      %v5978 = vpop.f32.mrb[0].mxu0
      %v5979 = vpop.f32.mrb[0].mxu0
      %v5980 = vadd.f32 0.0, %v5979
      %v5981 = vpop.f32.mrb[0].mxu0
      %5982 = vdwg.mxu0
      %v5984 = vsel %vm4063, %v5795, 0
      %5986 = vmatprep.subr.bf16.mxu0 0
      %5987 = vmatpush1.bf16.msra.mxu0 %v5803
      %5988 = vmatprep.subr.bf16.mxu0 0
      %5989 = vmatpush1.bf16.msra.mxu0 0
      %5990 = vmatprep.subr.bf16.mxu0 0
      %5991 = vmatpush1.bf16.msra.mxu0 0
      %5992 = vmatprep.subr.bf16.mxu0 0
      %5993 = vmatpush1.bf16.msra.mxu0 0
      %5994 = vmatprep.subr.bf16.mxu0 0
      %5995 = vmatpush1.bf16.msra.mxu0 0
      %5996 = vmatprep.subr.bf16.mxu0 0
      %5997 = vmatpush1.bf16.msra.mxu0 0
      %5998 = vmatprep.subr.bf16.mxu0 0
      %5999 = vmatpush1.bf16.msra.mxu0 0
      %6000 = vmatprep.subr.bf16.mxu0 0
      %6001 = vmatpush1.bf16.msra.mxu0 0
      %6002 = vmatprep.subr.bf16.mxu0 0
      %6003 = vmatpush1.bf16.msra.mxu0 0
      %6004 = vmatprep.subr.bf16.mxu0 0
      %6005 = vmatpush1.bf16.msra.mxu0 0
      %6006 = vmatprep.subr.bf16.mxu0 0
      %6007 = vmatpush1.bf16.msra.mxu0 0
      %6008 = vmatprep.subr.bf16.mxu0 0
      %6009 = vmatpush1.bf16.msra.mxu0 0
      %6010 = vmatprep.subr.bf16.mxu0 0
      %6011 = vmatpush1.bf16.msra.mxu0 0
      %6012 = vmatprep.subr.bf16.mxu0 0
      %6013 = vmatpush1.bf16.msra.mxu0 0
      %6014 = vmatprep.subr.bf16.mxu0 0
      %6015 = vmatpush1.bf16.msra.mxu0 0
      %6016 = vmatprep.subr.bf16.mxu0 0
      %6017 = vmatpush1.bf16.msra.mxu0 0
      %6018 = vmatprep.mubr.bf16.mxu0 0
      %6019 = vmatmul.mubr.bf16.gmra.mrb[0].mxu0 %v5984
      %v6020 = vpop.f32.mrb[0].mxu0
      %v6021 = vadd.f32 0.0, %v6020
      %v6022 = vpop.f32.mrb[0].mxu0
      %v6023 = vpop.f32.mrb[0].mxu0
      %v6024 = vadd.f32 0.0, %v6023
      %v6025 = vpop.f32.mrb[0].mxu0
      %6026 = vdwg.mxu0
      %v6028 = vsel %vm4063, %v5796, 0
      %6030 = vmatprep.subr.bf16.mxu0 0
      %6031 = vmatpush1.bf16.msra.mxu0 %v5804
      %6032 = vmatprep.subr.bf16.mxu0 0
      %6033 = vmatpush1.bf16.msra.mxu0 0
      %6034 = vmatprep.subr.bf16.mxu0 0
      %6035 = vmatpush1.bf16.msra.mxu0 0
      %6036 = vmatprep.subr.bf16.mxu0 0
      %6037 = vmatpush1.bf16.msra.mxu0 0
      %6038 = vmatprep.subr.bf16.mxu0 0
      %6039 = vmatpush1.bf16.msra.mxu0 0
      %6040 = vmatprep.subr.bf16.mxu0 0
      %6041 = vmatpush1.bf16.msra.mxu0 0
      %6042 = vmatprep.subr.bf16.mxu0 0
      %6043 = vmatpush1.bf16.msra.mxu0 0
      %6044 = vmatprep.subr.bf16.mxu0 0
      %6045 = vmatpush1.bf16.msra.mxu0 0
      %6046 = vmatprep.subr.bf16.mxu0 0
      %6047 = vmatpush1.bf16.msra.mxu0 0
      %6048 = vmatprep.subr.bf16.mxu0 0
      %6049 = vmatpush1.bf16.msra.mxu0 0
      %6050 = vmatprep.subr.bf16.mxu0 0
      %6051 = vmatpush1.bf16.msra.mxu0 0
      %6052 = vmatprep.subr.bf16.mxu0 0
      %6053 = vmatpush1.bf16.msra.mxu0 0
      %6054 = vmatprep.subr.bf16.mxu0 0
      %6055 = vmatpush1.bf16.msra.mxu0 0
      %6056 = vmatprep.subr.bf16.mxu0 0
      %6057 = vmatpush1.bf16.msra.mxu0 0
      %6058 = vmatprep.subr.bf16.mxu0 0
      %6059 = vmatpush1.bf16.msra.mxu0 0
      %6060 = vmatprep.subr.bf16.mxu0 0
      %6061 = vmatpush1.bf16.msra.mxu0 0
      %6062 = vmatprep.mubr.bf16.mxu0 0
      %6063 = vmatmul.mubr.bf16.gmra.mrb[0].mxu0 %v6028
      %v6064 = vpop.f32.mrb[0].mxu0
      %v6065 = vadd.f32 0.0, %v6064
      %v6066 = vpop.f32.mrb[0].mxu0
      %v6067 = vpop.f32.mrb[0].mxu0
      %v6068 = vadd.f32 0.0, %v6067
      %v6069 = vpop.f32.mrb[0].mxu0
      %6070 = vdwg.mxu0
      %v6072 = vsel %vm4063, %v5797, 0
      %6074 = vmatprep.subr.bf16.mxu0 0
      %6075 = vmatpush1.bf16.msra.mxu0 %v5805
      %6076 = vmatprep.subr.bf16.mxu0 0
      %6077 = vmatpush1.bf16.msra.mxu0 0
      %6078 = vmatprep.subr.bf16.mxu0 0
      %6079 = vmatpush1.bf16.msra.mxu0 0
      %6080 = vmatprep.subr.bf16.mxu0 0
      %6081 = vmatpush1.bf16.msra.mxu0 0
      %6082 = vmatprep.subr.bf16.mxu0 0
      %6083 = vmatpush1.bf16.msra.mxu0 0
      %6084 = vmatprep.subr.bf16.mxu0 0
      %6085 = vmatpush1.bf16.msra.mxu0 0
      %6086 = vmatprep.subr.bf16.mxu0 0
      %6087 = vmatpush1.bf16.msra.mxu0 0
      %6088 = vmatprep.subr.bf16.mxu0 0
      %6089 = vmatpush1.bf16.msra.mxu0 0
      %6090 = vmatprep.subr.bf16.mxu0 0
      %6091 = vmatpush1.bf16.msra.mxu0 0
      %6092 = vmatprep.subr.bf16.mxu0 0
      %6093 = vmatpush1.bf16.msra.mxu0 0
      %6094 = vmatprep.subr.bf16.mxu0 0
      %6095 = vmatpush1.bf16.msra.mxu0 0
      %6096 = vmatprep.subr.bf16.mxu0 0
      %6097 = vmatpush1.bf16.msra.mxu0 0
      %6098 = vmatprep.subr.bf16.mxu0 0
      %6099 = vmatpush1.bf16.msra.mxu0 0
      %6100 = vmatprep.subr.bf16.mxu0 0
      %6101 = vmatpush1.bf16.msra.mxu0 0
      %6102 = vmatprep.subr.bf16.mxu0 0
      %6103 = vmatpush1.bf16.msra.mxu0 0
      %6104 = vmatprep.subr.bf16.mxu0 0
      %6105 = vmatpush1.bf16.msra.mxu0 0
      %6106 = vmatprep.mubr.bf16.mxu0 0
      %6107 = vmatmul.mubr.bf16.gmra.mrb[0].mxu0 %v6072
      %v6108 = vpop.f32.mrb[0].mxu0
      %v6109 = vadd.f32 0.0, %v6108
      %v6110 = vpop.f32.mrb[0].mxu0
      %v6111 = vpop.f32.mrb[0].mxu0
      %v6112 = vadd.f32 0.0, %v6111
      %v6113 = vpop.f32.mrb[0].mxu0
      %6114 = vdwg.mxu0
      %v6116 = vsel %vm4063, %v5798, 0
      %6118 = vmatprep.subr.bf16.mxu0 0
      %6119 = vmatpush1.bf16.msra.mxu0 %v5806
      %6120 = vmatprep.subr.bf16.mxu0 0
      %6121 = vmatpush1.bf16.msra.mxu0 0
      %6122 = vmatprep.subr.bf16.mxu0 0
      %6123 = vmatpush1.bf16.msra.mxu0 0
      %6124 = vmatprep.subr.bf16.mxu0 0
      %6125 = vmatpush1.bf16.msra.mxu0 0
      %6126 = vmatprep.subr.bf16.mxu0 0
      %6127 = vmatpush1.bf16.msra.mxu0 0
      %6128 = vmatprep.subr.bf16.mxu0 0
      %6129 = vmatpush1.bf16.msra.mxu0 0
      %6130 = vmatprep.subr.bf16.mxu0 0
      %6131 = vmatpush1.bf16.msra.mxu0 0
      %6132 = vmatprep.subr.bf16.mxu0 0
      %6133 = vmatpush1.bf16.msra.mxu0 0
      %6134 = vmatprep.subr.bf16.mxu0 0
      %6135 = vmatpush1.bf16.msra.mxu0 0
      %6136 = vmatprep.subr.bf16.mxu0 0
      %6137 = vmatpush1.bf16.msra.mxu0 0
      %6138 = vmatprep.subr.bf16.mxu0 0
      %6139 = vmatpush1.bf16.msra.mxu0 0
      %6140 = vmatprep.subr.bf16.mxu0 0
      %6141 = vmatpush1.bf16.msra.mxu0 0
      %6142 = vmatprep.subr.bf16.mxu0 0
      %6143 = vmatpush1.bf16.msra.mxu0 0
      %6144 = vmatprep.subr.bf16.mxu0 0
      %6145 = vmatpush1.bf16.msra.mxu0 0
      %6146 = vmatprep.subr.bf16.mxu0 0
      %6147 = vmatpush1.bf16.msra.mxu0 0
      %6148 = vmatprep.subr.bf16.mxu0 0
      %6149 = vmatpush1.bf16.msra.mxu0 0
      %6150 = vmatprep.mubr.bf16.mxu0 0
      %6151 = vmatmul.mubr.bf16.gmra.mrb[0].mxu0 %v6116
      %v6152 = vpop.f32.mrb[0].mxu0
      %v6153 = vadd.f32 0.0, %v6152
      %v6154 = vpop.f32.mrb[0].mxu0
      %v6155 = vpop.f32.mrb[0].mxu0
      %v6156 = vadd.f32 0.0, %v6155
      %v6157 = vpop.f32.mrb[0].mxu0
      %6158 = vdwg.mxu0
      %6161 = vrot.lane.b32.xlu0 %v5889, 16
      %v6162 = vpop.permute.xlu0 %6161
      %6163 = vrot.lane.b32.xlu0 %v5892, 16
      %v6164 = vpop.permute.xlu0 %6163
      %6169 = vrot.lane.b32.xlu0 %v5933, 32
      %v6170 = vpop.permute.xlu0 %6169
      %6171 = vrot.lane.b32.xlu0 %v5936, 32
      %v6172 = vpop.permute.xlu0 %6171
      %6177 = vrot.lane.b32.xlu0 %v5977, 48
      %v6178 = vpop.permute.xlu0 %6177
      %6179 = vrot.lane.b32.xlu0 %v5980, 48
      %v6180 = vpop.permute.xlu0 %6179
      %6185 = vrot.lane.b32.xlu0 %v6021, 64
      %v6186 = vpop.permute.xlu0 %6185
      %6187 = vrot.lane.b32.xlu0 %v6024, 64
      %v6188 = vpop.permute.xlu0 %6187
      %6193 = vrot.lane.b32.xlu0 %v6065, 80
      %v6194 = vpop.permute.xlu0 %6193
      %6195 = vrot.lane.b32.xlu0 %v6068, 80
      %v6196 = vpop.permute.xlu0 %6195
      %6201 = vrot.lane.b32.xlu0 %v6109, 96
      %v6202 = vpop.permute.xlu0 %6201
      %6203 = vrot.lane.b32.xlu0 %v6112, 96
      %v6204 = vpop.permute.xlu0 %6203
      %6209 = vrot.lane.b32.xlu0 %v6153, 112
      %v6210 = vpop.permute.xlu0 %6209
      %6211 = vrot.lane.b32.xlu0 %v6156, 112
      %v6212 = vpop.permute.xlu0 %6211
      %v6215 = vsel %vm4063, %v5845, %v6162
      %v6216 = vsel %vm4063, %v5848, %v6164
      %v6217 = vsel %vm1897, %v6215, %v6170
      %v6218 = vsel %vm1897, %v6216, %v6172
      %v6219 = vsel %vm5060, %v6217, %v6178
      %v6220 = vsel %vm5060, %v6218, %v6180
      %v6221 = vsel %vm5063, %v6219, %v6186
      %v6222 = vsel %vm5063, %v6220, %v6188
      %v6223 = vsel %vm5066, %v6221, %v6194
      %v6224 = vsel %vm5066, %v6222, %v6196
      %v6225 = vsel %vm5069, %v6223, %v6202
      %v6226 = vsel %vm5069, %v6224, %v6204
      %v6227 = vsel %vm5072, %v6225, %v6210
      %v6228 = vsel %vm5072, %v6226, %v6212
      %v6229 = vld [vmem:[%s20] sm:$0xf]
      %v6230 = vld [vmem:[%s20 + $0x4] sm:$0xf]
      %v6231 = vld [vmem:[%s20 + $0x8] sm:$0xf]
      %v6232 = vld [vmem:[%s20 + $0xc] sm:$0xf]
      %v6233 = vld [vmem:[%s20 + $0x10] sm:$0xf]
      %v6234 = vld [vmem:[%s20 + $0x14] sm:$0xf]
      %v6235 = vld [vmem:[%s20 + $0x18] sm:$0xf]
      %v6236 = vld [vmem:[%s20 + $0x1c] sm:$0xf]
      %v6237 = vld [vmem:[%s20 + $0x20] sm:$0xf]
      %v6238 = vld [vmem:[%s20 + $0x24] sm:$0xf]
      %v6239 = vld [vmem:[%s20 + $0x28] sm:$0xf]
      %v6240 = vld [vmem:[%s20 + $0x2c] sm:$0xf]
      %v6241 = vld [vmem:[%s20 + $0x30] sm:$0xf]
      %v6242 = vld [vmem:[%s20 + $0x34] sm:$0xf]
      %v6243 = vld [vmem:[%s20 + $0x38] sm:$0xf]
      %v6244 = vld [vmem:[%s20 + $0x3c] sm:$0xf]
      %v6245 = vpack.c.bf16 %v5074, %v5073
      %v6246 = vpack.c.bf16 %v6228, %v6227
      %v6263 = vunpack.c.l.b16 %v6229
      %v6264 = vunpack.c.l.b16 %v6230
      %v6265 = vunpack.c.l.b16 %v6231
      %v6266 = vunpack.c.l.b16 %v6232
      %v6267 = vunpack.c.l.b16 %v6233
      %v6268 = vunpack.c.l.b16 %v6234
      %v6269 = vunpack.c.l.b16 %v6235
      %v6270 = vunpack.c.l.b16 %v6236
      %v6271 = vunpack.c.l.b16 %v6237
      %v6272 = vunpack.c.l.b16 %v6238
      %v6273 = vunpack.c.l.b16 %v6239
      %v6274 = vunpack.c.l.b16 %v6240
      %v6275 = vunpack.c.l.b16 %v6241
      %v6276 = vunpack.c.l.b16 %v6242
      %v6277 = vunpack.c.l.b16 %v6243
      %v6278 = vunpack.c.l.b16 %v6244
      %v6279 = vpack.c.b16 %v6264, %v6263
      %v6280 = vpack.c.b16 %v6266, %v6265
      %v6281 = vpack.c.b16 %v6268, %v6267
      %v6282 = vpack.c.b16 %v6270, %v6269
      %v6283 = vpack.c.b16 %v6272, %v6271
      %v6284 = vpack.c.b16 %v6274, %v6273
      %v6285 = vpack.c.b16 %v6276, %v6275
      %v6286 = vpack.c.b16 %v6278, %v6277
      %6295 = vmatprep.subr.bf16.mxu0 0
      %6296 = vmatpush1.bf16.msra.mxu0 %v6279
      %6297 = vmatprep.subr.bf16.mxu0 0
      %6298 = vmatpush1.bf16.msra.mxu0 %v6280
      %6299 = vmatprep.subr.bf16.mxu0 0
      %6300 = vmatpush1.bf16.msra.mxu0 %v6281
      %6301 = vmatprep.subr.bf16.mxu0 0
      %6302 = vmatpush1.bf16.msra.mxu0 %v6282
      %6303 = vmatprep.subr.bf16.mxu0 0
      %6304 = vmatpush1.bf16.msra.mxu0 %v6283
      %6305 = vmatprep.subr.bf16.mxu0 0
      %6306 = vmatpush1.bf16.msra.mxu0 %v6284
      %6307 = vmatprep.subr.bf16.mxu0 0
      %6308 = vmatpush1.bf16.msra.mxu0 %v6285
      %6309 = vmatprep.subr.bf16.mxu0 0
      %6310 = vmatpush1.bf16.msra.mxu0 %v6286
      %6311 = vmatprep.subr.bf16.mxu0 0
      %6312 = vmatpush1.bf16.msra.mxu0 0
      %6313 = vmatprep.subr.bf16.mxu0 0
      %6314 = vmatpush1.bf16.msra.mxu0 0
      %6315 = vmatprep.subr.bf16.mxu0 0
      %6316 = vmatpush1.bf16.msra.mxu0 0
      %6317 = vmatprep.subr.bf16.mxu0 0
      %6318 = vmatpush1.bf16.msra.mxu0 0
      %6319 = vmatprep.subr.bf16.mxu0 0
      %6320 = vmatpush1.bf16.msra.mxu0 0
      %6321 = vmatprep.subr.bf16.mxu0 0
      %6322 = vmatpush1.bf16.msra.mxu0 0
      %6323 = vmatprep.subr.bf16.mxu0 0
      %6324 = vmatpush1.bf16.msra.mxu0 0
      %6325 = vmatprep.subr.bf16.mxu0 0
      %6326 = vmatpush1.bf16.msra.mxu0 0
      %6327 = vmatprep.mubr.bf16.mxu0 0
      %6328 = vmatmul.mubr.bf16.gmra.mrb[0].mxu0 %v6245
      %v6329 = vpop.f32.mrb[0].mxu0
      %v6330 = vadd.f32 0.0, %v6329
      %v6331 = vpop.f32.mrb[0].mxu0
      %v6332 = vpop.f32.mrb[0].mxu0
      %v6333 = vadd.f32 0.0, %v6332
      %v6334 = vpop.f32.mrb[0].mxu0
      %6335 = vmatprep.mubr.bf16.mxu0 0
      %6336 = vmatmul.mubr.bf16.gmra.mrb[0].mxu0 %v6246
      %v6337 = vpop.f32.mrb[0].mxu0
      %v6338 = vadd.f32 0.0, %v6337
      %v6339 = vpop.f32.mrb[0].mxu0
      %v6340 = vpop.f32.mrb[0].mxu0
      %v6341 = vadd.f32 0.0, %v6340
      %v6342 = vpop.f32.mrb[0].mxu0
      %6343 = vdwg.mxu0
      %v6344 = vadd.f32 %v3564, %v6330
      %v6345 = vadd.f32 %v3565, %v6333
      %v6346 = vadd.f32 %v3566, %v6338
      %v6347 = vadd.f32 %v3567, %v6341
      %v6348 = vld [vmem:[%s21] sm:$0x1]
      %v6350 = vlaneseq
      %v6351 = vshrl.u32 %v6350, 7
      %v6352 = vsub.s32 0, %v6351
      %v6353 = vrot.slane %v6348, %v6352
      %v6355 = vadd.f32 %v6344, %v6353
      %v6356 = vadd.f32 %v6345, %v6353
      %v6357 = vadd.f32 %v6346, %v6353
      %v6358 = vadd.f32 %v6347, %v6353
      %v6359 = vld [vmem:[%s16] sm:$0x1]
      %v6360 = vld [vmem:[%s17] sm:$0x1]
      %6361 = vadd.xlane.f32.xlu0 %v6355
      %v6362 = vpop.xlane.xlu0 %6361
      %6363 = vadd.xlane.f32.xlu0 %v6356
      %v6364 = vpop.xlane.xlu0 %6363
      %6365 = vadd.xlane.f32.xlu0 %v6357
      %v6366 = vpop.xlane.xlu0 %6365
      %6367 = vadd.xlane.f32.xlu0 %v6358
      %v6368 = vpop.xlane.xlu0 %6367
      %v6369 = vmul.f32 %v6362, %v1824
      %v6370 = vmul.f32 %v6364, %v1824
      %v6371 = vmul.f32 %v6366, %v1824
      %v6372 = vmul.f32 %v6368, %v1824
      %v6373 = vsub.f32 %v6355, %v6369
      %v6374 = vsub.f32 %v6356, %v6370
      %v6375 = vsub.f32 %v6357, %v6371
      %v6376 = vsub.f32 %v6358, %v6372
      %v6377 = vmul.f32 %v6373, %v6373
      %v6378 = vmul.f32 %v6374, %v6374
      %v6379 = vmul.f32 %v6375, %v6375
      %v6380 = vmul.f32 %v6376, %v6376
      %6381 = vadd.xlane.f32.xlu0 %v6377
      %v6382 = vpop.xlane.xlu0 %6381
      %6383 = vadd.xlane.f32.xlu0 %v6378
      %v6384 = vpop.xlane.xlu0 %6383
      %6385 = vadd.xlane.f32.xlu0 %v6379
      %v6386 = vpop.xlane.xlu0 %6385
      %6387 = vadd.xlane.f32.xlu0 %v6380
      %v6388 = vpop.xlane.xlu0 %6387
      %v6389 = vmul.f32 %v6382, %v1824
      %v6390 = vmul.f32 %v6384, %v1824
      %v6391 = vmul.f32 %v6386, %v1824
      %v6392 = vmul.f32 %v6388, %v1824
      %v6393 = vadd.f32 %v6389, 1e-05
      %v6394 = vadd.f32 %v6390, 1e-05
      %v6395 = vadd.f32 %v6391, 1e-05
      %v6396 = vadd.f32 %v6392, 1e-05
      %v6397 = vrsqrt.pop %v6393
      %v6398 = vrsqrt.pop %v6394
      %v6399 = vrsqrt.pop %v6395
      %v6400 = vrsqrt.pop %v6396
      %v6401 = vmul.f32 %v6373, %v6397
      %v6402 = vmul.f32 %v6374, %v6398
      %v6403 = vmul.f32 %v6375, %v6399
      %v6404 = vmul.f32 %v6376, %v6400
      %v6406 = vlaneseq
      %v6407 = vshrl.u32 %v6406, 7
      %v6408 = vsub.s32 0, %v6407
      %v6409 = vrot.slane %v6359, %v6408
      %v6411 = vmul.f32 %v6401, %v6409
      %v6412 = vmul.f32 %v6402, %v6409
      %v6413 = vmul.f32 %v6403, %v6409
      %v6414 = vmul.f32 %v6404, %v6409
      %v6416 = vlaneseq
      %v6417 = vshrl.u32 %v6416, 7
      %v6418 = vsub.s32 0, %v6417
      %v6419 = vrot.slane %v6360, %v6418
      %v6421 = vadd.f32 %v6411, %v6419
      %v6422 = vadd.f32 %v6412, %v6419
      %v6423 = vadd.f32 %v6413, %v6419
      %v6424 = vadd.f32 %v6414, %v6419
      %v6425 = vld [vmem:[%s22] sm:$0xff]
      %v6426 = vld [vmem:[%s22 + $0x8] sm:$0xff]
      %v6427 = vld [vmem:[%s22 + $0x10] sm:$0xff]
      %v6428 = vld [vmem:[%s22 + $0x18] sm:$0xff]
      %v6429 = vld [vmem:[%s22 + $0x20] sm:$0xff]
      %v6430 = vld [vmem:[%s22 + $0x28] sm:$0xff]
      %v6431 = vld [vmem:[%s22 + $0x30] sm:$0xff]
      %v6432 = vld [vmem:[%s22 + $0x38] sm:$0xff]
      %v6433 = vld [vmem:[%s22 + $0x40] sm:$0xff]
      %v6434 = vld [vmem:[%s22 + $0x48] sm:$0xff]
      %v6435 = vld [vmem:[%s22 + $0x50] sm:$0xff]
      %v6436 = vld [vmem:[%s22 + $0x58] sm:$0xff]
      %v6437 = vld [vmem:[%s22 + $0x60] sm:$0xff]
      %v6438 = vld [vmem:[%s22 + $0x68] sm:$0xff]
      %v6439 = vld [vmem:[%s22 + $0x70] sm:$0xff]
      %v6440 = vld [vmem:[%s22 + $0x78] sm:$0xff]
      %v6441 = vld [vmem:[%s22 + $0x80] sm:$0xff]
      %v6442 = vld [vmem:[%s22 + $0x88] sm:$0xff]
      %v6443 = vld [vmem:[%s22 + $0x90] sm:$0xff]
      %v6444 = vld [vmem:[%s22 + $0x98] sm:$0xff]
      %v6445 = vld [vmem:[%s22 + $0xa0] sm:$0xff]
      %v6446 = vld [vmem:[%s22 + $0xa8] sm:$0xff]
      %v6447 = vld [vmem:[%s22 + $0xb0] sm:$0xff]
      %v6448 = vld [vmem:[%s22 + $0xb8] sm:$0xff]
      %v6449 = vld [vmem:[%s22 + $0xc0] sm:$0xff]
      %v6450 = vld [vmem:[%s22 + $0xc8] sm:$0xff]
      %v6451 = vld [vmem:[%s22 + $0xd0] sm:$0xff]
      %v6452 = vld [vmem:[%s22 + $0xd8] sm:$0xff]
      %v6453 = vld [vmem:[%s22 + $0xe0] sm:$0xff]
      %v6454 = vld [vmem:[%s22 + $0xe8] sm:$0xff]
      %v6455 = vld [vmem:[%s22 + $0xf0] sm:$0xff]
      %v6456 = vld [vmem:[%s22 + $0xf8] sm:$0xff]
      %v6457 = vpack.c.bf16 %v6422, %v6421
      %v6458 = vpack.c.bf16 %v6424, %v6423
      %v6459 = vld [vmem:[%s23] sm:$0xf]
      %v6461 = vlaneseq
      %v6462 = vshrl.u32 %v6461, 7
      %v6463 = vsub.s32 0, %v6462
      %v6464 = vrot.slane %v6459, %v6463
      %v6465 = vlaneseq
      %v6466 = vshrl.u32 %v6465, 7
      %v6467 = vsub.s32 1, %v6466
      %v6468 = vrot.slane %v6459, %v6467
      %v6469 = vlaneseq
      %v6470 = vshrl.u32 %v6469, 7
      %v6471 = vsub.s32 2, %v6470
      %v6472 = vrot.slane %v6459, %v6471
      %v6473 = vlaneseq
      %v6474 = vshrl.u32 %v6473, 7
      %v6475 = vsub.s32 3, %v6474
      %v6476 = vrot.slane %v6459, %v6475
      %v6513 = vunpack.c.l.b16 %v6425
      %v6514 = vunpack.c.h.b16 %v6425
      %v6515 = vunpack.c.l.b16 %v6426
      %v6516 = vunpack.c.h.b16 %v6426
      %v6517 = vunpack.c.l.b16 %v6427
      %v6518 = vunpack.c.h.b16 %v6427
      %v6519 = vunpack.c.l.b16 %v6428
      %v6520 = vunpack.c.h.b16 %v6428
      %v6521 = vunpack.c.l.b16 %v6429
      %v6522 = vunpack.c.h.b16 %v6429
      %v6523 = vunpack.c.l.b16 %v6430
      %v6524 = vunpack.c.h.b16 %v6430
      %v6525 = vunpack.c.l.b16 %v6431
      %v6526 = vunpack.c.h.b16 %v6431
      %v6527 = vunpack.c.l.b16 %v6432
      %v6528 = vunpack.c.h.b16 %v6432
      %v6529 = vunpack.c.l.b16 %v6433
      %v6530 = vunpack.c.h.b16 %v6433
      %v6531 = vunpack.c.l.b16 %v6434
      %v6532 = vunpack.c.h.b16 %v6434
      %v6533 = vunpack.c.l.b16 %v6435
      %v6534 = vunpack.c.h.b16 %v6435
      %v6535 = vunpack.c.l.b16 %v6436
      %v6536 = vunpack.c.h.b16 %v6436
      %v6537 = vunpack.c.l.b16 %v6437
      %v6538 = vunpack.c.h.b16 %v6437
      %v6539 = vunpack.c.l.b16 %v6438
      %v6540 = vunpack.c.h.b16 %v6438
      %v6541 = vunpack.c.l.b16 %v6439
      %v6542 = vunpack.c.h.b16 %v6439
      %v6543 = vunpack.c.l.b16 %v6440
      %v6544 = vunpack.c.h.b16 %v6440
      %v6545 = vunpack.c.l.b16 %v6441
      %v6546 = vunpack.c.h.b16 %v6441
      %v6547 = vunpack.c.l.b16 %v6442
      %v6548 = vunpack.c.h.b16 %v6442
      %v6549 = vunpack.c.l.b16 %v6443
      %v6550 = vunpack.c.h.b16 %v6443
      %v6551 = vunpack.c.l.b16 %v6444
      %v6552 = vunpack.c.h.b16 %v6444
      %v6553 = vunpack.c.l.b16 %v6445
      %v6554 = vunpack.c.h.b16 %v6445
      %v6555 = vunpack.c.l.b16 %v6446
      %v6556 = vunpack.c.h.b16 %v6446
      %v6557 = vunpack.c.l.b16 %v6447
      %v6558 = vunpack.c.h.b16 %v6447
      %v6559 = vunpack.c.l.b16 %v6448
      %v6560 = vunpack.c.h.b16 %v6448
      %v6561 = vunpack.c.l.b16 %v6449
      %v6562 = vunpack.c.h.b16 %v6449
      %v6563 = vunpack.c.l.b16 %v6450
      %v6564 = vunpack.c.h.b16 %v6450
      %v6565 = vunpack.c.l.b16 %v6451
      %v6566 = vunpack.c.h.b16 %v6451
      %v6567 = vunpack.c.l.b16 %v6452
      %v6568 = vunpack.c.h.b16 %v6452
      %v6569 = vunpack.c.l.b16 %v6453
      %v6570 = vunpack.c.h.b16 %v6453
      %v6571 = vunpack.c.l.b16 %v6454
      %v6572 = vunpack.c.h.b16 %v6454
      %v6573 = vunpack.c.l.b16 %v6455
      %v6574 = vunpack.c.h.b16 %v6455
      %v6575 = vunpack.c.l.b16 %v6456
      %v6576 = vunpack.c.h.b16 %v6456
      %v6577 = vpack.c.b16 %v6517, %v6513
      %v6578 = vpack.c.b16 %v6518, %v6514
      %v6579 = vpack.c.b16 %v6519, %v6515
      %v6580 = vpack.c.b16 %v6520, %v6516
      %v6581 = vpack.c.b16 %v6525, %v6521
      %v6582 = vpack.c.b16 %v6526, %v6522
      %v6583 = vpack.c.b16 %v6527, %v6523
      %v6584 = vpack.c.b16 %v6528, %v6524
      %v6585 = vpack.c.b16 %v6533, %v6529
      %v6586 = vpack.c.b16 %v6534, %v6530
      %v6587 = vpack.c.b16 %v6535, %v6531
      %v6588 = vpack.c.b16 %v6536, %v6532
      %v6589 = vpack.c.b16 %v6541, %v6537
      %v6590 = vpack.c.b16 %v6542, %v6538
      %v6591 = vpack.c.b16 %v6543, %v6539
      %v6592 = vpack.c.b16 %v6544, %v6540
      %v6593 = vpack.c.b16 %v6549, %v6545
      %v6594 = vpack.c.b16 %v6550, %v6546
      %v6595 = vpack.c.b16 %v6551, %v6547
      %v6596 = vpack.c.b16 %v6552, %v6548
      %v6597 = vpack.c.b16 %v6557, %v6553
      %v6598 = vpack.c.b16 %v6558, %v6554
      %v6599 = vpack.c.b16 %v6559, %v6555
      %v6600 = vpack.c.b16 %v6560, %v6556
      %v6601 = vpack.c.b16 %v6565, %v6561
      %v6602 = vpack.c.b16 %v6566, %v6562
      %v6603 = vpack.c.b16 %v6567, %v6563
      %v6604 = vpack.c.b16 %v6568, %v6564
      %v6605 = vpack.c.b16 %v6573, %v6569
      %v6606 = vpack.c.b16 %v6574, %v6570
      %v6607 = vpack.c.b16 %v6575, %v6571
      %v6608 = vpack.c.b16 %v6576, %v6572
      %6641 = vmatprep.subr.bf16.mxu0 %v6578
      %6642 = vmatpush1.bf16.msra.mxu0 %v6577
      %6643 = vmatprep.subr.bf16.mxu0 %v6582
      %6644 = vmatpush1.bf16.msra.mxu0 %v6581
      %6645 = vmatprep.subr.bf16.mxu0 %v6586
      %6646 = vmatpush1.bf16.msra.mxu0 %v6585
      %6647 = vmatprep.subr.bf16.mxu0 %v6590
      %6648 = vmatpush1.bf16.msra.mxu0 %v6589
      %6649 = vmatprep.subr.bf16.mxu0 %v6594
      %6650 = vmatpush1.bf16.msra.mxu0 %v6593
      %6651 = vmatprep.subr.bf16.mxu0 %v6598
      %6652 = vmatpush1.bf16.msra.mxu0 %v6597
      %6653 = vmatprep.subr.bf16.mxu0 %v6602
      %6654 = vmatpush1.bf16.msra.mxu0 %v6601
      %6655 = vmatprep.subr.bf16.mxu0 %v6606
      %6656 = vmatpush1.bf16.msra.mxu0 %v6605
      %6657 = vmatprep.subr.bf16.mxu0 0
      %6658 = vmatpush1.bf16.msra.mxu0 0
      %6659 = vmatprep.subr.bf16.mxu0 0
      %6660 = vmatpush1.bf16.msra.mxu0 0
      %6661 = vmatprep.subr.bf16.mxu0 0
      %6662 = vmatpush1.bf16.msra.mxu0 0
      %6663 = vmatprep.subr.bf16.mxu0 0
      %6664 = vmatpush1.bf16.msra.mxu0 0
      %6665 = vmatprep.subr.bf16.mxu0 0
      %6666 = vmatpush1.bf16.msra.mxu0 0
      %6667 = vmatprep.subr.bf16.mxu0 0
      %6668 = vmatpush1.bf16.msra.mxu0 0
      %6669 = vmatprep.subr.bf16.mxu0 0
      %6670 = vmatpush1.bf16.msra.mxu0 0
      %6671 = vmatprep.subr.bf16.mxu0 0
      %6672 = vmatpush1.bf16.msra.mxu0 0
      %6673 = vmatprep.mubr.bf16.mxu0 0
      %6674 = vmatmul.mubr.bf16.gmra.mrb[0].mxu0 %v6457
      %v6675 = vpop.f32.mrb[0].mxu0
      %v6676 = vadd.f32 %v6464, %v6675
      %v6677 = vpop.f32.mrb[0].mxu0
      %v6678 = vadd.f32 %v6468, %v6677
      %v6679 = vpop.f32.mrb[0].mxu0
      %v6680 = vadd.f32 %v6464, %v6679
      %v6681 = vpop.f32.mrb[0].mxu0
      %v6682 = vadd.f32 %v6468, %v6681
      %6683 = vmatprep.mubr.bf16.mxu0 0
      %6684 = vmatmul.mubr.bf16.gmra.mrb[0].mxu0 %v6458
      %v6685 = vpop.f32.mrb[0].mxu0
      %v6686 = vadd.f32 %v6464, %v6685
      %v6687 = vpop.f32.mrb[0].mxu0
      %v6688 = vadd.f32 %v6468, %v6687
      %v6689 = vpop.f32.mrb[0].mxu0
      %v6690 = vadd.f32 %v6464, %v6689
      %v6691 = vpop.f32.mrb[0].mxu0
      %v6692 = vadd.f32 %v6468, %v6691
      %6693 = vdwg.mxu0
      %6694 = vmatprep.subr.bf16.mxu0 %v6580
      %6695 = vmatpush1.bf16.msra.mxu0 %v6579
      %6696 = vmatprep.subr.bf16.mxu0 %v6584
      %6697 = vmatpush1.bf16.msra.mxu0 %v6583
      %6698 = vmatprep.subr.bf16.mxu0 %v6588
      %6699 = vmatpush1.bf16.msra.mxu0 %v6587
      %6700 = vmatprep.subr.bf16.mxu0 %v6592
      %6701 = vmatpush1.bf16.msra.mxu0 %v6591
      %6702 = vmatprep.subr.bf16.mxu0 %v6596
      %6703 = vmatpush1.bf16.msra.mxu0 %v6595
      %6704 = vmatprep.subr.bf16.mxu0 %v6600
      %6705 = vmatpush1.bf16.msra.mxu0 %v6599
      %6706 = vmatprep.subr.bf16.mxu0 %v6604
      %6707 = vmatpush1.bf16.msra.mxu0 %v6603
      %6708 = vmatprep.subr.bf16.mxu0 %v6608
      %6709 = vmatpush1.bf16.msra.mxu0 %v6607
      %6710 = vmatprep.subr.bf16.mxu0 0
      %6711 = vmatpush1.bf16.msra.mxu0 0
      %6712 = vmatprep.subr.bf16.mxu0 0
      %6713 = vmatpush1.bf16.msra.mxu0 0
      %6714 = vmatprep.subr.bf16.mxu0 0
      %6715 = vmatpush1.bf16.msra.mxu0 0
      %6716 = vmatprep.subr.bf16.mxu0 0
      %6717 = vmatpush1.bf16.msra.mxu0 0
      %6718 = vmatprep.subr.bf16.mxu0 0
      %6719 = vmatpush1.bf16.msra.mxu0 0
      %6720 = vmatprep.subr.bf16.mxu0 0
      %6721 = vmatpush1.bf16.msra.mxu0 0
      %6722 = vmatprep.subr.bf16.mxu0 0
      %6723 = vmatpush1.bf16.msra.mxu0 0
      %6724 = vmatprep.subr.bf16.mxu0 0
      %6725 = vmatpush1.bf16.msra.mxu0 0
      %6726 = vmatprep.mubr.bf16.mxu0 0
      %6727 = vmatmul.mubr.bf16.gmra.mrb[0].mxu0 %v6457
      %v6728 = vpop.f32.mrb[0].mxu0
      %v6729 = vadd.f32 %v6472, %v6728
      %v6730 = vpop.f32.mrb[0].mxu0
      %v6731 = vadd.f32 %v6476, %v6730
      %v6732 = vpop.f32.mrb[0].mxu0
      %v6733 = vadd.f32 %v6472, %v6732
      %v6734 = vpop.f32.mrb[0].mxu0
      %v6735 = vadd.f32 %v6476, %v6734
      %6736 = vmatprep.mubr.bf16.mxu0 0
      %6737 = vmatmul.mubr.bf16.gmra.mrb[0].mxu0 %v6458
      %v6738 = vpop.f32.mrb[0].mxu0
      %v6739 = vadd.f32 %v6472, %v6738
      %v6740 = vpop.f32.mrb[0].mxu0
      %v6741 = vadd.f32 %v6476, %v6740
      %v6742 = vpop.f32.mrb[0].mxu0
      %v6743 = vadd.f32 %v6472, %v6742
      %v6744 = vpop.f32.mrb[0].mxu0
      %v6745 = vadd.f32 %v6476, %v6744
      %6746 = vdwg.mxu0
      %v6747 = vmax.f32 %v6676, 0.0
      %v6748 = vmax.f32 %v6678, 0.0
      %v6749 = vmax.f32 %v6729, 0.0
      %v6750 = vmax.f32 %v6731, 0.0
      %v6751 = vmax.f32 %v6680, 0.0
      %v6752 = vmax.f32 %v6682, 0.0
      %v6753 = vmax.f32 %v6733, 0.0
      %v6754 = vmax.f32 %v6735, 0.0
      %v6755 = vmax.f32 %v6686, 0.0
      %v6756 = vmax.f32 %v6688, 0.0
      %v6757 = vmax.f32 %v6739, 0.0
      %v6758 = vmax.f32 %v6741, 0.0
      %v6759 = vmax.f32 %v6690, 0.0
      %v6760 = vmax.f32 %v6692, 0.0
      %v6761 = vmax.f32 %v6743, 0.0
      %v6762 = vmax.f32 %v6745, 0.0
      %v6763 = vld [vmem:[%s24] sm:$0xf]
      %v6764 = vld [vmem:[%s24 + $0x4] sm:$0xf]
      %v6765 = vld [vmem:[%s24 + $0x8] sm:$0xf]
      %v6766 = vld [vmem:[%s24 + $0xc] sm:$0xf]
      %v6767 = vld [vmem:[%s24 + $0x10] sm:$0xf]
      %v6768 = vld [vmem:[%s24 + $0x14] sm:$0xf]
      %v6769 = vld [vmem:[%s24 + $0x18] sm:$0xf]
      %v6770 = vld [vmem:[%s24 + $0x1c] sm:$0xf]
      %v6771 = vld [vmem:[%s24 + $0x20] sm:$0xf]
      %v6772 = vld [vmem:[%s24 + $0x24] sm:$0xf]
      %v6773 = vld [vmem:[%s24 + $0x28] sm:$0xf]
      %v6774 = vld [vmem:[%s24 + $0x2c] sm:$0xf]
      %v6775 = vld [vmem:[%s24 + $0x30] sm:$0xf]
      %v6776 = vld [vmem:[%s24 + $0x34] sm:$0xf]
      %v6777 = vld [vmem:[%s24 + $0x38] sm:$0xf]
      %v6778 = vld [vmem:[%s24 + $0x3c] sm:$0xf]
      %v6779 = vld [vmem:[%s24 + $0x40] sm:$0xf]
      %v6780 = vld [vmem:[%s24 + $0x44] sm:$0xf]
      %v6781 = vld [vmem:[%s24 + $0x48] sm:$0xf]
      %v6782 = vld [vmem:[%s24 + $0x4c] sm:$0xf]
      %v6783 = vld [vmem:[%s24 + $0x50] sm:$0xf]
      %v6784 = vld [vmem:[%s24 + $0x54] sm:$0xf]
      %v6785 = vld [vmem:[%s24 + $0x58] sm:$0xf]
      %v6786 = vld [vmem:[%s24 + $0x5c] sm:$0xf]
      %v6787 = vld [vmem:[%s24 + $0x60] sm:$0xf]
      %v6788 = vld [vmem:[%s24 + $0x64] sm:$0xf]
      %v6789 = vld [vmem:[%s24 + $0x68] sm:$0xf]
      %v6790 = vld [vmem:[%s24 + $0x6c] sm:$0xf]
      %v6791 = vld [vmem:[%s24 + $0x70] sm:$0xf]
      %v6792 = vld [vmem:[%s24 + $0x74] sm:$0xf]
      %v6793 = vld [vmem:[%s24 + $0x78] sm:$0xf]
      %v6794 = vld [vmem:[%s24 + $0x7c] sm:$0xf]
      %v6795 = vld [vmem:[%s24 + $0x80] sm:$0xf]
      %v6796 = vld [vmem:[%s24 + $0x84] sm:$0xf]
      %v6797 = vld [vmem:[%s24 + $0x88] sm:$0xf]
      %v6798 = vld [vmem:[%s24 + $0x8c] sm:$0xf]
      %v6799 = vld [vmem:[%s24 + $0x90] sm:$0xf]
      %v6800 = vld [vmem:[%s24 + $0x94] sm:$0xf]
      %v6801 = vld [vmem:[%s24 + $0x98] sm:$0xf]
      %v6802 = vld [vmem:[%s24 + $0x9c] sm:$0xf]
      %v6803 = vld [vmem:[%s24 + $0xa0] sm:$0xf]
      %v6804 = vld [vmem:[%s24 + $0xa4] sm:$0xf]
      %v6805 = vld [vmem:[%s24 + $0xa8] sm:$0xf]
      %v6806 = vld [vmem:[%s24 + $0xac] sm:$0xf]
      %v6807 = vld [vmem:[%s24 + $0xb0] sm:$0xf]
      %v6808 = vld [vmem:[%s24 + $0xb4] sm:$0xf]
      %v6809 = vld [vmem:[%s24 + $0xb8] sm:$0xf]
      %v6810 = vld [vmem:[%s24 + $0xbc] sm:$0xf]
      %v6811 = vld [vmem:[%s24 + $0xc0] sm:$0xf]
      %v6812 = vld [vmem:[%s24 + $0xc4] sm:$0xf]
      %v6813 = vld [vmem:[%s24 + $0xc8] sm:$0xf]
      %v6814 = vld [vmem:[%s24 + $0xcc] sm:$0xf]
      %v6815 = vld [vmem:[%s24 + $0xd0] sm:$0xf]
      %v6816 = vld [vmem:[%s24 + $0xd4] sm:$0xf]
      %v6817 = vld [vmem:[%s24 + $0xd8] sm:$0xf]
      %v6818 = vld [vmem:[%s24 + $0xdc] sm:$0xf]
      %v6819 = vld [vmem:[%s24 + $0xe0] sm:$0xf]
      %v6820 = vld [vmem:[%s24 + $0xe4] sm:$0xf]
      %v6821 = vld [vmem:[%s24 + $0xe8] sm:$0xf]
      %v6822 = vld [vmem:[%s24 + $0xec] sm:$0xf]
      %v6823 = vld [vmem:[%s24 + $0xf0] sm:$0xf]
      %v6824 = vld [vmem:[%s24 + $0xf4] sm:$0xf]
      %v6825 = vld [vmem:[%s24 + $0xf8] sm:$0xf]
      %v6826 = vld [vmem:[%s24 + $0xfc] sm:$0xf]
      %v6827 = vpack.c.bf16 %v6751, %v6747
      %v6828 = vpack.c.bf16 %v6752, %v6748
      %v6829 = vpack.c.bf16 %v6753, %v6749
      %v6830 = vpack.c.bf16 %v6754, %v6750
      %v6831 = vpack.c.bf16 %v6759, %v6755
      %v6832 = vpack.c.bf16 %v6760, %v6756
      %v6833 = vpack.c.bf16 %v6761, %v6757
      %v6834 = vpack.c.bf16 %v6762, %v6758
      %v6899 = vunpack.c.l.b16 %v6763
      %v6900 = vunpack.c.l.b16 %v6764
      %v6901 = vunpack.c.l.b16 %v6765
      %v6902 = vunpack.c.l.b16 %v6766
      %v6903 = vunpack.c.l.b16 %v6767
      %v6904 = vunpack.c.l.b16 %v6768
      %v6905 = vunpack.c.l.b16 %v6769
      %v6906 = vunpack.c.l.b16 %v6770
      %v6907 = vunpack.c.l.b16 %v6771
      %v6908 = vunpack.c.l.b16 %v6772
      %v6909 = vunpack.c.l.b16 %v6773
      %v6910 = vunpack.c.l.b16 %v6774
      %v6911 = vunpack.c.l.b16 %v6775
      %v6912 = vunpack.c.l.b16 %v6776
      %v6913 = vunpack.c.l.b16 %v6777
      %v6914 = vunpack.c.l.b16 %v6778
      %v6915 = vunpack.c.l.b16 %v6779
      %v6916 = vunpack.c.l.b16 %v6780
      %v6917 = vunpack.c.l.b16 %v6781
      %v6918 = vunpack.c.l.b16 %v6782
      %v6919 = vunpack.c.l.b16 %v6783
      %v6920 = vunpack.c.l.b16 %v6784
      %v6921 = vunpack.c.l.b16 %v6785
      %v6922 = vunpack.c.l.b16 %v6786
      %v6923 = vunpack.c.l.b16 %v6787
      %v6924 = vunpack.c.l.b16 %v6788
      %v6925 = vunpack.c.l.b16 %v6789
      %v6926 = vunpack.c.l.b16 %v6790
      %v6927 = vunpack.c.l.b16 %v6791
      %v6928 = vunpack.c.l.b16 %v6792
      %v6929 = vunpack.c.l.b16 %v6793
      %v6930 = vunpack.c.l.b16 %v6794
      %v6931 = vunpack.c.l.b16 %v6795
      %v6932 = vunpack.c.l.b16 %v6796
      %v6933 = vunpack.c.l.b16 %v6797
      %v6934 = vunpack.c.l.b16 %v6798
      %v6935 = vunpack.c.l.b16 %v6799
      %v6936 = vunpack.c.l.b16 %v6800
      %v6937 = vunpack.c.l.b16 %v6801
      %v6938 = vunpack.c.l.b16 %v6802
      %v6939 = vunpack.c.l.b16 %v6803
      %v6940 = vunpack.c.l.b16 %v6804
      %v6941 = vunpack.c.l.b16 %v6805
      %v6942 = vunpack.c.l.b16 %v6806
      %v6943 = vunpack.c.l.b16 %v6807
      %v6944 = vunpack.c.l.b16 %v6808
      %v6945 = vunpack.c.l.b16 %v6809
      %v6946 = vunpack.c.l.b16 %v6810
      %v6947 = vunpack.c.l.b16 %v6811
      %v6948 = vunpack.c.l.b16 %v6812
      %v6949 = vunpack.c.l.b16 %v6813
      %v6950 = vunpack.c.l.b16 %v6814
      %v6951 = vunpack.c.l.b16 %v6815
      %v6952 = vunpack.c.l.b16 %v6816
      %v6953 = vunpack.c.l.b16 %v6817
      %v6954 = vunpack.c.l.b16 %v6818
      %v6955 = vunpack.c.l.b16 %v6819
      %v6956 = vunpack.c.l.b16 %v6820
      %v6957 = vunpack.c.l.b16 %v6821
      %v6958 = vunpack.c.l.b16 %v6822
      %v6959 = vunpack.c.l.b16 %v6823
      %v6960 = vunpack.c.l.b16 %v6824
      %v6961 = vunpack.c.l.b16 %v6825
      %v6962 = vunpack.c.l.b16 %v6826
      %v6963 = vpack.c.b16 %v6900, %v6899
      %v6964 = vpack.c.b16 %v6902, %v6901
      %v6965 = vpack.c.b16 %v6904, %v6903
      %v6966 = vpack.c.b16 %v6906, %v6905
      %v6967 = vpack.c.b16 %v6908, %v6907
      %v6968 = vpack.c.b16 %v6910, %v6909
      %v6969 = vpack.c.b16 %v6912, %v6911
      %v6970 = vpack.c.b16 %v6914, %v6913
      %v6971 = vpack.c.b16 %v6916, %v6915
      %v6972 = vpack.c.b16 %v6918, %v6917
      %v6973 = vpack.c.b16 %v6920, %v6919
      %v6974 = vpack.c.b16 %v6922, %v6921
      %v6975 = vpack.c.b16 %v6924, %v6923
      %v6976 = vpack.c.b16 %v6926, %v6925
      %v6977 = vpack.c.b16 %v6928, %v6927
      %v6978 = vpack.c.b16 %v6930, %v6929
      %v6979 = vpack.c.b16 %v6932, %v6931
      %v6980 = vpack.c.b16 %v6934, %v6933
      %v6981 = vpack.c.b16 %v6936, %v6935
      %v6982 = vpack.c.b16 %v6938, %v6937
      %v6983 = vpack.c.b16 %v6940, %v6939
      %v6984 = vpack.c.b16 %v6942, %v6941
      %v6985 = vpack.c.b16 %v6944, %v6943
      %v6986 = vpack.c.b16 %v6946, %v6945
      %v6987 = vpack.c.b16 %v6948, %v6947
      %v6988 = vpack.c.b16 %v6950, %v6949
      %v6989 = vpack.c.b16 %v6952, %v6951
      %v6990 = vpack.c.b16 %v6954, %v6953
      %v6991 = vpack.c.b16 %v6956, %v6955
      %v6992 = vpack.c.b16 %v6958, %v6957
      %v6993 = vpack.c.b16 %v6960, %v6959
      %v6994 = vpack.c.b16 %v6962, %v6961
      %7027 = vmatprep.subr.bf16.mxu0 0
      %7028 = vmatpush1.bf16.msra.mxu0 %v6963
      %7029 = vmatprep.subr.bf16.mxu0 0
      %7030 = vmatpush1.bf16.msra.mxu0 %v6964
      %7031 = vmatprep.subr.bf16.mxu0 0
      %7032 = vmatpush1.bf16.msra.mxu0 %v6965
      %7033 = vmatprep.subr.bf16.mxu0 0
      %7034 = vmatpush1.bf16.msra.mxu0 %v6966
      %7035 = vmatprep.subr.bf16.mxu0 0
      %7036 = vmatpush1.bf16.msra.mxu0 %v6967
      %7037 = vmatprep.subr.bf16.mxu0 0
      %7038 = vmatpush1.bf16.msra.mxu0 %v6968
      %7039 = vmatprep.subr.bf16.mxu0 0
      %7040 = vmatpush1.bf16.msra.mxu0 %v6969
      %7041 = vmatprep.subr.bf16.mxu0 0
      %7042 = vmatpush1.bf16.msra.mxu0 %v6970
      %7043 = vmatprep.subr.bf16.mxu0 0
      %7044 = vmatpush1.bf16.msra.mxu0 %v6971
      %7045 = vmatprep.subr.bf16.mxu0 0
      %7046 = vmatpush1.bf16.msra.mxu0 %v6972
      %7047 = vmatprep.subr.bf16.mxu0 0
      %7048 = vmatpush1.bf16.msra.mxu0 %v6973
      %7049 = vmatprep.subr.bf16.mxu0 0
      %7050 = vmatpush1.bf16.msra.mxu0 %v6974
      %7051 = vmatprep.subr.bf16.mxu0 0
      %7052 = vmatpush1.bf16.msra.mxu0 %v6975
      %7053 = vmatprep.subr.bf16.mxu0 0
      %7054 = vmatpush1.bf16.msra.mxu0 %v6976
      %7055 = vmatprep.subr.bf16.mxu0 0
      %7056 = vmatpush1.bf16.msra.mxu0 %v6977
      %7057 = vmatprep.subr.bf16.mxu0 0
      %7058 = vmatpush1.bf16.msra.mxu0 %v6978
      %7059 = vmatprep.mubr.bf16.mxu0 %v6828
      %7060 = vmatmul.mubr.bf16.gmra.mrb[0].mxu0 %v6827
      %v7061 = vpop.f32.mrb[0].mxu0
      %v7062 = vadd.f32 0.0, %v7061
      %v7063 = vpop.f32.mrb[0].mxu0
      %v7064 = vpop.f32.mrb[0].mxu0
      %v7065 = vadd.f32 0.0, %v7064
      %v7066 = vpop.f32.mrb[0].mxu0
      %7067 = vmatprep.mubr.bf16.mxu0 %v6832
      %7068 = vmatmul.mubr.bf16.gmra.mrb[0].mxu0 %v6831
      %v7069 = vpop.f32.mrb[0].mxu0
      %v7070 = vadd.f32 0.0, %v7069
      %v7071 = vpop.f32.mrb[0].mxu0
      %v7072 = vpop.f32.mrb[0].mxu0
      %v7073 = vadd.f32 0.0, %v7072
      %v7074 = vpop.f32.mrb[0].mxu0
      %7075 = vdwg.mxu0
      %7076 = vmatprep.subr.bf16.mxu0 0
      %7077 = vmatpush1.bf16.msra.mxu0 %v6979
      %7078 = vmatprep.subr.bf16.mxu0 0
      %7079 = vmatpush1.bf16.msra.mxu0 %v6980
      %7080 = vmatprep.subr.bf16.mxu0 0
      %7081 = vmatpush1.bf16.msra.mxu0 %v6981
      %7082 = vmatprep.subr.bf16.mxu0 0
      %7083 = vmatpush1.bf16.msra.mxu0 %v6982
      %7084 = vmatprep.subr.bf16.mxu0 0
      %7085 = vmatpush1.bf16.msra.mxu0 %v6983
      %7086 = vmatprep.subr.bf16.mxu0 0
      %7087 = vmatpush1.bf16.msra.mxu0 %v6984
      %7088 = vmatprep.subr.bf16.mxu0 0
      %7089 = vmatpush1.bf16.msra.mxu0 %v6985
      %7090 = vmatprep.subr.bf16.mxu0 0
      %7091 = vmatpush1.bf16.msra.mxu0 %v6986
      %7092 = vmatprep.subr.bf16.mxu0 0
      %7093 = vmatpush1.bf16.msra.mxu0 %v6987
      %7094 = vmatprep.subr.bf16.mxu0 0
      %7095 = vmatpush1.bf16.msra.mxu0 %v6988
      %7096 = vmatprep.subr.bf16.mxu0 0
      %7097 = vmatpush1.bf16.msra.mxu0 %v6989
      %7098 = vmatprep.subr.bf16.mxu0 0
      %7099 = vmatpush1.bf16.msra.mxu0 %v6990
      %7100 = vmatprep.subr.bf16.mxu0 0
      %7101 = vmatpush1.bf16.msra.mxu0 %v6991
      %7102 = vmatprep.subr.bf16.mxu0 0
      %7103 = vmatpush1.bf16.msra.mxu0 %v6992
      %7104 = vmatprep.subr.bf16.mxu0 0
      %7105 = vmatpush1.bf16.msra.mxu0 %v6993
      %7106 = vmatprep.subr.bf16.mxu0 0
      %7107 = vmatpush1.bf16.msra.mxu0 %v6994
      %7108 = vmatprep.mubr.bf16.mxu0 %v6830
      %7109 = vmatmul.mubr.bf16.gmra.mrb[0].mxu0 %v6829
      %v7110 = vpop.f32.mrb[0].mxu0
      %v7111 = vadd.f32 %v7062, %v7110
      %v7112 = vpop.f32.mrb[0].mxu0
      %v7113 = vpop.f32.mrb[0].mxu0
      %v7114 = vadd.f32 %v7065, %v7113
      %v7115 = vpop.f32.mrb[0].mxu0
      %7116 = vmatprep.mubr.bf16.mxu0 %v6834
      %7117 = vmatmul.mubr.bf16.gmra.mrb[0].mxu0 %v6833
      %v7118 = vpop.f32.mrb[0].mxu0
      %v7119 = vadd.f32 %v7070, %v7118
      %v7120 = vpop.f32.mrb[0].mxu0
      %v7121 = vpop.f32.mrb[0].mxu0
      %v7122 = vadd.f32 %v7073, %v7121
      %v7123 = vpop.f32.mrb[0].mxu0
      %7124 = vdwg.mxu0
      %v7125 = vadd.f32 %v6355, %v7111
      %v7126 = vadd.f32 %v6356, %v7114
      %v7127 = vadd.f32 %v6357, %v7119
      %v7128 = vadd.f32 %v6358, %v7122
      %v7129 = vld [vmem:[%s25] sm:$0x1]
      %v7131 = vlaneseq
      %v7132 = vshrl.u32 %v7131, 7
      %v7133 = vsub.s32 0, %v7132
      %v7134 = vrot.slane %v7129, %v7133
      %v7136 = vadd.f32 %v7125, %v7134
      %v7137 = vadd.f32 %v7126, %v7134
      %v7138 = vadd.f32 %v7127, %v7134
      %v7139 = vadd.f32 %v7128, %v7134
      %v7140 = vadd.f32 %v7136, %v7137
      %v7141 = vrot.slane %v7140, 4
      %v7142 = vadd.f32 %v7140, %v7141
      %v7143 = vrot.slane %v7142, 2
      %v7144 = vadd.f32 %v7142, %v7143
      %v7145 = vrot.slane %v7144, 1
      %v7146 = vadd.f32 %v7144, %v7145
      %v7147 = vrcp.pop 16.0
      %v7148 = vmul.f32 %v7146, %v7147
      %v7149 = vadd.f32 %v7138, %v7139
      %v7150 = vrot.slane %v7149, 4
      %v7151 = vadd.f32 %v7149, %v7150
      %v7152 = vrot.slane %v7151, 2
      %v7153 = vadd.f32 %v7151, %v7152
      %v7154 = vrot.slane %v7153, 1
      %v7155 = vadd.f32 %v7153, %v7154
      %v7156 = vmul.f32 %v7155, %v7147
      %v7157 = vld [vmem:[%s26] sm:$0xff]
      %v7158 = vld [vmem:[%s26 + $0x8] sm:$0xff]
      %v7159 = vld [vmem:[%s26 + $0x10] sm:$0xff]
      %v7160 = vld [vmem:[%s26 + $0x18] sm:$0xff]
      %v7161 = vld [vmem:[%s26 + $0x20] sm:$0xff]
      %v7162 = vld [vmem:[%s26 + $0x28] sm:$0xff]
      %v7163 = vld [vmem:[%s26 + $0x30] sm:$0xff]
      %v7164 = vld [vmem:[%s26 + $0x38] sm:$0xff]
      %v7165 = vld [vmem:[%s26 + $0x40] sm:$0xff]
      %v7166 = vld [vmem:[%s26 + $0x48] sm:$0xff]
      %v7167 = vld [vmem:[%s26 + $0x50] sm:$0xff]
      %v7168 = vld [vmem:[%s26 + $0x58] sm:$0xff]
      %v7169 = vld [vmem:[%s26 + $0x60] sm:$0xff]
      %v7170 = vld [vmem:[%s26 + $0x68] sm:$0xff]
      %v7171 = vld [vmem:[%s26 + $0x70] sm:$0xff]
      %v7172 = vld [vmem:[%s26 + $0x78] sm:$0xff]
      %v7173 = vld [vmem:[%s26 + $0x80] sm:$0xff]
      %v7174 = vld [vmem:[%s26 + $0x88] sm:$0xff]
      %v7175 = vld [vmem:[%s26 + $0x90] sm:$0xff]
      %v7176 = vld [vmem:[%s26 + $0x98] sm:$0xff]
      %v7177 = vld [vmem:[%s26 + $0xa0] sm:$0xff]
      %v7178 = vld [vmem:[%s26 + $0xa8] sm:$0xff]
      %v7179 = vld [vmem:[%s26 + $0xb0] sm:$0xff]
      %v7180 = vld [vmem:[%s26 + $0xb8] sm:$0xff]
      %v7181 = vld [vmem:[%s26 + $0xc0] sm:$0xff]
      %v7182 = vld [vmem:[%s26 + $0xc8] sm:$0xff]
      %v7183 = vld [vmem:[%s26 + $0xd0] sm:$0xff]
      %v7184 = vld [vmem:[%s26 + $0xd8] sm:$0xff]
      %v7185 = vld [vmem:[%s26 + $0xe0] sm:$0xff]
      %v7186 = vld [vmem:[%s26 + $0xe8] sm:$0xff]
      %v7187 = vld [vmem:[%s26 + $0xf0] sm:$0xff]
      %v7188 = vld [vmem:[%s26 + $0xf8] sm:$0xff]
      %v7189 = vld [vmem:[%s26 + $0x100] sm:$0xff]
      %v7190 = vld [vmem:[%s26 + $0x108] sm:$0xff]
      %v7191 = vld [vmem:[%s26 + $0x110] sm:$0xff]
      %v7192 = vld [vmem:[%s26 + $0x118] sm:$0xff]
      %v7193 = vld [vmem:[%s26 + $0x120] sm:$0xff]
      %v7194 = vld [vmem:[%s26 + $0x128] sm:$0xff]
      %v7195 = vld [vmem:[%s26 + $0x130] sm:$0xff]
      %v7196 = vld [vmem:[%s26 + $0x138] sm:$0xff]
      %v7197 = vld [vmem:[%s26 + $0x140] sm:$0xff]
      %v7198 = vld [vmem:[%s26 + $0x148] sm:$0xff]
      %v7199 = vld [vmem:[%s26 + $0x150] sm:$0xff]
      %v7200 = vld [vmem:[%s26 + $0x158] sm:$0xff]
      %v7201 = vld [vmem:[%s26 + $0x160] sm:$0xff]
      %v7202 = vld [vmem:[%s26 + $0x168] sm:$0xff]
      %v7203 = vld [vmem:[%s26 + $0x170] sm:$0xff]
      %v7204 = vld [vmem:[%s26 + $0x178] sm:$0xff]
      %v7205 = vld [vmem:[%s26 + $0x180] sm:$0xff]
      %v7206 = vld [vmem:[%s26 + $0x188] sm:$0xff]
      %v7207 = vld [vmem:[%s26 + $0x190] sm:$0xff]
      %v7208 = vld [vmem:[%s26 + $0x198] sm:$0xff]
      %v7209 = vld [vmem:[%s26 + $0x1a0] sm:$0xff]
      %v7210 = vld [vmem:[%s26 + $0x1a8] sm:$0xff]
      %v7211 = vld [vmem:[%s26 + $0x1b0] sm:$0xff]
      %v7212 = vld [vmem:[%s26 + $0x1b8] sm:$0xff]
      %v7213 = vld [vmem:[%s26 + $0x1c0] sm:$0xff]
      %v7214 = vld [vmem:[%s26 + $0x1c8] sm:$0xff]
      %v7215 = vld [vmem:[%s26 + $0x1d0] sm:$0xff]
      %v7216 = vld [vmem:[%s26 + $0x1d8] sm:$0xff]
      %v7217 = vld [vmem:[%s26 + $0x1e0] sm:$0xff]
      %v7218 = vld [vmem:[%s26 + $0x1e8] sm:$0xff]
      %v7219 = vld [vmem:[%s26 + $0x1f0] sm:$0xff]
      %v7220 = vld [vmem:[%s26 + $0x1f8] sm:$0xff]
      %v7221 = vld [vmem:[%s26 + $0x200] sm:$0xff]
      %v7222 = vld [vmem:[%s26 + $0x208] sm:$0xff]
      %v7223 = vld [vmem:[%s26 + $0x210] sm:$0xff]
      %v7224 = vld [vmem:[%s26 + $0x218] sm:$0xff]
      %v7225 = vld [vmem:[%s26 + $0x220] sm:$0xff]
      %v7226 = vld [vmem:[%s26 + $0x228] sm:$0xff]
      %v7227 = vld [vmem:[%s26 + $0x230] sm:$0xff]
      %v7228 = vld [vmem:[%s26 + $0x238] sm:$0xff]
      %v7229 = vld [vmem:[%s26 + $0x240] sm:$0xff]
      %v7230 = vld [vmem:[%s26 + $0x248] sm:$0xff]
      %v7231 = vld [vmem:[%s26 + $0x250] sm:$0xff]
      %v7232 = vld [vmem:[%s26 + $0x258] sm:$0xff]
      %v7233 = vld [vmem:[%s26 + $0x260] sm:$0xff]
      %v7234 = vld [vmem:[%s26 + $0x268] sm:$0xff]
      %v7235 = vld [vmem:[%s26 + $0x270] sm:$0xff]
      %v7236 = vld [vmem:[%s26 + $0x278] sm:$0xff]
      %v7237 = vld [vmem:[%s26 + $0x280] sm:$0xff]
      %v7238 = vld [vmem:[%s26 + $0x288] sm:$0xff]
      %v7239 = vld [vmem:[%s26 + $0x290] sm:$0xff]
      %v7240 = vld [vmem:[%s26 + $0x298] sm:$0xff]
      %v7241 = vld [vmem:[%s26 + $0x2a0] sm:$0xff]
      %v7242 = vld [vmem:[%s26 + $0x2a8] sm:$0xff]
      %v7243 = vld [vmem:[%s26 + $0x2b0] sm:$0xff]
      %v7244 = vld [vmem:[%s26 + $0x2b8] sm:$0xff]
      %v7245 = vld [vmem:[%s26 + $0x2c0] sm:$0xff]
      %v7246 = vld [vmem:[%s26 + $0x2c8] sm:$0xff]
      %v7247 = vld [vmem:[%s26 + $0x2d0] sm:$0xff]
      %v7248 = vld [vmem:[%s26 + $0x2d8] sm:$0xff]
      %v7249 = vld [vmem:[%s26 + $0x2e0] sm:$0xff]
      %v7250 = vld [vmem:[%s26 + $0x2e8] sm:$0xff]
      %v7251 = vld [vmem:[%s26 + $0x2f0] sm:$0xff]
      %v7252 = vld [vmem:[%s26 + $0x2f8] sm:$0xff]
      %v7253 = vld [vmem:[%s26 + $0x300] sm:$0xff]
      %v7254 = vld [vmem:[%s26 + $0x308] sm:$0xff]
      %v7255 = vld [vmem:[%s26 + $0x310] sm:$0xff]
      %v7256 = vld [vmem:[%s26 + $0x318] sm:$0xff]
      %v7257 = vld [vmem:[%s26 + $0x320] sm:$0xff]
      %v7258 = vld [vmem:[%s26 + $0x328] sm:$0xff]
      %v7259 = vld [vmem:[%s26 + $0x330] sm:$0xff]
      %v7260 = vld [vmem:[%s26 + $0x338] sm:$0xff]
      %v7261 = vld [vmem:[%s26 + $0x340] sm:$0xff]
      %v7262 = vld [vmem:[%s26 + $0x348] sm:$0xff]
      %v7263 = vld [vmem:[%s26 + $0x350] sm:$0xff]
      %v7264 = vld [vmem:[%s26 + $0x358] sm:$0xff]
      %v7265 = vld [vmem:[%s26 + $0x360] sm:$0xff]
      %v7266 = vld [vmem:[%s26 + $0x368] sm:$0xff]
      %v7267 = vld [vmem:[%s26 + $0x370] sm:$0xff]
      %v7268 = vld [vmem:[%s26 + $0x378] sm:$0xff]
      %v7269 = vld [vmem:[%s26 + $0x380] sm:$0xff]
      %v7270 = vld [vmem:[%s26 + $0x388] sm:$0xff]
      %v7271 = vld [vmem:[%s26 + $0x390] sm:$0xff]
      %v7272 = vld [vmem:[%s26 + $0x398] sm:$0xff]
      %v7273 = vld [vmem:[%s26 + $0x3a0] sm:$0xff]
      %v7274 = vld [vmem:[%s26 + $0x3a8] sm:$0xff]
      %v7275 = vld [vmem:[%s26 + $0x3b0] sm:$0xff]
      %v7276 = vld [vmem:[%s26 + $0x3b8] sm:$0xff]
      %v7277 = vld [vmem:[%s26 + $0x3c0] sm:$0xff]
      %v7278 = vld [vmem:[%s26 + $0x3c8] sm:$0xff]
      %v7279 = vld [vmem:[%s26 + $0x3d0] sm:$0xff]
      %v7280 = vld [vmem:[%s26 + $0x3d8] sm:$0xff]
      %v7281 = vld [vmem:[%s26 + $0x3e0] sm:$0xff]
      %v7282 = vld [vmem:[%s26 + $0x3e8] sm:$0xff]
      %v7283 = vld [vmem:[%s26 + $0x3f0] sm:$0xff]
      %v7284 = vld [vmem:[%s26 + $0x3f8] sm:$0xff]
      %v7285 = vpack.c.bf16 %v7148, %v7148
      %v7286 = vpack.c.bf16 %v7156, %v7156
      %v7287 = vld [vmem:[%s27] sm:$0xff]
      %v7416 = vunpack.c.l.b16 %v7157
      %v7417 = vunpack.c.h.b16 %v7157
      %v7418 = vunpack.c.l.b16 %v7158
      %v7419 = vunpack.c.h.b16 %v7158
      %v7420 = vunpack.c.l.b16 %v7159
      %v7421 = vunpack.c.h.b16 %v7159
      %v7422 = vunpack.c.l.b16 %v7160
      %v7423 = vunpack.c.h.b16 %v7160
      %v7424 = vunpack.c.l.b16 %v7161
      %v7425 = vunpack.c.h.b16 %v7161
      %v7426 = vunpack.c.l.b16 %v7162
      %v7427 = vunpack.c.h.b16 %v7162
      %v7428 = vunpack.c.l.b16 %v7163
      %v7429 = vunpack.c.h.b16 %v7163
      %v7430 = vunpack.c.l.b16 %v7164
      %v7431 = vunpack.c.h.b16 %v7164
      %v7432 = vunpack.c.l.b16 %v7165
      %v7433 = vunpack.c.h.b16 %v7165
      %v7434 = vunpack.c.l.b16 %v7166
      %v7435 = vunpack.c.h.b16 %v7166
      %v7436 = vunpack.c.l.b16 %v7167
      %v7437 = vunpack.c.h.b16 %v7167
      %v7438 = vunpack.c.l.b16 %v7168
      %v7439 = vunpack.c.h.b16 %v7168
      %v7440 = vunpack.c.l.b16 %v7169
      %v7441 = vunpack.c.h.b16 %v7169
      %v7442 = vunpack.c.l.b16 %v7170
      %v7443 = vunpack.c.h.b16 %v7170
      %v7444 = vunpack.c.l.b16 %v7171
      %v7445 = vunpack.c.h.b16 %v7171
      %v7446 = vunpack.c.l.b16 %v7172
      %v7447 = vunpack.c.h.b16 %v7172
      %v7448 = vunpack.c.l.b16 %v7173
      %v7449 = vunpack.c.h.b16 %v7173
      %v7450 = vunpack.c.l.b16 %v7174
      %v7451 = vunpack.c.h.b16 %v7174
      %v7452 = vunpack.c.l.b16 %v7175
      %v7453 = vunpack.c.h.b16 %v7175
      %v7454 = vunpack.c.l.b16 %v7176
      %v7455 = vunpack.c.h.b16 %v7176
      %v7456 = vunpack.c.l.b16 %v7177
      %v7457 = vunpack.c.h.b16 %v7177
      %v7458 = vunpack.c.l.b16 %v7178
      %v7459 = vunpack.c.h.b16 %v7178
      %v7460 = vunpack.c.l.b16 %v7179
      %v7461 = vunpack.c.h.b16 %v7179
      %v7462 = vunpack.c.l.b16 %v7180
      %v7463 = vunpack.c.h.b16 %v7180
      %v7464 = vunpack.c.l.b16 %v7181
      %v7465 = vunpack.c.h.b16 %v7181
      %v7466 = vunpack.c.l.b16 %v7182
      %v7467 = vunpack.c.h.b16 %v7182
      %v7468 = vunpack.c.l.b16 %v7183
      %v7469 = vunpack.c.h.b16 %v7183
      %v7470 = vunpack.c.l.b16 %v7184
      %v7471 = vunpack.c.h.b16 %v7184
      %v7472 = vunpack.c.l.b16 %v7185
      %v7473 = vunpack.c.h.b16 %v7185
      %v7474 = vunpack.c.l.b16 %v7186
      %v7475 = vunpack.c.h.b16 %v7186
      %v7476 = vunpack.c.l.b16 %v7187
      %v7477 = vunpack.c.h.b16 %v7187
      %v7478 = vunpack.c.l.b16 %v7188
      %v7479 = vunpack.c.h.b16 %v7188
      %v7480 = vunpack.c.l.b16 %v7189
      %v7481 = vunpack.c.h.b16 %v7189
      %v7482 = vunpack.c.l.b16 %v7190
      %v7483 = vunpack.c.h.b16 %v7190
      %v7484 = vunpack.c.l.b16 %v7191
      %v7485 = vunpack.c.h.b16 %v7191
      %v7486 = vunpack.c.l.b16 %v7192
      %v7487 = vunpack.c.h.b16 %v7192
      %v7488 = vunpack.c.l.b16 %v7193
      %v7489 = vunpack.c.h.b16 %v7193
      %v7490 = vunpack.c.l.b16 %v7194
      %v7491 = vunpack.c.h.b16 %v7194
      %v7492 = vunpack.c.l.b16 %v7195
      %v7493 = vunpack.c.h.b16 %v7195
      %v7494 = vunpack.c.l.b16 %v7196
      %v7495 = vunpack.c.h.b16 %v7196
      %v7496 = vunpack.c.l.b16 %v7197
      %v7497 = vunpack.c.h.b16 %v7197
      %v7498 = vunpack.c.l.b16 %v7198
      %v7499 = vunpack.c.h.b16 %v7198
      %v7500 = vunpack.c.l.b16 %v7199
      %v7501 = vunpack.c.h.b16 %v7199
      %v7502 = vunpack.c.l.b16 %v7200
      %v7503 = vunpack.c.h.b16 %v7200
      %v7504 = vunpack.c.l.b16 %v7201
      %v7505 = vunpack.c.h.b16 %v7201
      %v7506 = vunpack.c.l.b16 %v7202
      %v7507 = vunpack.c.h.b16 %v7202
      %v7508 = vunpack.c.l.b16 %v7203
      %v7509 = vunpack.c.h.b16 %v7203
      %v7510 = vunpack.c.l.b16 %v7204
      %v7511 = vunpack.c.h.b16 %v7204
      %v7512 = vunpack.c.l.b16 %v7205
      %v7513 = vunpack.c.h.b16 %v7205
      %v7514 = vunpack.c.l.b16 %v7206
      %v7515 = vunpack.c.h.b16 %v7206
      %v7516 = vunpack.c.l.b16 %v7207
      %v7517 = vunpack.c.h.b16 %v7207
      %v7518 = vunpack.c.l.b16 %v7208
      %v7519 = vunpack.c.h.b16 %v7208
      %v7520 = vunpack.c.l.b16 %v7209
      %v7521 = vunpack.c.h.b16 %v7209
      %v7522 = vunpack.c.l.b16 %v7210
      %v7523 = vunpack.c.h.b16 %v7210
      %v7524 = vunpack.c.l.b16 %v7211
      %v7525 = vunpack.c.h.b16 %v7211
      %v7526 = vunpack.c.l.b16 %v7212
      %v7527 = vunpack.c.h.b16 %v7212
      %v7528 = vunpack.c.l.b16 %v7213
      %v7529 = vunpack.c.h.b16 %v7213
      %v7530 = vunpack.c.l.b16 %v7214
      %v7531 = vunpack.c.h.b16 %v7214
      %v7532 = vunpack.c.l.b16 %v7215
      %v7533 = vunpack.c.h.b16 %v7215
      %v7534 = vunpack.c.l.b16 %v7216
      %v7535 = vunpack.c.h.b16 %v7216
      %v7536 = vunpack.c.l.b16 %v7217
      %v7537 = vunpack.c.h.b16 %v7217
      %v7538 = vunpack.c.l.b16 %v7218
      %v7539 = vunpack.c.h.b16 %v7218
      %v7540 = vunpack.c.l.b16 %v7219
      %v7541 = vunpack.c.h.b16 %v7219
      %v7542 = vunpack.c.l.b16 %v7220
      %v7543 = vunpack.c.h.b16 %v7220
      %v7544 = vunpack.c.l.b16 %v7221
      %v7545 = vunpack.c.h.b16 %v7221
      %v7546 = vunpack.c.l.b16 %v7222
      %v7547 = vunpack.c.h.b16 %v7222
      %v7548 = vunpack.c.l.b16 %v7223
      %v7549 = vunpack.c.h.b16 %v7223
      %v7550 = vunpack.c.l.b16 %v7224
      %v7551 = vunpack.c.h.b16 %v7224
      %v7552 = vunpack.c.l.b16 %v7225
      %v7553 = vunpack.c.h.b16 %v7225
      %v7554 = vunpack.c.l.b16 %v7226
      %v7555 = vunpack.c.h.b16 %v7226
      %v7556 = vunpack.c.l.b16 %v7227
      %v7557 = vunpack.c.h.b16 %v7227
      %v7558 = vunpack.c.l.b16 %v7228
      %v7559 = vunpack.c.h.b16 %v7228
      %v7560 = vunpack.c.l.b16 %v7229
      %v7561 = vunpack.c.h.b16 %v7229
      %v7562 = vunpack.c.l.b16 %v7230
      %v7563 = vunpack.c.h.b16 %v7230
      %v7564 = vunpack.c.l.b16 %v7231
      %v7565 = vunpack.c.h.b16 %v7231
      %v7566 = vunpack.c.l.b16 %v7232
      %v7567 = vunpack.c.h.b16 %v7232
      %v7568 = vunpack.c.l.b16 %v7233
      %v7569 = vunpack.c.h.b16 %v7233
      %v7570 = vunpack.c.l.b16 %v7234
      %v7571 = vunpack.c.h.b16 %v7234
      %v7572 = vunpack.c.l.b16 %v7235
      %v7573 = vunpack.c.h.b16 %v7235
      %v7574 = vunpack.c.l.b16 %v7236
      %v7575 = vunpack.c.h.b16 %v7236
      %v7576 = vunpack.c.l.b16 %v7237
      %v7577 = vunpack.c.h.b16 %v7237
      %v7578 = vunpack.c.l.b16 %v7238
      %v7579 = vunpack.c.h.b16 %v7238
      %v7580 = vunpack.c.l.b16 %v7239
      %v7581 = vunpack.c.h.b16 %v7239
      %v7582 = vunpack.c.l.b16 %v7240
      %v7583 = vunpack.c.h.b16 %v7240
      %v7584 = vunpack.c.l.b16 %v7241
      %v7585 = vunpack.c.h.b16 %v7241
      %v7586 = vunpack.c.l.b16 %v7242
      %v7587 = vunpack.c.h.b16 %v7242
      %v7588 = vunpack.c.l.b16 %v7243
      %v7589 = vunpack.c.h.b16 %v7243
      %v7590 = vunpack.c.l.b16 %v7244
      %v7591 = vunpack.c.h.b16 %v7244
      %v7592 = vunpack.c.l.b16 %v7245
      %v7593 = vunpack.c.h.b16 %v7245
      %v7594 = vunpack.c.l.b16 %v7246
      %v7595 = vunpack.c.h.b16 %v7246
      %v7596 = vunpack.c.l.b16 %v7247
      %v7597 = vunpack.c.h.b16 %v7247
      %v7598 = vunpack.c.l.b16 %v7248
      %v7599 = vunpack.c.h.b16 %v7248
      %v7600 = vunpack.c.l.b16 %v7249
      %v7601 = vunpack.c.h.b16 %v7249
      %v7602 = vunpack.c.l.b16 %v7250
      %v7603 = vunpack.c.h.b16 %v7250
      %v7604 = vunpack.c.l.b16 %v7251
      %v7605 = vunpack.c.h.b16 %v7251
      %v7606 = vunpack.c.l.b16 %v7252
      %v7607 = vunpack.c.h.b16 %v7252
      %v7608 = vunpack.c.l.b16 %v7253
      %v7609 = vunpack.c.h.b16 %v7253
      %v7610 = vunpack.c.l.b16 %v7254
      %v7611 = vunpack.c.h.b16 %v7254
      %v7612 = vunpack.c.l.b16 %v7255
      %v7613 = vunpack.c.h.b16 %v7255
      %v7614 = vunpack.c.l.b16 %v7256
      %v7615 = vunpack.c.h.b16 %v7256
      %v7616 = vunpack.c.l.b16 %v7257
      %v7617 = vunpack.c.h.b16 %v7257
      %v7618 = vunpack.c.l.b16 %v7258
      %v7619 = vunpack.c.h.b16 %v7258
      %v7620 = vunpack.c.l.b16 %v7259
      %v7621 = vunpack.c.h.b16 %v7259
      %v7622 = vunpack.c.l.b16 %v7260
      %v7623 = vunpack.c.h.b16 %v7260
      %v7624 = vunpack.c.l.b16 %v7261
      %v7625 = vunpack.c.h.b16 %v7261
      %v7626 = vunpack.c.l.b16 %v7262
      %v7627 = vunpack.c.h.b16 %v7262
      %v7628 = vunpack.c.l.b16 %v7263
      %v7629 = vunpack.c.h.b16 %v7263
      %v7630 = vunpack.c.l.b16 %v7264
      %v7631 = vunpack.c.h.b16 %v7264
      %v7632 = vunpack.c.l.b16 %v7265
      %v7633 = vunpack.c.h.b16 %v7265
      %v7634 = vunpack.c.l.b16 %v7266
      %v7635 = vunpack.c.h.b16 %v7266
      %v7636 = vunpack.c.l.b16 %v7267
      %v7637 = vunpack.c.h.b16 %v7267
      %v7638 = vunpack.c.l.b16 %v7268
      %v7639 = vunpack.c.h.b16 %v7268
      %v7640 = vunpack.c.l.b16 %v7269
      %v7641 = vunpack.c.h.b16 %v7269
      %v7642 = vunpack.c.l.b16 %v7270
      %v7643 = vunpack.c.h.b16 %v7270
      %v7644 = vunpack.c.l.b16 %v7271
      %v7645 = vunpack.c.h.b16 %v7271
      %v7646 = vunpack.c.l.b16 %v7272
      %v7647 = vunpack.c.h.b16 %v7272
      %v7648 = vunpack.c.l.b16 %v7273
      %v7649 = vunpack.c.h.b16 %v7273
      %v7650 = vunpack.c.l.b16 %v7274
      %v7651 = vunpack.c.h.b16 %v7274
      %v7652 = vunpack.c.l.b16 %v7275
      %v7653 = vunpack.c.h.b16 %v7275
      %v7654 = vunpack.c.l.b16 %v7276
      %v7655 = vunpack.c.h.b16 %v7276
      %v7656 = vunpack.c.l.b16 %v7277
      %v7657 = vunpack.c.h.b16 %v7277
      %v7658 = vunpack.c.l.b16 %v7278
      %v7659 = vunpack.c.h.b16 %v7278
      %v7660 = vunpack.c.l.b16 %v7279
      %v7661 = vunpack.c.h.b16 %v7279
      %v7662 = vunpack.c.l.b16 %v7280
      %v7663 = vunpack.c.h.b16 %v7280
      %v7664 = vunpack.c.l.b16 %v7281
      %v7665 = vunpack.c.h.b16 %v7281
      %v7666 = vunpack.c.l.b16 %v7282
      %v7667 = vunpack.c.h.b16 %v7282
      %v7668 = vunpack.c.l.b16 %v7283
      %v7669 = vunpack.c.h.b16 %v7283
      %v7670 = vunpack.c.l.b16 %v7284
      %v7671 = vunpack.c.h.b16 %v7284
      %v7672 = vpack.c.b16 %v7424, %v7416
      %v7673 = vpack.c.b16 %v7425, %v7417
      %v7674 = vpack.c.b16 %v7426, %v7418
      %v7675 = vpack.c.b16 %v7427, %v7419
      %v7676 = vpack.c.b16 %v7428, %v7420
      %v7677 = vpack.c.b16 %v7429, %v7421
      %v7678 = vpack.c.b16 %v7430, %v7422
      %v7679 = vpack.c.b16 %v7431, %v7423
      %v7680 = vpack.c.b16 %v7440, %v7432
      %v7681 = vpack.c.b16 %v7441, %v7433
      %v7682 = vpack.c.b16 %v7442, %v7434
      %v7683 = vpack.c.b16 %v7443, %v7435
      %v7684 = vpack.c.b16 %v7444, %v7436
      %v7685 = vpack.c.b16 %v7445, %v7437
      %v7686 = vpack.c.b16 %v7446, %v7438
      %v7687 = vpack.c.b16 %v7447, %v7439
      %v7688 = vpack.c.b16 %v7456, %v7448
      %v7689 = vpack.c.b16 %v7457, %v7449
      %v7690 = vpack.c.b16 %v7458, %v7450
      %v7691 = vpack.c.b16 %v7459, %v7451
      %v7692 = vpack.c.b16 %v7460, %v7452
      %v7693 = vpack.c.b16 %v7461, %v7453
      %v7694 = vpack.c.b16 %v7462, %v7454
      %v7695 = vpack.c.b16 %v7463, %v7455
      %v7696 = vpack.c.b16 %v7472, %v7464
      %v7697 = vpack.c.b16 %v7473, %v7465
      %v7698 = vpack.c.b16 %v7474, %v7466
      %v7699 = vpack.c.b16 %v7475, %v7467
      %v7700 = vpack.c.b16 %v7476, %v7468
      %v7701 = vpack.c.b16 %v7477, %v7469
      %v7702 = vpack.c.b16 %v7478, %v7470
      %v7703 = vpack.c.b16 %v7479, %v7471
      %v7704 = vpack.c.b16 %v7488, %v7480
      %v7705 = vpack.c.b16 %v7489, %v7481
      %v7706 = vpack.c.b16 %v7490, %v7482
      %v7707 = vpack.c.b16 %v7491, %v7483
      %v7708 = vpack.c.b16 %v7492, %v7484
      %v7709 = vpack.c.b16 %v7493, %v7485
      %v7710 = vpack.c.b16 %v7494, %v7486
      %v7711 = vpack.c.b16 %v7495, %v7487
      %v7712 = vpack.c.b16 %v7504, %v7496
      %v7713 = vpack.c.b16 %v7505, %v7497
      %v7714 = vpack.c.b16 %v7506, %v7498
      %v7715 = vpack.c.b16 %v7507, %v7499
      %v7716 = vpack.c.b16 %v7508, %v7500
      %v7717 = vpack.c.b16 %v7509, %v7501
      %v7718 = vpack.c.b16 %v7510, %v7502
      %v7719 = vpack.c.b16 %v7511, %v7503
      %v7720 = vpack.c.b16 %v7520, %v7512
      %v7721 = vpack.c.b16 %v7521, %v7513
      %v7722 = vpack.c.b16 %v7522, %v7514
      %v7723 = vpack.c.b16 %v7523, %v7515
      %v7724 = vpack.c.b16 %v7524, %v7516
      %v7725 = vpack.c.b16 %v7525, %v7517
      %v7726 = vpack.c.b16 %v7526, %v7518
      %v7727 = vpack.c.b16 %v7527, %v7519
      %v7728 = vpack.c.b16 %v7536, %v7528
      %v7729 = vpack.c.b16 %v7537, %v7529
      %v7730 = vpack.c.b16 %v7538, %v7530
      %v7731 = vpack.c.b16 %v7539, %v7531
      %v7732 = vpack.c.b16 %v7540, %v7532
      %v7733 = vpack.c.b16 %v7541, %v7533
      %v7734 = vpack.c.b16 %v7542, %v7534
      %v7735 = vpack.c.b16 %v7543, %v7535
      %v7736 = vpack.c.b16 %v7552, %v7544
      %v7737 = vpack.c.b16 %v7553, %v7545
      %v7738 = vpack.c.b16 %v7554, %v7546
      %v7739 = vpack.c.b16 %v7555, %v7547
      %v7740 = vpack.c.b16 %v7556, %v7548
      %v7741 = vpack.c.b16 %v7557, %v7549
      %v7742 = vpack.c.b16 %v7558, %v7550
      %v7743 = vpack.c.b16 %v7559, %v7551
      %v7744 = vpack.c.b16 %v7568, %v7560
      %v7745 = vpack.c.b16 %v7569, %v7561
      %v7746 = vpack.c.b16 %v7570, %v7562
      %v7747 = vpack.c.b16 %v7571, %v7563
      %v7748 = vpack.c.b16 %v7572, %v7564
      %v7749 = vpack.c.b16 %v7573, %v7565
      %v7750 = vpack.c.b16 %v7574, %v7566
      %v7751 = vpack.c.b16 %v7575, %v7567
      %v7752 = vpack.c.b16 %v7584, %v7576
      %v7753 = vpack.c.b16 %v7585, %v7577
      %v7754 = vpack.c.b16 %v7586, %v7578
      %v7755 = vpack.c.b16 %v7587, %v7579
      %v7756 = vpack.c.b16 %v7588, %v7580
      %v7757 = vpack.c.b16 %v7589, %v7581
      %v7758 = vpack.c.b16 %v7590, %v7582
      %v7759 = vpack.c.b16 %v7591, %v7583
      %v7760 = vpack.c.b16 %v7600, %v7592
      %v7761 = vpack.c.b16 %v7601, %v7593
      %v7762 = vpack.c.b16 %v7602, %v7594
      %v7763 = vpack.c.b16 %v7603, %v7595
      %v7764 = vpack.c.b16 %v7604, %v7596
      %v7765 = vpack.c.b16 %v7605, %v7597
      %v7766 = vpack.c.b16 %v7606, %v7598
      %v7767 = vpack.c.b16 %v7607, %v7599
      %v7768 = vpack.c.b16 %v7616, %v7608
      %v7769 = vpack.c.b16 %v7617, %v7609
      %v7770 = vpack.c.b16 %v7618, %v7610
      %v7771 = vpack.c.b16 %v7619, %v7611
      %v7772 = vpack.c.b16 %v7620, %v7612
      %v7773 = vpack.c.b16 %v7621, %v7613
      %v7774 = vpack.c.b16 %v7622, %v7614
      %v7775 = vpack.c.b16 %v7623, %v7615
      %v7776 = vpack.c.b16 %v7632, %v7624
      %v7777 = vpack.c.b16 %v7633, %v7625
      %v7778 = vpack.c.b16 %v7634, %v7626
      %v7779 = vpack.c.b16 %v7635, %v7627
      %v7780 = vpack.c.b16 %v7636, %v7628
      %v7781 = vpack.c.b16 %v7637, %v7629
      %v7782 = vpack.c.b16 %v7638, %v7630
      %v7783 = vpack.c.b16 %v7639, %v7631
      %v7784 = vpack.c.b16 %v7648, %v7640
      %v7785 = vpack.c.b16 %v7649, %v7641
      %v7786 = vpack.c.b16 %v7650, %v7642
      %v7787 = vpack.c.b16 %v7651, %v7643
      %v7788 = vpack.c.b16 %v7652, %v7644
      %v7789 = vpack.c.b16 %v7653, %v7645
      %v7790 = vpack.c.b16 %v7654, %v7646
      %v7791 = vpack.c.b16 %v7655, %v7647
      %v7792 = vpack.c.b16 %v7664, %v7656
      %v7793 = vpack.c.b16 %v7665, %v7657
      %v7794 = vpack.c.b16 %v7666, %v7658
      %v7795 = vpack.c.b16 %v7667, %v7659
      %v7796 = vpack.c.b16 %v7668, %v7660
      %v7797 = vpack.c.b16 %v7669, %v7661
      %v7798 = vpack.c.b16 %v7670, %v7662
      %v7799 = vpack.c.b16 %v7671, %v7663
      %v7929 = vlaneseq
      %v7930 = vshrl.u32 %v7929, 7
      %v7931 = vsub.s32 0, %v7930
      %v7932 = vrot.slane %v7287, %v7931
      %v7933 = vlaneseq
      %v7934 = vshrl.u32 %v7933, 7
      %v7935 = vsub.s32 1, %v7934
      %v7936 = vrot.slane %v7287, %v7935
      %v7937 = vlaneseq
      %v7938 = vshrl.u32 %v7937, 7
      %v7939 = vsub.s32 2, %v7938
      %v7940 = vrot.slane %v7287, %v7939
      %v7941 = vlaneseq
      %v7942 = vshrl.u32 %v7941, 7
      %v7943 = vsub.s32 3, %v7942
      %v7944 = vrot.slane %v7287, %v7943
      %v7945 = vlaneseq
      %v7946 = vshrl.u32 %v7945, 7
      %v7947 = vsub.s32 4, %v7946
      %v7948 = vrot.slane %v7287, %v7947
      %v7949 = vlaneseq
      %v7950 = vshrl.u32 %v7949, 7
      %v7951 = vsub.s32 5, %v7950
      %v7952 = vrot.slane %v7287, %v7951
      %v7953 = vlaneseq
      %v7954 = vshrl.u32 %v7953, 7
      %v7955 = vsub.s32 6, %v7954
      %v7956 = vrot.slane %v7287, %v7955
      %v7957 = vlaneseq
      %v7958 = vshrl.u32 %v7957, 7
      %v7959 = vsub.s32 7, %v7958
      %v7960 = vrot.slane %v7287, %v7959
      %7969 = vmatprep.subr.bf16.mxu0 %v7673
      %7970 = vmatpush1.bf16.msra.mxu0 %v7672
      %7971 = vmatprep.subr.bf16.mxu0 %v7681
      %7972 = vmatpush1.bf16.msra.mxu0 %v7680
      %7973 = vmatprep.subr.bf16.mxu0 %v7689
      %7974 = vmatpush1.bf16.msra.mxu0 %v7688
      %7975 = vmatprep.subr.bf16.mxu0 %v7697
      %7976 = vmatpush1.bf16.msra.mxu0 %v7696
      %7977 = vmatprep.subr.bf16.mxu0 %v7705
      %7978 = vmatpush1.bf16.msra.mxu0 %v7704
      %7979 = vmatprep.subr.bf16.mxu0 %v7713
      %7980 = vmatpush1.bf16.msra.mxu0 %v7712
      %7981 = vmatprep.subr.bf16.mxu0 %v7721
      %7982 = vmatpush1.bf16.msra.mxu0 %v7720
      %7983 = vmatprep.subr.bf16.mxu0 %v7729
      %7984 = vmatpush1.bf16.msra.mxu0 %v7728
      %7985 = vmatprep.subr.bf16.mxu0 %v7737
      %7986 = vmatpush1.bf16.msra.mxu0 %v7736
      %7987 = vmatprep.subr.bf16.mxu0 %v7745
      %7988 = vmatpush1.bf16.msra.mxu0 %v7744
      %7989 = vmatprep.subr.bf16.mxu0 %v7753
      %7990 = vmatpush1.bf16.msra.mxu0 %v7752
      %7991 = vmatprep.subr.bf16.mxu0 %v7761
      %7992 = vmatpush1.bf16.msra.mxu0 %v7760
      %7993 = vmatprep.subr.bf16.mxu0 %v7769
      %7994 = vmatpush1.bf16.msra.mxu0 %v7768
      %7995 = vmatprep.subr.bf16.mxu0 %v7777
      %7996 = vmatpush1.bf16.msra.mxu0 %v7776
      %7997 = vmatprep.subr.bf16.mxu0 %v7785
      %7998 = vmatpush1.bf16.msra.mxu0 %v7784
      %7999 = vmatprep.subr.bf16.mxu0 %v7793
      %8000 = vmatpush1.bf16.msra.mxu0 %v7792
      %8001 = vmatprep.mubr.bf16.mxu0 %v7286
      %8002 = vmatmul.mubr.bf16.gmra.mrb[0].mxu0 %v7285
      %v8003 = vpop.f32.mrb[0].mxu0
      %v8004 = vadd.f32 %v7932, %v8003
      %v8005 = vpop.f32.mrb[0].mxu0
      %v8006 = vadd.f32 %v7936, %v8005
      %v8007 = vpop.f32.mrb[0].mxu0
      %v8008 = vpop.f32.mrb[0].mxu0
      %8009 = vdwg.mxu0
      %8010 = vmatprep.subr.bf16.mxu0 %v7675
      %8011 = vmatpush1.bf16.msra.mxu0 %v7674
      %8012 = vmatprep.subr.bf16.mxu0 %v7683
      %8013 = vmatpush1.bf16.msra.mxu0 %v7682
      %8014 = vmatprep.subr.bf16.mxu0 %v7691
      %8015 = vmatpush1.bf16.msra.mxu0 %v7690
      %8016 = vmatprep.subr.bf16.mxu0 %v7699
      %8017 = vmatpush1.bf16.msra.mxu0 %v7698
      %8018 = vmatprep.subr.bf16.mxu0 %v7707
      %8019 = vmatpush1.bf16.msra.mxu0 %v7706
      %8020 = vmatprep.subr.bf16.mxu0 %v7715
      %8021 = vmatpush1.bf16.msra.mxu0 %v7714
      %8022 = vmatprep.subr.bf16.mxu0 %v7723
      %8023 = vmatpush1.bf16.msra.mxu0 %v7722
      %8024 = vmatprep.subr.bf16.mxu0 %v7731
      %8025 = vmatpush1.bf16.msra.mxu0 %v7730
      %8026 = vmatprep.subr.bf16.mxu0 %v7739
      %8027 = vmatpush1.bf16.msra.mxu0 %v7738
      %8028 = vmatprep.subr.bf16.mxu0 %v7747
      %8029 = vmatpush1.bf16.msra.mxu0 %v7746
      %8030 = vmatprep.subr.bf16.mxu0 %v7755
      %8031 = vmatpush1.bf16.msra.mxu0 %v7754
      %8032 = vmatprep.subr.bf16.mxu0 %v7763
      %8033 = vmatpush1.bf16.msra.mxu0 %v7762
      %8034 = vmatprep.subr.bf16.mxu0 %v7771
      %8035 = vmatpush1.bf16.msra.mxu0 %v7770
      %8036 = vmatprep.subr.bf16.mxu0 %v7779
      %8037 = vmatpush1.bf16.msra.mxu0 %v7778
      %8038 = vmatprep.subr.bf16.mxu0 %v7787
      %8039 = vmatpush1.bf16.msra.mxu0 %v7786
      %8040 = vmatprep.subr.bf16.mxu0 %v7795
      %8041 = vmatpush1.bf16.msra.mxu0 %v7794
      %8042 = vmatprep.mubr.bf16.mxu0 %v7286
      %8043 = vmatmul.mubr.bf16.gmra.mrb[0].mxu0 %v7285
      %v8044 = vpop.f32.mrb[0].mxu0
      %v8045 = vadd.f32 %v7940, %v8044
      %v8046 = vpop.f32.mrb[0].mxu0
      %v8047 = vadd.f32 %v7944, %v8046
      %v8048 = vpop.f32.mrb[0].mxu0
      %v8049 = vpop.f32.mrb[0].mxu0
      %8050 = vdwg.mxu0
      %8051 = vmatprep.subr.bf16.mxu0 %v7677
      %8052 = vmatpush1.bf16.msra.mxu0 %v7676
      %8053 = vmatprep.subr.bf16.mxu0 %v7685
      %8054 = vmatpush1.bf16.msra.mxu0 %v7684
      %8055 = vmatprep.subr.bf16.mxu0 %v7693
      %8056 = vmatpush1.bf16.msra.mxu0 %v7692
      %8057 = vmatprep.subr.bf16.mxu0 %v7701
      %8058 = vmatpush1.bf16.msra.mxu0 %v7700
      %8059 = vmatprep.subr.bf16.mxu0 %v7709
      %8060 = vmatpush1.bf16.msra.mxu0 %v7708
      %8061 = vmatprep.subr.bf16.mxu0 %v7717
      %8062 = vmatpush1.bf16.msra.mxu0 %v7716
      %8063 = vmatprep.subr.bf16.mxu0 %v7725
      %8064 = vmatpush1.bf16.msra.mxu0 %v7724
      %8065 = vmatprep.subr.bf16.mxu0 %v7733
      %8066 = vmatpush1.bf16.msra.mxu0 %v7732
      %8067 = vmatprep.subr.bf16.mxu0 %v7741
      %8068 = vmatpush1.bf16.msra.mxu0 %v7740
      %8069 = vmatprep.subr.bf16.mxu0 %v7749
      %8070 = vmatpush1.bf16.msra.mxu0 %v7748
      %8071 = vmatprep.subr.bf16.mxu0 %v7757
      %8072 = vmatpush1.bf16.msra.mxu0 %v7756
      %8073 = vmatprep.subr.bf16.mxu0 %v7765
      %8074 = vmatpush1.bf16.msra.mxu0 %v7764
      %8075 = vmatprep.subr.bf16.mxu0 %v7773
      %8076 = vmatpush1.bf16.msra.mxu0 %v7772
      %8077 = vmatprep.subr.bf16.mxu0 %v7781
      %8078 = vmatpush1.bf16.msra.mxu0 %v7780
      %8079 = vmatprep.subr.bf16.mxu0 %v7789
      %8080 = vmatpush1.bf16.msra.mxu0 %v7788
      %8081 = vmatprep.subr.bf16.mxu0 %v7797
      %8082 = vmatpush1.bf16.msra.mxu0 %v7796
      %8083 = vmatprep.mubr.bf16.mxu0 %v7286
      %8084 = vmatmul.mubr.bf16.gmra.mrb[0].mxu0 %v7285
      %v8085 = vpop.f32.mrb[0].mxu0
      %v8086 = vadd.f32 %v7948, %v8085
      %v8087 = vpop.f32.mrb[0].mxu0
      %v8088 = vadd.f32 %v7952, %v8087
      %v8089 = vpop.f32.mrb[0].mxu0
      %v8090 = vpop.f32.mrb[0].mxu0
      %8091 = vdwg.mxu0
      %8092 = vmatprep.subr.bf16.mxu0 %v7679
      %8093 = vmatpush1.bf16.msra.mxu0 %v7678
      %8094 = vmatprep.subr.bf16.mxu0 %v7687
      %8095 = vmatpush1.bf16.msra.mxu0 %v7686
      %8096 = vmatprep.subr.bf16.mxu0 %v7695
      %8097 = vmatpush1.bf16.msra.mxu0 %v7694
      %8098 = vmatprep.subr.bf16.mxu0 %v7703
      %8099 = vmatpush1.bf16.msra.mxu0 %v7702
      %8100 = vmatprep.subr.bf16.mxu0 %v7711
      %8101 = vmatpush1.bf16.msra.mxu0 %v7710
      %8102 = vmatprep.subr.bf16.mxu0 %v7719
      %8103 = vmatpush1.bf16.msra.mxu0 %v7718
      %8104 = vmatprep.subr.bf16.mxu0 %v7727
      %8105 = vmatpush1.bf16.msra.mxu0 %v7726
      %8106 = vmatprep.subr.bf16.mxu0 %v7735
      %8107 = vmatpush1.bf16.msra.mxu0 %v7734
      %8108 = vmatprep.subr.bf16.mxu0 %v7743
      %8109 = vmatpush1.bf16.msra.mxu0 %v7742
      %8110 = vmatprep.subr.bf16.mxu0 %v7751
      %8111 = vmatpush1.bf16.msra.mxu0 %v7750
      %8112 = vmatprep.subr.bf16.mxu0 %v7759
      %8113 = vmatpush1.bf16.msra.mxu0 %v7758
      %8114 = vmatprep.subr.bf16.mxu0 %v7767
      %8115 = vmatpush1.bf16.msra.mxu0 %v7766
      %8116 = vmatprep.subr.bf16.mxu0 %v7775
      %8117 = vmatpush1.bf16.msra.mxu0 %v7774
      %8118 = vmatprep.subr.bf16.mxu0 %v7783
      %8119 = vmatpush1.bf16.msra.mxu0 %v7782
      %8120 = vmatprep.subr.bf16.mxu0 %v7791
      %8121 = vmatpush1.bf16.msra.mxu0 %v7790
      %8122 = vmatprep.subr.bf16.mxu0 %v7799
      %8123 = vmatpush1.bf16.msra.mxu0 %v7798
      %8124 = vmatprep.mubr.bf16.mxu0 %v7286
      %8125 = vmatmul.mubr.bf16.gmra.mrb[0].mxu0 %v7285
      %v8126 = vpop.f32.mrb[0].mxu0
      %v8127 = vadd.f32 %v7956, %v8126
      %v8128 = vpop.f32.mrb[0].mxu0
      %v8129 = vadd.f32 %v7960, %v8128
      %v8130 = vpop.f32.mrb[0].mxu0
      %v8131 = vpop.f32.mrb[0].mxu0
      %8132 = vdwg.mxu0
      %v8141 = vcombine.low %v8004, %v8006
      %v8142 = vcombine.low %v8045, %v8047
      %v8143 = vcombine.low %v8086, %v8088
      %v8144 = vcombine.low %v8127, %v8129
      %v8146 = vunpack.c.l.s4 1966171168
      %v8147 = vunpack.c.0.s8 %v8146
      %v8148 = vlaneseq
      %v8149 = vshrl.u32 %v8148, 7
      %v8150 = vsub.s32 %v8147, %v8149
      %v8151 = vrot.slane %v8141, %v8150
      %v8153 = vunpack.c.l.s4 1966171168
      %v8154 = vunpack.c.0.s8 %v8153
      %v8155 = vlaneseq
      %v8156 = vshrl.u32 %v8155, 7
      %v8157 = vsub.s32 %v8154, %v8156
      %v8158 = vrot.slane %v8142, %v8157
      %v8160 = vunpack.c.l.s4 1966171168
      %v8161 = vunpack.c.0.s8 %v8160
      %v8162 = vlaneseq
      %v8163 = vshrl.u32 %v8162, 7
      %v8164 = vsub.s32 %v8161, %v8163
      %v8165 = vrot.slane %v8143, %v8164
      %v8167 = vunpack.c.l.s4 1966171168
      %v8168 = vunpack.c.0.s8 %v8167
      %v8169 = vlaneseq
      %v8170 = vshrl.u32 %v8169, 7
      %v8171 = vsub.s32 %v8168, %v8170
      %v8172 = vrot.slane %v8144, %v8171
      %v8173 = vcombine.low %v8151, %v8158
      %v8174 = vcombine.low %v8165, %v8172
      %v8176 = vunpack.c.l.s4 1966171168
      %v8177 = vunpack.c.0.s8 %v8176
      %v8178 = vlaneseq
      %v8179 = vshrl.u32 %v8178, 7
      %v8180 = vsub.s32 %v8177, %v8179
      %v8181 = vrot.slane %v8173, %v8180
      %v8183 = vunpack.c.l.s4 1966171168
      %v8184 = vunpack.c.0.s8 %v8183
      %v8185 = vlaneseq
      %v8186 = vshrl.u32 %v8185, 7
      %v8187 = vsub.s32 %v8184, %v8186
      %v8188 = vrot.slane %v8174, %v8187
      %v8189 = vcombine.low %v8181, %v8188
      %8191 = vst [vmem:[%s865] sm:$0xff] %v8189
      %p8192 = scmp.lt.s32.totalorder %s39, 1
      %s8193 = scalar_select %p8192, %s39, 1
      %s8194 = smul.addr %s8193, 8
      %s8195 = scalar_lea.vmem %s28, %s8194
      // Predicated region
      $region133: #{embed_enc_clf_forward.1} parent=131 // pred_check
        %p8196 = pneg %p655
      $region134: #{embed_enc_clf_forward.1} parent=131 // pred_check_branch
        %8198 = sbr.rel (%p8196) target = $region136
      $region135: #{embed_enc_clf_forward.1} parent=131 // pred_region
        _
      $region136: #{embed_enc_clf_forward.1} parent=131 // pred_fallthru
        _
    $region132: #{embed_enc_clf_forward.1} parent=5 // pred_fallthru
      _
    %p8199 = scmp.le.s32.totalorder 2, %s34
    // Predicated region
    $region137: #{embed_enc_clf_forward.1} parent=5 // pred_check
      %p8200 = pneg %p8199
    $region138: #{embed_enc_clf_forward.1} parent=5 // pred_check_branch
      %8202 = sbr.rel (%p8200) target = $region140
    $region139: #{embed_enc_clf_forward.1} parent=5 // pred_region
      %s8203 = ssub.s32 %s34, 2
      // Predicated region
      $region141: #{embed_enc_clf_forward.1} parent=139 // pred_check
        %p8204 = pneg %p661
      $region142: #{embed_enc_clf_forward.1} parent=139 // pred_check_branch
        %8206 = sbr.rel (%p8204) target = $region144
      $region143: #{embed_enc_clf_forward.1} parent=139 // pred_region
        %p8207 = scmp.lt.s32.totalorder %s40, 1
        %s8208 = scalar_select %p8207, %s40, 1
        %s8209 = smul.addr %s8208, 8
        %s8210 = scalar_lea.vmem %s28, %s8209
      $region144: #{embed_enc_clf_forward.1} parent=139 // pred_fallthru
        _
    $region140: #{embed_enc_clf_forward.1} parent=5 // pred_fallthru
      _
  $region6: #{embed_enc_clf_forward.1} parent=0 // loop_footer
    %s38 = sadd.s32 1, %s34
  $region7: #{embed_enc_clf_forward.1} parent=0 // loop_footer_branch
    %33 = sbr.rel target = $region3
  $region8: #{embed_enc_clf_forward.1} parent=0 // loop_exit
    _

</llo_original>
